<compile_context>
chip_gen: v7x
topology: tpu7x:2x2x1
jax: 0.10.0
libtpu: 0.0.40
codegen_flags: <defaults>
</compile_context>

<pallas_src>
import functools

import jax
import jax.numpy as jnp
from jax.experimental import pallas as pl
from jax.experimental.pallas import tpu as pltpu


# ---------------------------------------------------------------- constants

DILATIONS = (1, 1, 4, 16, 64)        # NBlock i=0..4: dil = 1, then 4**(i-1)
NUM_LAYERS = 2                       # NConvNeXthi.num_layers
NUM_BLOCKS = NUM_LAYERS * len(DILATIONS)
K_UP = 9                             # upconv kernel size
K_BLK = 9                            # NBlock dwconv1 kernel size
CIN_PAD = 8                          # one-hot channels padded 5 -> 8
STEM_COLS = 128                      # K_UP*CIN_PAD = 72, lane-padded to 128
LN_EPS = 1e-5                        # torch nn.LayerNorm default
PAD_MAX = (K_BLK // 2) * max(DILATIONS)   # 256: fixed scratch offset for all blocks


# ---------------------------------------------------------------- fused kernel

def fused_kernel(cols_ref, upw_ref, upb_ref, lnw_ref, lnb_ref,
                 cw_ref, cb_ref, fc1w_ref, fc1b_ref, fc2w_ref, fc2b_ref,
                 o_ref, xpad_scr, *, L, C, K, eps, approx_gelu):
    # cols_ref : (1, L, 128) bf16   lane-padded im2col'ed one-hot input
    # upw_ref  : (128, C)    bf16   stem weight (im2col layout, zero-padded rows)
    # upb_ref  : (1, C)      f32
    # lnw/lnb  : (NB, 1, C)  f32    per-block LayerNorm affine
    # cw_ref   : (NB, K*C, C) bf16  per-block im2col conv weights
    # cb_ref   : (NB, 1, C)  f32
    # fc*_ref  : (C, C) bf16 / (1, C) f32   final 1x1 convs
    # o_ref    : (1, L, C)   f32
    # xpad_scr : VMEM (L + 2*PAD_MAX, C) bf16   shared padded buffer

    half = K // 2

    # Zero only the two halo regions, once per grid step (per batch element).
    # The interior [PAD_MAX, PAD_MAX+L) is fully overwritten by every block,
    # so stale data can never leak into a later block's reads.
    # NOTE: deliberately NOT gated on program_id==0 (megacore-safe).
    zeros_halo = jnp.zeros((PAD_MAX, C), jnp.bfloat16)
    xpad_scr[pl.ds(0, PAD_MAX), :] = zeros_halo
    xpad_scr[pl.ds(PAD_MAX + L, PAD_MAX), :] = zeros_halo

    def gelu(v):
        if approx_gelu:
            # tanh approximation -> EUP slot (accuracy tradeoff vs torch erf GELU)
            return 0.5 * v * (1.0 + jnp.tanh(
                0.7978845608028654 * (v + 0.044715 * v * v * v)))
        return 0.5 * v * (1.0 + jax.lax.erf(v * 0.7071067811865476))

    # --- stem: one-hot Conv1d(5,C,k=9,p=4) as one lane-aligned im2col matmul ---
    x = jnp.dot(cols_ref[0], upw_ref[...], preferred_element_type=jnp.float32)
    x = jnp.maximum(x + upb_ref[...], 0.0)           # (L, C) f32 residual stream

    inv_c = 1.0 / C

    def layer_body(layer, x):
        # 5 statically-unrolled NBlocks per layer (static dilations / offsets).
        for j, dil in enumerate(DILATIONS):
            blk = layer * len(DILATIONS) + j         # dynamic weight index
            # --- one-pass LayerNorm over channels (biased var, eps in rsqrt) ---
            mu = jnp.sum(x, axis=-1, keepdims=True) * inv_c
            msq = jnp.sum(x * x, axis=-1, keepdims=True) * inv_c
            var = msq - mu * mu
            xn = (x - mu) * jax.lax.rsqrt(var + eps)
            xn = xn * lnw_ref[blk] + lnb_ref[blk]
            # --- "same" dilated Conv1d(C,C,k=9,dil) as ONE im2col matmul ---
            xpad_scr[pl.ds(PAD_MAX, L), :] = xn.astype(jnp.bfloat16)
            taps = [xpad_scr[pl.ds(PAD_MAX + (k - half) * dil, L), :]
                    for k in range(K)]               # 9 x (L, C) bf16, static offsets
            cols = jnp.concatenate(taps, axis=-1)    # (L, K*C) bf16
            acc = jnp.dot(cols, cw_ref[blk], preferred_element_type=jnp.float32)
            acc = acc + cb_ref[blk]
            # --- GELU + pre-norm residual ---
            x = x + gelu(acc)
        return x

    x = jax.lax.fori_loop(0, NUM_LAYERS, layer_body, x)

    # --- head: Conv1d(C,C,1) -> ReLU -> Conv1d(C,C,1) ---
    h = jnp.dot(x.astype(jnp.bfloat16), fc1w_ref[...],
                preferred_element_type=jnp.float32) + fc1b_ref[...]
    h = jnp.maximum(h, 0.0)
    o_ref[0] = (jnp.dot(h.astype(jnp.bfloat16), fc2w_ref[...],
                        preferred_element_type=jnp.float32) + fc2b_ref[...])


def fused_forward(cols, upw, upb, lnw, lnb, cw, cb, fc1w, fc1b, fc2w, fc2b,
                  *, L, C, K=K_BLK, eps=LN_EPS, approx_gelu=False):
    B = cols.shape[0]
    kern = functools.partial(fused_kernel, L=L, C=C, K=K, eps=eps,
                             approx_gelu=approx_gelu)

    # Rough resident-VMEM estimate: double-buffered weights + per-step I/O
    # blocks + scratch + largest in-kernel temporaries.  Floor at 32 MiB.
    weight_bytes = sum(int(a.size) * a.dtype.itemsize
                       for a in (upw, upb, lnw, lnb, cw, cb,
                                 fc1w, fc1b, fc2w, fc2b))
    io_bytes = int(cols.shape[1]) * int(cols.shape[2]) * 2 + L * C * 4
    scr_bytes = (L + 2 * PAD_MAX) * C * 2
    tmp_bytes = L * (K * C) * 2 + 4 * L * C * 4
    est = 2 * weight_bytes + 2 * io_bytes + scr_bytes + tmp_bytes
    vmem_limit = int(min(max(est, 32 * 1024 * 1024), 100 * 1024 * 1024))

    return pl.pallas_call(
        kern,
        out_shape=jax.ShapeDtypeStruct((B, L, C), jnp.float32),
        grid=(B,),
        in_specs=[
            pl.BlockSpec((1, L, cols.shape[2]), lambda b: (b, 0, 0)),
            pl.BlockSpec(upw.shape, lambda b: (0, 0)),
            pl.BlockSpec(upb.shape, lambda b: (0, 0)),
            pl.BlockSpec(lnw.shape, lambda b: (0, 0, 0)),
            pl.BlockSpec(lnb.shape, lambda b: (0, 0, 0)),
            pl.BlockSpec(cw.shape, lambda b: (0, 0, 0)),
            pl.BlockSpec(cb.shape, lambda b: (0, 0, 0)),
            pl.BlockSpec(fc1w.shape, lambda b: (0, 0)),
            pl.BlockSpec(fc1b.shape, lambda b: (0, 0)),
            pl.BlockSpec(fc2w.shape, lambda b: (0, 0)),
            pl.BlockSpec(fc2b.shape, lambda b: (0, 0)),
        ],
        out_specs=pl.BlockSpec((1, L, C), lambda b: (b, 0, 0)),
        scratch_shapes=[pltpu.VMEM((L + 2 * PAD_MAX, C), jnp.bfloat16)],
        compiler_params=pltpu.CompilerParams(
            dimension_semantics=("parallel",),
            vmem_limit_bytes=vmem_limit),
    )(cols, upw, upb, lnw, lnb, cw, cb, fc1w, fc1b, fc2w, fc2b)


# ---------------------------------------------------------------- parameters

def init_params(key, d_model=128, alphabet=5, std=0.02):
    keys = iter(jax.random.split(key, 64))
    p = {}
    # upconv: torch Conv1d(5, d_model, k=9) weight (Cout, Cin, K)
    w = jax.random.normal(next(keys), (d_model, alphabet, K_UP), jnp.float32) * std
    w = jnp.transpose(w, (2, 1, 0))                              # (K, Cin, Cout)
    w = jnp.pad(w, ((0, 0), (0, CIN_PAD - alphabet), (0, 0)))    # Cin 5 -> 8
    w = w.reshape(K_UP * CIN_PAD, d_model)                       # (72, C)
    w = jnp.pad(w, ((0, STEM_COLS - K_UP * CIN_PAD), (0, 0)))    # (128, C)
    p["upconv_w"] = w.astype(jnp.bfloat16)
    p["upconv_b"] = jax.random.normal(next(keys), (1, d_model), jnp.float32) * std

    ln_w, ln_b, conv_w, conv_b = [], [], [], []
    for _ in range(NUM_LAYERS):
        for _dil in DILATIONS:
            cw = jax.random.normal(next(keys), (d_model, d_model, K_BLK),
                                   jnp.float32) * std            # (Cout, Cin, K)
            ln_w.append(jnp.ones((1, d_model), jnp.float32))
            ln_b.append(jnp.zeros((1, d_model), jnp.float32))
            # im2col layout: rows [k*Cin:(k+1)*Cin] = w[:, :, k].T
            conv_w.append(jnp.transpose(cw, (2, 1, 0)).reshape(K_BLK * d_model,
                                                               d_model))
            conv_b.append(jax.random.normal(next(keys), (1, d_model),
                                            jnp.float32) * std)
    p["ln_w"] = jnp.stack(ln_w)                                  # (10, 1, C) f32
    p["ln_b"] = jnp.stack(ln_b)                                  # (10, 1, C) f32
    p["conv_w"] = jnp.stack(conv_w).astype(jnp.bfloat16)         # (10, 9C, C) bf16
    p["conv_b"] = jnp.stack(conv_b)                              # (10, 1, C) f32

    w1 = jax.random.normal(next(keys), (d_model, d_model, 1), jnp.float32) * std
    w2 = jax.random.normal(next(keys), (d_model, d_model, 1), jnp.float32) * std
    p["fc1_w"] = jnp.transpose(w1[:, :, 0]).astype(jnp.bfloat16)  # (Cin, Cout)
    p["fc1_b"] = jax.random.normal(next(keys), (1, d_model), jnp.float32) * std
    p["fc2_w"] = jnp.transpose(w2[:, :, 0]).astype(jnp.bfloat16)
    p["fc2_b"] = jax.random.normal(next(keys), (1, d_model), jnp.float32) * std
    return p


# ---------------------------------------------------------------- model glue

def nconvnexthi_forward(tokens, params, alphabet=5, approx_gelu=False):
    # tokens: (B, L) int32 in [0, alphabet)
    B, L = tokens.shape
    d_model = params["conv_b"].shape[-1]
    half = K_UP // 2
    # one-hot -> channel pad 5->8 -> spatial pad -> im2col -> lane pad 72->128
    x = jax.nn.one_hot(tokens, alphabet, dtype=jnp.bfloat16)        # (B, L, 5)
    x = jnp.pad(x, ((0, 0), (0, 0), (0, CIN_PAD - alphabet)))       # (B, L, 8)
    xpad = jnp.pad(x, ((0, 0), (half, half), (0, 0)))               # (B, L+8, 8)
    cols = jnp.concatenate([xpad[:, k:k + L, :] for k in range(K_UP)],
                           axis=-1)                                 # (B, L, 72)
    cols = jnp.pad(cols, ((0, 0), (0, 0),
                          (0, STEM_COLS - K_UP * CIN_PAD)))         # (B, L, 128)
    out = fused_forward(
        cols, params["upconv_w"], params["upconv_b"],
        params["ln_w"], params["ln_b"], params["conv_w"], params["conv_b"],
        params["fc1_w"], params["fc1_b"], params["fc2_w"], params["fc2_b"],
        L=L, C=d_model, K=K_BLK, eps=LN_EPS, approx_gelu=approx_gelu)
    return out, None


if __name__ == "__main__":
    B, L, d_model, alphabet = 2, 128, 128, 5
    key = jax.random.PRNGKey(0)
    k_tok, k_par = jax.random.split(key)
    tokens = jax.random.randint(k_tok, (B, L), 0, alphabet, dtype=jnp.int32)
    params = init_params(k_par, d_model=d_model, alphabet=alphabet)

    out, state = nconvnexthi_forward(tokens, params, alphabet=alphabet)
    out = jax.block_until_ready(out)
    assert out.shape == (B, L, d_model), out.shape
    assert out.dtype == jnp.float32
    assert state is None
    assert bool(jnp.all(jnp.isfinite(out)))
    print("KERNEL_OK")
</pallas_src>

<mosaic_0001>
module attributes {stable_mosaic.version = 11 : i64} {
  func.func @fused_kernel(%arg0: i32, %arg1: memref<1x128x128xbf16, #tpu.memory_space<vmem>>, %arg2: memref<128x128xbf16, #tpu.memory_space<vmem>>, %arg3: memref<1x128xf32, #tpu.memory_space<vmem>>, %arg4: memref<10x1x128xf32, #tpu.memory_space<vmem>>, %arg5: memref<10x1x128xf32, #tpu.memory_space<vmem>>, %arg6: memref<10x1152x128xbf16, #tpu.memory_space<vmem>>, %arg7: memref<10x1x128xf32, #tpu.memory_space<vmem>>, %arg8: memref<128x128xbf16, #tpu.memory_space<vmem>>, %arg9: memref<1x128xf32, #tpu.memory_space<vmem>>, %arg10: memref<128x128xbf16, #tpu.memory_space<vmem>>, %arg11: memref<1x128xf32, #tpu.memory_space<vmem>>, %arg12: memref<1x128x128xf32, #tpu.memory_space<vmem>>, %arg13: memref<640x128xbf16, #tpu.memory_space<vmem>>) attributes {dimension_semantics = [#tpu.dimension_semantics<parallel>], iteration_bounds = array<i64: 2>, scalar_prefetch = 0 : i64, scratch_operands = 1 : i64, tpu.core_type = #tpu.core_type<tc>, window_params = [{transform_indices = @transform_0, window_bounds = array<i64: 1, 128, 128>}, {pipeline_mode = #tpu.pipeline_mode<synchronous>, transform_indices = @transform_1, window_bounds = array<i64: 128, 128>}, {pipeline_mode = #tpu.pipeline_mode<synchronous>, transform_indices = @transform_2, window_bounds = array<i64: 1, 128>}, {pipeline_mode = #tpu.pipeline_mode<synchronous>, transform_indices = @transform_3, window_bounds = array<i64: 10, 1, 128>}, {pipeline_mode = #tpu.pipeline_mode<synchronous>, transform_indices = @transform_4, window_bounds = array<i64: 10, 1, 128>}, {pipeline_mode = #tpu.pipeline_mode<synchronous>, transform_indices = @transform_5, window_bounds = array<i64: 10, 1152, 128>}, {pipeline_mode = #tpu.pipeline_mode<synchronous>, transform_indices = @transform_6, window_bounds = array<i64: 10, 1, 128>}, {pipeline_mode = #tpu.pipeline_mode<synchronous>, transform_indices = @transform_7, window_bounds = array<i64: 128, 128>}, {pipeline_mode = #tpu.pipeline_mode<synchronous>, transform_indices = @transform_8, window_bounds = array<i64: 1, 128>}, {pipeline_mode = #tpu.pipeline_mode<synchronous>, transform_indices = @transform_9, window_bounds = array<i64: 128, 128>}, {pipeline_mode = #tpu.pipeline_mode<synchronous>, transform_indices = @transform_10, window_bounds = array<i64: 1, 128>}, {transform_indices = @transform_11, window_bounds = array<i64: 1, 128, 128>}]} {
    %cst = arith.constant 0.000000e+00 : bf16
    %0 = vector.broadcast %cst : bf16 to vector<256x128xbf16>
    %c0 = arith.constant 0 : index
    %c0_0 = arith.constant 0 : index
    %1 = vector.load %arg13[%c0, %c0_0] : memref<640x128xbf16, #tpu.memory_space<vmem>>, vector<256x128xbf16>
    tpu.vector_store %arg13[%c0, %c0_0], %0 {strides = array<i32>} : memref<640x128xbf16, #tpu.memory_space<vmem>>, vector<256x128xbf16>,
    %c384 = arith.constant 384 : index
    %c0_1 = arith.constant 0 : index
    %2 = vector.load %arg13[%c384, %c0_1] : memref<640x128xbf16, #tpu.memory_space<vmem>>, vector<256x128xbf16>
    tpu.vector_store %arg13[%c384, %c0_1], %0 {strides = array<i32>} : memref<640x128xbf16, #tpu.memory_space<vmem>>, vector<256x128xbf16>,
    %c0_2 = arith.constant 0 : index
    %c0_3 = arith.constant 0 : index
    %c0_4 = arith.constant 0 : index
    %3 = vector.load %arg1[%c0_2, %c0_3, %c0_4] : memref<1x128x128xbf16, #tpu.memory_space<vmem>>, vector<1x128x128xbf16>
    %4 = vector.shape_cast %3 : vector<1x128x128xbf16> to vector<128x128xbf16>
    %c0_5 = arith.constant 0 : index
    %c0_6 = arith.constant 0 : index
    %5 = vector.load %arg2[%c0_5, %c0_6] : memref<128x128xbf16, #tpu.memory_space<vmem>>, vector<128x128xbf16>
    %cst_7 = arith.constant dense<0.000000e+00> : vector<128x128xf32>
    %6 = tpu.matmul %4, %5, %cst_7 {dimension_numbers = #tpu.dot_dimension_numbers<[1], [0], [0], [1], [0, 0, 1, 1], [], []>} : vector<128x128xbf16>, vector<128x128xbf16>, vector<128x128xf32> -> vector<128x128xf32>
    %c0_8 = arith.constant 0 : index
    %c0_9 = arith.constant 0 : index
    %7 = vector.load %arg3[%c0_8, %c0_9] : memref<1x128xf32, #tpu.memory_space<vmem>>, vector<1x128xf32>
    %8 = vector.broadcast %7 : vector<1x128xf32> to vector<128x128xf32>
    %9 = arith.addf %6, %8 : vector<128x128xf32>
    %cst_10 = arith.constant 0.000000e+00 : f32
    %10 = vector.broadcast %cst_10 : f32 to vector<128x128xf32>
    %11 = arith.maximumf %9, %10 : vector<128x128xf32>
    %c0_i32 = arith.constant 0 : i32
    %c2_i32 = arith.constant 2 : i32
    %12 = arith.addi %c0_i32, %c2_i32 : i32
    %c1_i32 = arith.constant 1 : i32
    %13 = scf.for %arg14 = %c0_i32 to %12 step %c1_i32 iter_args(%arg15 = %11) -> (vector<128x128xf32>)  : i32 {
      %c5_i32 = arith.constant 5 : i32
      %31 = arith.muli %arg14, %c5_i32 : i32
      %c0_i32_26 = arith.constant 0 : i32
      %32 = arith.addi %31, %c0_i32_26 : i32
      %cst_27 = arith.constant dense<0.000000e+00> : vector<128xf32>
      %33 = vector.multi_reduction <add>, %arg15, %cst_27 [1] : vector<128x128xf32> to vector<128xf32>
      %34 = vector.shape_cast %33 : vector<128xf32> to vector<128x1xf32>
      %cst_28 = arith.constant 7.812500e-03 : f32
      %35 = vector.broadcast %cst_28 : f32 to vector<128x1xf32>
      %36 = arith.mulf %34, %35 : vector<128x1xf32>
      %37 = arith.mulf %arg15, %arg15 : vector<128x128xf32>
      %cst_29 = arith.constant dense<0.000000e+00> : vector<128xf32>
      %38 = vector.multi_reduction <add>, %37, %cst_29 [1] : vector<128x128xf32> to vector<128xf32>
      %39 = vector.shape_cast %38 : vector<128xf32> to vector<128x1xf32>
      %cst_30 = arith.constant 7.812500e-03 : f32
      %40 = vector.broadcast %cst_30 : f32 to vector<128x1xf32>
      %41 = arith.mulf %39, %40 : vector<128x1xf32>
      %42 = arith.mulf %36, %36 : vector<128x1xf32>
      %43 = arith.subf %41, %42 : vector<128x1xf32>
      %44 = vector.broadcast %36 : vector<128x1xf32> to vector<128x128xf32>
      %45 = arith.subf %arg15, %44 : vector<128x128xf32>
      %cst_31 = arith.constant 9.99999974E-6 : f32
      %46 = vector.broadcast %cst_31 : f32 to vector<128x1xf32>
      %47 = arith.addf %43, %46 : vector<128x1xf32>
      %48 = math.rsqrt %47 : vector<128x1xf32>
      %49 = vector.broadcast %48 : vector<128x1xf32> to vector<128x128xf32>
      %50 = arith.mulf %45, %49 : vector<128x128xf32>
      %51 = arith.index_cast %32 : i32 to index
      %c0_32 = arith.constant 0 : index
      %c0_33 = arith.constant 0 : index
      %52 = vector.load %arg4[%51, %c0_32, %c0_33] : memref<10x1x128xf32, #tpu.memory_space<vmem>>, vector<1x1x128xf32>
      %53 = vector.shape_cast %52 : vector<1x1x128xf32> to vector<1x128xf32>
      %54 = vector.broadcast %53 : vector<1x128xf32> to vector<128x128xf32>
      %55 = arith.mulf %50, %54 : vector<128x128xf32>
      %56 = arith.index_cast %32 : i32 to index
      %c0_34 = arith.constant 0 : index
      %c0_35 = arith.constant 0 : index
      %57 = vector.load %arg5[%56, %c0_34, %c0_35] : memref<10x1x128xf32, #tpu.memory_space<vmem>>, vector<1x1x128xf32>
      %58 = vector.shape_cast %57 : vector<1x1x128xf32> to vector<1x128xf32>
      %59 = vector.broadcast %58 : vector<1x128xf32> to vector<128x128xf32>
      %60 = arith.addf %55, %59 : vector<128x128xf32>
      %61 = arith.truncf %60 : vector<128x128xf32> to vector<128x128xbf16>
      %c256 = arith.constant 256 : index
      %c0_36 = arith.constant 0 : index
      %62 = vector.load %arg13[%c256, %c0_36] : memref<640x128xbf16, #tpu.memory_space<vmem>>, vector<128x128xbf16>
      tpu.vector_store %arg13[%c256, %c0_36], %61 {strides = array<i32>} : memref<640x128xbf16, #tpu.memory_space<vmem>>, vector<128x128xbf16>,
      %c252 = arith.constant 252 : index
      %c0_37 = arith.constant 0 : index
      %63 = vector.load %arg13[%c252, %c0_37] : memref<640x128xbf16, #tpu.memory_space<vmem>>, vector<128x128xbf16>
      %c253 = arith.constant 253 : index
      %c0_38 = arith.constant 0 : index
      %64 = vector.load %arg13[%c253, %c0_38] : memref<640x128xbf16, #tpu.memory_space<vmem>>, vector<128x128xbf16>
      %c254 = arith.constant 254 : index
      %c0_39 = arith.constant 0 : index
      %65 = vector.load %arg13[%c254, %c0_39] : memref<640x128xbf16, #tpu.memory_space<vmem>>, vector<128x128xbf16>
      %c255 = arith.constant 255 : index
      %c0_40 = arith.constant 0 : index
      %66 = vector.load %arg13[%c255, %c0_40] : memref<640x128xbf16, #tpu.memory_space<vmem>>, vector<128x128xbf16>
      %c256_41 = arith.constant 256 : index
      %c0_42 = arith.constant 0 : index
      %67 = vector.load %arg13[%c256_41, %c0_42] : memref<640x128xbf16, #tpu.memory_space<vmem>>, vector<128x128xbf16>
      %c257 = arith.constant 257 : index
      %c0_43 = arith.constant 0 : index
      %68 = vector.load %arg13[%c257, %c0_43] : memref<640x128xbf16, #tpu.memory_space<vmem>>, vector<128x128xbf16>
      %c258 = arith.constant 258 : index
      %c0_44 = arith.constant 0 : index
      %69 = vector.load %arg13[%c258, %c0_44] : memref<640x128xbf16, #tpu.memory_space<vmem>>, vector<128x128xbf16>
      %c259 = arith.constant 259 : index
      %c0_45 = arith.constant 0 : index
      %70 = vector.load %arg13[%c259, %c0_45] : memref<640x128xbf16, #tpu.memory_space<vmem>>, vector<128x128xbf16>
      %c260 = arith.constant 260 : index
      %c0_46 = arith.constant 0 : index
      %71 = vector.load %arg13[%c260, %c0_46] : memref<640x128xbf16, #tpu.memory_space<vmem>>, vector<128x128xbf16>
      %72 = tpu.concatenate %63, %64, %65, %66, %67, %68, %69, %70, %71 in 1 : vector<128x128xbf16>, vector<128x128xbf16>, vector<128x128xbf16>, vector<128x128xbf16>, vector<128x128xbf16>, vector<128x128xbf16>, vector<128x128xbf16>, vector<128x128xbf16>, vector<128x128xbf16> -> vector<128x1152xbf16>
      %73 = arith.index_cast %32 : i32 to index
      %c0_47 = arith.constant 0 : index
      %c0_48 = arith.constant 0 : index
      %74 = vector.load %arg6[%73, %c0_47, %c0_48] : memref<10x1152x128xbf16, #tpu.memory_space<vmem>>, vector<1x1152x128xbf16>
      %75 = vector.shape_cast %74 : vector<1x1152x128xbf16> to vector<1152x128xbf16>
      %cst_49 = arith.constant dense<0.000000e+00> : vector<128x128xf32>
      %76 = tpu.matmul %72, %75, %cst_49 {dimension_numbers = #tpu.dot_dimension_numbers<[1], [0], [0], [1], [0, 0, 1, 1], [], []>} : vector<128x1152xbf16>, vector<1152x128xbf16>, vector<128x128xf32> -> vector<128x128xf32>
      %77 = arith.index_cast %32 : i32 to index
      %c0_50 = arith.constant 0 : index
      %c0_51 = arith.constant 0 : index
      %78 = vector.load %arg7[%77, %c0_50, %c0_51] : memref<10x1x128xf32, #tpu.memory_space<vmem>>, vector<1x1x128xf32>
      %79 = vector.shape_cast %78 : vector<1x1x128xf32> to vector<1x128xf32>
      %80 = vector.broadcast %79 : vector<1x128xf32> to vector<128x128xf32>
      %81 = arith.addf %76, %80 : vector<128x128xf32>
      %cst_52 = arith.constant 5.000000e-01 : f32
      %82 = vector.broadcast %cst_52 : f32 to vector<128x128xf32>
      %83 = arith.mulf %82, %81 : vector<128x128xf32>
      %cst_53 = arith.constant 0.707106769 : f32
      %84 = vector.broadcast %cst_53 : f32 to vector<128x128xf32>
      %85 = arith.mulf %81, %84 : vector<128x128xf32>
      %86 = math.erf %85 : vector<128x128xf32>
      %cst_54 = arith.constant 1.000000e+00 : f32
      %87 = vector.broadcast %cst_54 : f32 to vector<128x128xf32>
      %88 = arith.addf %87, %86 : vector<128x128xf32>
      %89 = arith.mulf %83, %88 : vector<128x128xf32>
      %90 = arith.addf %arg15, %89 : vector<128x128xf32>
      %c5_i32_55 = arith.constant 5 : i32
      %91 = arith.muli %arg14, %c5_i32_55 : i32
      %c1_i32_56 = arith.constant 1 : i32
      %92 = arith.addi %91, %c1_i32_56 : i32
      %cst_57 = arith.constant dense<0.000000e+00> : vector<128xf32>
      %93 = vector.multi_reduction <add>, %90, %cst_57 [1] : vector<128x128xf32> to vector<128xf32>
      %94 = vector.shape_cast %93 : vector<128xf32> to vector<128x1xf32>
      %cst_58 = arith.constant 7.812500e-03 : f32
      %95 = vector.broadcast %cst_58 : f32 to vector<128x1xf32>
      %96 = arith.mulf %94, %95 : vector<128x1xf32>
      %97 = arith.mulf %90, %90 : vector<128x128xf32>
      %cst_59 = arith.constant dense<0.000000e+00> : vector<128xf32>
      %98 = vector.multi_reduction <add>, %97, %cst_59 [1] : vector<128x128xf32> to vector<128xf32>
      %99 = vector.shape_cast %98 : vector<128xf32> to vector<128x1xf32>
      %cst_60 = arith.constant 7.812500e-03 : f32
      %100 = vector.broadcast %cst_60 : f32 to vector<128x1xf32>
      %101 = arith.mulf %99, %100 : vector<128x1xf32>
      %102 = arith.mulf %96, %96 : vector<128x1xf32>
      %103 = arith.subf %101, %102 : vector<128x1xf32>
      %104 = vector.broadcast %96 : vector<128x1xf32> to vector<128x128xf32>
      %105 = arith.subf %90, %104 : vector<128x128xf32>
      %cst_61 = arith.constant 9.99999974E-6 : f32
      %106 = vector.broadcast %cst_61 : f32 to vector<128x1xf32>
      %107 = arith.addf %103, %106 : vector<128x1xf32>
      %108 = math.rsqrt %107 : vector<128x1xf32>
      %109 = vector.broadcast %108 : vector<128x1xf32> to vector<128x128xf32>
      %110 = arith.mulf %105, %109 : vector<128x128xf32>
      %111 = arith.index_cast %92 : i32 to index
      %c0_62 = arith.constant 0 : index
      %c0_63 = arith.constant 0 : index
      %112 = vector.load %arg4[%111, %c0_62, %c0_63] : memref<10x1x128xf32, #tpu.memory_space<vmem>>, vector<1x1x128xf32>
      %113 = vector.shape_cast %112 : vector<1x1x128xf32> to vector<1x128xf32>
      %114 = vector.broadcast %113 : vector<1x128xf32> to vector<128x128xf32>
      %115 = arith.mulf %110, %114 : vector<128x128xf32>
      %116 = arith.index_cast %92 : i32 to index
      %c0_64 = arith.constant 0 : index
      %c0_65 = arith.constant 0 : index
      %117 = vector.load %arg5[%116, %c0_64, %c0_65] : memref<10x1x128xf32, #tpu.memory_space<vmem>>, vector<1x1x128xf32>
      %118 = vector.shape_cast %117 : vector<1x1x128xf32> to vector<1x128xf32>
      %119 = vector.broadcast %118 : vector<1x128xf32> to vector<128x128xf32>
      %120 = arith.addf %115, %119 : vector<128x128xf32>
      %121 = arith.truncf %120 : vector<128x128xf32> to vector<128x128xbf16>
      %c256_66 = arith.constant 256 : index
      %c0_67 = arith.constant 0 : index
      %122 = vector.load %arg13[%c256_66, %c0_67] : memref<640x128xbf16, #tpu.memory_space<vmem>>, vector<128x128xbf16>
      tpu.vector_store %arg13[%c256_66, %c0_67], %121 {strides = array<i32>} : memref<640x128xbf16, #tpu.memory_space<vmem>>, vector<128x128xbf16>,
      %c252_68 = arith.constant 252 : index
      %c0_69 = arith.constant 0 : index
      %123 = vector.load %arg13[%c252_68, %c0_69] : memref<640x128xbf16, #tpu.memory_space<vmem>>, vector<128x128xbf16>
      %c253_70 = arith.constant 253 : index
      %c0_71 = arith.constant 0 : index
      %124 = vector.load %arg13[%c253_70, %c0_71] : memref<640x128xbf16, #tpu.memory_space<vmem>>, vector<128x128xbf16>
      %c254_72 = arith.constant 254 : index
      %c0_73 = arith.constant 0 : index
      %125 = vector.load %arg13[%c254_72, %c0_73] : memref<640x128xbf16, #tpu.memory_space<vmem>>, vector<128x128xbf16>
      %c255_74 = arith.constant 255 : index
      %c0_75 = arith.constant 0 : index
      %126 = vector.load %arg13[%c255_74, %c0_75] : memref<640x128xbf16, #tpu.memory_space<vmem>>, vector<128x128xbf16>
      %c256_76 = arith.constant 256 : index
      %c0_77 = arith.constant 0 : index
      %127 = vector.load %arg13[%c256_76, %c0_77] : memref<640x128xbf16, #tpu.memory_space<vmem>>, vector<128x128xbf16>
      %c257_78 = arith.constant 257 : index
      %c0_79 = arith.constant 0 : index
      %128 = vector.load %arg13[%c257_78, %c0_79] : memref<640x128xbf16, #tpu.memory_space<vmem>>, vector<128x128xbf16>
      %c258_80 = arith.constant 258 : index
      %c0_81 = arith.constant 0 : index
      %129 = vector.load %arg13[%c258_80, %c0_81] : memref<640x128xbf16, #tpu.memory_space<vmem>>, vector<128x128xbf16>
      %c259_82 = arith.constant 259 : index
      %c0_83 = arith.constant 0 : index
      %130 = vector.load %arg13[%c259_82, %c0_83] : memref<640x128xbf16, #tpu.memory_space<vmem>>, vector<128x128xbf16>
      %c260_84 = arith.constant 260 : index
      %c0_85 = arith.constant 0 : index
      %131 = vector.load %arg13[%c260_84, %c0_85] : memref<640x128xbf16, #tpu.memory_space<vmem>>, vector<128x128xbf16>
      %132 = tpu.concatenate %123, %124, %125, %126, %127, %128, %129, %130, %131 in 1 : vector<128x128xbf16>, vector<128x128xbf16>, vector<128x128xbf16>, vector<128x128xbf16>, vector<128x128xbf16>, vector<128x128xbf16>, vector<128x128xbf16>, vector<128x128xbf16>, vector<128x128xbf16> -> vector<128x1152xbf16>
      %133 = arith.index_cast %92 : i32 to index
      %c0_86 = arith.constant 0 : index
      %c0_87 = arith.constant 0 : index
      %134 = vector.load %arg6[%133, %c0_86, %c0_87] : memref<10x1152x128xbf16, #tpu.memory_space<vmem>>, vector<1x1152x128xbf16>
      %135 = vector.shape_cast %134 : vector<1x1152x128xbf16> to vector<1152x128xbf16>
      %cst_88 = arith.constant dense<0.000000e+00> : vector<128x128xf32>
      %136 = tpu.matmul %132, %135, %cst_88 {dimension_numbers = #tpu.dot_dimension_numbers<[1], [0], [0], [1], [0, 0, 1, 1], [], []>} : vector<128x1152xbf16>, vector<1152x128xbf16>, vector<128x128xf32> -> vector<128x128xf32>
      %137 = arith.index_cast %92 : i32 to index
      %c0_89 = arith.constant 0 : index
      %c0_90 = arith.constant 0 : index
      %138 = vector.load %arg7[%137, %c0_89, %c0_90] : memref<10x1x128xf32, #tpu.memory_space<vmem>>, vector<1x1x128xf32>
      %139 = vector.shape_cast %138 : vector<1x1x128xf32> to vector<1x128xf32>
      %140 = vector.broadcast %139 : vector<1x128xf32> to vector<128x128xf32>
      %141 = arith.addf %136, %140 : vector<128x128xf32>
      %cst_91 = arith.constant 5.000000e-01 : f32
      %142 = vector.broadcast %cst_91 : f32 to vector<128x128xf32>
      %143 = arith.mulf %142, %141 : vector<128x128xf32>
      %cst_92 = arith.constant 0.707106769 : f32
      %144 = vector.broadcast %cst_92 : f32 to vector<128x128xf32>
      %145 = arith.mulf %141, %144 : vector<128x128xf32>
      %146 = math.erf %145 : vector<128x128xf32>
      %cst_93 = arith.constant 1.000000e+00 : f32
      %147 = vector.broadcast %cst_93 : f32 to vector<128x128xf32>
      %148 = arith.addf %147, %146 : vector<128x128xf32>
      %149 = arith.mulf %143, %148 : vector<128x128xf32>
      %150 = arith.addf %90, %149 : vector<128x128xf32>
      %c5_i32_94 = arith.constant 5 : i32
      %151 = arith.muli %arg14, %c5_i32_94 : i32
      %c2_i32_95 = arith.constant 2 : i32
      %152 = arith.addi %151, %c2_i32_95 : i32
      %cst_96 = arith.constant dense<0.000000e+00> : vector<128xf32>
      %153 = vector.multi_reduction <add>, %150, %cst_96 [1] : vector<128x128xf32> to vector<128xf32>
      %154 = vector.shape_cast %153 : vector<128xf32> to vector<128x1xf32>
      %cst_97 = arith.constant 7.812500e-03 : f32
      %155 = vector.broadcast %cst_97 : f32 to vector<128x1xf32>
      %156 = arith.mulf %154, %155 : vector<128x1xf32>
      %157 = arith.mulf %150, %150 : vector<128x128xf32>
      %cst_98 = arith.constant dense<0.000000e+00> : vector<128xf32>
      %158 = vector.multi_reduction <add>, %157, %cst_98 [1] : vector<128x128xf32> to vector<128xf32>
      %159 = vector.shape_cast %158 : vector<128xf32> to vector<128x1xf32>
      %cst_99 = arith.constant 7.812500e-03 : f32
      %160 = vector.broadcast %cst_99 : f32 to vector<128x1xf32>
      %161 = arith.mulf %159, %160 : vector<128x1xf32>
      %162 = arith.mulf %156, %156 : vector<128x1xf32>
      %163 = arith.subf %161, %162 : vector<128x1xf32>
      %164 = vector.broadcast %156 : vector<128x1xf32> to vector<128x128xf32>
      %165 = arith.subf %150, %164 : vector<128x128xf32>
      %cst_100 = arith.constant 9.99999974E-6 : f32
      %166 = vector.broadcast %cst_100 : f32 to vector<128x1xf32>
      %167 = arith.addf %163, %166 : vector<128x1xf32>
      %168 = math.rsqrt %167 : vector<128x1xf32>
      %169 = vector.broadcast %168 : vector<128x1xf32> to vector<128x128xf32>
      %170 = arith.mulf %165, %169 : vector<128x128xf32>
      %171 = arith.index_cast %152 : i32 to index
      %c0_101 = arith.constant 0 : index
      %c0_102 = arith.constant 0 : index
      %172 = vector.load %arg4[%171, %c0_101, %c0_102] : memref<10x1x128xf32, #tpu.memory_space<vmem>>, vector<1x1x128xf32>
      %173 = vector.shape_cast %172 : vector<1x1x128xf32> to vector<1x128xf32>
      %174 = vector.broadcast %173 : vector<1x128xf32> to vector<128x128xf32>
      %175 = arith.mulf %170, %174 : vector<128x128xf32>
      %176 = arith.index_cast %152 : i32 to index
      %c0_103 = arith.constant 0 : index
      %c0_104 = arith.constant 0 : index
      %177 = vector.load %arg5[%176, %c0_103, %c0_104] : memref<10x1x128xf32, #tpu.memory_space<vmem>>, vector<1x1x128xf32>
      %178 = vector.shape_cast %177 : vector<1x1x128xf32> to vector<1x128xf32>
      %179 = vector.broadcast %178 : vector<1x128xf32> to vector<128x128xf32>
      %180 = arith.addf %175, %179 : vector<128x128xf32>
      %181 = arith.truncf %180 : vector<128x128xf32> to vector<128x128xbf16>
      %c256_105 = arith.constant 256 : index
      %c0_106 = arith.constant 0 : index
      %182 = vector.load %arg13[%c256_105, %c0_106] : memref<640x128xbf16, #tpu.memory_space<vmem>>, vector<128x128xbf16>
      tpu.vector_store %arg13[%c256_105, %c0_106], %181 {strides = array<i32>} : memref<640x128xbf16, #tpu.memory_space<vmem>>, vector<128x128xbf16>,
      %c240 = arith.constant 240 : index
      %c0_107 = arith.constant 0 : index
      %183 = vector.load %arg13[%c240, %c0_107] : memref<640x128xbf16, #tpu.memory_space<vmem>>, vector<128x128xbf16>
      %c244 = arith.constant 244 : index
      %c0_108 = arith.constant 0 : index
      %184 = vector.load %arg13[%c244, %c0_108] : memref<640x128xbf16, #tpu.memory_space<vmem>>, vector<128x128xbf16>
      %c248 = arith.constant 248 : index
      %c0_109 = arith.constant 0 : index
      %185 = vector.load %arg13[%c248, %c0_109] : memref<640x128xbf16, #tpu.memory_space<vmem>>, vector<128x128xbf16>
      %c252_110 = arith.constant 252 : index
      %c0_111 = arith.constant 0 : index
      %186 = vector.load %arg13[%c252_110, %c0_111] : memref<640x128xbf16, #tpu.memory_space<vmem>>, vector<128x128xbf16>
      %c256_112 = arith.constant 256 : index
      %c0_113 = arith.constant 0 : index
      %187 = vector.load %arg13[%c256_112, %c0_113] : memref<640x128xbf16, #tpu.memory_space<vmem>>, vector<128x128xbf16>
      %c260_114 = arith.constant 260 : index
      %c0_115 = arith.constant 0 : index
      %188 = vector.load %arg13[%c260_114, %c0_115] : memref<640x128xbf16, #tpu.memory_space<vmem>>, vector<128x128xbf16>
      %c264 = arith.constant 264 : index
      %c0_116 = arith.constant 0 : index
      %189 = vector.load %arg13[%c264, %c0_116] : memref<640x128xbf16, #tpu.memory_space<vmem>>, vector<128x128xbf16>
      %c268 = arith.constant 268 : index
      %c0_117 = arith.constant 0 : index
      %190 = vector.load %arg13[%c268, %c0_117] : memref<640x128xbf16, #tpu.memory_space<vmem>>, vector<128x128xbf16>
      %c272 = arith.constant 272 : index
      %c0_118 = arith.constant 0 : index
      %191 = vector.load %arg13[%c272, %c0_118] : memref<640x128xbf16, #tpu.memory_space<vmem>>, vector<128x128xbf16>
      %192 = tpu.concatenate %183, %184, %185, %186, %187, %188, %189, %190, %191 in 1 : vector<128x128xbf16>, vector<128x128xbf16>, vector<128x128xbf16>, vector<128x128xbf16>, vector<128x128xbf16>, vector<128x128xbf16>, vector<128x128xbf16>, vector<128x128xbf16>, vector<128x128xbf16> -> vector<128x1152xbf16>
      %193 = arith.index_cast %152 : i32 to index
      %c0_119 = arith.constant 0 : index
      %c0_120 = arith.constant 0 : index
      %194 = vector.load %arg6[%193, %c0_119, %c0_120] : memref<10x1152x128xbf16, #tpu.memory_space<vmem>>, vector<1x1152x128xbf16>
      %195 = vector.shape_cast %194 : vector<1x1152x128xbf16> to vector<1152x128xbf16>
      %cst_121 = arith.constant dense<0.000000e+00> : vector<128x128xf32>
      %196 = tpu.matmul %192, %195, %cst_121 {dimension_numbers = #tpu.dot_dimension_numbers<[1], [0], [0], [1], [0, 0, 1, 1], [], []>} : vector<128x1152xbf16>, vector<1152x128xbf16>, vector<128x128xf32> -> vector<128x128xf32>
      %197 = arith.index_cast %152 : i32 to index
      %c0_122 = arith.constant 0 : index
      %c0_123 = arith.constant 0 : index
      %198 = vector.load %arg7[%197, %c0_122, %c0_123] : memref<10x1x128xf32, #tpu.memory_space<vmem>>, vector<1x1x128xf32>
      %199 = vector.shape_cast %198 : vector<1x1x128xf32> to vector<1x128xf32>
      %200 = vector.broadcast %199 : vector<1x128xf32> to vector<128x128xf32>
      %201 = arith.addf %196, %200 : vector<128x128xf32>
      %cst_124 = arith.constant 5.000000e-01 : f32
      %202 = vector.broadcast %cst_124 : f32 to vector<128x128xf32>
      %203 = arith.mulf %202, %201 : vector<128x128xf32>
      %cst_125 = arith.constant 0.707106769 : f32
      %204 = vector.broadcast %cst_125 : f32 to vector<128x128xf32>
      %205 = arith.mulf %201, %204 : vector<128x128xf32>
      %206 = math.erf %205 : vector<128x128xf32>
      %cst_126 = arith.constant 1.000000e+00 : f32
      %207 = vector.broadcast %cst_126 : f32 to vector<128x128xf32>
      %208 = arith.addf %207, %206 : vector<128x128xf32>
      %209 = arith.mulf %203, %208 : vector<128x128xf32>
      %210 = arith.addf %150, %209 : vector<128x128xf32>
      %c5_i32_127 = arith.constant 5 : i32
      %211 = arith.muli %arg14, %c5_i32_127 : i32
      %c3_i32 = arith.constant 3 : i32
      %212 = arith.addi %211, %c3_i32 : i32
      %cst_128 = arith.constant dense<0.000000e+00> : vector<128xf32>
      %213 = vector.multi_reduction <add>, %210, %cst_128 [1] : vector<128x128xf32> to vector<128xf32>
      %214 = vector.shape_cast %213 : vector<128xf32> to vector<128x1xf32>
      %cst_129 = arith.constant 7.812500e-03 : f32
      %215 = vector.broadcast %cst_129 : f32 to vector<128x1xf32>
      %216 = arith.mulf %214, %215 : vector<128x1xf32>
      %217 = arith.mulf %210, %210 : vector<128x128xf32>
      %cst_130 = arith.constant dense<0.000000e+00> : vector<128xf32>
      %218 = vector.multi_reduction <add>, %217, %cst_130 [1] : vector<128x128xf32> to vector<128xf32>
      %219 = vector.shape_cast %218 : vector<128xf32> to vector<128x1xf32>
      %cst_131 = arith.constant 7.812500e-03 : f32
      %220 = vector.broadcast %cst_131 : f32 to vector<128x1xf32>
      %221 = arith.mulf %219, %220 : vector<128x1xf32>
      %222 = arith.mulf %216, %216 : vector<128x1xf32>
      %223 = arith.subf %221, %222 : vector<128x1xf32>
      %224 = vector.broadcast %216 : vector<128x1xf32> to vector<128x128xf32>
      %225 = arith.subf %210, %224 : vector<128x128xf32>
      %cst_132 = arith.constant 9.99999974E-6 : f32
      %226 = vector.broadcast %cst_132 : f32 to vector<128x1xf32>
      %227 = arith.addf %223, %226 : vector<128x1xf32>
      %228 = math.rsqrt %227 : vector<128x1xf32>
      %229 = vector.broadcast %228 : vector<128x1xf32> to vector<128x128xf32>
      %230 = arith.mulf %225, %229 : vector<128x128xf32>
      %231 = arith.index_cast %212 : i32 to index
      %c0_133 = arith.constant 0 : index
      %c0_134 = arith.constant 0 : index
      %232 = vector.load %arg4[%231, %c0_133, %c0_134] : memref<10x1x128xf32, #tpu.memory_space<vmem>>, vector<1x1x128xf32>
      %233 = vector.shape_cast %232 : vector<1x1x128xf32> to vector<1x128xf32>
      %234 = vector.broadcast %233 : vector<1x128xf32> to vector<128x128xf32>
      %235 = arith.mulf %230, %234 : vector<128x128xf32>
      %236 = arith.index_cast %212 : i32 to index
      %c0_135 = arith.constant 0 : index
      %c0_136 = arith.constant 0 : index
      %237 = vector.load %arg5[%236, %c0_135, %c0_136] : memref<10x1x128xf32, #tpu.memory_space<vmem>>, vector<1x1x128xf32>
      %238 = vector.shape_cast %237 : vector<1x1x128xf32> to vector<1x128xf32>
      %239 = vector.broadcast %238 : vector<1x128xf32> to vector<128x128xf32>
      %240 = arith.addf %235, %239 : vector<128x128xf32>
      %241 = arith.truncf %240 : vector<128x128xf32> to vector<128x128xbf16>
      %c256_137 = arith.constant 256 : index
      %c0_138 = arith.constant 0 : index
      %242 = vector.load %arg13[%c256_137, %c0_138] : memref<640x128xbf16, #tpu.memory_space<vmem>>, vector<128x128xbf16>
      tpu.vector_store %arg13[%c256_137, %c0_138], %241 {strides = array<i32>} : memref<640x128xbf16, #tpu.memory_space<vmem>>, vector<128x128xbf16>,
      %c192 = arith.constant 192 : index
      %c0_139 = arith.constant 0 : index
      %243 = vector.load %arg13[%c192, %c0_139] : memref<640x128xbf16, #tpu.memory_space<vmem>>, vector<128x128xbf16>
      %c208 = arith.constant 208 : index
      %c0_140 = arith.constant 0 : index
      %244 = vector.load %arg13[%c208, %c0_140] : memref<640x128xbf16, #tpu.memory_space<vmem>>, vector<128x128xbf16>
      %c224 = arith.constant 224 : index
      %c0_141 = arith.constant 0 : index
      %245 = vector.load %arg13[%c224, %c0_141] : memref<640x128xbf16, #tpu.memory_space<vmem>>, vector<128x128xbf16>
      %c240_142 = arith.constant 240 : index
      %c0_143 = arith.constant 0 : index
      %246 = vector.load %arg13[%c240_142, %c0_143] : memref<640x128xbf16, #tpu.memory_space<vmem>>, vector<128x128xbf16>
      %c256_144 = arith.constant 256 : index
      %c0_145 = arith.constant 0 : index
      %247 = vector.load %arg13[%c256_144, %c0_145] : memref<640x128xbf16, #tpu.memory_space<vmem>>, vector<128x128xbf16>
      %c272_146 = arith.constant 272 : index
      %c0_147 = arith.constant 0 : index
      %248 = vector.load %arg13[%c272_146, %c0_147] : memref<640x128xbf16, #tpu.memory_space<vmem>>, vector<128x128xbf16>
      %c288 = arith.constant 288 : index
      %c0_148 = arith.constant 0 : index
      %249 = vector.load %arg13[%c288, %c0_148] : memref<640x128xbf16, #tpu.memory_space<vmem>>, vector<128x128xbf16>
      %c304 = arith.constant 304 : index
      %c0_149 = arith.constant 0 : index
      %250 = vector.load %arg13[%c304, %c0_149] : memref<640x128xbf16, #tpu.memory_space<vmem>>, vector<128x128xbf16>
      %c320 = arith.constant 320 : index
      %c0_150 = arith.constant 0 : index
      %251 = vector.load %arg13[%c320, %c0_150] : memref<640x128xbf16, #tpu.memory_space<vmem>>, vector<128x128xbf16>
      %252 = tpu.concatenate %243, %244, %245, %246, %247, %248, %249, %250, %251 in 1 : vector<128x128xbf16>, vector<128x128xbf16>, vector<128x128xbf16>, vector<128x128xbf16>, vector<128x128xbf16>, vector<128x128xbf16>, vector<128x128xbf16>, vector<128x128xbf16>, vector<128x128xbf16> -> vector<128x1152xbf16>
      %253 = arith.index_cast %212 : i32 to index
      %c0_151 = arith.constant 0 : index
      %c0_152 = arith.constant 0 : index
      %254 = vector.load %arg6[%253, %c0_151, %c0_152] : memref<10x1152x128xbf16, #tpu.memory_space<vmem>>, vector<1x1152x128xbf16>
      %255 = vector.shape_cast %254 : vector<1x1152x128xbf16> to vector<1152x128xbf16>
      %cst_153 = arith.constant dense<0.000000e+00> : vector<128x128xf32>
      %256 = tpu.matmul %252, %255, %cst_153 {dimension_numbers = #tpu.dot_dimension_numbers<[1], [0], [0], [1], [0, 0, 1, 1], [], []>} : vector<128x1152xbf16>, vector<1152x128xbf16>, vector<128x128xf32> -> vector<128x128xf32>
      %257 = arith.index_cast %212 : i32 to index
      %c0_154 = arith.constant 0 : index
      %c0_155 = arith.constant 0 : index
      %258 = vector.load %arg7[%257, %c0_154, %c0_155] : memref<10x1x128xf32, #tpu.memory_space<vmem>>, vector<1x1x128xf32>
      %259 = vector.shape_cast %258 : vector<1x1x128xf32> to vector<1x128xf32>
      %260 = vector.broadcast %259 : vector<1x128xf32> to vector<128x128xf32>
      %261 = arith.addf %256, %260 : vector<128x128xf32>
      %cst_156 = arith.constant 5.000000e-01 : f32
      %262 = vector.broadcast %cst_156 : f32 to vector<128x128xf32>
      %263 = arith.mulf %262, %261 : vector<128x128xf32>
      %cst_157 = arith.constant 0.707106769 : f32
      %264 = vector.broadcast %cst_157 : f32 to vector<128x128xf32>
      %265 = arith.mulf %261, %264 : vector<128x128xf32>
      %266 = math.erf %265 : vector<128x128xf32>
      %cst_158 = arith.constant 1.000000e+00 : f32
      %267 = vector.broadcast %cst_158 : f32 to vector<128x128xf32>
      %268 = arith.addf %267, %266 : vector<128x128xf32>
      %269 = arith.mulf %263, %268 : vector<128x128xf32>
      %270 = arith.addf %210, %269 : vector<128x128xf32>
      %c5_i32_159 = arith.constant 5 : i32
      %271 = arith.muli %arg14, %c5_i32_159 : i32
      %c4_i32 = arith.constant 4 : i32
      %272 = arith.addi %271, %c4_i32 : i32
      %cst_160 = arith.constant dense<0.000000e+00> : vector<128xf32>
      %273 = vector.multi_reduction <add>, %270, %cst_160 [1] : vector<128x128xf32> to vector<128xf32>
      %274 = vector.shape_cast %273 : vector<128xf32> to vector<128x1xf32>
      %cst_161 = arith.constant 7.812500e-03 : f32
      %275 = vector.broadcast %cst_161 : f32 to vector<128x1xf32>
      %276 = arith.mulf %274, %275 : vector<128x1xf32>
      %277 = arith.mulf %270, %270 : vector<128x128xf32>
      %cst_162 = arith.constant dense<0.000000e+00> : vector<128xf32>
      %278 = vector.multi_reduction <add>, %277, %cst_162 [1] : vector<128x128xf32> to vector<128xf32>
      %279 = vector.shape_cast %278 : vector<128xf32> to vector<128x1xf32>
      %cst_163 = arith.constant 7.812500e-03 : f32
      %280 = vector.broadcast %cst_163 : f32 to vector<128x1xf32>
      %281 = arith.mulf %279, %280 : vector<128x1xf32>
      %282 = arith.mulf %276, %276 : vector<128x1xf32>
      %283 = arith.subf %281, %282 : vector<128x1xf32>
      %284 = vector.broadcast %276 : vector<128x1xf32> to vector<128x128xf32>
      %285 = arith.subf %270, %284 : vector<128x128xf32>
      %cst_164 = arith.constant 9.99999974E-6 : f32
      %286 = vector.broadcast %cst_164 : f32 to vector<128x1xf32>
      %287 = arith.addf %283, %286 : vector<128x1xf32>
      %288 = math.rsqrt %287 : vector<128x1xf32>
      %289 = vector.broadcast %288 : vector<128x1xf32> to vector<128x128xf32>
      %290 = arith.mulf %285, %289 : vector<128x128xf32>
      %291 = arith.index_cast %272 : i32 to index
      %c0_165 = arith.constant 0 : index
      %c0_166 = arith.constant 0 : index
      %292 = vector.load %arg4[%291, %c0_165, %c0_166] : memref<10x1x128xf32, #tpu.memory_space<vmem>>, vector<1x1x128xf32>
      %293 = vector.shape_cast %292 : vector<1x1x128xf32> to vector<1x128xf32>
      %294 = vector.broadcast %293 : vector<1x128xf32> to vector<128x128xf32>
      %295 = arith.mulf %290, %294 : vector<128x128xf32>
      %296 = arith.index_cast %272 : i32 to index
      %c0_167 = arith.constant 0 : index
      %c0_168 = arith.constant 0 : index
      %297 = vector.load %arg5[%296, %c0_167, %c0_168] : memref<10x1x128xf32, #tpu.memory_space<vmem>>, vector<1x1x128xf32>
      %298 = vector.shape_cast %297 : vector<1x1x128xf32> to vector<1x128xf32>
      %299 = vector.broadcast %298 : vector<1x128xf32> to vector<128x128xf32>
      %300 = arith.addf %295, %299 : vector<128x128xf32>
      %301 = arith.truncf %300 : vector<128x128xf32> to vector<128x128xbf16>
      %c256_169 = arith.constant 256 : index
      %c0_170 = arith.constant 0 : index
      %302 = vector.load %arg13[%c256_169, %c0_170] : memref<640x128xbf16, #tpu.memory_space<vmem>>, vector<128x128xbf16>
      tpu.vector_store %arg13[%c256_169, %c0_170], %301 {strides = array<i32>} : memref<640x128xbf16, #tpu.memory_space<vmem>>, vector<128x128xbf16>,
      %c0_171 = arith.constant 0 : index
      %c0_172 = arith.constant 0 : index
      %303 = vector.load %arg13[%c0_171, %c0_172] : memref<640x128xbf16, #tpu.memory_space<vmem>>, vector<128x128xbf16>
      %c64 = arith.constant 64 : index
      %c0_173 = arith.constant 0 : index
      %304 = vector.load %arg13[%c64, %c0_173] : memref<640x128xbf16, #tpu.memory_space<vmem>>, vector<128x128xbf16>
      %c128 = arith.constant 128 : index
      %c0_174 = arith.constant 0 : index
      %305 = vector.load %arg13[%c128, %c0_174] : memref<640x128xbf16, #tpu.memory_space<vmem>>, vector<128x128xbf16>
      %c192_175 = arith.constant 192 : index
      %c0_176 = arith.constant 0 : index
      %306 = vector.load %arg13[%c192_175, %c0_176] : memref<640x128xbf16, #tpu.memory_space<vmem>>, vector<128x128xbf16>
      %c256_177 = arith.constant 256 : index
      %c0_178 = arith.constant 0 : index
      %307 = vector.load %arg13[%c256_177, %c0_178] : memref<640x128xbf16, #tpu.memory_space<vmem>>, vector<128x128xbf16>
      %c320_179 = arith.constant 320 : index
      %c0_180 = arith.constant 0 : index
      %308 = vector.load %arg13[%c320_179, %c0_180] : memref<640x128xbf16, #tpu.memory_space<vmem>>, vector<128x128xbf16>
      %c384_181 = arith.constant 384 : index
      %c0_182 = arith.constant 0 : index
      %309 = vector.load %arg13[%c384_181, %c0_182] : memref<640x128xbf16, #tpu.memory_space<vmem>>, vector<128x128xbf16>
      %c448 = arith.constant 448 : index
      %c0_183 = arith.constant 0 : index
      %310 = vector.load %arg13[%c448, %c0_183] : memref<640x128xbf16, #tpu.memory_space<vmem>>, vector<128x128xbf16>
      %c512 = arith.constant 512 : index
      %c0_184 = arith.constant 0 : index
      %311 = vector.load %arg13[%c512, %c0_184] : memref<640x128xbf16, #tpu.memory_space<vmem>>, vector<128x128xbf16>
      %312 = tpu.concatenate %303, %304, %305, %306, %307, %308, %309, %310, %311 in 1 : vector<128x128xbf16>, vector<128x128xbf16>, vector<128x128xbf16>, vector<128x128xbf16>, vector<128x128xbf16>, vector<128x128xbf16>, vector<128x128xbf16>, vector<128x128xbf16>, vector<128x128xbf16> -> vector<128x1152xbf16>
      %313 = arith.index_cast %272 : i32 to index
      %c0_185 = arith.constant 0 : index
      %c0_186 = arith.constant 0 : index
      %314 = vector.load %arg6[%313, %c0_185, %c0_186] : memref<10x1152x128xbf16, #tpu.memory_space<vmem>>, vector<1x1152x128xbf16>
      %315 = vector.shape_cast %314 : vector<1x1152x128xbf16> to vector<1152x128xbf16>
      %cst_187 = arith.constant dense<0.000000e+00> : vector<128x128xf32>
      %316 = tpu.matmul %312, %315, %cst_187 {dimension_numbers = #tpu.dot_dimension_numbers<[1], [0], [0], [1], [0, 0, 1, 1], [], []>} : vector<128x1152xbf16>, vector<1152x128xbf16>, vector<128x128xf32> -> vector<128x128xf32>
      %317 = arith.index_cast %272 : i32 to index
      %c0_188 = arith.constant 0 : index
      %c0_189 = arith.constant 0 : index
      %318 = vector.load %arg7[%317, %c0_188, %c0_189] : memref<10x1x128xf32, #tpu.memory_space<vmem>>, vector<1x1x128xf32>
      %319 = vector.shape_cast %318 : vector<1x1x128xf32> to vector<1x128xf32>
      %320 = vector.broadcast %319 : vector<1x128xf32> to vector<128x128xf32>
      %321 = arith.addf %316, %320 : vector<128x128xf32>
      %cst_190 = arith.constant 5.000000e-01 : f32
      %322 = vector.broadcast %cst_190 : f32 to vector<128x128xf32>
      %323 = arith.mulf %322, %321 : vector<128x128xf32>
      %cst_191 = arith.constant 0.707106769 : f32
      %324 = vector.broadcast %cst_191 : f32 to vector<128x128xf32>
      %325 = arith.mulf %321, %324 : vector<128x128xf32>
      %326 = math.erf %325 : vector<128x128xf32>
      %cst_192 = arith.constant 1.000000e+00 : f32
      %327 = vector.broadcast %cst_192 : f32 to vector<128x128xf32>
      %328 = arith.addf %327, %326 : vector<128x128xf32>
      %329 = arith.mulf %323, %328 : vector<128x128xf32>
      %330 = arith.addf %270, %329 : vector<128x128xf32>
      scf.yield %330 : vector<128x128xf32>
    }
    %c2_i32_11 = arith.constant 2 : i32
    %14 = arith.truncf %13 : vector<128x128xf32> to vector<128x128xbf16>
    %c0_12 = arith.constant 0 : index
    %c0_13 = arith.constant 0 : index
    %15 = vector.load %arg8[%c0_12, %c0_13] : memref<128x128xbf16, #tpu.memory_space<vmem>>, vector<128x128xbf16>
    %cst_14 = arith.constant dense<0.000000e+00> : vector<128x128xf32>
    %16 = tpu.matmul %14, %15, %cst_14 {dimension_numbers = #tpu.dot_dimension_numbers<[1], [0], [0], [1], [0, 0, 1, 1], [], []>} : vector<128x128xbf16>, vector<128x128xbf16>, vector<128x128xf32> -> vector<128x128xf32>
    %c0_15 = arith.constant 0 : index
    %c0_16 = arith.constant 0 : index
    %17 = vector.load %arg9[%c0_15, %c0_16] : memref<1x128xf32, #tpu.memory_space<vmem>>, vector<1x128xf32>
    %18 = vector.broadcast %17 : vector<1x128xf32> to vector<128x128xf32>
    %19 = arith.addf %16, %18 : vector<128x128xf32>
    %cst_17 = arith.constant 0.000000e+00 : f32
    %20 = vector.broadcast %cst_17 : f32 to vector<128x128xf32>
    %21 = arith.maximumf %19, %20 : vector<128x128xf32>
    %22 = arith.truncf %21 : vector<128x128xf32> to vector<128x128xbf16>
    %c0_18 = arith.constant 0 : index
    %c0_19 = arith.constant 0 : index
    %23 = vector.load %arg10[%c0_18, %c0_19] : memref<128x128xbf16, #tpu.memory_space<vmem>>, vector<128x128xbf16>
    %cst_20 = arith.constant dense<0.000000e+00> : vector<128x128xf32>
    %24 = tpu.matmul %22, %23, %cst_20 {dimension_numbers = #tpu.dot_dimension_numbers<[1], [0], [0], [1], [0, 0, 1, 1], [], []>} : vector<128x128xbf16>, vector<128x128xbf16>, vector<128x128xf32> -> vector<128x128xf32>
    %c0_21 = arith.constant 0 : index
    %c0_22 = arith.constant 0 : index
    %25 = vector.load %arg11[%c0_21, %c0_22] : memref<1x128xf32, #tpu.memory_space<vmem>>, vector<1x128xf32>
    %26 = vector.broadcast %25 : vector<1x128xf32> to vector<128x128xf32>
    %27 = arith.addf %24, %26 : vector<128x128xf32>
    %c0_23 = arith.constant 0 : index
    %c0_24 = arith.constant 0 : index
    %c0_25 = arith.constant 0 : index
    %28 = vector.load %arg12[%c0_23, %c0_24, %c0_25] : memref<1x128x128xf32, #tpu.memory_space<vmem>>, vector<1x128x128xf32>
    %29 = vector.shape_cast %28 : vector<1x128x128xf32> to vector<128x128xf32>
    %30 = vector.shape_cast %27 : vector<128x128xf32> to vector<1x128x128xf32>
    tpu.vector_store %arg12[%c0_23, %c0_24, %c0_25], %30 {strides = array<i32>} : memref<1x128x128xf32, #tpu.memory_space<vmem>>, vector<1x128x128xf32>,
    return
  }
  func.func @transform_0(%arg0: i32) -> (i32, i32, i32) {
    %c0_i32 = arith.constant 0 : i32
    %c0_i32_0 = arith.constant 0 : i32
    %c0_i32_1 = arith.constant 0 : i32
    return %arg0, %c0_i32, %c0_i32_0 : i32, i32, i32
  }
  func.func @transform_1(%arg0: i32) -> (i32, i32) {
    %c0_i32 = arith.constant 0 : i32
    %c0_i32_0 = arith.constant 0 : i32
    %c0_i32_1 = arith.constant 0 : i32
    return %c0_i32, %c0_i32_0 : i32, i32
  }
  func.func @transform_2(%arg0: i32) -> (i32, i32) {
    %c0_i32 = arith.constant 0 : i32
    %c0_i32_0 = arith.constant 0 : i32
    %c0_i32_1 = arith.constant 0 : i32
    return %c0_i32, %c0_i32_0 : i32, i32
  }
  func.func @transform_3(%arg0: i32) -> (i32, i32, i32) {
    %c0_i32 = arith.constant 0 : i32
    %c0_i32_0 = arith.constant 0 : i32
    %c0_i32_1 = arith.constant 0 : i32
    %c0_i32_2 = arith.constant 0 : i32
    return %c0_i32, %c0_i32_0, %c0_i32_1 : i32, i32, i32
  }
  func.func @transform_4(%arg0: i32) -> (i32, i32, i32) {
    %c0_i32 = arith.constant 0 : i32
    %c0_i32_0 = arith.constant 0 : i32
    %c0_i32_1 = arith.constant 0 : i32
    %c0_i32_2 = arith.constant 0 : i32
    return %c0_i32, %c0_i32_0, %c0_i32_1 : i32, i32, i32
  }
  func.func @transform_5(%arg0: i32) -> (i32, i32, i32) {
    %c0_i32 = arith.constant 0 : i32
    %c0_i32_0 = arith.constant 0 : i32
    %c0_i32_1 = arith.constant 0 : i32
    %c0_i32_2 = arith.constant 0 : i32
    return %c0_i32, %c0_i32_0, %c0_i32_1 : i32, i32, i32
  }
  func.func @transform_6(%arg0: i32) -> (i32, i32, i32) {
    %c0_i32 = arith.constant 0 : i32
    %c0_i32_0 = arith.constant 0 : i32
    %c0_i32_1 = arith.constant 0 : i32
    %c0_i32_2 = arith.constant 0 : i32
    return %c0_i32, %c0_i32_0, %c0_i32_1 : i32, i32, i32
  }
  func.func @transform_7(%arg0: i32) -> (i32, i32) {
    %c0_i32 = arith.constant 0 : i32
    %c0_i32_0 = arith.constant 0 : i32
    %c0_i32_1 = arith.constant 0 : i32
    return %c0_i32, %c0_i32_0 : i32, i32
  }
  func.func @transform_8(%arg0: i32) -> (i32, i32) {
    %c0_i32 = arith.constant 0 : i32
    %c0_i32_0 = arith.constant 0 : i32
    %c0_i32_1 = arith.constant 0 : i32
    return %c0_i32, %c0_i32_0 : i32, i32
  }
  func.func @transform_9(%arg0: i32) -> (i32, i32) {
    %c0_i32 = arith.constant 0 : i32
    %c0_i32_0 = arith.constant 0 : i32
    %c0_i32_1 = arith.constant 0 : i32
    return %c0_i32, %c0_i32_0 : i32, i32
  }
  func.func @transform_10(%arg0: i32) -> (i32, i32) {
    %c0_i32 = arith.constant 0 : i32
    %c0_i32_0 = arith.constant 0 : i32
    %c0_i32_1 = arith.constant 0 : i32
    return %c0_i32, %c0_i32_0 : i32, i32
  }
  func.func @transform_11(%arg0: i32) -> (i32, i32, i32) {
    %c0_i32 = arith.constant 0 : i32
    %c0_i32_0 = arith.constant 0 : i32
    %c0_i32_1 = arith.constant 0 : i32
    return %arg0, %c0_i32, %c0_i32_0 : i32, i32, i32
  }
}

</mosaic_0001>

<llo_original>
// kernel: tpu_custom_call.1
$region0: #{tpu_custom_call.1}
  #allocation0 [shape = 'u32[]', space=smem, size = 0x4, offset = 0x4, fixed_abs, tag = 'smem constant byte address 0x4 - core index']
  #allocation1 [shape = 'u32[144,128]{1,0:T(1,128)}', space=vmem, size = 0x12000, scoped, tag = 'internal scratch']
  #allocation2 [shape = 'bf16[640,128]{1,0:T(16,128)(2,1)}', space=vmem, size = 0x28000, scoped, tag = 'scratch operand']
  %s0 = inlined_call_operand.hbm [shape: bf16[2,128,128], index: 0, kind: input, shape index: {}]
  %s1 = inlined_call_operand.hbm [shape: bf16[128,128], index: 1, kind: input, shape index: {}]
  %s2 = inlined_call_operand.hbm [shape: f32[1,128], index: 2, kind: input, shape index: {}]
  %s3 = inlined_call_operand.hbm [shape: f32[10,1,128], index: 3, kind: input, shape index: {}]
  %s4 = inlined_call_operand.hbm [shape: f32[10,1,128], index: 4, kind: input, shape index: {}]
  %s5 = inlined_call_operand.hbm [shape: bf16[10,1152,128], index: 5, kind: input, shape index: {}]
  %s6 = inlined_call_operand.hbm [shape: f32[10,1,128], index: 6, kind: input, shape index: {}]
  %s7 = inlined_call_operand.hbm [shape: bf16[128,128], index: 7, kind: input, shape index: {}]
  %s8 = inlined_call_operand.hbm [shape: f32[1,128], index: 8, kind: input, shape index: {}]
  %s9 = inlined_call_operand.hbm [shape: bf16[128,128], index: 9, kind: input, shape index: {}]
  %s10 = inlined_call_operand.hbm [shape: f32[1,128], index: 10, kind: input, shape index: {}]
  %s11 = inlined_call_operand.hbm [shape: f32[2,128,128], index: 11, kind: output, shape index: {}]
  %s12 = sld [smem:[#allocation0]]
  $region128: #{tpu_custom_call.1} parent=0
    _
  %s14 = ssub.s32 1, %s12
  %s15 = scalar_select 0, %s14, %s12
  $region1: #{tpu_custom_call.1} parent=0
    #allocation3 [shape = 'u8[65536]{0}', space=vmem, size = 0x10000, scoped, tag = 'input window, operand 0']
    #allocation4 [shape = 's32[2]{0}', space=sflag, size = 0x8, scoped, tag = 'scoped memory for tpu_custom_call.1']
    #allocation5 [shape = 's32[2]{0}', space=sflag, size = 0x8, scoped, tag = 'scoped memory for tpu_custom_call.1']
    #allocation6 [shape = 'u8[32768]{0}', space=vmem, size = 0x8000, scoped, tag = 'input window, operand 1, single buffered']
    #allocation7 [shape = 's32[1]{0}', space=sflag, size = 0x4, scoped, tag = 'scoped memory for tpu_custom_call.1']
    #allocation8 [shape = 'u8[512]{0}', space=vmem, size = 0x400, scoped, tag = 'input window, operand 2, single buffered']
    #allocation9 [shape = 'u8[5120]{0}', space=vmem, size = 0x1400, scoped, tag = 'input window, operand 3, single buffered']
    #allocation10 [shape = 's32[1]{0}', space=sflag, size = 0x4, scoped, tag = 'scoped memory for tpu_custom_call.1']
    #allocation11 [shape = 'u8[5120]{0}', space=vmem, size = 0x1400, scoped, tag = 'input window, operand 4, single buffered']
    #allocation12 [shape = 'u8[2949120]{0}', space=vmem, size = 0x2d0000, scoped, tag = 'input window, operand 5, single buffered']
    #allocation13 [shape = 's32[1]{0}', space=sflag, size = 0x4, scoped, tag = 'scoped memory for tpu_custom_call.1']
    #allocation14 [shape = 'u8[5120]{0}', space=vmem, size = 0x1400, scoped, tag = 'input window, operand 6, single buffered']
    #allocation15 [shape = 'u8[32768]{0}', space=vmem, size = 0x8000, scoped, tag = 'input window, operand 7, single buffered']
    #allocation16 [shape = 's32[1]{0}', space=sflag, size = 0x4, scoped, tag = 'scoped memory for tpu_custom_call.1']
    #allocation17 [shape = 'u8[512]{0}', space=vmem, size = 0x400, scoped, tag = 'input window, operand 8, single buffered']
    #allocation18 [shape = 'u8[32768]{0}', space=vmem, size = 0x8000, scoped, tag = 'input window, operand 9, single buffered']
    #allocation19 [shape = 's32[1]{0}', space=sflag, size = 0x4, scoped, tag = 'scoped memory for tpu_custom_call.1']
    #allocation20 [shape = 'u8[512]{0}', space=vmem, size = 0x400, scoped, tag = 'input window, operand 10, single buffered']
    #allocation21 [shape = 'u8[131072]{0}', space=vmem, size = 0x20000, scoped, tag = 'output window, operand 0']
    %16 = vsyncpa [#allocation4], 0
    %s17 = scalar_lea.sflag [#allocation4], 1
    %18 = vsyncpa %s17, 0
    %19 = vsyncpa [#allocation7], 0
    %20 = vsyncpa [#allocation10], 0
    %21 = vsyncpa [#allocation13], 0
    %22 = vsyncpa [#allocation16], 0
    %23 = vsyncpa [#allocation19], 0
    %24 = vsyncpa [#allocation5], 0
    %s25 = scalar_lea.sflag [#allocation5], 1
    %26 = vsyncpa %s25, 0
    loop: start=0, step=1, limit=4
    $region2: #{tpu_custom_call.1} parent=1 // loop_pre_header
      _
    $region3: #{tpu_custom_call.1} parent=1 // loop_header
      %s28 = sphi 0, %s32
      %p29 = scmp.ge.s32.totalorder %s28, 4
      %s38 = sphi 0, %s40
      %s41 = sphi 0, %s38
      %s42 = sphi 0, %s41
      %s58 = sphi 0, %s42
      %s62 = sphi 0, %s62
      %s64 = sphi 0, %s62
      %s65 = sphi 0, %s64
      %s79 = sphi 0, %s65
      %s83 = sphi 0, %s83
      %s85 = sphi 0, %s83
      %s86 = sphi 0, %s85
      %s100 = sphi 0, %s86
      %s104 = sphi 0, %s104
      %s106 = sphi 0, %s104
      %s107 = sphi 0, %s106
      %s121 = sphi 0, %s107
      %s125 = sphi 0, %s125
      %s127 = sphi 0, %s125
      %s128 = sphi 0, %s127
      %s142 = sphi 0, %s128
      %s146 = sphi 0, %s146
      %s148 = sphi 0, %s146
      %s149 = sphi 0, %s148
      %s163 = sphi 0, %s149
      %s167 = sphi 0, %s167
      %s169 = sphi 0, %s167
      %s170 = sphi 0, %s169
      %s184 = sphi 0, %s170
      %s188 = sphi 0, %s188
      %s190 = sphi 0, %s188
      %s191 = sphi 0, %s190
      %s205 = sphi 0, %s191
      %s209 = sphi 0, %s209
      %s211 = sphi 0, %s209
      %s212 = sphi 0, %s211
      %s226 = sphi 0, %s212
      %s230 = sphi 0, %s230
      %s232 = sphi 0, %s230
      %s233 = sphi 0, %s232
      %s247 = sphi 0, %s233
      %s251 = sphi 0, %s251
      %s253 = sphi 0, %s251
      %s254 = sphi 0, %s253
      %s268 = sphi 0, %s254
      %s274 = sphi 0, %s276
      %s277 = sphi 0, %s274
      %s278 = sphi 0, %s277
      %s294 = sphi 0, %s278
    $region4: #{tpu_custom_call.1} parent=1 // loop_header_branch
      %31 = sbr.rel (%p29) target = $region8
    $region5: #{tpu_custom_call.1} parent=1 // loop_body
      %s33 = ssub.s32 %s28, 1
      %s34 = ssub.s32 %s28, 2
      %s35 = sadd.s32 %s28, 1
      %s36 = ssub.s32 %s28, %s35
      %p37 = scmp.eq.s32.totalorder %s36, 0
      %s39 = sadd.s32 %s38, 1
      %s40 = scalar_select %p37, %s38, %s39
      %p43 = pneg %p37
      %p44 = scmp.eq.s32.totalorder %s28, 1
      %p45 = por %p43, %p44
      %p46 = scmp.ne.s32.totalorder %s38, %s41
      %p47 = scmp.eq.s32.totalorder %s28, 0
      %p48 = por %p46, %p47
      %p49 = scmp.ne.s32.totalorder %s38, %s41
      %p50 = scmp.eq.s32.totalorder %s33, 1
      %p51 = por %p49, %p50
      %p52 = scmp.ne.s32.totalorder %s41, %s42
      %p53 = scmp.eq.s32.totalorder %s33, 0
      %p54 = por %p52, %p53
      %p55 = scmp.ne.s32.totalorder %s41, %s42
      %p56 = scmp.eq.s32.totalorder %s34, 1
      %p57 = por %p55, %p56
      %p59 = scmp.ne.s32.totalorder %s42, %s58
      %p60 = scmp.eq.s32.totalorder %s34, 0
      %p61 = por %p59, %p60
      %s63 = sadd.s32 %s62, 1
      %p66 = scmp.eq.s32.totalorder %s28, 1
      %p67 = scmp.ne.s32.totalorder %s62, %s64
      %p68 = scmp.eq.s32.totalorder %s28, 0
      %p69 = por %p67, %p68
      %p70 = scmp.ne.s32.totalorder %s62, %s64
      %p71 = scmp.eq.s32.totalorder %s33, 1
      %p72 = por %p70, %p71
      %p73 = scmp.ne.s32.totalorder %s64, %s65
      %p74 = scmp.eq.s32.totalorder %s33, 0
      %p75 = por %p73, %p74
      %p76 = scmp.ne.s32.totalorder %s64, %s65
      %p77 = scmp.eq.s32.totalorder %s34, 1
      %p78 = por %p76, %p77
      %p80 = scmp.ne.s32.totalorder %s65, %s79
      %p81 = scmp.eq.s32.totalorder %s34, 0
      %p82 = por %p80, %p81
      %s84 = sadd.s32 %s83, 1
      %p87 = scmp.eq.s32.totalorder %s28, 1
      %p88 = scmp.ne.s32.totalorder %s83, %s85
      %p89 = scmp.eq.s32.totalorder %s28, 0
      %p90 = por %p88, %p89
      %p91 = scmp.ne.s32.totalorder %s83, %s85
      %p92 = scmp.eq.s32.totalorder %s33, 1
      %p93 = por %p91, %p92
      %p94 = scmp.ne.s32.totalorder %s85, %s86
      %p95 = scmp.eq.s32.totalorder %s33, 0
      %p96 = por %p94, %p95
      %p97 = scmp.ne.s32.totalorder %s85, %s86
      %p98 = scmp.eq.s32.totalorder %s34, 1
      %p99 = por %p97, %p98
      %p101 = scmp.ne.s32.totalorder %s86, %s100
      %p102 = scmp.eq.s32.totalorder %s34, 0
      %p103 = por %p101, %p102
      %s105 = sadd.s32 %s104, 1
      %p108 = scmp.eq.s32.totalorder %s28, 1
      %p109 = scmp.ne.s32.totalorder %s104, %s106
      %p110 = scmp.eq.s32.totalorder %s28, 0
      %p111 = por %p109, %p110
      %p112 = scmp.ne.s32.totalorder %s104, %s106
      %p113 = scmp.eq.s32.totalorder %s33, 1
      %p114 = por %p112, %p113
      %p115 = scmp.ne.s32.totalorder %s106, %s107
      %p116 = scmp.eq.s32.totalorder %s33, 0
      %p117 = por %p115, %p116
      %p118 = scmp.ne.s32.totalorder %s106, %s107
      %p119 = scmp.eq.s32.totalorder %s34, 1
      %p120 = por %p118, %p119
      %p122 = scmp.ne.s32.totalorder %s107, %s121
      %p123 = scmp.eq.s32.totalorder %s34, 0
      %p124 = por %p122, %p123
      %s126 = sadd.s32 %s125, 1
      %p129 = scmp.eq.s32.totalorder %s28, 1
      %p130 = scmp.ne.s32.totalorder %s125, %s127
      %p131 = scmp.eq.s32.totalorder %s28, 0
      %p132 = por %p130, %p131
      %p133 = scmp.ne.s32.totalorder %s125, %s127
      %p134 = scmp.eq.s32.totalorder %s33, 1
      %p135 = por %p133, %p134
      %p136 = scmp.ne.s32.totalorder %s127, %s128
      %p137 = scmp.eq.s32.totalorder %s33, 0
      %p138 = por %p136, %p137
      %p139 = scmp.ne.s32.totalorder %s127, %s128
      %p140 = scmp.eq.s32.totalorder %s34, 1
      %p141 = por %p139, %p140
      %p143 = scmp.ne.s32.totalorder %s128, %s142
      %p144 = scmp.eq.s32.totalorder %s34, 0
      %p145 = por %p143, %p144
      %s147 = sadd.s32 %s146, 1
      %p150 = scmp.eq.s32.totalorder %s28, 1
      %p151 = scmp.ne.s32.totalorder %s146, %s148
      %p152 = scmp.eq.s32.totalorder %s28, 0
      %p153 = por %p151, %p152
      %p154 = scmp.ne.s32.totalorder %s146, %s148
      %p155 = scmp.eq.s32.totalorder %s33, 1
      %p156 = por %p154, %p155
      %p157 = scmp.ne.s32.totalorder %s148, %s149
      %p158 = scmp.eq.s32.totalorder %s33, 0
      %p159 = por %p157, %p158
      %p160 = scmp.ne.s32.totalorder %s148, %s149
      %p161 = scmp.eq.s32.totalorder %s34, 1
      %p162 = por %p160, %p161
      %p164 = scmp.ne.s32.totalorder %s149, %s163
      %p165 = scmp.eq.s32.totalorder %s34, 0
      %p166 = por %p164, %p165
      %s168 = sadd.s32 %s167, 1
      %p171 = scmp.eq.s32.totalorder %s28, 1
      %p172 = scmp.ne.s32.totalorder %s167, %s169
      %p173 = scmp.eq.s32.totalorder %s28, 0
      %p174 = por %p172, %p173
      %p175 = scmp.ne.s32.totalorder %s167, %s169
      %p176 = scmp.eq.s32.totalorder %s33, 1
      %p177 = por %p175, %p176
      %p178 = scmp.ne.s32.totalorder %s169, %s170
      %p179 = scmp.eq.s32.totalorder %s33, 0
      %p180 = por %p178, %p179
      %p181 = scmp.ne.s32.totalorder %s169, %s170
      %p182 = scmp.eq.s32.totalorder %s34, 1
      %p183 = por %p181, %p182
      %p185 = scmp.ne.s32.totalorder %s170, %s184
      %p186 = scmp.eq.s32.totalorder %s34, 0
      %p187 = por %p185, %p186
      %s189 = sadd.s32 %s188, 1
      %p192 = scmp.eq.s32.totalorder %s28, 1
      %p193 = scmp.ne.s32.totalorder %s188, %s190
      %p194 = scmp.eq.s32.totalorder %s28, 0
      %p195 = por %p193, %p194
      %p196 = scmp.ne.s32.totalorder %s188, %s190
      %p197 = scmp.eq.s32.totalorder %s33, 1
      %p198 = por %p196, %p197
      %p199 = scmp.ne.s32.totalorder %s190, %s191
      %p200 = scmp.eq.s32.totalorder %s33, 0
      %p201 = por %p199, %p200
      %p202 = scmp.ne.s32.totalorder %s190, %s191
      %p203 = scmp.eq.s32.totalorder %s34, 1
      %p204 = por %p202, %p203
      %p206 = scmp.ne.s32.totalorder %s191, %s205
      %p207 = scmp.eq.s32.totalorder %s34, 0
      %p208 = por %p206, %p207
      %s210 = sadd.s32 %s209, 1
      %p213 = scmp.eq.s32.totalorder %s28, 1
      %p214 = scmp.ne.s32.totalorder %s209, %s211
      %p215 = scmp.eq.s32.totalorder %s28, 0
      %p216 = por %p214, %p215
      %p217 = scmp.ne.s32.totalorder %s209, %s211
      %p218 = scmp.eq.s32.totalorder %s33, 1
      %p219 = por %p217, %p218
      %p220 = scmp.ne.s32.totalorder %s211, %s212
      %p221 = scmp.eq.s32.totalorder %s33, 0
      %p222 = por %p220, %p221
      %p223 = scmp.ne.s32.totalorder %s211, %s212
      %p224 = scmp.eq.s32.totalorder %s34, 1
      %p225 = por %p223, %p224
      %p227 = scmp.ne.s32.totalorder %s212, %s226
      %p228 = scmp.eq.s32.totalorder %s34, 0
      %p229 = por %p227, %p228
      %s231 = sadd.s32 %s230, 1
      %p234 = scmp.eq.s32.totalorder %s28, 1
      %p235 = scmp.ne.s32.totalorder %s230, %s232
      %p236 = scmp.eq.s32.totalorder %s28, 0
      %p237 = por %p235, %p236
      %p238 = scmp.ne.s32.totalorder %s230, %s232
      %p239 = scmp.eq.s32.totalorder %s33, 1
      %p240 = por %p238, %p239
      %p241 = scmp.ne.s32.totalorder %s232, %s233
      %p242 = scmp.eq.s32.totalorder %s33, 0
      %p243 = por %p241, %p242
      %p244 = scmp.ne.s32.totalorder %s232, %s233
      %p245 = scmp.eq.s32.totalorder %s34, 1
      %p246 = por %p244, %p245
      %p248 = scmp.ne.s32.totalorder %s233, %s247
      %p249 = scmp.eq.s32.totalorder %s34, 0
      %p250 = por %p248, %p249
      %s252 = sadd.s32 %s251, 1
      %p255 = scmp.eq.s32.totalorder %s28, 1
      %p256 = scmp.ne.s32.totalorder %s251, %s253
      %p257 = scmp.eq.s32.totalorder %s28, 0
      %p258 = por %p256, %p257
      %p259 = scmp.ne.s32.totalorder %s251, %s253
      %p260 = scmp.eq.s32.totalorder %s33, 1
      %p261 = por %p259, %p260
      %p262 = scmp.ne.s32.totalorder %s253, %s254
      %p263 = scmp.eq.s32.totalorder %s33, 0
      %p264 = por %p262, %p263
      %p265 = scmp.ne.s32.totalorder %s253, %s254
      %p266 = scmp.eq.s32.totalorder %s34, 1
      %p267 = por %p265, %p266
      %p269 = scmp.ne.s32.totalorder %s254, %s268
      %p270 = scmp.eq.s32.totalorder %s34, 0
      %p271 = por %p269, %p270
      %s272 = ssub.s32 %s28, %s35
      %p273 = scmp.eq.s32.totalorder %s272, 0
      %s275 = sadd.s32 %s274, 1
      %s276 = scalar_select %p273, %s274, %s275
      %p279 = pneg %p273
      %p280 = scmp.eq.s32.totalorder %s28, 1
      %p281 = por %p279, %p280
      %p282 = scmp.ne.s32.totalorder %s274, %s277
      %p283 = scmp.eq.s32.totalorder %s28, 0
      %p284 = por %p282, %p283
      %p285 = scmp.ne.s32.totalorder %s274, %s277
      %p286 = scmp.eq.s32.totalorder %s33, 1
      %p287 = por %p285, %p286
      %p288 = scmp.ne.s32.totalorder %s277, %s278
      %p289 = scmp.eq.s32.totalorder %s33, 0
      %p290 = por %p288, %p289
      %p291 = scmp.ne.s32.totalorder %s277, %s278
      %p292 = scmp.eq.s32.totalorder %s34, 1
      %p293 = por %p291, %p292
      %p295 = scmp.ne.s32.totalorder %s278, %s294
      %p296 = scmp.eq.s32.totalorder %s34, 0
      %p297 = por %p295, %p296
      %p298 = scmp.le.s32.totalorder 1, %s28
      %p299 = scmp.lt.s32.totalorder %s28, 3
      %p300 = pnand %p298, %p299
      %p301 = pneg %p300
      // Predicated region
      $region9: #{tpu_custom_call.1} parent=5 // pred_check
        _
      $region10: #{tpu_custom_call.1} parent=5 // pred_check_branch
        %303 = sbr.rel (%p300) target = $region12
      $region11: #{tpu_custom_call.1} parent=5 // pred_region
        %s304 = ssub.s32 %s28, 1
        // Predicated region
        $region13: #{tpu_custom_call.1} parent=11 // pred_check
          %p305 = pneg %p75
        $region14: #{tpu_custom_call.1} parent=11 // pred_check_branch
          %307 = sbr.rel (%p305) target = $region16
        $region15: #{tpu_custom_call.1} parent=11 // pred_region
          %s309 = ssub.s32 1024, 1024
          %310 = vsyncadd [#allocation7], %s309
          %s311 = sshll.u32 [#allocation6], 4
          %s312 = int_to_ptr.vmem [resolvable:$true] %s311
          %317 = dma.hbm_to_vmem [thread:$0]  %s1, 1024, %s312, [#allocation7], 64, 64, 4
        $region16: #{tpu_custom_call.1} parent=11 // pred_fallthru
          _
        // Predicated region
        $region17: #{tpu_custom_call.1} parent=11 // pred_check
          %p318 = pneg %p96
        $region18: #{tpu_custom_call.1} parent=11 // pred_check_branch
          %320 = sbr.rel (%p318) target = $region20
        $region19: #{tpu_custom_call.1} parent=11 // pred_region
          %s322 = ssub.s32 16, 16
          %323 = vsyncadd [#allocation7], %s322
          %s325 = sshll.u32 [#allocation8], 4
          %s326 = int_to_ptr.vmem [resolvable:$true] %s325
          %328 = dma.hbm_to_vmem [thread:$0]  %s2, 16, %s326, [#allocation7]
        $region20: #{tpu_custom_call.1} parent=11 // pred_fallthru
          _
        // Predicated region
        $region21: #{tpu_custom_call.1} parent=11 // pred_check
          %p329 = pneg %p117
        $region22: #{tpu_custom_call.1} parent=11 // pred_check_branch
          %331 = sbr.rel (%p329) target = $region24
        $region23: #{tpu_custom_call.1} parent=11 // pred_region
          %s333 = ssub.s32 160, 160
          %334 = vsyncadd [#allocation10], %s333
          %s335 = sshll.u32 [#allocation9], 4
          %s336 = int_to_ptr.vmem [resolvable:$true] %s335
          %341 = dma.hbm_to_vmem [thread:$0]  %s3, 160, %s336, [#allocation10], 16, 16, 1
        $region24: #{tpu_custom_call.1} parent=11 // pred_fallthru
          _
        // Predicated region
        $region25: #{tpu_custom_call.1} parent=11 // pred_check
          %p342 = pneg %p138
        $region26: #{tpu_custom_call.1} parent=11 // pred_check_branch
          %344 = sbr.rel (%p342) target = $region28
        $region27: #{tpu_custom_call.1} parent=11 // pred_region
          %s346 = ssub.s32 160, 160
          %347 = vsyncadd [#allocation10], %s346
          %s348 = sshll.u32 [#allocation11], 4
          %s349 = int_to_ptr.vmem [resolvable:$true] %s348
          %354 = dma.hbm_to_vmem [thread:$0]  %s4, 160, %s349, [#allocation10], 16, 16, 1
        $region28: #{tpu_custom_call.1} parent=11 // pred_fallthru
          _
        // Predicated region
        $region29: #{tpu_custom_call.1} parent=11 // pred_check
          %p355 = pneg %p159
        $region30: #{tpu_custom_call.1} parent=11 // pred_check_branch
          %357 = sbr.rel (%p355) target = $region32
        $region31: #{tpu_custom_call.1} parent=11 // pred_region
          %s359 = ssub.s32 92160, 92160
          %360 = vsyncadd [#allocation13], %s359
          %s361 = sshll.u32 [#allocation12], 4
          %s362 = int_to_ptr.vmem [resolvable:$true] %s361
          %367 = dma.hbm_to_vmem [thread:$0]  %s5, 92160, %s362, [#allocation13], 64, 64, 4
        $region32: #{tpu_custom_call.1} parent=11 // pred_fallthru
          _
        // Predicated region
        $region33: #{tpu_custom_call.1} parent=11 // pred_check
          %p368 = pneg %p180
        $region34: #{tpu_custom_call.1} parent=11 // pred_check_branch
          %370 = sbr.rel (%p368) target = $region36
        $region35: #{tpu_custom_call.1} parent=11 // pred_region
          %s372 = ssub.s32 160, 160
          %373 = vsyncadd [#allocation13], %s372
          %s374 = sshll.u32 [#allocation14], 4
          %s375 = int_to_ptr.vmem [resolvable:$true] %s374
          %380 = dma.hbm_to_vmem [thread:$0]  %s6, 160, %s375, [#allocation13], 16, 16, 1
        $region36: #{tpu_custom_call.1} parent=11 // pred_fallthru
          _
        // Predicated region
        $region37: #{tpu_custom_call.1} parent=11 // pred_check
          %p381 = pneg %p201
        $region38: #{tpu_custom_call.1} parent=11 // pred_check_branch
          %383 = sbr.rel (%p381) target = $region40
        $region39: #{tpu_custom_call.1} parent=11 // pred_region
          %s385 = ssub.s32 1024, 1024
          %386 = vsyncadd [#allocation16], %s385
          %s387 = sshll.u32 [#allocation15], 4
          %s388 = int_to_ptr.vmem [resolvable:$true] %s387
          %393 = dma.hbm_to_vmem [thread:$0]  %s7, 1024, %s388, [#allocation16], 64, 64, 4
        $region40: #{tpu_custom_call.1} parent=11 // pred_fallthru
          _
        // Predicated region
        $region41: #{tpu_custom_call.1} parent=11 // pred_check
          %p394 = pneg %p222
        $region42: #{tpu_custom_call.1} parent=11 // pred_check_branch
          %396 = sbr.rel (%p394) target = $region44
        $region43: #{tpu_custom_call.1} parent=11 // pred_region
          %s398 = ssub.s32 16, 16
          %399 = vsyncadd [#allocation16], %s398
          %s401 = sshll.u32 [#allocation17], 4
          %s402 = int_to_ptr.vmem [resolvable:$true] %s401
          %404 = dma.hbm_to_vmem [thread:$0]  %s8, 16, %s402, [#allocation16]
        $region44: #{tpu_custom_call.1} parent=11 // pred_fallthru
          _
        // Predicated region
        $region45: #{tpu_custom_call.1} parent=11 // pred_check
          %p405 = pneg %p243
        $region46: #{tpu_custom_call.1} parent=11 // pred_check_branch
          %407 = sbr.rel (%p405) target = $region48
        $region47: #{tpu_custom_call.1} parent=11 // pred_region
          %s409 = ssub.s32 1024, 1024
          %410 = vsyncadd [#allocation19], %s409
          %s411 = sshll.u32 [#allocation18], 4
          %s412 = int_to_ptr.vmem [resolvable:$true] %s411
          %417 = dma.hbm_to_vmem [thread:$0]  %s9, 1024, %s412, [#allocation19], 64, 64, 4
        $region48: #{tpu_custom_call.1} parent=11 // pred_fallthru
          _
        // Predicated region
        $region49: #{tpu_custom_call.1} parent=11 // pred_check
          %p418 = pneg %p264
        $region50: #{tpu_custom_call.1} parent=11 // pred_check_branch
          %420 = sbr.rel (%p418) target = $region52
        $region51: #{tpu_custom_call.1} parent=11 // pred_region
          %s422 = ssub.s32 16, 16
          %423 = vsyncadd [#allocation19], %s422
          %s425 = sshll.u32 [#allocation20], 4
          %s426 = int_to_ptr.vmem [resolvable:$true] %s425
          %428 = dma.hbm_to_vmem [thread:$0]  %s10, 16, %s426, [#allocation19]
        $region52: #{tpu_custom_call.1} parent=11 // pred_fallthru
          _
      $region12: #{tpu_custom_call.1} parent=5 // pred_fallthru
        _
      %p429 = scmp.lt.s32.totalorder %s28, 2
      // Predicated region
      $region53: #{tpu_custom_call.1} parent=5 // pred_check
        %p430 = pneg %p429
      $region54: #{tpu_custom_call.1} parent=5 // pred_check_branch
        %432 = sbr.rel (%p430) target = $region56
      $region55: #{tpu_custom_call.1} parent=5 // pred_region
        // Predicated region
        $region57: #{tpu_custom_call.1} parent=55 // pred_check
          %p433 = pneg %p48
        $region58: #{tpu_custom_call.1} parent=55 // pred_check_branch
          %435 = sbr.rel (%p433) target = $region60
        $region59: #{tpu_custom_call.1} parent=55 // pred_region
          %s436 = sand.u32 %s38, 1
          %s437 = scalar_lea.sflag [#allocation4], %s436
          %s438 = sand.u32 %s38, 1
          %s439 = smul.addr %s438, 64
          %s440 = scalar_lea.vmem [#allocation3], %s439
          %s442 = ssub.s32 1024, 1024
          %443 = vsyncadd %s437, %s442
          %s444 = smul.addr %s28, 16
          %s445 = smul.addr %s444, 64
          %s446 = scalar_lea.hbm %s0, %s445
          %s447 = sshll.u32 %s440, 4
          %s448 = int_to_ptr.vmem [resolvable:$true] %s447
          %453 = dma.hbm_to_vmem [thread:$0]  %s446, 1024, %s448, %s437, 64, 64, 4
        $region60: #{tpu_custom_call.1} parent=55 // pred_fallthru
          _
      $region56: #{tpu_custom_call.1} parent=5 // pred_fallthru
        _
      %p454 = scmp.le.s32.totalorder 1, %s28
      %p455 = scmp.lt.s32.totalorder %s28, 3
      %p456 = pnand %p454, %p455
      %p457 = pneg %p456
      // Predicated region
      $region61: #{tpu_custom_call.1} parent=5 // pred_check
        _
      $region62: #{tpu_custom_call.1} parent=5 // pred_check_branch
        %459 = sbr.rel (%p456) target = $region64
      $region63: #{tpu_custom_call.1} parent=5 // pred_region
        %s460 = ssub.s32 %s28, 1
        %s461 = sand.u32 %s41, 1
        %s462 = scalar_lea.sflag [#allocation4], %s461
        %s463 = sand.u32 %s41, 1
        %s464 = smul.addr %s463, 64
        %s465 = scalar_lea.vmem [#allocation3], %s464
        // Predicated region
        $region65: #{tpu_custom_call.1} parent=63 // pred_check
          %p466 = pneg %p54
        $region66: #{tpu_custom_call.1} parent=63 // pred_check_branch
          %468 = sbr.rel (%p466) target = $region68
        $region67: #{tpu_custom_call.1} parent=63 // pred_region
          %469 = dma.done %s462, 1024
        $region68: #{tpu_custom_call.1} parent=63 // pred_fallthru
          _
        // Predicated region
        $region69: #{tpu_custom_call.1} parent=63 // pred_check
          %p470 = pneg %p75
        $region70: #{tpu_custom_call.1} parent=63 // pred_check_branch
          %472 = sbr.rel (%p470) target = $region72
        $region71: #{tpu_custom_call.1} parent=63 // pred_region
          %473 = dma.done [#allocation7], 1024
        $region72: #{tpu_custom_call.1} parent=63 // pred_fallthru
          _
        // Predicated region
        $region73: #{tpu_custom_call.1} parent=63 // pred_check
          %p474 = pneg %p96
        $region74: #{tpu_custom_call.1} parent=63 // pred_check_branch
          %476 = sbr.rel (%p474) target = $region76
        $region75: #{tpu_custom_call.1} parent=63 // pred_region
          %477 = dma.done [#allocation7], 16
        $region76: #{tpu_custom_call.1} parent=63 // pred_fallthru
          _
        // Predicated region
        $region77: #{tpu_custom_call.1} parent=63 // pred_check
          %p478 = pneg %p117
        $region78: #{tpu_custom_call.1} parent=63 // pred_check_branch
          %480 = sbr.rel (%p478) target = $region80
        $region79: #{tpu_custom_call.1} parent=63 // pred_region
          %481 = dma.done [#allocation10], 160
        $region80: #{tpu_custom_call.1} parent=63 // pred_fallthru
          _
        // Predicated region
        $region81: #{tpu_custom_call.1} parent=63 // pred_check
          %p482 = pneg %p138
        $region82: #{tpu_custom_call.1} parent=63 // pred_check_branch
          %484 = sbr.rel (%p482) target = $region84
        $region83: #{tpu_custom_call.1} parent=63 // pred_region
          %485 = dma.done [#allocation10], 160
        $region84: #{tpu_custom_call.1} parent=63 // pred_fallthru
          _
        // Predicated region
        $region85: #{tpu_custom_call.1} parent=63 // pred_check
          %p486 = pneg %p159
        $region86: #{tpu_custom_call.1} parent=63 // pred_check_branch
          %488 = sbr.rel (%p486) target = $region88
        $region87: #{tpu_custom_call.1} parent=63 // pred_region
          %489 = dma.done [#allocation13], 92160
        $region88: #{tpu_custom_call.1} parent=63 // pred_fallthru
          _
        // Predicated region
        $region89: #{tpu_custom_call.1} parent=63 // pred_check
          %p490 = pneg %p180
        $region90: #{tpu_custom_call.1} parent=63 // pred_check_branch
          %492 = sbr.rel (%p490) target = $region92
        $region91: #{tpu_custom_call.1} parent=63 // pred_region
          %493 = dma.done [#allocation13], 160
        $region92: #{tpu_custom_call.1} parent=63 // pred_fallthru
          _
        // Predicated region
        $region93: #{tpu_custom_call.1} parent=63 // pred_check
          %p494 = pneg %p201
        $region94: #{tpu_custom_call.1} parent=63 // pred_check_branch
          %496 = sbr.rel (%p494) target = $region96
        $region95: #{tpu_custom_call.1} parent=63 // pred_region
          %497 = dma.done [#allocation16], 1024
        $region96: #{tpu_custom_call.1} parent=63 // pred_fallthru
          _
        // Predicated region
        $region97: #{tpu_custom_call.1} parent=63 // pred_check
          %p498 = pneg %p222
        $region98: #{tpu_custom_call.1} parent=63 // pred_check_branch
          %500 = sbr.rel (%p498) target = $region100
        $region99: #{tpu_custom_call.1} parent=63 // pred_region
          %501 = dma.done [#allocation16], 16
        $region100: #{tpu_custom_call.1} parent=63 // pred_fallthru
          _
        // Predicated region
        $region101: #{tpu_custom_call.1} parent=63 // pred_check
          %p502 = pneg %p243
        $region102: #{tpu_custom_call.1} parent=63 // pred_check_branch
          %504 = sbr.rel (%p502) target = $region104
        $region103: #{tpu_custom_call.1} parent=63 // pred_region
          %505 = dma.done [#allocation19], 1024
        $region104: #{tpu_custom_call.1} parent=63 // pred_fallthru
          _
        // Predicated region
        $region105: #{tpu_custom_call.1} parent=63 // pred_check
          %p506 = pneg %p264
        $region106: #{tpu_custom_call.1} parent=63 // pred_check_branch
          %508 = sbr.rel (%p506) target = $region108
        $region107: #{tpu_custom_call.1} parent=63 // pred_region
          %509 = dma.done [#allocation19], 16
        $region108: #{tpu_custom_call.1} parent=63 // pred_fallthru
          _
        %s510 = sand.u32 %s41, 1
        %s511 = scalar_lea.sflag [#allocation4], %s510
        %s512 = sand.u32 %s41, 1
        %s513 = smul.addr %s512, 64
        %s514 = scalar_lea.vmem [#allocation3], %s513
        %p515 = pneg %p54
        %p516 = pneg %p51
        %p517 = pneg %p75
        %p518 = pneg %p72
        %p519 = pneg %p96
        %p520 = pneg %p93
        %p521 = pneg %p117
        %p522 = pneg %p114
        %p523 = pneg %p138
        %p524 = pneg %p135
        %p525 = pneg %p159
        %p526 = pneg %p156
        %p527 = pneg %p180
        %p528 = pneg %p177
        %p529 = pneg %p201
        %p530 = pneg %p198
        %p531 = pneg %p222
        %p532 = pneg %p219
        %p533 = pneg %p243
        %p534 = pneg %p240
        %p535 = pneg %p264
        %p536 = pneg %p261
        %p537 = pneg %p290
        %p538 = pneg %p287
        %s539 = sand.u32 %s277, 1
        %s540 = scalar_lea.sflag [#allocation5], %s539
        %s541 = sand.u32 %s277, 1
        %s542 = smul.addr %s541, 128
        %s543 = scalar_lea.vmem [#allocation21], %s542
        %545 = vst [vmem:[#allocation2] sm:$0xff] 0
        %546 = vst [vmem:[#allocation2 + $0x8] sm:$0xff] 0
        %547 = vst [vmem:[#allocation2 + $0x10] sm:$0xff] 0
        %548 = vst [vmem:[#allocation2 + $0x18] sm:$0xff] 0
        %549 = vst [vmem:[#allocation2 + $0x20] sm:$0xff] 0
        %550 = vst [vmem:[#allocation2 + $0x28] sm:$0xff] 0
        %551 = vst [vmem:[#allocation2 + $0x30] sm:$0xff] 0
        %552 = vst [vmem:[#allocation2 + $0x38] sm:$0xff] 0
        %553 = vst [vmem:[#allocation2 + $0x40] sm:$0xff] 0
        %554 = vst [vmem:[#allocation2 + $0x48] sm:$0xff] 0
        %555 = vst [vmem:[#allocation2 + $0x50] sm:$0xff] 0
        %556 = vst [vmem:[#allocation2 + $0x58] sm:$0xff] 0
        %557 = vst [vmem:[#allocation2 + $0x60] sm:$0xff] 0
        %558 = vst [vmem:[#allocation2 + $0x68] sm:$0xff] 0
        %559 = vst [vmem:[#allocation2 + $0x70] sm:$0xff] 0
        %560 = vst [vmem:[#allocation2 + $0x78] sm:$0xff] 0
        %561 = vst [vmem:[#allocation2 + $0xc0] sm:$0xff] 0
        %562 = vst [vmem:[#allocation2 + $0xc8] sm:$0xff] 0
        %563 = vst [vmem:[#allocation2 + $0xd0] sm:$0xff] 0
        %564 = vst [vmem:[#allocation2 + $0xd8] sm:$0xff] 0
        %565 = vst [vmem:[#allocation2 + $0xe0] sm:$0xff] 0
        %566 = vst [vmem:[#allocation2 + $0xe8] sm:$0xff] 0
        %567 = vst [vmem:[#allocation2 + $0xf0] sm:$0xff] 0
        %568 = vst [vmem:[#allocation2 + $0xf8] sm:$0xff] 0
        %569 = vst [vmem:[#allocation2 + $0x100] sm:$0xff] 0
        %570 = vst [vmem:[#allocation2 + $0x108] sm:$0xff] 0
        %571 = vst [vmem:[#allocation2 + $0x110] sm:$0xff] 0
        %572 = vst [vmem:[#allocation2 + $0x118] sm:$0xff] 0
        %573 = vst [vmem:[#allocation2 + $0x120] sm:$0xff] 0
        %574 = vst [vmem:[#allocation2 + $0x128] sm:$0xff] 0
        %575 = vst [vmem:[#allocation2 + $0x130] sm:$0xff] 0
        %576 = vst [vmem:[#allocation2 + $0x138] sm:$0xff] 0
        %v577 = vld [vmem:[%s465] sm:$0xf]
        %v578 = vld [vmem:[%s465 + $0x4] sm:$0xf]
        %v579 = vld [vmem:[%s465 + $0x8] sm:$0xf]
        %v580 = vld [vmem:[%s465 + $0xc] sm:$0xf]
        %v581 = vld [vmem:[%s465 + $0x10] sm:$0xf]
        %v582 = vld [vmem:[%s465 + $0x14] sm:$0xf]
        %v583 = vld [vmem:[%s465 + $0x18] sm:$0xf]
        %v584 = vld [vmem:[%s465 + $0x1c] sm:$0xf]
        %v585 = vld [vmem:[%s465 + $0x20] sm:$0xf]
        %v586 = vld [vmem:[%s465 + $0x24] sm:$0xf]
        %v587 = vld [vmem:[%s465 + $0x28] sm:$0xf]
        %v588 = vld [vmem:[%s465 + $0x2c] sm:$0xf]
        %v589 = vld [vmem:[%s465 + $0x30] sm:$0xf]
        %v590 = vld [vmem:[%s465 + $0x34] sm:$0xf]
        %v591 = vld [vmem:[%s465 + $0x38] sm:$0xf]
        %v592 = vld [vmem:[%s465 + $0x3c] sm:$0xf]
        %v593 = vld [vmem:[#allocation6] sm:$0xf]
        %v594 = vld [vmem:[#allocation6 + $0x4] sm:$0xf]
        %v595 = vld [vmem:[#allocation6 + $0x8] sm:$0xf]
        %v596 = vld [vmem:[#allocation6 + $0xc] sm:$0xf]
        %v597 = vld [vmem:[#allocation6 + $0x10] sm:$0xf]
        %v598 = vld [vmem:[#allocation6 + $0x14] sm:$0xf]
        %v599 = vld [vmem:[#allocation6 + $0x18] sm:$0xf]
        %v600 = vld [vmem:[#allocation6 + $0x1c] sm:$0xf]
        %v601 = vld [vmem:[#allocation6 + $0x20] sm:$0xf]
        %v602 = vld [vmem:[#allocation6 + $0x24] sm:$0xf]
        %v603 = vld [vmem:[#allocation6 + $0x28] sm:$0xf]
        %v604 = vld [vmem:[#allocation6 + $0x2c] sm:$0xf]
        %v605 = vld [vmem:[#allocation6 + $0x30] sm:$0xf]
        %v606 = vld [vmem:[#allocation6 + $0x34] sm:$0xf]
        %v607 = vld [vmem:[#allocation6 + $0x38] sm:$0xf]
        %v608 = vld [vmem:[#allocation6 + $0x3c] sm:$0xf]
        %v609 = vld [vmem:[#allocation8] sm:$0x1]
        %v611 = vlaneseq
        %v612 = vshrl.u32 %v611, 7
        %v613 = vsub.s32 0, %v612
        %v614 = vrot.slane %v609, %v613
        %v632 = vunpack.c.l.b16 %v577
        %v633 = vunpack.c.l.b16 %v578
        %v634 = vunpack.c.l.b16 %v579
        %v635 = vunpack.c.l.b16 %v580
        %v636 = vunpack.c.l.b16 %v581
        %v637 = vunpack.c.l.b16 %v582
        %v638 = vunpack.c.l.b16 %v583
        %v639 = vunpack.c.l.b16 %v584
        %v640 = vunpack.c.l.b16 %v585
        %v641 = vunpack.c.l.b16 %v586
        %v642 = vunpack.c.l.b16 %v587
        %v643 = vunpack.c.l.b16 %v588
        %v644 = vunpack.c.l.b16 %v589
        %v645 = vunpack.c.l.b16 %v590
        %v646 = vunpack.c.l.b16 %v591
        %v647 = vunpack.c.l.b16 %v592
        %v648 = vpack.c.b16 %v633, %v632
        %v649 = vpack.c.b16 %v635, %v634
        %v650 = vpack.c.b16 %v637, %v636
        %v651 = vpack.c.b16 %v639, %v638
        %v652 = vpack.c.b16 %v641, %v640
        %v653 = vpack.c.b16 %v643, %v642
        %v654 = vpack.c.b16 %v645, %v644
        %v655 = vpack.c.b16 %v647, %v646
        %v680 = vunpack.c.l.b16 %v593
        %v681 = vunpack.c.l.b16 %v594
        %v682 = vunpack.c.l.b16 %v595
        %v683 = vunpack.c.l.b16 %v596
        %v684 = vunpack.c.l.b16 %v597
        %v685 = vunpack.c.l.b16 %v598
        %v686 = vunpack.c.l.b16 %v599
        %v687 = vunpack.c.l.b16 %v600
        %v688 = vunpack.c.l.b16 %v601
        %v689 = vunpack.c.l.b16 %v602
        %v690 = vunpack.c.l.b16 %v603
        %v691 = vunpack.c.l.b16 %v604
        %v692 = vunpack.c.l.b16 %v605
        %v693 = vunpack.c.l.b16 %v606
        %v694 = vunpack.c.l.b16 %v607
        %v695 = vunpack.c.l.b16 %v608
        %v696 = vpack.c.b16 %v681, %v680
        %v697 = vpack.c.b16 %v683, %v682
        %v698 = vpack.c.b16 %v685, %v684
        %v699 = vpack.c.b16 %v687, %v686
        %v700 = vpack.c.b16 %v689, %v688
        %v701 = vpack.c.b16 %v691, %v690
        %v702 = vpack.c.b16 %v693, %v692
        %v703 = vpack.c.b16 %v695, %v694
        %712 = vmatprep.subr.bf16.mxu0 0
        %713 = vmatpush1.bf16.msra.mxu0 %v696
        %714 = vmatprep.subr.bf16.mxu0 0
        %715 = vmatpush1.bf16.msra.mxu0 %v697
        %716 = vmatprep.subr.bf16.mxu0 0
        %717 = vmatpush1.bf16.msra.mxu0 %v698
        %718 = vmatprep.subr.bf16.mxu0 0
        %719 = vmatpush1.bf16.msra.mxu0 %v699
        %720 = vmatprep.subr.bf16.mxu0 0
        %721 = vmatpush1.bf16.msra.mxu0 %v700
        %722 = vmatprep.subr.bf16.mxu0 0
        %723 = vmatpush1.bf16.msra.mxu0 %v701
        %724 = vmatprep.subr.bf16.mxu0 0
        %725 = vmatpush1.bf16.msra.mxu0 %v702
        %726 = vmatprep.subr.bf16.mxu0 0
        %727 = vmatpush1.bf16.msra.mxu0 %v703
        %728 = vmatprep.subr.bf16.mxu0 0
        %729 = vmatpush1.bf16.msra.mxu0 0
        %730 = vmatprep.subr.bf16.mxu0 0
        %731 = vmatpush1.bf16.msra.mxu0 0
        %732 = vmatprep.subr.bf16.mxu0 0
        %733 = vmatpush1.bf16.msra.mxu0 0
        %734 = vmatprep.subr.bf16.mxu0 0
        %735 = vmatpush1.bf16.msra.mxu0 0
        %736 = vmatprep.subr.bf16.mxu0 0
        %737 = vmatpush1.bf16.msra.mxu0 0
        %738 = vmatprep.subr.bf16.mxu0 0
        %739 = vmatpush1.bf16.msra.mxu0 0
        %740 = vmatprep.subr.bf16.mxu0 0
        %741 = vmatpush1.bf16.msra.mxu0 0
        %742 = vmatprep.subr.bf16.mxu0 0
        %743 = vmatpush1.bf16.msra.mxu0 0
        %744 = vmatprep.mubr.bf16.mxu0 0
        %745 = vmatmul.mubr.bf16.gmra.mrb[0].mxu0 %v648
        %v746 = vpop.f32.mrb[0].mxu0
        %v747 = vadd.f32 %v614, %v746
        %v748 = vpop.f32.mrb[0].mxu0
        %v749 = vpop.f32.mrb[0].mxu0
        %v750 = vadd.f32 %v614, %v749
        %v751 = vpop.f32.mrb[0].mxu0
        %752 = vmatprep.mubr.bf16.mxu0 0
        %753 = vmatmul.mubr.bf16.gmra.mrb[0].mxu0 %v649
        %v754 = vpop.f32.mrb[0].mxu0
        %v755 = vadd.f32 %v614, %v754
        %v756 = vpop.f32.mrb[0].mxu0
        %v757 = vpop.f32.mrb[0].mxu0
        %v758 = vadd.f32 %v614, %v757
        %v759 = vpop.f32.mrb[0].mxu0
        %760 = vmatprep.mubr.bf16.mxu0 0
        %761 = vmatmul.mubr.bf16.gmra.mrb[0].mxu0 %v650
        %v762 = vpop.f32.mrb[0].mxu0
        %v763 = vadd.f32 %v614, %v762
        %v764 = vpop.f32.mrb[0].mxu0
        %v765 = vpop.f32.mrb[0].mxu0
        %v766 = vadd.f32 %v614, %v765
        %v767 = vpop.f32.mrb[0].mxu0
        %768 = vmatprep.mubr.bf16.mxu0 0
        %769 = vmatmul.mubr.bf16.gmra.mrb[0].mxu0 %v651
        %v770 = vpop.f32.mrb[0].mxu0
        %v771 = vadd.f32 %v614, %v770
        %v772 = vpop.f32.mrb[0].mxu0
        %v773 = vpop.f32.mrb[0].mxu0
        %v774 = vadd.f32 %v614, %v773
        %v775 = vpop.f32.mrb[0].mxu0
        %776 = vmatprep.mubr.bf16.mxu0 0
        %777 = vmatmul.mubr.bf16.gmra.mrb[0].mxu0 %v652
        %v778 = vpop.f32.mrb[0].mxu0
        %v779 = vadd.f32 %v614, %v778
        %v780 = vpop.f32.mrb[0].mxu0
        %v781 = vpop.f32.mrb[0].mxu0
        %v782 = vadd.f32 %v614, %v781
        %v783 = vpop.f32.mrb[0].mxu0
        %784 = vmatprep.mubr.bf16.mxu0 0
        %785 = vmatmul.mubr.bf16.gmra.mrb[0].mxu0 %v653
        %v786 = vpop.f32.mrb[0].mxu0
        %v787 = vadd.f32 %v614, %v786
        %v788 = vpop.f32.mrb[0].mxu0
        %v789 = vpop.f32.mrb[0].mxu0
        %v790 = vadd.f32 %v614, %v789
        %v791 = vpop.f32.mrb[0].mxu0
        %792 = vmatprep.mubr.bf16.mxu0 0
        %793 = vmatmul.mubr.bf16.gmra.mrb[0].mxu0 %v654
        %v794 = vpop.f32.mrb[0].mxu0
        %v795 = vadd.f32 %v614, %v794
        %v796 = vpop.f32.mrb[0].mxu0
        %v797 = vpop.f32.mrb[0].mxu0
        %v798 = vadd.f32 %v614, %v797
        %v799 = vpop.f32.mrb[0].mxu0
        %800 = vmatprep.mubr.bf16.mxu0 0
        %801 = vmatmul.mubr.bf16.gmra.mrb[0].mxu0 %v655
        %v802 = vpop.f32.mrb[0].mxu0
        %v803 = vadd.f32 %v614, %v802
        %v804 = vpop.f32.mrb[0].mxu0
        %v805 = vpop.f32.mrb[0].mxu0
        %v806 = vadd.f32 %v614, %v805
        %v807 = vpop.f32.mrb[0].mxu0
        %808 = vdwg.mxu0
        %v809 = vmax.f32 %v747, 0.0
        %v810 = vmax.f32 %v750, 0.0
        %v811 = vmax.f32 %v755, 0.0
        %v812 = vmax.f32 %v758, 0.0
        %v813 = vmax.f32 %v763, 0.0
        %v814 = vmax.f32 %v766, 0.0
        %v815 = vmax.f32 %v771, 0.0
        %v816 = vmax.f32 %v774, 0.0
        %v817 = vmax.f32 %v779, 0.0
        %v818 = vmax.f32 %v782, 0.0
        %v819 = vmax.f32 %v787, 0.0
        %v820 = vmax.f32 %v790, 0.0
        %v821 = vmax.f32 %v795, 0.0
        %v822 = vmax.f32 %v798, 0.0
        %v823 = vmax.f32 %v803, 0.0
        %v824 = vmax.f32 %v806, 0.0
        loop: start=0, step=1, limit=2
        $region109: #{tpu_custom_call.1} parent=63 // loop_pre_header
          _
        $region110: #{tpu_custom_call.1} parent=63 // loop_header
          %s826 = sphi 0, %s830
          %p827 = scmp.ge.s32.totalorder %s826, 2
          %v831 = vphi %v809, %v9281
          %v832 = vphi %v810, %v9282
          %v833 = vphi %v811, %v9283
          %v834 = vphi %v812, %v9284
          %v835 = vphi %v813, %v9285
          %v836 = vphi %v814, %v9286
          %v837 = vphi %v815, %v9287
          %v838 = vphi %v816, %v9288
          %v839 = vphi %v817, %v9289
          %v840 = vphi %v818, %v9290
          %v841 = vphi %v819, %v9291
          %v842 = vphi %v820, %v9292
          %v843 = vphi %v821, %v9293
          %v844 = vphi %v822, %v9294
          %v845 = vphi %v823, %v9295
          %v846 = vphi %v824, %v9296
        $region111: #{tpu_custom_call.1} parent=63 // loop_header_branch
          %829 = sbr.rel (%p827) target = $region115
        $region112: #{tpu_custom_call.1} parent=63 // loop_body
          %s847 = smul.u32 %s826, 5
          %848 = vadd.xlane.f32.xlu0 %v831
          %v849 = vpop.xlane.xlu0 %848
          %850 = vadd.xlane.f32.xlu0 %v832
          %v851 = vpop.xlane.xlu0 %850
          %852 = vadd.xlane.f32.xlu0 %v833
          %v853 = vpop.xlane.xlu0 %852
          %854 = vadd.xlane.f32.xlu0 %v834
          %v855 = vpop.xlane.xlu0 %854
          %856 = vadd.xlane.f32.xlu0 %v835
          %v857 = vpop.xlane.xlu0 %856
          %858 = vadd.xlane.f32.xlu0 %v836
          %v859 = vpop.xlane.xlu0 %858
          %860 = vadd.xlane.f32.xlu0 %v837
          %v861 = vpop.xlane.xlu0 %860
          %862 = vadd.xlane.f32.xlu0 %v838
          %v863 = vpop.xlane.xlu0 %862
          %864 = vadd.xlane.f32.xlu0 %v839
          %v865 = vpop.xlane.xlu0 %864
          %866 = vadd.xlane.f32.xlu0 %v840
          %v867 = vpop.xlane.xlu0 %866
          %868 = vadd.xlane.f32.xlu0 %v841
          %v869 = vpop.xlane.xlu0 %868
          %870 = vadd.xlane.f32.xlu0 %v842
          %v871 = vpop.xlane.xlu0 %870
          %872 = vadd.xlane.f32.xlu0 %v843
          %v873 = vpop.xlane.xlu0 %872
          %874 = vadd.xlane.f32.xlu0 %v844
          %v875 = vpop.xlane.xlu0 %874
          %876 = vadd.xlane.f32.xlu0 %v845
          %v877 = vpop.xlane.xlu0 %876
          %878 = vadd.xlane.f32.xlu0 %v846
          %v879 = vpop.xlane.xlu0 %878
          %v880 = vmul.f32 %v849, 0.0078125
          %v881 = vmul.f32 %v851, 0.0078125
          %v882 = vmul.f32 %v853, 0.0078125
          %v883 = vmul.f32 %v855, 0.0078125
          %v884 = vmul.f32 %v857, 0.0078125
          %v885 = vmul.f32 %v859, 0.0078125
          %v886 = vmul.f32 %v861, 0.0078125
          %v887 = vmul.f32 %v863, 0.0078125
          %v888 = vmul.f32 %v865, 0.0078125
          %v889 = vmul.f32 %v867, 0.0078125
          %v890 = vmul.f32 %v869, 0.0078125
          %v891 = vmul.f32 %v871, 0.0078125
          %v892 = vmul.f32 %v873, 0.0078125
          %v893 = vmul.f32 %v875, 0.0078125
          %v894 = vmul.f32 %v877, 0.0078125
          %v895 = vmul.f32 %v879, 0.0078125
          %v896 = vmul.f32 %v831, %v831
          %v897 = vmul.f32 %v832, %v832
          %v898 = vmul.f32 %v833, %v833
          %v899 = vmul.f32 %v834, %v834
          %v900 = vmul.f32 %v835, %v835
          %v901 = vmul.f32 %v836, %v836
          %v902 = vmul.f32 %v837, %v837
          %v903 = vmul.f32 %v838, %v838
          %v904 = vmul.f32 %v839, %v839
          %v905 = vmul.f32 %v840, %v840
          %v906 = vmul.f32 %v841, %v841
          %v907 = vmul.f32 %v842, %v842
          %v908 = vmul.f32 %v843, %v843
          %v909 = vmul.f32 %v844, %v844
          %v910 = vmul.f32 %v845, %v845
          %v911 = vmul.f32 %v846, %v846
          %912 = vadd.xlane.f32.xlu0 %v896
          %v913 = vpop.xlane.xlu0 %912
          %914 = vadd.xlane.f32.xlu0 %v897
          %v915 = vpop.xlane.xlu0 %914
          %916 = vadd.xlane.f32.xlu0 %v898
          %v917 = vpop.xlane.xlu0 %916
          %918 = vadd.xlane.f32.xlu0 %v899
          %v919 = vpop.xlane.xlu0 %918
          %920 = vadd.xlane.f32.xlu0 %v900
          %v921 = vpop.xlane.xlu0 %920
          %922 = vadd.xlane.f32.xlu0 %v901
          %v923 = vpop.xlane.xlu0 %922
          %924 = vadd.xlane.f32.xlu0 %v902
          %v925 = vpop.xlane.xlu0 %924
          %926 = vadd.xlane.f32.xlu0 %v903
          %v927 = vpop.xlane.xlu0 %926
          %928 = vadd.xlane.f32.xlu0 %v904
          %v929 = vpop.xlane.xlu0 %928
          %930 = vadd.xlane.f32.xlu0 %v905
          %v931 = vpop.xlane.xlu0 %930
          %932 = vadd.xlane.f32.xlu0 %v906
          %v933 = vpop.xlane.xlu0 %932
          %934 = vadd.xlane.f32.xlu0 %v907
          %v935 = vpop.xlane.xlu0 %934
          %936 = vadd.xlane.f32.xlu0 %v908
          %v937 = vpop.xlane.xlu0 %936
          %938 = vadd.xlane.f32.xlu0 %v909
          %v939 = vpop.xlane.xlu0 %938
          %940 = vadd.xlane.f32.xlu0 %v910
          %v941 = vpop.xlane.xlu0 %940
          %942 = vadd.xlane.f32.xlu0 %v911
          %v943 = vpop.xlane.xlu0 %942
          %v944 = vmul.f32 %v913, 0.0078125
          %v945 = vmul.f32 %v915, 0.0078125
          %v946 = vmul.f32 %v917, 0.0078125
          %v947 = vmul.f32 %v919, 0.0078125
          %v948 = vmul.f32 %v921, 0.0078125
          %v949 = vmul.f32 %v923, 0.0078125
          %v950 = vmul.f32 %v925, 0.0078125
          %v951 = vmul.f32 %v927, 0.0078125
          %v952 = vmul.f32 %v929, 0.0078125
          %v953 = vmul.f32 %v931, 0.0078125
          %v954 = vmul.f32 %v933, 0.0078125
          %v955 = vmul.f32 %v935, 0.0078125
          %v956 = vmul.f32 %v937, 0.0078125
          %v957 = vmul.f32 %v939, 0.0078125
          %v958 = vmul.f32 %v941, 0.0078125
          %v959 = vmul.f32 %v943, 0.0078125
          %v960 = vmul.f32 %v880, %v880
          %v961 = vmul.f32 %v881, %v881
          %v962 = vmul.f32 %v882, %v882
          %v963 = vmul.f32 %v883, %v883
          %v964 = vmul.f32 %v884, %v884
          %v965 = vmul.f32 %v885, %v885
          %v966 = vmul.f32 %v886, %v886
          %v967 = vmul.f32 %v887, %v887
          %v968 = vmul.f32 %v888, %v888
          %v969 = vmul.f32 %v889, %v889
          %v970 = vmul.f32 %v890, %v890
          %v971 = vmul.f32 %v891, %v891
          %v972 = vmul.f32 %v892, %v892
          %v973 = vmul.f32 %v893, %v893
          %v974 = vmul.f32 %v894, %v894
          %v975 = vmul.f32 %v895, %v895
          %v976 = vsub.f32 %v944, %v960
          %v977 = vsub.f32 %v945, %v961
          %v978 = vsub.f32 %v946, %v962
          %v979 = vsub.f32 %v947, %v963
          %v980 = vsub.f32 %v948, %v964
          %v981 = vsub.f32 %v949, %v965
          %v982 = vsub.f32 %v950, %v966
          %v983 = vsub.f32 %v951, %v967
          %v984 = vsub.f32 %v952, %v968
          %v985 = vsub.f32 %v953, %v969
          %v986 = vsub.f32 %v954, %v970
          %v987 = vsub.f32 %v955, %v971
          %v988 = vsub.f32 %v956, %v972
          %v989 = vsub.f32 %v957, %v973
          %v990 = vsub.f32 %v958, %v974
          %v991 = vsub.f32 %v959, %v975
          %v992 = vsub.f32 %v831, %v880
          %v993 = vsub.f32 %v832, %v881
          %v994 = vsub.f32 %v833, %v882
          %v995 = vsub.f32 %v834, %v883
          %v996 = vsub.f32 %v835, %v884
          %v997 = vsub.f32 %v836, %v885
          %v998 = vsub.f32 %v837, %v886
          %v999 = vsub.f32 %v838, %v887
          %v1000 = vsub.f32 %v839, %v888
          %v1001 = vsub.f32 %v840, %v889
          %v1002 = vsub.f32 %v841, %v890
          %v1003 = vsub.f32 %v842, %v891
          %v1004 = vsub.f32 %v843, %v892
          %v1005 = vsub.f32 %v844, %v893
          %v1006 = vsub.f32 %v845, %v894
          %v1007 = vsub.f32 %v846, %v895
          %v1008 = vadd.f32 %v976, 1e-05
          %v1009 = vadd.f32 %v977, 1e-05
          %v1010 = vadd.f32 %v978, 1e-05
          %v1011 = vadd.f32 %v979, 1e-05
          %v1012 = vadd.f32 %v980, 1e-05
          %v1013 = vadd.f32 %v981, 1e-05
          %v1014 = vadd.f32 %v982, 1e-05
          %v1015 = vadd.f32 %v983, 1e-05
          %v1016 = vadd.f32 %v984, 1e-05
          %v1017 = vadd.f32 %v985, 1e-05
          %v1018 = vadd.f32 %v986, 1e-05
          %v1019 = vadd.f32 %v987, 1e-05
          %v1020 = vadd.f32 %v988, 1e-05
          %v1021 = vadd.f32 %v989, 1e-05
          %v1022 = vadd.f32 %v990, 1e-05
          %v1023 = vadd.f32 %v991, 1e-05
          %v1024 = vrsqrt.pop %v1008
          %v1025 = vrsqrt.pop %v1009
          %v1026 = vrsqrt.pop %v1010
          %v1027 = vrsqrt.pop %v1011
          %v1028 = vrsqrt.pop %v1012
          %v1029 = vrsqrt.pop %v1013
          %v1030 = vrsqrt.pop %v1014
          %v1031 = vrsqrt.pop %v1015
          %v1032 = vrsqrt.pop %v1016
          %v1033 = vrsqrt.pop %v1017
          %v1034 = vrsqrt.pop %v1018
          %v1035 = vrsqrt.pop %v1019
          %v1036 = vrsqrt.pop %v1020
          %v1037 = vrsqrt.pop %v1021
          %v1038 = vrsqrt.pop %v1022
          %v1039 = vrsqrt.pop %v1023
          %v1040 = vmul.f32 %v992, %v1024
          %v1041 = vmul.f32 %v993, %v1025
          %v1042 = vmul.f32 %v994, %v1026
          %v1043 = vmul.f32 %v995, %v1027
          %v1044 = vmul.f32 %v996, %v1028
          %v1045 = vmul.f32 %v997, %v1029
          %v1046 = vmul.f32 %v998, %v1030
          %v1047 = vmul.f32 %v999, %v1031
          %v1048 = vmul.f32 %v1000, %v1032
          %v1049 = vmul.f32 %v1001, %v1033
          %v1050 = vmul.f32 %v1002, %v1034
          %v1051 = vmul.f32 %v1003, %v1035
          %v1052 = vmul.f32 %v1004, %v1036
          %v1053 = vmul.f32 %v1005, %v1037
          %v1054 = vmul.f32 %v1006, %v1038
          %v1055 = vmul.f32 %v1007, %v1039
          %s1056 = scalar_lea.vmem [#allocation9], %s847
          %v1057 = vld [vmem:[%s1056] sm:$0x1]
          %v1059 = vlaneseq
          %v1060 = vshrl.u32 %v1059, 7
          %v1061 = vsub.s32 0, %v1060
          %v1062 = vrot.slane %v1057, %v1061
          %v1064 = vmul.f32 %v1040, %v1062
          %v1065 = vmul.f32 %v1041, %v1062
          %v1066 = vmul.f32 %v1042, %v1062
          %v1067 = vmul.f32 %v1043, %v1062
          %v1068 = vmul.f32 %v1044, %v1062
          %v1069 = vmul.f32 %v1045, %v1062
          %v1070 = vmul.f32 %v1046, %v1062
          %v1071 = vmul.f32 %v1047, %v1062
          %v1072 = vmul.f32 %v1048, %v1062
          %v1073 = vmul.f32 %v1049, %v1062
          %v1074 = vmul.f32 %v1050, %v1062
          %v1075 = vmul.f32 %v1051, %v1062
          %v1076 = vmul.f32 %v1052, %v1062
          %v1077 = vmul.f32 %v1053, %v1062
          %v1078 = vmul.f32 %v1054, %v1062
          %v1079 = vmul.f32 %v1055, %v1062
          %s1080 = scalar_lea.vmem [#allocation11], %s847
          %v1081 = vld [vmem:[%s1080] sm:$0x1]
          %v1083 = vlaneseq
          %v1084 = vshrl.u32 %v1083, 7
          %v1085 = vsub.s32 0, %v1084
          %v1086 = vrot.slane %v1081, %v1085
          %v1088 = vadd.f32 %v1064, %v1086
          %v1089 = vadd.f32 %v1065, %v1086
          %v1090 = vadd.f32 %v1066, %v1086
          %v1091 = vadd.f32 %v1067, %v1086
          %v1092 = vadd.f32 %v1068, %v1086
          %v1093 = vadd.f32 %v1069, %v1086
          %v1094 = vadd.f32 %v1070, %v1086
          %v1095 = vadd.f32 %v1071, %v1086
          %v1096 = vadd.f32 %v1072, %v1086
          %v1097 = vadd.f32 %v1073, %v1086
          %v1098 = vadd.f32 %v1074, %v1086
          %v1099 = vadd.f32 %v1075, %v1086
          %v1100 = vadd.f32 %v1076, %v1086
          %v1101 = vadd.f32 %v1077, %v1086
          %v1102 = vadd.f32 %v1078, %v1086
          %v1103 = vadd.f32 %v1079, %v1086
          %v1104 = vpack.c.bf16 %v1089, %v1088
          %v1105 = vpack.c.bf16 %v1091, %v1090
          %v1106 = vpack.c.bf16 %v1093, %v1092
          %v1107 = vpack.c.bf16 %v1095, %v1094
          %v1108 = vpack.c.bf16 %v1097, %v1096
          %v1109 = vpack.c.bf16 %v1099, %v1098
          %v1110 = vpack.c.bf16 %v1101, %v1100
          %v1111 = vpack.c.bf16 %v1103, %v1102
          %1112 = vst [vmem:[#allocation2 + $0x80] sm:$0xff] %v1104
          %1113 = vst [vmem:[#allocation2 + $0x88] sm:$0xff] %v1105
          %1114 = vst [vmem:[#allocation2 + $0x90] sm:$0xff] %v1106
          %1115 = vst [vmem:[#allocation2 + $0x98] sm:$0xff] %v1107
          %1116 = vst [vmem:[#allocation2 + $0xa0] sm:$0xff] %v1108
          %1117 = vst [vmem:[#allocation2 + $0xa8] sm:$0xff] %v1109
          %1118 = vst [vmem:[#allocation2 + $0xb0] sm:$0xff] %v1110
          %1119 = vst [vmem:[#allocation2 + $0xb8] sm:$0xff] %v1111
          %v1120 = vld [vmem:[#allocation2 + $0x78] sm:$0xc0]
          %v1121 = vld [vmem:[#allocation2 + $0x80] sm:$0xff]
          %v1122 = vld [vmem:[#allocation2 + $0x88] sm:$0xff]
          %v1123 = vld [vmem:[#allocation2 + $0x90] sm:$0xff]
          %v1124 = vld [vmem:[#allocation2 + $0x98] sm:$0xff]
          %v1125 = vld [vmem:[#allocation2 + $0xa0] sm:$0xff]
          %v1126 = vld [vmem:[#allocation2 + $0xa8] sm:$0xff]
          %v1127 = vld [vmem:[#allocation2 + $0xb0] sm:$0xff]
          %v1128 = vld [vmem:[#allocation2 + $0xb8] sm:$0x3f]
          %v1129 = vld [vmem:[#allocation2 + $0xb8] sm:$0x7f]
          %v1130 = vld [vmem:[#allocation2 + $0x78] sm:$0x80]
          %v1131 = vld [vmem:[#allocation2 + $0xb8] sm:$0xff]
          %v1132 = vld [vmem:[#allocation2 + $0xc0] sm:$0x1]
          %v1133 = vld [vmem:[#allocation2 + $0x80] sm:$0xfe]
          %v1134 = vld [vmem:[#allocation2 + $0xc0] sm:$0x3]
          %v1135 = vld [vmem:[#allocation2 + $0x80] sm:$0xfc]
          %vm1136 = vsmask.f32 7424
          %v1138 = vshrl.u32 %v1120, 16
          %v1140 = vshll.u32 %v1120, 16
          %v1142 = vrot.slane %v1140, 1
          %v1143 = vor.u32 %v1138, %v1142
          %v1145 = vshll.u32 %v1121, 16
          %v1147 = vrot.slane %v1145, 1
          %v1148 = vsel %vm1136, %v1143, %v1147
          %v1149 = vshrl.u32 %v1121, 16
          %v1151 = vor.u32 %v1149, %v1147
          %v1153 = vshll.u32 %v1122, 16
          %v1155 = vrot.slane %v1153, 1
          %v1156 = vsel %vm1136, %v1151, %v1155
          %v1157 = vshrl.u32 %v1122, 16
          %v1159 = vor.u32 %v1157, %v1155
          %v1161 = vshll.u32 %v1123, 16
          %v1163 = vrot.slane %v1161, 1
          %v1164 = vsel %vm1136, %v1159, %v1163
          %v1165 = vshrl.u32 %v1123, 16
          %v1167 = vor.u32 %v1165, %v1163
          %v1169 = vshll.u32 %v1124, 16
          %v1171 = vrot.slane %v1169, 1
          %v1172 = vsel %vm1136, %v1167, %v1171
          %v1173 = vshrl.u32 %v1124, 16
          %v1175 = vor.u32 %v1173, %v1171
          %v1177 = vshll.u32 %v1125, 16
          %v1179 = vrot.slane %v1177, 1
          %v1180 = vsel %vm1136, %v1175, %v1179
          %v1181 = vshrl.u32 %v1125, 16
          %v1183 = vor.u32 %v1181, %v1179
          %v1185 = vshll.u32 %v1126, 16
          %v1187 = vrot.slane %v1185, 1
          %v1188 = vsel %vm1136, %v1183, %v1187
          %v1189 = vshrl.u32 %v1126, 16
          %v1191 = vor.u32 %v1189, %v1187
          %v1193 = vshll.u32 %v1127, 16
          %v1195 = vrot.slane %v1193, 1
          %v1196 = vsel %vm1136, %v1191, %v1195
          %v1197 = vshrl.u32 %v1127, 16
          %v1199 = vor.u32 %v1197, %v1195
          %v1201 = vshll.u32 %v1129, 16
          %v1203 = vrot.slane %v1201, 1
          %v1204 = vsel %vm1136, %v1199, %v1203
          %v1205 = vshrl.u32 %v1129, 16
          %v1207 = vor.u32 %v1205, %v1203
          %vm1217 = vcmask 1046528
          %v1218 = vrot.slane %v1130, 1
          %v1219 = vrot.slane %v1121, 1
          %v1220 = vsel %vm1217, %v1218, %v1219
          %v1221 = vrot.slane %v1122, 1
          %v1222 = vsel %vm1217, %v1219, %v1221
          %v1223 = vrot.slane %v1123, 1
          %v1224 = vsel %vm1217, %v1221, %v1223
          %v1225 = vrot.slane %v1124, 1
          %v1226 = vsel %vm1217, %v1223, %v1225
          %v1227 = vrot.slane %v1125, 1
          %v1228 = vsel %vm1217, %v1225, %v1227
          %v1229 = vrot.slane %v1126, 1
          %v1230 = vsel %vm1217, %v1227, %v1229
          %v1231 = vrot.slane %v1127, 1
          %v1232 = vsel %vm1217, %v1229, %v1231
          %v1233 = vrot.slane %v1129, 1
          %v1234 = vsel %vm1217, %v1231, %v1233
          %vm1235 = vsmask.f32 6400
          %v1237 = vshrl.u32 %v1130, 16
          %v1239 = vrot.slane %v1237, 1
          %v1240 = vrot.slane %v1149, 1
          %v1241 = vrot.slane %v1145, 2
          %v1242 = vor.u32 %v1240, %v1241
          %v1243 = vsel %vm1235, %v1239, %v1242
          %v1244 = vrot.slane %v1157, 1
          %v1245 = vrot.slane %v1153, 2
          %v1246 = vor.u32 %v1244, %v1245
          %v1247 = vsel %vm1235, %v1242, %v1246
          %v1248 = vrot.slane %v1165, 1
          %v1249 = vrot.slane %v1161, 2
          %v1250 = vor.u32 %v1248, %v1249
          %v1251 = vsel %vm1235, %v1246, %v1250
          %v1252 = vrot.slane %v1173, 1
          %v1253 = vrot.slane %v1169, 2
          %v1254 = vor.u32 %v1252, %v1253
          %v1255 = vsel %vm1235, %v1250, %v1254
          %v1256 = vrot.slane %v1181, 1
          %v1257 = vrot.slane %v1177, 2
          %v1258 = vor.u32 %v1256, %v1257
          %v1259 = vsel %vm1235, %v1254, %v1258
          %v1260 = vrot.slane %v1189, 1
          %v1261 = vrot.slane %v1185, 2
          %v1262 = vor.u32 %v1260, %v1261
          %v1263 = vsel %vm1235, %v1258, %v1262
          %v1264 = vrot.slane %v1197, 1
          %v1265 = vrot.slane %v1193, 2
          %v1266 = vor.u32 %v1264, %v1265
          %v1267 = vsel %vm1235, %v1262, %v1266
          %v1269 = vshrl.u32 %v1131, 16
          %v1271 = vrot.slane %v1269, 1
          %v1272 = vshll.u32 %v1131, 16
          %v1274 = vrot.slane %v1272, 2
          %v1275 = vor.u32 %v1271, %v1274
          %v1276 = vsel %vm1235, %v1266, %v1275
          %vm1278 = vcmask 1045504
          %v1279 = vrot.slane %v1121, 2
          %v1280 = vrot.slane %v1122, 2
          %v1281 = vsel %vm1278, %v1279, %v1280
          %v1282 = vrot.slane %v1123, 2
          %v1283 = vsel %vm1278, %v1280, %v1282
          %v1284 = vrot.slane %v1124, 2
          %v1285 = vsel %vm1278, %v1282, %v1284
          %v1286 = vrot.slane %v1125, 2
          %v1287 = vsel %vm1278, %v1284, %v1286
          %v1288 = vrot.slane %v1126, 2
          %v1289 = vsel %vm1278, %v1286, %v1288
          %v1290 = vrot.slane %v1127, 2
          %v1291 = vsel %vm1278, %v1288, %v1290
          %v1292 = vrot.slane %v1131, 2
          %v1293 = vsel %vm1278, %v1290, %v1292
          %vm1294 = vsmask.f32 5376
          %v1295 = vrot.slane %v1149, 2
          %v1296 = vrot.slane %v1145, 3
          %v1297 = vor.u32 %v1295, %v1296
          %v1298 = vrot.slane %v1157, 2
          %v1299 = vrot.slane %v1153, 3
          %v1300 = vor.u32 %v1298, %v1299
          %v1301 = vsel %vm1294, %v1297, %v1300
          %v1302 = vrot.slane %v1165, 2
          %v1303 = vrot.slane %v1161, 3
          %v1304 = vor.u32 %v1302, %v1303
          %v1305 = vsel %vm1294, %v1300, %v1304
          %v1306 = vrot.slane %v1173, 2
          %v1307 = vrot.slane %v1169, 3
          %v1308 = vor.u32 %v1306, %v1307
          %v1309 = vsel %vm1294, %v1304, %v1308
          %v1310 = vrot.slane %v1181, 2
          %v1311 = vrot.slane %v1177, 3
          %v1312 = vor.u32 %v1310, %v1311
          %v1313 = vsel %vm1294, %v1308, %v1312
          %v1314 = vrot.slane %v1189, 2
          %v1315 = vrot.slane %v1185, 3
          %v1316 = vor.u32 %v1314, %v1315
          %v1317 = vsel %vm1294, %v1312, %v1316
          %v1318 = vrot.slane %v1197, 2
          %v1319 = vrot.slane %v1193, 3
          %v1320 = vor.u32 %v1318, %v1319
          %v1321 = vsel %vm1294, %v1316, %v1320
          %v1322 = vrot.slane %v1269, 2
          %v1323 = vrot.slane %v1272, 3
          %v1324 = vor.u32 %v1322, %v1323
          %v1325 = vsel %vm1294, %v1320, %v1324
          %v1327 = vshll.u32 %v1132, 16
          %v1329 = vrot.slane %v1327, 3
          %v1330 = vsel %vm1294, %v1324, %v1329
          %vm1333 = vcmask 1044480
          %v1334 = vrot.slane %v1133, 3
          %v1335 = vrot.slane %v1122, 3
          %v1336 = vsel %vm1333, %v1334, %v1335
          %v1337 = vrot.slane %v1123, 3
          %v1338 = vsel %vm1333, %v1335, %v1337
          %v1339 = vrot.slane %v1124, 3
          %v1340 = vsel %vm1333, %v1337, %v1339
          %v1341 = vrot.slane %v1125, 3
          %v1342 = vsel %vm1333, %v1339, %v1341
          %v1343 = vrot.slane %v1126, 3
          %v1344 = vsel %vm1333, %v1341, %v1343
          %v1345 = vrot.slane %v1127, 3
          %v1346 = vsel %vm1333, %v1343, %v1345
          %v1347 = vrot.slane %v1131, 3
          %v1348 = vsel %vm1333, %v1345, %v1347
          %v1349 = vrot.slane %v1132, 3
          %v1350 = vsel %vm1333, %v1347, %v1349
          %vm1351 = vsmask.f32 4352
          %v1353 = vshrl.u32 %v1133, 16
          %v1355 = vrot.slane %v1353, 3
          %v1356 = vshll.u32 %v1133, 16
          %v1358 = vrot.slane %v1356, 4
          %v1359 = vor.u32 %v1355, %v1358
          %v1360 = vrot.slane %v1157, 3
          %v1361 = vrot.slane %v1153, 4
          %v1362 = vor.u32 %v1360, %v1361
          %v1363 = vsel %vm1351, %v1359, %v1362
          %v1364 = vrot.slane %v1165, 3
          %v1365 = vrot.slane %v1161, 4
          %v1366 = vor.u32 %v1364, %v1365
          %v1367 = vsel %vm1351, %v1362, %v1366
          %v1368 = vrot.slane %v1173, 3
          %v1369 = vrot.slane %v1169, 4
          %v1370 = vor.u32 %v1368, %v1369
          %v1371 = vsel %vm1351, %v1366, %v1370
          %v1372 = vrot.slane %v1181, 3
          %v1373 = vrot.slane %v1177, 4
          %v1374 = vor.u32 %v1372, %v1373
          %v1375 = vsel %vm1351, %v1370, %v1374
          %v1376 = vrot.slane %v1189, 3
          %v1377 = vrot.slane %v1185, 4
          %v1378 = vor.u32 %v1376, %v1377
          %v1379 = vsel %vm1351, %v1374, %v1378
          %v1380 = vrot.slane %v1197, 3
          %v1381 = vrot.slane %v1193, 4
          %v1382 = vor.u32 %v1380, %v1381
          %v1383 = vsel %vm1351, %v1378, %v1382
          %v1384 = vrot.slane %v1269, 3
          %v1385 = vrot.slane %v1272, 4
          %v1386 = vor.u32 %v1384, %v1385
          %v1387 = vsel %vm1351, %v1382, %v1386
          %v1389 = vshrl.u32 %v1134, 16
          %v1391 = vrot.slane %v1389, 3
          %v1392 = vshll.u32 %v1134, 16
          %v1394 = vrot.slane %v1392, 4
          %v1395 = vor.u32 %v1391, %v1394
          %v1396 = vsel %vm1351, %v1386, %v1395
          %vm1399 = vcmask 1043456
          %v1400 = vrot.slane %v1135, 4
          %v1401 = vrot.slane %v1122, 4
          %v1402 = vsel %vm1399, %v1400, %v1401
          %v1403 = vrot.slane %v1123, 4
          %v1404 = vsel %vm1399, %v1401, %v1403
          %v1405 = vrot.slane %v1124, 4
          %v1406 = vsel %vm1399, %v1403, %v1405
          %v1407 = vrot.slane %v1125, 4
          %v1408 = vsel %vm1399, %v1405, %v1407
          %v1409 = vrot.slane %v1126, 4
          %v1410 = vsel %vm1399, %v1407, %v1409
          %v1411 = vrot.slane %v1127, 4
          %v1412 = vsel %vm1399, %v1409, %v1411
          %v1413 = vrot.slane %v1131, 4
          %v1414 = vsel %vm1399, %v1411, %v1413
          %v1415 = vrot.slane %v1134, 4
          %v1416 = vsel %vm1399, %v1413, %v1415
          %s1417 = smul.u32 %s847, 144
          %s1418 = smul.addr %s1417, 4
          %s1419 = scalar_lea.vmem [#allocation12], %s1418
          %v1420 = vld [vmem:[%s1419] sm:$0xf]
          %v1421 = vld [vmem:[%s1419 + $0x4] sm:$0xf]
          %v1422 = vld [vmem:[%s1419 + $0x8] sm:$0xf]
          %v1423 = vld [vmem:[%s1419 + $0xc] sm:$0xf]
          %v1424 = vld [vmem:[%s1419 + $0x10] sm:$0xf]
          %v1425 = vld [vmem:[%s1419 + $0x14] sm:$0xf]
          %v1426 = vld [vmem:[%s1419 + $0x18] sm:$0xf]
          %v1427 = vld [vmem:[%s1419 + $0x1c] sm:$0xf]
          %v1428 = vld [vmem:[%s1419 + $0x20] sm:$0xf]
          %v1429 = vld [vmem:[%s1419 + $0x24] sm:$0xf]
          %v1430 = vld [vmem:[%s1419 + $0x28] sm:$0xf]
          %v1431 = vld [vmem:[%s1419 + $0x2c] sm:$0xf]
          %v1432 = vld [vmem:[%s1419 + $0x30] sm:$0xf]
          %v1433 = vld [vmem:[%s1419 + $0x34] sm:$0xf]
          %v1434 = vld [vmem:[%s1419 + $0x38] sm:$0xf]
          %v1435 = vld [vmem:[%s1419 + $0x3c] sm:$0xf]
          %v1436 = vld [vmem:[%s1419 + $0x40] sm:$0xf]
          %v1437 = vld [vmem:[%s1419 + $0x44] sm:$0xf]
          %v1438 = vld [vmem:[%s1419 + $0x48] sm:$0xf]
          %v1439 = vld [vmem:[%s1419 + $0x4c] sm:$0xf]
          %v1440 = vld [vmem:[%s1419 + $0x50] sm:$0xf]
          %v1441 = vld [vmem:[%s1419 + $0x54] sm:$0xf]
          %v1442 = vld [vmem:[%s1419 + $0x58] sm:$0xf]
          %v1443 = vld [vmem:[%s1419 + $0x5c] sm:$0xf]
          %v1444 = vld [vmem:[%s1419 + $0x60] sm:$0xf]
          %v1445 = vld [vmem:[%s1419 + $0x64] sm:$0xf]
          %v1446 = vld [vmem:[%s1419 + $0x68] sm:$0xf]
          %v1447 = vld [vmem:[%s1419 + $0x6c] sm:$0xf]
          %v1448 = vld [vmem:[%s1419 + $0x70] sm:$0xf]
          %v1449 = vld [vmem:[%s1419 + $0x74] sm:$0xf]
          %v1450 = vld [vmem:[%s1419 + $0x78] sm:$0xf]
          %v1451 = vld [vmem:[%s1419 + $0x7c] sm:$0xf]
          %v1452 = vld [vmem:[%s1419 + $0x80] sm:$0xf]
          %v1453 = vld [vmem:[%s1419 + $0x84] sm:$0xf]
          %v1454 = vld [vmem:[%s1419 + $0x88] sm:$0xf]
          %v1455 = vld [vmem:[%s1419 + $0x8c] sm:$0xf]
          %v1456 = vld [vmem:[%s1419 + $0x90] sm:$0xf]
          %v1457 = vld [vmem:[%s1419 + $0x94] sm:$0xf]
          %v1458 = vld [vmem:[%s1419 + $0x98] sm:$0xf]
          %v1459 = vld [vmem:[%s1419 + $0x9c] sm:$0xf]
          %v1460 = vld [vmem:[%s1419 + $0xa0] sm:$0xf]
          %v1461 = vld [vmem:[%s1419 + $0xa4] sm:$0xf]
          %v1462 = vld [vmem:[%s1419 + $0xa8] sm:$0xf]
          %v1463 = vld [vmem:[%s1419 + $0xac] sm:$0xf]
          %v1464 = vld [vmem:[%s1419 + $0xb0] sm:$0xf]
          %v1465 = vld [vmem:[%s1419 + $0xb4] sm:$0xf]
          %v1466 = vld [vmem:[%s1419 + $0xb8] sm:$0xf]
          %v1467 = vld [vmem:[%s1419 + $0xbc] sm:$0xf]
          %v1468 = vld [vmem:[%s1419 + $0xc0] sm:$0xf]
          %v1469 = vld [vmem:[%s1419 + $0xc4] sm:$0xf]
          %v1470 = vld [vmem:[%s1419 + $0xc8] sm:$0xf]
          %v1471 = vld [vmem:[%s1419 + $0xcc] sm:$0xf]
          %v1472 = vld [vmem:[%s1419 + $0xd0] sm:$0xf]
          %v1473 = vld [vmem:[%s1419 + $0xd4] sm:$0xf]
          %v1474 = vld [vmem:[%s1419 + $0xd8] sm:$0xf]
          %v1475 = vld [vmem:[%s1419 + $0xdc] sm:$0xf]
          %v1476 = vld [vmem:[%s1419 + $0xe0] sm:$0xf]
          %v1477 = vld [vmem:[%s1419 + $0xe4] sm:$0xf]
          %v1478 = vld [vmem:[%s1419 + $0xe8] sm:$0xf]
          %v1479 = vld [vmem:[%s1419 + $0xec] sm:$0xf]
          %v1480 = vld [vmem:[%s1419 + $0xf0] sm:$0xf]
          %v1481 = vld [vmem:[%s1419 + $0xf4] sm:$0xf]
          %v1482 = vld [vmem:[%s1419 + $0xf8] sm:$0xf]
          %v1483 = vld [vmem:[%s1419 + $0xfc] sm:$0xf]
          %v1484 = vld [vmem:[%s1419 + $0x100] sm:$0xf]
          %v1485 = vld [vmem:[%s1419 + $0x104] sm:$0xf]
          %v1486 = vld [vmem:[%s1419 + $0x108] sm:$0xf]
          %v1487 = vld [vmem:[%s1419 + $0x10c] sm:$0xf]
          %v1488 = vld [vmem:[%s1419 + $0x110] sm:$0xf]
          %v1489 = vld [vmem:[%s1419 + $0x114] sm:$0xf]
          %v1490 = vld [vmem:[%s1419 + $0x118] sm:$0xf]
          %v1491 = vld [vmem:[%s1419 + $0x11c] sm:$0xf]
          %v1492 = vld [vmem:[%s1419 + $0x120] sm:$0xf]
          %v1493 = vld [vmem:[%s1419 + $0x124] sm:$0xf]
          %v1494 = vld [vmem:[%s1419 + $0x128] sm:$0xf]
          %v1495 = vld [vmem:[%s1419 + $0x12c] sm:$0xf]
          %v1496 = vld [vmem:[%s1419 + $0x130] sm:$0xf]
          %v1497 = vld [vmem:[%s1419 + $0x134] sm:$0xf]
          %v1498 = vld [vmem:[%s1419 + $0x138] sm:$0xf]
          %v1499 = vld [vmem:[%s1419 + $0x13c] sm:$0xf]
          %v1500 = vld [vmem:[%s1419 + $0x140] sm:$0xf]
          %v1501 = vld [vmem:[%s1419 + $0x144] sm:$0xf]
          %v1502 = vld [vmem:[%s1419 + $0x148] sm:$0xf]
          %v1503 = vld [vmem:[%s1419 + $0x14c] sm:$0xf]
          %v1504 = vld [vmem:[%s1419 + $0x150] sm:$0xf]
          %v1505 = vld [vmem:[%s1419 + $0x154] sm:$0xf]
          %v1506 = vld [vmem:[%s1419 + $0x158] sm:$0xf]
          %v1507 = vld [vmem:[%s1419 + $0x15c] sm:$0xf]
          %v1508 = vld [vmem:[%s1419 + $0x160] sm:$0xf]
          %v1509 = vld [vmem:[%s1419 + $0x164] sm:$0xf]
          %v1510 = vld [vmem:[%s1419 + $0x168] sm:$0xf]
          %v1511 = vld [vmem:[%s1419 + $0x16c] sm:$0xf]
          %v1512 = vld [vmem:[%s1419 + $0x170] sm:$0xf]
          %v1513 = vld [vmem:[%s1419 + $0x174] sm:$0xf]
          %v1514 = vld [vmem:[%s1419 + $0x178] sm:$0xf]
          %v1515 = vld [vmem:[%s1419 + $0x17c] sm:$0xf]
          %v1516 = vld [vmem:[%s1419 + $0x180] sm:$0xf]
          %v1517 = vld [vmem:[%s1419 + $0x184] sm:$0xf]
          %v1518 = vld [vmem:[%s1419 + $0x188] sm:$0xf]
          %v1519 = vld [vmem:[%s1419 + $0x18c] sm:$0xf]
          %v1520 = vld [vmem:[%s1419 + $0x190] sm:$0xf]
          %v1521 = vld [vmem:[%s1419 + $0x194] sm:$0xf]
          %v1522 = vld [vmem:[%s1419 + $0x198] sm:$0xf]
          %v1523 = vld [vmem:[%s1419 + $0x19c] sm:$0xf]
          %v1524 = vld [vmem:[%s1419 + $0x1a0] sm:$0xf]
          %v1525 = vld [vmem:[%s1419 + $0x1a4] sm:$0xf]
          %v1526 = vld [vmem:[%s1419 + $0x1a8] sm:$0xf]
          %v1527 = vld [vmem:[%s1419 + $0x1ac] sm:$0xf]
          %v1528 = vld [vmem:[%s1419 + $0x1b0] sm:$0xf]
          %v1529 = vld [vmem:[%s1419 + $0x1b4] sm:$0xf]
          %v1530 = vld [vmem:[%s1419 + $0x1b8] sm:$0xf]
          %v1531 = vld [vmem:[%s1419 + $0x1bc] sm:$0xf]
          %v1532 = vld [vmem:[%s1419 + $0x1c0] sm:$0xf]
          %v1533 = vld [vmem:[%s1419 + $0x1c4] sm:$0xf]
          %v1534 = vld [vmem:[%s1419 + $0x1c8] sm:$0xf]
          %v1535 = vld [vmem:[%s1419 + $0x1cc] sm:$0xf]
          %v1536 = vld [vmem:[%s1419 + $0x1d0] sm:$0xf]
          %v1537 = vld [vmem:[%s1419 + $0x1d4] sm:$0xf]
          %v1538 = vld [vmem:[%s1419 + $0x1d8] sm:$0xf]
          %v1539 = vld [vmem:[%s1419 + $0x1dc] sm:$0xf]
          %v1540 = vld [vmem:[%s1419 + $0x1e0] sm:$0xf]
          %v1541 = vld [vmem:[%s1419 + $0x1e4] sm:$0xf]
          %v1542 = vld [vmem:[%s1419 + $0x1e8] sm:$0xf]
          %v1543 = vld [vmem:[%s1419 + $0x1ec] sm:$0xf]
          %v1544 = vld [vmem:[%s1419 + $0x1f0] sm:$0xf]
          %v1545 = vld [vmem:[%s1419 + $0x1f4] sm:$0xf]
          %v1546 = vld [vmem:[%s1419 + $0x1f8] sm:$0xf]
          %v1547 = vld [vmem:[%s1419 + $0x1fc] sm:$0xf]
          %v1548 = vld [vmem:[%s1419 + $0x200] sm:$0xf]
          %v1549 = vld [vmem:[%s1419 + $0x204] sm:$0xf]
          %v1550 = vld [vmem:[%s1419 + $0x208] sm:$0xf]
          %v1551 = vld [vmem:[%s1419 + $0x20c] sm:$0xf]
          %v1552 = vld [vmem:[%s1419 + $0x210] sm:$0xf]
          %v1553 = vld [vmem:[%s1419 + $0x214] sm:$0xf]
          %v1554 = vld [vmem:[%s1419 + $0x218] sm:$0xf]
          %v1555 = vld [vmem:[%s1419 + $0x21c] sm:$0xf]
          %v1556 = vld [vmem:[%s1419 + $0x220] sm:$0xf]
          %v1557 = vld [vmem:[%s1419 + $0x224] sm:$0xf]
          %v1558 = vld [vmem:[%s1419 + $0x228] sm:$0xf]
          %v1559 = vld [vmem:[%s1419 + $0x22c] sm:$0xf]
          %v1560 = vld [vmem:[%s1419 + $0x230] sm:$0xf]
          %v1561 = vld [vmem:[%s1419 + $0x234] sm:$0xf]
          %v1562 = vld [vmem:[%s1419 + $0x238] sm:$0xf]
          %v1563 = vld [vmem:[%s1419 + $0x23c] sm:$0xf]
          %s1564 = scalar_lea.vmem [#allocation14], %s847
          %v1565 = vld [vmem:[%s1564] sm:$0x1]
          %v1567 = vlaneseq
          %v1568 = vshrl.u32 %v1567, 7
          %v1569 = vsub.s32 0, %v1568
          %v1570 = vrot.slane %v1565, %v1569
          %vm1574 = vcmask 1041408
          %v1575 = vrot.slane %v1120, 6
          %v1576 = vrot.slane %v1121, 6
          %v1577 = vsel %vm1574, %v1575, %v1576
          %v1578 = vrot.slane %v1148, 6
          %v1579 = vrot.slane %v1156, 6
          %v1580 = vsel %vm1574, %v1578, %v1579
          %v1581 = vrot.slane %v1220, 6
          %v1582 = vrot.slane %v1222, 6
          %v1583 = vsel %vm1574, %v1581, %v1582
          %v1584 = vrot.slane %v1243, 6
          %v1585 = vrot.slane %v1247, 6
          %v1586 = vsel %vm1574, %v1584, %v1585
          %v1587 = vrot.slane %v1279, 6
          %v1588 = vrot.slane %v1281, 6
          %v1589 = vsel %vm1574, %v1587, %v1588
          %v1590 = vrot.slane %v1297, 6
          %v1591 = vrot.slane %v1301, 6
          %v1592 = vsel %vm1574, %v1590, %v1591
          %v1593 = vrot.slane %v1334, 6
          %v1594 = vrot.slane %v1336, 6
          %v1595 = vsel %vm1574, %v1593, %v1594
          %v1596 = vrot.slane %v1359, 6
          %v1597 = vrot.slane %v1363, 6
          %v1598 = vsel %vm1574, %v1596, %v1597
          %v1599 = vrot.slane %v1400, 6
          %v1600 = vrot.slane %v1402, 6
          %v1601 = vsel %vm1574, %v1599, %v1600
          %v1602 = vrot.slane %v1122, 6
          %v1603 = vsel %vm1574, %v1576, %v1602
          %v1604 = vrot.slane %v1164, 6
          %v1605 = vsel %vm1574, %v1579, %v1604
          %v1606 = vrot.slane %v1224, 6
          %v1607 = vsel %vm1574, %v1582, %v1606
          %v1608 = vrot.slane %v1251, 6
          %v1609 = vsel %vm1574, %v1585, %v1608
          %v1610 = vrot.slane %v1283, 6
          %v1611 = vsel %vm1574, %v1588, %v1610
          %v1612 = vrot.slane %v1305, 6
          %v1613 = vsel %vm1574, %v1591, %v1612
          %v1614 = vrot.slane %v1338, 6
          %v1615 = vsel %vm1574, %v1594, %v1614
          %v1616 = vrot.slane %v1367, 6
          %v1617 = vsel %vm1574, %v1597, %v1616
          %v1618 = vrot.slane %v1404, 6
          %v1619 = vsel %vm1574, %v1600, %v1618
          %v1620 = vrot.slane %v1123, 6
          %v1621 = vsel %vm1574, %v1602, %v1620
          %v1622 = vrot.slane %v1172, 6
          %v1623 = vsel %vm1574, %v1604, %v1622
          %v1624 = vrot.slane %v1226, 6
          %v1625 = vsel %vm1574, %v1606, %v1624
          %v1626 = vrot.slane %v1255, 6
          %v1627 = vsel %vm1574, %v1608, %v1626
          %v1628 = vrot.slane %v1285, 6
          %v1629 = vsel %vm1574, %v1610, %v1628
          %v1630 = vrot.slane %v1309, 6
          %v1631 = vsel %vm1574, %v1612, %v1630
          %v1632 = vrot.slane %v1340, 6
          %v1633 = vsel %vm1574, %v1614, %v1632
          %v1634 = vrot.slane %v1371, 6
          %v1635 = vsel %vm1574, %v1616, %v1634
          %v1636 = vrot.slane %v1406, 6
          %v1637 = vsel %vm1574, %v1618, %v1636
          %v1638 = vrot.slane %v1124, 6
          %v1639 = vsel %vm1574, %v1620, %v1638
          %v1640 = vrot.slane %v1180, 6
          %v1641 = vsel %vm1574, %v1622, %v1640
          %v1642 = vrot.slane %v1228, 6
          %v1643 = vsel %vm1574, %v1624, %v1642
          %v1644 = vrot.slane %v1259, 6
          %v1645 = vsel %vm1574, %v1626, %v1644
          %v1646 = vrot.slane %v1287, 6
          %v1647 = vsel %vm1574, %v1628, %v1646
          %v1648 = vrot.slane %v1313, 6
          %v1649 = vsel %vm1574, %v1630, %v1648
          %v1650 = vrot.slane %v1342, 6
          %v1651 = vsel %vm1574, %v1632, %v1650
          %v1652 = vrot.slane %v1375, 6
          %v1653 = vsel %vm1574, %v1634, %v1652
          %v1654 = vrot.slane %v1408, 6
          %v1655 = vsel %vm1574, %v1636, %v1654
          %v1656 = vrot.slane %v1125, 6
          %v1657 = vsel %vm1574, %v1638, %v1656
          %v1658 = vrot.slane %v1188, 6
          %v1659 = vsel %vm1574, %v1640, %v1658
          %v1660 = vrot.slane %v1230, 6
          %v1661 = vsel %vm1574, %v1642, %v1660
          %v1662 = vrot.slane %v1263, 6
          %v1663 = vsel %vm1574, %v1644, %v1662
          %v1664 = vrot.slane %v1289, 6
          %v1665 = vsel %vm1574, %v1646, %v1664
          %v1666 = vrot.slane %v1317, 6
          %v1667 = vsel %vm1574, %v1648, %v1666
          %v1668 = vrot.slane %v1344, 6
          %v1669 = vsel %vm1574, %v1650, %v1668
          %v1670 = vrot.slane %v1379, 6
          %v1671 = vsel %vm1574, %v1652, %v1670
          %v1672 = vrot.slane %v1410, 6
          %v1673 = vsel %vm1574, %v1654, %v1672
          %v1674 = vrot.slane %v1126, 6
          %v1675 = vsel %vm1574, %v1656, %v1674
          %v1676 = vrot.slane %v1196, 6
          %v1677 = vsel %vm1574, %v1658, %v1676
          %v1678 = vrot.slane %v1232, 6
          %v1679 = vsel %vm1574, %v1660, %v1678
          %v1680 = vrot.slane %v1267, 6
          %v1681 = vsel %vm1574, %v1662, %v1680
          %v1682 = vrot.slane %v1291, 6
          %v1683 = vsel %vm1574, %v1664, %v1682
          %v1684 = vrot.slane %v1321, 6
          %v1685 = vsel %vm1574, %v1666, %v1684
          %v1686 = vrot.slane %v1346, 6
          %v1687 = vsel %vm1574, %v1668, %v1686
          %v1688 = vrot.slane %v1383, 6
          %v1689 = vsel %vm1574, %v1670, %v1688
          %v1690 = vrot.slane %v1412, 6
          %v1691 = vsel %vm1574, %v1672, %v1690
          %v1692 = vrot.slane %v1127, 6
          %v1693 = vsel %vm1574, %v1674, %v1692
          %v1694 = vrot.slane %v1204, 6
          %v1695 = vsel %vm1574, %v1676, %v1694
          %v1696 = vrot.slane %v1234, 6
          %v1697 = vsel %vm1574, %v1678, %v1696
          %v1698 = vrot.slane %v1276, 6
          %v1699 = vsel %vm1574, %v1680, %v1698
          %v1700 = vrot.slane %v1293, 6
          %v1701 = vsel %vm1574, %v1682, %v1700
          %v1702 = vrot.slane %v1325, 6
          %v1703 = vsel %vm1574, %v1684, %v1702
          %v1704 = vrot.slane %v1348, 6
          %v1705 = vsel %vm1574, %v1686, %v1704
          %v1706 = vrot.slane %v1387, 6
          %v1707 = vsel %vm1574, %v1688, %v1706
          %v1708 = vrot.slane %v1414, 6
          %v1709 = vsel %vm1574, %v1690, %v1708
          %v1710 = vrot.slane %v1128, 6
          %v1711 = vsel %vm1574, %v1692, %v1710
          %v1712 = vrot.slane %v1207, 6
          %v1713 = vsel %vm1574, %v1694, %v1712
          %v1714 = vrot.slane %v1233, 6
          %v1715 = vsel %vm1574, %v1696, %v1714
          %v1716 = vrot.slane %v1275, 6
          %v1717 = vsel %vm1574, %v1698, %v1716
          %v1718 = vrot.slane %v1292, 6
          %v1719 = vsel %vm1574, %v1700, %v1718
          %v1720 = vrot.slane %v1330, 6
          %v1721 = vsel %vm1574, %v1702, %v1720
          %v1722 = vrot.slane %v1350, 6
          %v1723 = vsel %vm1574, %v1704, %v1722
          %v1724 = vrot.slane %v1396, 6
          %v1725 = vsel %vm1574, %v1706, %v1724
          %v1726 = vrot.slane %v1416, 6
          %v1727 = vsel %vm1574, %v1708, %v1726
          %v1944 = vunpack.c.l.b16 %v1420
          %v1945 = vunpack.c.l.b16 %v1421
          %v1946 = vunpack.c.l.b16 %v1422
          %v1947 = vunpack.c.l.b16 %v1423
          %v1948 = vunpack.c.l.b16 %v1424
          %v1949 = vunpack.c.l.b16 %v1425
          %v1950 = vunpack.c.l.b16 %v1426
          %v1951 = vunpack.c.l.b16 %v1427
          %v1952 = vunpack.c.l.b16 %v1428
          %v1953 = vunpack.c.l.b16 %v1429
          %v1954 = vunpack.c.l.b16 %v1430
          %v1955 = vunpack.c.l.b16 %v1431
          %v1956 = vunpack.c.l.b16 %v1432
          %v1957 = vunpack.c.l.b16 %v1433
          %v1958 = vunpack.c.l.b16 %v1434
          %v1959 = vunpack.c.l.b16 %v1435
          %v1960 = vunpack.c.l.b16 %v1436
          %v1961 = vunpack.c.l.b16 %v1437
          %v1962 = vunpack.c.l.b16 %v1438
          %v1963 = vunpack.c.l.b16 %v1439
          %v1964 = vunpack.c.l.b16 %v1440
          %v1965 = vunpack.c.l.b16 %v1441
          %v1966 = vunpack.c.l.b16 %v1442
          %v1967 = vunpack.c.l.b16 %v1443
          %v1968 = vunpack.c.l.b16 %v1444
          %v1969 = vunpack.c.l.b16 %v1445
          %v1970 = vunpack.c.l.b16 %v1446
          %v1971 = vunpack.c.l.b16 %v1447
          %v1972 = vunpack.c.l.b16 %v1448
          %v1973 = vunpack.c.l.b16 %v1449
          %v1974 = vunpack.c.l.b16 %v1450
          %v1975 = vunpack.c.l.b16 %v1451
          %v1976 = vunpack.c.l.b16 %v1452
          %v1977 = vunpack.c.l.b16 %v1453
          %v1978 = vunpack.c.l.b16 %v1454
          %v1979 = vunpack.c.l.b16 %v1455
          %v1980 = vunpack.c.l.b16 %v1456
          %v1981 = vunpack.c.l.b16 %v1457
          %v1982 = vunpack.c.l.b16 %v1458
          %v1983 = vunpack.c.l.b16 %v1459
          %v1984 = vunpack.c.l.b16 %v1460
          %v1985 = vunpack.c.l.b16 %v1461
          %v1986 = vunpack.c.l.b16 %v1462
          %v1987 = vunpack.c.l.b16 %v1463
          %v1988 = vunpack.c.l.b16 %v1464
          %v1989 = vunpack.c.l.b16 %v1465
          %v1990 = vunpack.c.l.b16 %v1466
          %v1991 = vunpack.c.l.b16 %v1467
          %v1992 = vunpack.c.l.b16 %v1468
          %v1993 = vunpack.c.l.b16 %v1469
          %v1994 = vunpack.c.l.b16 %v1470
          %v1995 = vunpack.c.l.b16 %v1471
          %v1996 = vunpack.c.l.b16 %v1472
          %v1997 = vunpack.c.l.b16 %v1473
          %v1998 = vunpack.c.l.b16 %v1474
          %v1999 = vunpack.c.l.b16 %v1475
          %v2000 = vunpack.c.l.b16 %v1476
          %v2001 = vunpack.c.l.b16 %v1477
          %v2002 = vunpack.c.l.b16 %v1478
          %v2003 = vunpack.c.l.b16 %v1479
          %v2004 = vunpack.c.l.b16 %v1480
          %v2005 = vunpack.c.l.b16 %v1481
          %v2006 = vunpack.c.l.b16 %v1482
          %v2007 = vunpack.c.l.b16 %v1483
          %v2008 = vunpack.c.l.b16 %v1484
          %v2009 = vunpack.c.l.b16 %v1485
          %v2010 = vunpack.c.l.b16 %v1486
          %v2011 = vunpack.c.l.b16 %v1487
          %v2012 = vunpack.c.l.b16 %v1488
          %v2013 = vunpack.c.l.b16 %v1489
          %v2014 = vunpack.c.l.b16 %v1490
          %v2015 = vunpack.c.l.b16 %v1491
          %v2016 = vunpack.c.l.b16 %v1492
          %v2017 = vunpack.c.l.b16 %v1493
          %v2018 = vunpack.c.l.b16 %v1494
          %v2019 = vunpack.c.l.b16 %v1495
          %v2020 = vunpack.c.l.b16 %v1496
          %v2021 = vunpack.c.l.b16 %v1497
          %v2022 = vunpack.c.l.b16 %v1498
          %v2023 = vunpack.c.l.b16 %v1499
          %v2024 = vunpack.c.l.b16 %v1500
          %v2025 = vunpack.c.l.b16 %v1501
          %v2026 = vunpack.c.l.b16 %v1502
          %v2027 = vunpack.c.l.b16 %v1503
          %v2028 = vunpack.c.l.b16 %v1504
          %v2029 = vunpack.c.l.b16 %v1505
          %v2030 = vunpack.c.l.b16 %v1506
          %v2031 = vunpack.c.l.b16 %v1507
          %v2032 = vunpack.c.l.b16 %v1508
          %v2033 = vunpack.c.l.b16 %v1509
          %v2034 = vunpack.c.l.b16 %v1510
          %v2035 = vunpack.c.l.b16 %v1511
          %v2036 = vunpack.c.l.b16 %v1512
          %v2037 = vunpack.c.l.b16 %v1513
          %v2038 = vunpack.c.l.b16 %v1514
          %v2039 = vunpack.c.l.b16 %v1515
          %v2040 = vunpack.c.l.b16 %v1516
          %v2041 = vunpack.c.l.b16 %v1517
          %v2042 = vunpack.c.l.b16 %v1518
          %v2043 = vunpack.c.l.b16 %v1519
          %v2044 = vunpack.c.l.b16 %v1520
          %v2045 = vunpack.c.l.b16 %v1521
          %v2046 = vunpack.c.l.b16 %v1522
          %v2047 = vunpack.c.l.b16 %v1523
          %v2048 = vunpack.c.l.b16 %v1524
          %v2049 = vunpack.c.l.b16 %v1525
          %v2050 = vunpack.c.l.b16 %v1526
          %v2051 = vunpack.c.l.b16 %v1527
          %v2052 = vunpack.c.l.b16 %v1528
          %v2053 = vunpack.c.l.b16 %v1529
          %v2054 = vunpack.c.l.b16 %v1530
          %v2055 = vunpack.c.l.b16 %v1531
          %v2056 = vunpack.c.l.b16 %v1532
          %v2057 = vunpack.c.l.b16 %v1533
          %v2058 = vunpack.c.l.b16 %v1534
          %v2059 = vunpack.c.l.b16 %v1535
          %v2060 = vunpack.c.l.b16 %v1536
          %v2061 = vunpack.c.l.b16 %v1537
          %v2062 = vunpack.c.l.b16 %v1538
          %v2063 = vunpack.c.l.b16 %v1539
          %v2064 = vunpack.c.l.b16 %v1540
          %v2065 = vunpack.c.l.b16 %v1541
          %v2066 = vunpack.c.l.b16 %v1542
          %v2067 = vunpack.c.l.b16 %v1543
          %v2068 = vunpack.c.l.b16 %v1544
          %v2069 = vunpack.c.l.b16 %v1545
          %v2070 = vunpack.c.l.b16 %v1546
          %v2071 = vunpack.c.l.b16 %v1547
          %v2072 = vunpack.c.l.b16 %v1548
          %v2073 = vunpack.c.l.b16 %v1549
          %v2074 = vunpack.c.l.b16 %v1550
          %v2075 = vunpack.c.l.b16 %v1551
          %v2076 = vunpack.c.l.b16 %v1552
          %v2077 = vunpack.c.l.b16 %v1553
          %v2078 = vunpack.c.l.b16 %v1554
          %v2079 = vunpack.c.l.b16 %v1555
          %v2080 = vunpack.c.l.b16 %v1556
          %v2081 = vunpack.c.l.b16 %v1557
          %v2082 = vunpack.c.l.b16 %v1558
          %v2083 = vunpack.c.l.b16 %v1559
          %v2084 = vunpack.c.l.b16 %v1560
          %v2085 = vunpack.c.l.b16 %v1561
          %v2086 = vunpack.c.l.b16 %v1562
          %v2087 = vunpack.c.l.b16 %v1563
          %v2088 = vpack.c.b16 %v1945, %v1944
          %v2089 = vpack.c.b16 %v1947, %v1946
          %v2090 = vpack.c.b16 %v1949, %v1948
          %v2091 = vpack.c.b16 %v1951, %v1950
          %v2092 = vpack.c.b16 %v1953, %v1952
          %v2093 = vpack.c.b16 %v1955, %v1954
          %v2094 = vpack.c.b16 %v1957, %v1956
          %v2095 = vpack.c.b16 %v1959, %v1958
          %v2096 = vpack.c.b16 %v1961, %v1960
          %v2097 = vpack.c.b16 %v1963, %v1962
          %v2098 = vpack.c.b16 %v1965, %v1964
          %v2099 = vpack.c.b16 %v1967, %v1966
          %v2100 = vpack.c.b16 %v1969, %v1968
          %v2101 = vpack.c.b16 %v1971, %v1970
          %v2102 = vpack.c.b16 %v1973, %v1972
          %v2103 = vpack.c.b16 %v1975, %v1974
          %v2104 = vpack.c.b16 %v1977, %v1976
          %v2105 = vpack.c.b16 %v1979, %v1978
          %v2106 = vpack.c.b16 %v1981, %v1980
          %v2107 = vpack.c.b16 %v1983, %v1982
          %v2108 = vpack.c.b16 %v1985, %v1984
          %v2109 = vpack.c.b16 %v1987, %v1986
          %v2110 = vpack.c.b16 %v1989, %v1988
          %v2111 = vpack.c.b16 %v1991, %v1990
          %v2112 = vpack.c.b16 %v1993, %v1992
          %v2113 = vpack.c.b16 %v1995, %v1994
          %v2114 = vpack.c.b16 %v1997, %v1996
          %v2115 = vpack.c.b16 %v1999, %v1998
          %v2116 = vpack.c.b16 %v2001, %v2000
          %v2117 = vpack.c.b16 %v2003, %v2002
          %v2118 = vpack.c.b16 %v2005, %v2004
          %v2119 = vpack.c.b16 %v2007, %v2006
          %v2120 = vpack.c.b16 %v2009, %v2008
          %v2121 = vpack.c.b16 %v2011, %v2010
          %v2122 = vpack.c.b16 %v2013, %v2012
          %v2123 = vpack.c.b16 %v2015, %v2014
          %v2124 = vpack.c.b16 %v2017, %v2016
          %v2125 = vpack.c.b16 %v2019, %v2018
          %v2126 = vpack.c.b16 %v2021, %v2020
          %v2127 = vpack.c.b16 %v2023, %v2022
          %v2128 = vpack.c.b16 %v2025, %v2024
          %v2129 = vpack.c.b16 %v2027, %v2026
          %v2130 = vpack.c.b16 %v2029, %v2028
          %v2131 = vpack.c.b16 %v2031, %v2030
          %v2132 = vpack.c.b16 %v2033, %v2032
          %v2133 = vpack.c.b16 %v2035, %v2034
          %v2134 = vpack.c.b16 %v2037, %v2036
          %v2135 = vpack.c.b16 %v2039, %v2038
          %v2136 = vpack.c.b16 %v2041, %v2040
          %v2137 = vpack.c.b16 %v2043, %v2042
          %v2138 = vpack.c.b16 %v2045, %v2044
          %v2139 = vpack.c.b16 %v2047, %v2046
          %v2140 = vpack.c.b16 %v2049, %v2048
          %v2141 = vpack.c.b16 %v2051, %v2050
          %v2142 = vpack.c.b16 %v2053, %v2052
          %v2143 = vpack.c.b16 %v2055, %v2054
          %v2144 = vpack.c.b16 %v2057, %v2056
          %v2145 = vpack.c.b16 %v2059, %v2058
          %v2146 = vpack.c.b16 %v2061, %v2060
          %v2147 = vpack.c.b16 %v2063, %v2062
          %v2148 = vpack.c.b16 %v2065, %v2064
          %v2149 = vpack.c.b16 %v2067, %v2066
          %v2150 = vpack.c.b16 %v2069, %v2068
          %v2151 = vpack.c.b16 %v2071, %v2070
          %v2152 = vpack.c.b16 %v2073, %v2072
          %v2153 = vpack.c.b16 %v2075, %v2074
          %v2154 = vpack.c.b16 %v2077, %v2076
          %v2155 = vpack.c.b16 %v2079, %v2078
          %v2156 = vpack.c.b16 %v2081, %v2080
          %v2157 = vpack.c.b16 %v2083, %v2082
          %v2158 = vpack.c.b16 %v2085, %v2084
          %v2159 = vpack.c.b16 %v2087, %v2086
          %2232 = vmatprep.subr.bf16.mxu0 0
          %2233 = vmatpush1.bf16.msra.mxu0 %v2088
          %2234 = vmatprep.subr.bf16.mxu0 0
          %2235 = vmatpush1.bf16.msra.mxu0 %v2089
          %2236 = vmatprep.subr.bf16.mxu0 0
          %2237 = vmatpush1.bf16.msra.mxu0 %v2090
          %2238 = vmatprep.subr.bf16.mxu0 0
          %2239 = vmatpush1.bf16.msra.mxu0 %v2091
          %2240 = vmatprep.subr.bf16.mxu0 0
          %2241 = vmatpush1.bf16.msra.mxu0 %v2092
          %2242 = vmatprep.subr.bf16.mxu0 0
          %2243 = vmatpush1.bf16.msra.mxu0 %v2093
          %2244 = vmatprep.subr.bf16.mxu0 0
          %2245 = vmatpush1.bf16.msra.mxu0 %v2094
          %2246 = vmatprep.subr.bf16.mxu0 0
          %2247 = vmatpush1.bf16.msra.mxu0 %v2095
          %2248 = vmatprep.subr.bf16.mxu0 0
          %2249 = vmatpush1.bf16.msra.mxu0 %v2096
          %2250 = vmatprep.subr.bf16.mxu0 0
          %2251 = vmatpush1.bf16.msra.mxu0 %v2097
          %2252 = vmatprep.subr.bf16.mxu0 0
          %2253 = vmatpush1.bf16.msra.mxu0 %v2098
          %2254 = vmatprep.subr.bf16.mxu0 0
          %2255 = vmatpush1.bf16.msra.mxu0 %v2099
          %2256 = vmatprep.subr.bf16.mxu0 0
          %2257 = vmatpush1.bf16.msra.mxu0 %v2100
          %2258 = vmatprep.subr.bf16.mxu0 0
          %2259 = vmatpush1.bf16.msra.mxu0 %v2101
          %2260 = vmatprep.subr.bf16.mxu0 0
          %2261 = vmatpush1.bf16.msra.mxu0 %v2102
          %2262 = vmatprep.subr.bf16.mxu0 0
          %2263 = vmatpush1.bf16.msra.mxu0 %v2103
          %2264 = vmatprep.mubr.bf16.mxu0 %v1580
          %2265 = vmatmul.mubr.bf16.gmra.mrb[0].mxu0 %v1577
          %v2266 = vpop.f32.mrb[0].mxu0
          %v2267 = vadd.f32 %v1570, %v2266
          %v2268 = vpop.f32.mrb[0].mxu0
          %v2269 = vpop.f32.mrb[0].mxu0
          %v2270 = vadd.f32 %v1570, %v2269
          %v2271 = vpop.f32.mrb[0].mxu0
          %2272 = vmatprep.mubr.bf16.mxu0 %v1605
          %2273 = vmatmul.mubr.bf16.gmra.mrb[0].mxu0 %v1603
          %v2274 = vpop.f32.mrb[0].mxu0
          %v2275 = vadd.f32 %v1570, %v2274
          %v2276 = vpop.f32.mrb[0].mxu0
          %v2277 = vpop.f32.mrb[0].mxu0
          %v2278 = vadd.f32 %v1570, %v2277
          %v2279 = vpop.f32.mrb[0].mxu0
          %2280 = vmatprep.mubr.bf16.mxu0 %v1623
          %2281 = vmatmul.mubr.bf16.gmra.mrb[0].mxu0 %v1621
          %v2282 = vpop.f32.mrb[0].mxu0
          %v2283 = vadd.f32 %v1570, %v2282
          %v2284 = vpop.f32.mrb[0].mxu0
          %v2285 = vpop.f32.mrb[0].mxu0
          %v2286 = vadd.f32 %v1570, %v2285
          %v2287 = vpop.f32.mrb[0].mxu0
          %2288 = vmatprep.mubr.bf16.mxu0 %v1641
          %2289 = vmatmul.mubr.bf16.gmra.mrb[0].mxu0 %v1639
          %v2290 = vpop.f32.mrb[0].mxu0
          %v2291 = vadd.f32 %v1570, %v2290
          %v2292 = vpop.f32.mrb[0].mxu0
          %v2293 = vpop.f32.mrb[0].mxu0
          %v2294 = vadd.f32 %v1570, %v2293
          %v2295 = vpop.f32.mrb[0].mxu0
          %2296 = vmatprep.mubr.bf16.mxu0 %v1659
          %2297 = vmatmul.mubr.bf16.gmra.mrb[0].mxu0 %v1657
          %v2298 = vpop.f32.mrb[0].mxu0
          %v2299 = vadd.f32 %v1570, %v2298
          %v2300 = vpop.f32.mrb[0].mxu0
          %v2301 = vpop.f32.mrb[0].mxu0
          %v2302 = vadd.f32 %v1570, %v2301
          %v2303 = vpop.f32.mrb[0].mxu0
          %2304 = vmatprep.mubr.bf16.mxu0 %v1677
          %2305 = vmatmul.mubr.bf16.gmra.mrb[0].mxu0 %v1675
          %v2306 = vpop.f32.mrb[0].mxu0
          %v2307 = vadd.f32 %v1570, %v2306
          %v2308 = vpop.f32.mrb[0].mxu0
          %v2309 = vpop.f32.mrb[0].mxu0
          %v2310 = vadd.f32 %v1570, %v2309
          %v2311 = vpop.f32.mrb[0].mxu0
          %2312 = vmatprep.mubr.bf16.mxu0 %v1695
          %2313 = vmatmul.mubr.bf16.gmra.mrb[0].mxu0 %v1693
          %v2314 = vpop.f32.mrb[0].mxu0
          %v2315 = vadd.f32 %v1570, %v2314
          %v2316 = vpop.f32.mrb[0].mxu0
          %v2317 = vpop.f32.mrb[0].mxu0
          %v2318 = vadd.f32 %v1570, %v2317
          %v2319 = vpop.f32.mrb[0].mxu0
          %2320 = vmatprep.mubr.bf16.mxu0 %v1713
          %2321 = vmatmul.mubr.bf16.gmra.mrb[0].mxu0 %v1711
          %v2322 = vpop.f32.mrb[0].mxu0
          %v2323 = vadd.f32 %v1570, %v2322
          %v2324 = vpop.f32.mrb[0].mxu0
          %v2325 = vpop.f32.mrb[0].mxu0
          %v2326 = vadd.f32 %v1570, %v2325
          %v2327 = vpop.f32.mrb[0].mxu0
          %2328 = vdwg.mxu0
          %2329 = vmatprep.subr.bf16.mxu0 0
          %2330 = vmatpush1.bf16.msra.mxu0 %v2104
          %2331 = vmatprep.subr.bf16.mxu0 0
          %2332 = vmatpush1.bf16.msra.mxu0 %v2105
          %2333 = vmatprep.subr.bf16.mxu0 0
          %2334 = vmatpush1.bf16.msra.mxu0 %v2106
          %2335 = vmatprep.subr.bf16.mxu0 0
          %2336 = vmatpush1.bf16.msra.mxu0 %v2107
          %2337 = vmatprep.subr.bf16.mxu0 0
          %2338 = vmatpush1.bf16.msra.mxu0 %v2108
          %2339 = vmatprep.subr.bf16.mxu0 0
          %2340 = vmatpush1.bf16.msra.mxu0 %v2109
          %2341 = vmatprep.subr.bf16.mxu0 0
          %2342 = vmatpush1.bf16.msra.mxu0 %v2110
          %2343 = vmatprep.subr.bf16.mxu0 0
          %2344 = vmatpush1.bf16.msra.mxu0 %v2111
          %2345 = vmatprep.subr.bf16.mxu0 0
          %2346 = vmatpush1.bf16.msra.mxu0 %v2112
          %2347 = vmatprep.subr.bf16.mxu0 0
          %2348 = vmatpush1.bf16.msra.mxu0 %v2113
          %2349 = vmatprep.subr.bf16.mxu0 0
          %2350 = vmatpush1.bf16.msra.mxu0 %v2114
          %2351 = vmatprep.subr.bf16.mxu0 0
          %2352 = vmatpush1.bf16.msra.mxu0 %v2115
          %2353 = vmatprep.subr.bf16.mxu0 0
          %2354 = vmatpush1.bf16.msra.mxu0 %v2116
          %2355 = vmatprep.subr.bf16.mxu0 0
          %2356 = vmatpush1.bf16.msra.mxu0 %v2117
          %2357 = vmatprep.subr.bf16.mxu0 0
          %2358 = vmatpush1.bf16.msra.mxu0 %v2118
          %2359 = vmatprep.subr.bf16.mxu0 0
          %2360 = vmatpush1.bf16.msra.mxu0 %v2119
          %2361 = vmatprep.mubr.bf16.mxu0 %v1586
          %2362 = vmatmul.mubr.bf16.gmra.mrb[0].mxu0 %v1583
          %v2363 = vpop.f32.mrb[0].mxu0
          %v2364 = vadd.f32 %v2267, %v2363
          %v2365 = vpop.f32.mrb[0].mxu0
          %v2366 = vpop.f32.mrb[0].mxu0
          %v2367 = vadd.f32 %v2270, %v2366
          %v2368 = vpop.f32.mrb[0].mxu0
          %2369 = vmatprep.mubr.bf16.mxu0 %v1609
          %2370 = vmatmul.mubr.bf16.gmra.mrb[0].mxu0 %v1607
          %v2371 = vpop.f32.mrb[0].mxu0
          %v2372 = vadd.f32 %v2275, %v2371
          %v2373 = vpop.f32.mrb[0].mxu0
          %v2374 = vpop.f32.mrb[0].mxu0
          %v2375 = vadd.f32 %v2278, %v2374
          %v2376 = vpop.f32.mrb[0].mxu0
          %2377 = vmatprep.mubr.bf16.mxu0 %v1627
          %2378 = vmatmul.mubr.bf16.gmra.mrb[0].mxu0 %v1625
          %v2379 = vpop.f32.mrb[0].mxu0
          %v2380 = vadd.f32 %v2283, %v2379
          %v2381 = vpop.f32.mrb[0].mxu0
          %v2382 = vpop.f32.mrb[0].mxu0
          %v2383 = vadd.f32 %v2286, %v2382
          %v2384 = vpop.f32.mrb[0].mxu0
          %2385 = vmatprep.mubr.bf16.mxu0 %v1645
          %2386 = vmatmul.mubr.bf16.gmra.mrb[0].mxu0 %v1643
          %v2387 = vpop.f32.mrb[0].mxu0
          %v2388 = vadd.f32 %v2291, %v2387
          %v2389 = vpop.f32.mrb[0].mxu0
          %v2390 = vpop.f32.mrb[0].mxu0
          %v2391 = vadd.f32 %v2294, %v2390
          %v2392 = vpop.f32.mrb[0].mxu0
          %2393 = vmatprep.mubr.bf16.mxu0 %v1663
          %2394 = vmatmul.mubr.bf16.gmra.mrb[0].mxu0 %v1661
          %v2395 = vpop.f32.mrb[0].mxu0
          %v2396 = vadd.f32 %v2299, %v2395
          %v2397 = vpop.f32.mrb[0].mxu0
          %v2398 = vpop.f32.mrb[0].mxu0
          %v2399 = vadd.f32 %v2302, %v2398
          %v2400 = vpop.f32.mrb[0].mxu0
          %2401 = vmatprep.mubr.bf16.mxu0 %v1681
          %2402 = vmatmul.mubr.bf16.gmra.mrb[0].mxu0 %v1679
          %v2403 = vpop.f32.mrb[0].mxu0
          %v2404 = vadd.f32 %v2307, %v2403
          %v2405 = vpop.f32.mrb[0].mxu0
          %v2406 = vpop.f32.mrb[0].mxu0
          %v2407 = vadd.f32 %v2310, %v2406
          %v2408 = vpop.f32.mrb[0].mxu0
          %2409 = vmatprep.mubr.bf16.mxu0 %v1699
          %2410 = vmatmul.mubr.bf16.gmra.mrb[0].mxu0 %v1697
          %v2411 = vpop.f32.mrb[0].mxu0
          %v2412 = vadd.f32 %v2315, %v2411
          %v2413 = vpop.f32.mrb[0].mxu0
          %v2414 = vpop.f32.mrb[0].mxu0
          %v2415 = vadd.f32 %v2318, %v2414
          %v2416 = vpop.f32.mrb[0].mxu0
          %2417 = vmatprep.mubr.bf16.mxu0 %v1717
          %2418 = vmatmul.mubr.bf16.gmra.mrb[0].mxu0 %v1715
          %v2419 = vpop.f32.mrb[0].mxu0
          %v2420 = vadd.f32 %v2323, %v2419
          %v2421 = vpop.f32.mrb[0].mxu0
          %v2422 = vpop.f32.mrb[0].mxu0
          %v2423 = vadd.f32 %v2326, %v2422
          %v2424 = vpop.f32.mrb[0].mxu0
          %2425 = vdwg.mxu0
          %2426 = vmatprep.subr.bf16.mxu0 0
          %2427 = vmatpush1.bf16.msra.mxu0 %v2120
          %2428 = vmatprep.subr.bf16.mxu0 0
          %2429 = vmatpush1.bf16.msra.mxu0 %v2121
          %2430 = vmatprep.subr.bf16.mxu0 0
          %2431 = vmatpush1.bf16.msra.mxu0 %v2122
          %2432 = vmatprep.subr.bf16.mxu0 0
          %2433 = vmatpush1.bf16.msra.mxu0 %v2123
          %2434 = vmatprep.subr.bf16.mxu0 0
          %2435 = vmatpush1.bf16.msra.mxu0 %v2124
          %2436 = vmatprep.subr.bf16.mxu0 0
          %2437 = vmatpush1.bf16.msra.mxu0 %v2125
          %2438 = vmatprep.subr.bf16.mxu0 0
          %2439 = vmatpush1.bf16.msra.mxu0 %v2126
          %2440 = vmatprep.subr.bf16.mxu0 0
          %2441 = vmatpush1.bf16.msra.mxu0 %v2127
          %2442 = vmatprep.subr.bf16.mxu0 0
          %2443 = vmatpush1.bf16.msra.mxu0 %v2128
          %2444 = vmatprep.subr.bf16.mxu0 0
          %2445 = vmatpush1.bf16.msra.mxu0 %v2129
          %2446 = vmatprep.subr.bf16.mxu0 0
          %2447 = vmatpush1.bf16.msra.mxu0 %v2130
          %2448 = vmatprep.subr.bf16.mxu0 0
          %2449 = vmatpush1.bf16.msra.mxu0 %v2131
          %2450 = vmatprep.subr.bf16.mxu0 0
          %2451 = vmatpush1.bf16.msra.mxu0 %v2132
          %2452 = vmatprep.subr.bf16.mxu0 0
          %2453 = vmatpush1.bf16.msra.mxu0 %v2133
          %2454 = vmatprep.subr.bf16.mxu0 0
          %2455 = vmatpush1.bf16.msra.mxu0 %v2134
          %2456 = vmatprep.subr.bf16.mxu0 0
          %2457 = vmatpush1.bf16.msra.mxu0 %v2135
          %2458 = vmatprep.mubr.bf16.mxu0 %v1592
          %2459 = vmatmul.mubr.bf16.gmra.mrb[0].mxu0 %v1589
          %v2460 = vpop.f32.mrb[0].mxu0
          %v2461 = vadd.f32 %v2364, %v2460
          %v2462 = vpop.f32.mrb[0].mxu0
          %v2463 = vpop.f32.mrb[0].mxu0
          %v2464 = vadd.f32 %v2367, %v2463
          %v2465 = vpop.f32.mrb[0].mxu0
          %2466 = vmatprep.mubr.bf16.mxu0 %v1613
          %2467 = vmatmul.mubr.bf16.gmra.mrb[0].mxu0 %v1611
          %v2468 = vpop.f32.mrb[0].mxu0
          %v2469 = vadd.f32 %v2372, %v2468
          %v2470 = vpop.f32.mrb[0].mxu0
          %v2471 = vpop.f32.mrb[0].mxu0
          %v2472 = vadd.f32 %v2375, %v2471
          %v2473 = vpop.f32.mrb[0].mxu0
          %2474 = vmatprep.mubr.bf16.mxu0 %v1631
          %2475 = vmatmul.mubr.bf16.gmra.mrb[0].mxu0 %v1629
          %v2476 = vpop.f32.mrb[0].mxu0
          %v2477 = vadd.f32 %v2380, %v2476
          %v2478 = vpop.f32.mrb[0].mxu0
          %v2479 = vpop.f32.mrb[0].mxu0
          %v2480 = vadd.f32 %v2383, %v2479
          %v2481 = vpop.f32.mrb[0].mxu0
          %2482 = vmatprep.mubr.bf16.mxu0 %v1649
          %2483 = vmatmul.mubr.bf16.gmra.mrb[0].mxu0 %v1647
          %v2484 = vpop.f32.mrb[0].mxu0
          %v2485 = vadd.f32 %v2388, %v2484
          %v2486 = vpop.f32.mrb[0].mxu0
          %v2487 = vpop.f32.mrb[0].mxu0
          %v2488 = vadd.f32 %v2391, %v2487
          %v2489 = vpop.f32.mrb[0].mxu0
          %2490 = vmatprep.mubr.bf16.mxu0 %v1667
          %2491 = vmatmul.mubr.bf16.gmra.mrb[0].mxu0 %v1665
          %v2492 = vpop.f32.mrb[0].mxu0
          %v2493 = vadd.f32 %v2396, %v2492
          %v2494 = vpop.f32.mrb[0].mxu0
          %v2495 = vpop.f32.mrb[0].mxu0
          %v2496 = vadd.f32 %v2399, %v2495
          %v2497 = vpop.f32.mrb[0].mxu0
          %2498 = vmatprep.mubr.bf16.mxu0 %v1685
          %2499 = vmatmul.mubr.bf16.gmra.mrb[0].mxu0 %v1683
          %v2500 = vpop.f32.mrb[0].mxu0
          %v2501 = vadd.f32 %v2404, %v2500
          %v2502 = vpop.f32.mrb[0].mxu0
          %v2503 = vpop.f32.mrb[0].mxu0
          %v2504 = vadd.f32 %v2407, %v2503
          %v2505 = vpop.f32.mrb[0].mxu0
          %2506 = vmatprep.mubr.bf16.mxu0 %v1703
          %2507 = vmatmul.mubr.bf16.gmra.mrb[0].mxu0 %v1701
          %v2508 = vpop.f32.mrb[0].mxu0
          %v2509 = vadd.f32 %v2412, %v2508
          %v2510 = vpop.f32.mrb[0].mxu0
          %v2511 = vpop.f32.mrb[0].mxu0
          %v2512 = vadd.f32 %v2415, %v2511
          %v2513 = vpop.f32.mrb[0].mxu0
          %2514 = vmatprep.mubr.bf16.mxu0 %v1721
          %2515 = vmatmul.mubr.bf16.gmra.mrb[0].mxu0 %v1719
          %v2516 = vpop.f32.mrb[0].mxu0
          %v2517 = vadd.f32 %v2420, %v2516
          %v2518 = vpop.f32.mrb[0].mxu0
          %v2519 = vpop.f32.mrb[0].mxu0
          %v2520 = vadd.f32 %v2423, %v2519
          %v2521 = vpop.f32.mrb[0].mxu0
          %2522 = vdwg.mxu0
          %2523 = vmatprep.subr.bf16.mxu0 0
          %2524 = vmatpush1.bf16.msra.mxu0 %v2136
          %2525 = vmatprep.subr.bf16.mxu0 0
          %2526 = vmatpush1.bf16.msra.mxu0 %v2137
          %2527 = vmatprep.subr.bf16.mxu0 0
          %2528 = vmatpush1.bf16.msra.mxu0 %v2138
          %2529 = vmatprep.subr.bf16.mxu0 0
          %2530 = vmatpush1.bf16.msra.mxu0 %v2139
          %2531 = vmatprep.subr.bf16.mxu0 0
          %2532 = vmatpush1.bf16.msra.mxu0 %v2140
          %2533 = vmatprep.subr.bf16.mxu0 0
          %2534 = vmatpush1.bf16.msra.mxu0 %v2141
          %2535 = vmatprep.subr.bf16.mxu0 0
          %2536 = vmatpush1.bf16.msra.mxu0 %v2142
          %2537 = vmatprep.subr.bf16.mxu0 0
          %2538 = vmatpush1.bf16.msra.mxu0 %v2143
          %2539 = vmatprep.subr.bf16.mxu0 0
          %2540 = vmatpush1.bf16.msra.mxu0 %v2144
          %2541 = vmatprep.subr.bf16.mxu0 0
          %2542 = vmatpush1.bf16.msra.mxu0 %v2145
          %2543 = vmatprep.subr.bf16.mxu0 0
          %2544 = vmatpush1.bf16.msra.mxu0 %v2146
          %2545 = vmatprep.subr.bf16.mxu0 0
          %2546 = vmatpush1.bf16.msra.mxu0 %v2147
          %2547 = vmatprep.subr.bf16.mxu0 0
          %2548 = vmatpush1.bf16.msra.mxu0 %v2148
          %2549 = vmatprep.subr.bf16.mxu0 0
          %2550 = vmatpush1.bf16.msra.mxu0 %v2149
          %2551 = vmatprep.subr.bf16.mxu0 0
          %2552 = vmatpush1.bf16.msra.mxu0 %v2150
          %2553 = vmatprep.subr.bf16.mxu0 0
          %2554 = vmatpush1.bf16.msra.mxu0 %v2151
          %2555 = vmatprep.mubr.bf16.mxu0 %v1598
          %2556 = vmatmul.mubr.bf16.gmra.mrb[0].mxu0 %v1595
          %v2557 = vpop.f32.mrb[0].mxu0
          %v2558 = vadd.f32 %v2461, %v2557
          %v2559 = vpop.f32.mrb[0].mxu0
          %v2560 = vpop.f32.mrb[0].mxu0
          %v2561 = vadd.f32 %v2464, %v2560
          %v2562 = vpop.f32.mrb[0].mxu0
          %2563 = vmatprep.mubr.bf16.mxu0 %v1617
          %2564 = vmatmul.mubr.bf16.gmra.mrb[0].mxu0 %v1615
          %v2565 = vpop.f32.mrb[0].mxu0
          %v2566 = vadd.f32 %v2469, %v2565
          %v2567 = vpop.f32.mrb[0].mxu0
          %v2568 = vpop.f32.mrb[0].mxu0
          %v2569 = vadd.f32 %v2472, %v2568
          %v2570 = vpop.f32.mrb[0].mxu0
          %2571 = vmatprep.mubr.bf16.mxu0 %v1635
          %2572 = vmatmul.mubr.bf16.gmra.mrb[0].mxu0 %v1633
          %v2573 = vpop.f32.mrb[0].mxu0
          %v2574 = vadd.f32 %v2477, %v2573
          %v2575 = vpop.f32.mrb[0].mxu0
          %v2576 = vpop.f32.mrb[0].mxu0
          %v2577 = vadd.f32 %v2480, %v2576
          %v2578 = vpop.f32.mrb[0].mxu0
          %2579 = vmatprep.mubr.bf16.mxu0 %v1653
          %2580 = vmatmul.mubr.bf16.gmra.mrb[0].mxu0 %v1651
          %v2581 = vpop.f32.mrb[0].mxu0
          %v2582 = vadd.f32 %v2485, %v2581
          %v2583 = vpop.f32.mrb[0].mxu0
          %v2584 = vpop.f32.mrb[0].mxu0
          %v2585 = vadd.f32 %v2488, %v2584
          %v2586 = vpop.f32.mrb[0].mxu0
          %2587 = vmatprep.mubr.bf16.mxu0 %v1671
          %2588 = vmatmul.mubr.bf16.gmra.mrb[0].mxu0 %v1669
          %v2589 = vpop.f32.mrb[0].mxu0
          %v2590 = vadd.f32 %v2493, %v2589
          %v2591 = vpop.f32.mrb[0].mxu0
          %v2592 = vpop.f32.mrb[0].mxu0
          %v2593 = vadd.f32 %v2496, %v2592
          %v2594 = vpop.f32.mrb[0].mxu0
          %2595 = vmatprep.mubr.bf16.mxu0 %v1689
          %2596 = vmatmul.mubr.bf16.gmra.mrb[0].mxu0 %v1687
          %v2597 = vpop.f32.mrb[0].mxu0
          %v2598 = vadd.f32 %v2501, %v2597
          %v2599 = vpop.f32.mrb[0].mxu0
          %v2600 = vpop.f32.mrb[0].mxu0
          %v2601 = vadd.f32 %v2504, %v2600
          %v2602 = vpop.f32.mrb[0].mxu0
          %2603 = vmatprep.mubr.bf16.mxu0 %v1707
          %2604 = vmatmul.mubr.bf16.gmra.mrb[0].mxu0 %v1705
          %v2605 = vpop.f32.mrb[0].mxu0
          %v2606 = vadd.f32 %v2509, %v2605
          %v2607 = vpop.f32.mrb[0].mxu0
          %v2608 = vpop.f32.mrb[0].mxu0
          %v2609 = vadd.f32 %v2512, %v2608
          %v2610 = vpop.f32.mrb[0].mxu0
          %2611 = vmatprep.mubr.bf16.mxu0 %v1725
          %2612 = vmatmul.mubr.bf16.gmra.mrb[0].mxu0 %v1723
          %v2613 = vpop.f32.mrb[0].mxu0
          %v2614 = vadd.f32 %v2517, %v2613
          %v2615 = vpop.f32.mrb[0].mxu0
          %v2616 = vpop.f32.mrb[0].mxu0
          %v2617 = vadd.f32 %v2520, %v2616
          %v2618 = vpop.f32.mrb[0].mxu0
          %2619 = vdwg.mxu0
          %2620 = vmatprep.subr.bf16.mxu0 0
          %2621 = vmatpush1.bf16.msra.mxu0 %v2152
          %2622 = vmatprep.subr.bf16.mxu0 0
          %2623 = vmatpush1.bf16.msra.mxu0 %v2153
          %2624 = vmatprep.subr.bf16.mxu0 0
          %2625 = vmatpush1.bf16.msra.mxu0 %v2154
          %2626 = vmatprep.subr.bf16.mxu0 0
          %2627 = vmatpush1.bf16.msra.mxu0 %v2155
          %2628 = vmatprep.subr.bf16.mxu0 0
          %2629 = vmatpush1.bf16.msra.mxu0 %v2156
          %2630 = vmatprep.subr.bf16.mxu0 0
          %2631 = vmatpush1.bf16.msra.mxu0 %v2157
          %2632 = vmatprep.subr.bf16.mxu0 0
          %2633 = vmatpush1.bf16.msra.mxu0 %v2158
          %2634 = vmatprep.subr.bf16.mxu0 0
          %2635 = vmatpush1.bf16.msra.mxu0 %v2159
          %2636 = vmatprep.subr.bf16.mxu0 0
          %2637 = vmatpush1.bf16.msra.mxu0 0
          %2638 = vmatprep.subr.bf16.mxu0 0
          %2639 = vmatpush1.bf16.msra.mxu0 0
          %2640 = vmatprep.subr.bf16.mxu0 0
          %2641 = vmatpush1.bf16.msra.mxu0 0
          %2642 = vmatprep.subr.bf16.mxu0 0
          %2643 = vmatpush1.bf16.msra.mxu0 0
          %2644 = vmatprep.subr.bf16.mxu0 0
          %2645 = vmatpush1.bf16.msra.mxu0 0
          %2646 = vmatprep.subr.bf16.mxu0 0
          %2647 = vmatpush1.bf16.msra.mxu0 0
          %2648 = vmatprep.subr.bf16.mxu0 0
          %2649 = vmatpush1.bf16.msra.mxu0 0
          %2650 = vmatprep.subr.bf16.mxu0 0
          %2651 = vmatpush1.bf16.msra.mxu0 0
          %2652 = vmatprep.mubr.bf16.mxu0 0
          %2653 = vmatmul.mubr.bf16.gmra.mrb[0].mxu0 %v1601
          %v2654 = vpop.f32.mrb[0].mxu0
          %v2655 = vadd.f32 %v2558, %v2654
          %v2656 = vpop.f32.mrb[0].mxu0
          %v2657 = vpop.f32.mrb[0].mxu0
          %v2658 = vadd.f32 %v2561, %v2657
          %v2659 = vpop.f32.mrb[0].mxu0
          %2660 = vmatprep.mubr.bf16.mxu0 0
          %2661 = vmatmul.mubr.bf16.gmra.mrb[0].mxu0 %v1619
          %v2662 = vpop.f32.mrb[0].mxu0
          %v2663 = vadd.f32 %v2566, %v2662
          %v2664 = vpop.f32.mrb[0].mxu0
          %v2665 = vpop.f32.mrb[0].mxu0
          %v2666 = vadd.f32 %v2569, %v2665
          %v2667 = vpop.f32.mrb[0].mxu0
          %2668 = vmatprep.mubr.bf16.mxu0 0
          %2669 = vmatmul.mubr.bf16.gmra.mrb[0].mxu0 %v1637
          %v2670 = vpop.f32.mrb[0].mxu0
          %v2671 = vadd.f32 %v2574, %v2670
          %v2672 = vpop.f32.mrb[0].mxu0
          %v2673 = vpop.f32.mrb[0].mxu0
          %v2674 = vadd.f32 %v2577, %v2673
          %v2675 = vpop.f32.mrb[0].mxu0
          %2676 = vmatprep.mubr.bf16.mxu0 0
          %2677 = vmatmul.mubr.bf16.gmra.mrb[0].mxu0 %v1655
          %v2678 = vpop.f32.mrb[0].mxu0
          %v2679 = vadd.f32 %v2582, %v2678
          %v2680 = vpop.f32.mrb[0].mxu0
          %v2681 = vpop.f32.mrb[0].mxu0
          %v2682 = vadd.f32 %v2585, %v2681
          %v2683 = vpop.f32.mrb[0].mxu0
          %2684 = vmatprep.mubr.bf16.mxu0 0
          %2685 = vmatmul.mubr.bf16.gmra.mrb[0].mxu0 %v1673
          %v2686 = vpop.f32.mrb[0].mxu0
          %v2687 = vadd.f32 %v2590, %v2686
          %v2688 = vpop.f32.mrb[0].mxu0
          %v2689 = vpop.f32.mrb[0].mxu0
          %v2690 = vadd.f32 %v2593, %v2689
          %v2691 = vpop.f32.mrb[0].mxu0
          %2692 = vmatprep.mubr.bf16.mxu0 0
          %2693 = vmatmul.mubr.bf16.gmra.mrb[0].mxu0 %v1691
          %v2694 = vpop.f32.mrb[0].mxu0
          %v2695 = vadd.f32 %v2598, %v2694
          %v2696 = vpop.f32.mrb[0].mxu0
          %v2697 = vpop.f32.mrb[0].mxu0
          %v2698 = vadd.f32 %v2601, %v2697
          %v2699 = vpop.f32.mrb[0].mxu0
          %2700 = vmatprep.mubr.bf16.mxu0 0
          %2701 = vmatmul.mubr.bf16.gmra.mrb[0].mxu0 %v1709
          %v2702 = vpop.f32.mrb[0].mxu0
          %v2703 = vadd.f32 %v2606, %v2702
          %v2704 = vpop.f32.mrb[0].mxu0
          %v2705 = vpop.f32.mrb[0].mxu0
          %v2706 = vadd.f32 %v2609, %v2705
          %v2707 = vpop.f32.mrb[0].mxu0
          %2708 = vmatprep.mubr.bf16.mxu0 0
          %2709 = vmatmul.mubr.bf16.gmra.mrb[0].mxu0 %v1727
          %v2710 = vpop.f32.mrb[0].mxu0
          %v2711 = vadd.f32 %v2614, %v2710
          %v2712 = vpop.f32.mrb[0].mxu0
          %v2713 = vpop.f32.mrb[0].mxu0
          %v2714 = vadd.f32 %v2617, %v2713
          %v2715 = vpop.f32.mrb[0].mxu0
          %2716 = vdwg.mxu0
          %v2717 = vmul.f32 %v2655, 0.5
          %v2718 = vmul.f32 %v2658, 0.5
          %v2719 = vmul.f32 %v2663, 0.5
          %v2720 = vmul.f32 %v2666, 0.5
          %v2721 = vmul.f32 %v2671, 0.5
          %v2722 = vmul.f32 %v2674, 0.5
          %v2723 = vmul.f32 %v2679, 0.5
          %v2724 = vmul.f32 %v2682, 0.5
          %v2725 = vmul.f32 %v2687, 0.5
          %v2726 = vmul.f32 %v2690, 0.5
          %v2727 = vmul.f32 %v2695, 0.5
          %v2728 = vmul.f32 %v2698, 0.5
          %v2729 = vmul.f32 %v2703, 0.5
          %v2730 = vmul.f32 %v2706, 0.5
          %v2731 = vmul.f32 %v2711, 0.5
          %v2732 = vmul.f32 %v2714, 0.5
          %v2733 = vmul.f32 %v2655, 0.70710677
          %v2734 = vmul.f32 %v2658, 0.70710677
          %v2735 = vmul.f32 %v2663, 0.70710677
          %v2736 = vmul.f32 %v2666, 0.70710677
          %v2737 = vmul.f32 %v2671, 0.70710677
          %v2738 = vmul.f32 %v2674, 0.70710677
          %v2739 = vmul.f32 %v2679, 0.70710677
          %v2740 = vmul.f32 %v2682, 0.70710677
          %v2741 = vmul.f32 %v2687, 0.70710677
          %v2742 = vmul.f32 %v2690, 0.70710677
          %v2743 = vmul.f32 %v2695, 0.70710677
          %v2744 = vmul.f32 %v2698, 0.70710677
          %v2745 = vmul.f32 %v2703, 0.70710677
          %v2746 = vmul.f32 %v2706, 0.70710677
          %v2747 = vmul.f32 %v2711, 0.70710677
          %v2748 = vmul.f32 %v2714, 0.70710677
          %v2749 = verf.f32.pop %v2733
          %v2750 = verf.f32.pop %v2734
          %v2751 = verf.f32.pop %v2735
          %v2752 = verf.f32.pop %v2736
          %v2753 = verf.f32.pop %v2737
          %v2754 = verf.f32.pop %v2738
          %v2755 = verf.f32.pop %v2739
          %v2756 = verf.f32.pop %v2740
          %v2757 = verf.f32.pop %v2741
          %v2758 = verf.f32.pop %v2742
          %v2759 = verf.f32.pop %v2743
          %v2760 = verf.f32.pop %v2744
          %v2761 = verf.f32.pop %v2745
          %v2762 = verf.f32.pop %v2746
          %v2763 = verf.f32.pop %v2747
          %v2764 = verf.f32.pop %v2748
          %v2765 = vadd.f32 %v2749, 1.0
          %v2766 = vadd.f32 %v2750, 1.0
          %v2767 = vadd.f32 %v2751, 1.0
          %v2768 = vadd.f32 %v2752, 1.0
          %v2769 = vadd.f32 %v2753, 1.0
          %v2770 = vadd.f32 %v2754, 1.0
          %v2771 = vadd.f32 %v2755, 1.0
          %v2772 = vadd.f32 %v2756, 1.0
          %v2773 = vadd.f32 %v2757, 1.0
          %v2774 = vadd.f32 %v2758, 1.0
          %v2775 = vadd.f32 %v2759, 1.0
          %v2776 = vadd.f32 %v2760, 1.0
          %v2777 = vadd.f32 %v2761, 1.0
          %v2778 = vadd.f32 %v2762, 1.0
          %v2779 = vadd.f32 %v2763, 1.0
          %v2780 = vadd.f32 %v2764, 1.0
          %v2781 = vmul.f32 %v2717, %v2765
          %v2782 = vmul.f32 %v2718, %v2766
          %v2783 = vmul.f32 %v2719, %v2767
          %v2784 = vmul.f32 %v2720, %v2768
          %v2785 = vmul.f32 %v2721, %v2769
          %v2786 = vmul.f32 %v2722, %v2770
          %v2787 = vmul.f32 %v2723, %v2771
          %v2788 = vmul.f32 %v2724, %v2772
          %v2789 = vmul.f32 %v2725, %v2773
          %v2790 = vmul.f32 %v2726, %v2774
          %v2791 = vmul.f32 %v2727, %v2775
          %v2792 = vmul.f32 %v2728, %v2776
          %v2793 = vmul.f32 %v2729, %v2777
          %v2794 = vmul.f32 %v2730, %v2778
          %v2795 = vmul.f32 %v2731, %v2779
          %v2796 = vmul.f32 %v2732, %v2780
          %v2797 = vadd.f32 %v831, %v2781
          %v2798 = vadd.f32 %v832, %v2782
          %v2799 = vadd.f32 %v833, %v2783
          %v2800 = vadd.f32 %v834, %v2784
          %v2801 = vadd.f32 %v835, %v2785
          %v2802 = vadd.f32 %v836, %v2786
          %v2803 = vadd.f32 %v837, %v2787
          %v2804 = vadd.f32 %v838, %v2788
          %v2805 = vadd.f32 %v839, %v2789
          %v2806 = vadd.f32 %v840, %v2790
          %v2807 = vadd.f32 %v841, %v2791
          %v2808 = vadd.f32 %v842, %v2792
          %v2809 = vadd.f32 %v843, %v2793
          %v2810 = vadd.f32 %v844, %v2794
          %v2811 = vadd.f32 %v845, %v2795
          %v2812 = vadd.f32 %v846, %v2796
          %s2813 = sadd.s32 %s847, 1
          %2814 = vadd.xlane.f32.xlu0 %v2797
          %v2815 = vpop.xlane.xlu0 %2814
          %2816 = vadd.xlane.f32.xlu0 %v2798
          %v2817 = vpop.xlane.xlu0 %2816
          %2818 = vadd.xlane.f32.xlu0 %v2799
          %v2819 = vpop.xlane.xlu0 %2818
          %2820 = vadd.xlane.f32.xlu0 %v2800
          %v2821 = vpop.xlane.xlu0 %2820
          %2822 = vadd.xlane.f32.xlu0 %v2801
          %v2823 = vpop.xlane.xlu0 %2822
          %2824 = vadd.xlane.f32.xlu0 %v2802
          %v2825 = vpop.xlane.xlu0 %2824
          %2826 = vadd.xlane.f32.xlu0 %v2803
          %v2827 = vpop.xlane.xlu0 %2826
          %2828 = vadd.xlane.f32.xlu0 %v2804
          %v2829 = vpop.xlane.xlu0 %2828
          %2830 = vadd.xlane.f32.xlu0 %v2805
          %v2831 = vpop.xlane.xlu0 %2830
          %2832 = vadd.xlane.f32.xlu0 %v2806
          %v2833 = vpop.xlane.xlu0 %2832
          %2834 = vadd.xlane.f32.xlu0 %v2807
          %v2835 = vpop.xlane.xlu0 %2834
          %2836 = vadd.xlane.f32.xlu0 %v2808
          %v2837 = vpop.xlane.xlu0 %2836
          %2838 = vadd.xlane.f32.xlu0 %v2809
          %v2839 = vpop.xlane.xlu0 %2838
          %2840 = vadd.xlane.f32.xlu0 %v2810
          %v2841 = vpop.xlane.xlu0 %2840
          %2842 = vadd.xlane.f32.xlu0 %v2811
          %v2843 = vpop.xlane.xlu0 %2842
          %2844 = vadd.xlane.f32.xlu0 %v2812
          %v2845 = vpop.xlane.xlu0 %2844
          %v2846 = vmul.f32 %v2815, 0.0078125
          %v2847 = vmul.f32 %v2817, 0.0078125
          %v2848 = vmul.f32 %v2819, 0.0078125
          %v2849 = vmul.f32 %v2821, 0.0078125
          %v2850 = vmul.f32 %v2823, 0.0078125
          %v2851 = vmul.f32 %v2825, 0.0078125
          %v2852 = vmul.f32 %v2827, 0.0078125
          %v2853 = vmul.f32 %v2829, 0.0078125
          %v2854 = vmul.f32 %v2831, 0.0078125
          %v2855 = vmul.f32 %v2833, 0.0078125
          %v2856 = vmul.f32 %v2835, 0.0078125
          %v2857 = vmul.f32 %v2837, 0.0078125
          %v2858 = vmul.f32 %v2839, 0.0078125
          %v2859 = vmul.f32 %v2841, 0.0078125
          %v2860 = vmul.f32 %v2843, 0.0078125
          %v2861 = vmul.f32 %v2845, 0.0078125
          %v2862 = vmul.f32 %v2797, %v2797
          %v2863 = vmul.f32 %v2798, %v2798
          %v2864 = vmul.f32 %v2799, %v2799
          %v2865 = vmul.f32 %v2800, %v2800
          %v2866 = vmul.f32 %v2801, %v2801
          %v2867 = vmul.f32 %v2802, %v2802
          %v2868 = vmul.f32 %v2803, %v2803
          %v2869 = vmul.f32 %v2804, %v2804
          %v2870 = vmul.f32 %v2805, %v2805
          %v2871 = vmul.f32 %v2806, %v2806
          %v2872 = vmul.f32 %v2807, %v2807
          %v2873 = vmul.f32 %v2808, %v2808
          %v2874 = vmul.f32 %v2809, %v2809
          %v2875 = vmul.f32 %v2810, %v2810
          %v2876 = vmul.f32 %v2811, %v2811
          %v2877 = vmul.f32 %v2812, %v2812
          %2878 = vadd.xlane.f32.xlu0 %v2862
          %v2879 = vpop.xlane.xlu0 %2878
          %2880 = vadd.xlane.f32.xlu0 %v2863
          %v2881 = vpop.xlane.xlu0 %2880
          %2882 = vadd.xlane.f32.xlu0 %v2864
          %v2883 = vpop.xlane.xlu0 %2882
          %2884 = vadd.xlane.f32.xlu0 %v2865
          %v2885 = vpop.xlane.xlu0 %2884
          %2886 = vadd.xlane.f32.xlu0 %v2866
          %v2887 = vpop.xlane.xlu0 %2886
          %2888 = vadd.xlane.f32.xlu0 %v2867
          %v2889 = vpop.xlane.xlu0 %2888
          %2890 = vadd.xlane.f32.xlu0 %v2868
          %v2891 = vpop.xlane.xlu0 %2890
          %2892 = vadd.xlane.f32.xlu0 %v2869
          %v2893 = vpop.xlane.xlu0 %2892
          %2894 = vadd.xlane.f32.xlu0 %v2870
          %v2895 = vpop.xlane.xlu0 %2894
          %2896 = vadd.xlane.f32.xlu0 %v2871
          %v2897 = vpop.xlane.xlu0 %2896
          %2898 = vadd.xlane.f32.xlu0 %v2872
          %v2899 = vpop.xlane.xlu0 %2898
          %2900 = vadd.xlane.f32.xlu0 %v2873
          %v2901 = vpop.xlane.xlu0 %2900
          %2902 = vadd.xlane.f32.xlu0 %v2874
          %v2903 = vpop.xlane.xlu0 %2902
          %2904 = vadd.xlane.f32.xlu0 %v2875
          %v2905 = vpop.xlane.xlu0 %2904
          %2906 = vadd.xlane.f32.xlu0 %v2876
          %v2907 = vpop.xlane.xlu0 %2906
          %2908 = vadd.xlane.f32.xlu0 %v2877
          %v2909 = vpop.xlane.xlu0 %2908
          %v2910 = vmul.f32 %v2879, 0.0078125
          %v2911 = vmul.f32 %v2881, 0.0078125
          %v2912 = vmul.f32 %v2883, 0.0078125
          %v2913 = vmul.f32 %v2885, 0.0078125
          %v2914 = vmul.f32 %v2887, 0.0078125
          %v2915 = vmul.f32 %v2889, 0.0078125
          %v2916 = vmul.f32 %v2891, 0.0078125
          %v2917 = vmul.f32 %v2893, 0.0078125
          %v2918 = vmul.f32 %v2895, 0.0078125
          %v2919 = vmul.f32 %v2897, 0.0078125
          %v2920 = vmul.f32 %v2899, 0.0078125
          %v2921 = vmul.f32 %v2901, 0.0078125
          %v2922 = vmul.f32 %v2903, 0.0078125
          %v2923 = vmul.f32 %v2905, 0.0078125
          %v2924 = vmul.f32 %v2907, 0.0078125
          %v2925 = vmul.f32 %v2909, 0.0078125
          %v2926 = vmul.f32 %v2846, %v2846
          %v2927 = vmul.f32 %v2847, %v2847
          %v2928 = vmul.f32 %v2848, %v2848
          %v2929 = vmul.f32 %v2849, %v2849
          %v2930 = vmul.f32 %v2850, %v2850
          %v2931 = vmul.f32 %v2851, %v2851
          %v2932 = vmul.f32 %v2852, %v2852
          %v2933 = vmul.f32 %v2853, %v2853
          %v2934 = vmul.f32 %v2854, %v2854
          %v2935 = vmul.f32 %v2855, %v2855
          %v2936 = vmul.f32 %v2856, %v2856
          %v2937 = vmul.f32 %v2857, %v2857
          %v2938 = vmul.f32 %v2858, %v2858
          %v2939 = vmul.f32 %v2859, %v2859
          %v2940 = vmul.f32 %v2860, %v2860
          %v2941 = vmul.f32 %v2861, %v2861
          %v2942 = vsub.f32 %v2910, %v2926
          %v2943 = vsub.f32 %v2911, %v2927
          %v2944 = vsub.f32 %v2912, %v2928
          %v2945 = vsub.f32 %v2913, %v2929
          %v2946 = vsub.f32 %v2914, %v2930
          %v2947 = vsub.f32 %v2915, %v2931
          %v2948 = vsub.f32 %v2916, %v2932
          %v2949 = vsub.f32 %v2917, %v2933
          %v2950 = vsub.f32 %v2918, %v2934
          %v2951 = vsub.f32 %v2919, %v2935
          %v2952 = vsub.f32 %v2920, %v2936
          %v2953 = vsub.f32 %v2921, %v2937
          %v2954 = vsub.f32 %v2922, %v2938
          %v2955 = vsub.f32 %v2923, %v2939
          %v2956 = vsub.f32 %v2924, %v2940
          %v2957 = vsub.f32 %v2925, %v2941
          %v2958 = vsub.f32 %v2797, %v2846
          %v2959 = vsub.f32 %v2798, %v2847
          %v2960 = vsub.f32 %v2799, %v2848
          %v2961 = vsub.f32 %v2800, %v2849
          %v2962 = vsub.f32 %v2801, %v2850
          %v2963 = vsub.f32 %v2802, %v2851
          %v2964 = vsub.f32 %v2803, %v2852
          %v2965 = vsub.f32 %v2804, %v2853
          %v2966 = vsub.f32 %v2805, %v2854
          %v2967 = vsub.f32 %v2806, %v2855
          %v2968 = vsub.f32 %v2807, %v2856
          %v2969 = vsub.f32 %v2808, %v2857
          %v2970 = vsub.f32 %v2809, %v2858
          %v2971 = vsub.f32 %v2810, %v2859
          %v2972 = vsub.f32 %v2811, %v2860
          %v2973 = vsub.f32 %v2812, %v2861
          %v2974 = vadd.f32 %v2942, 1e-05
          %v2975 = vadd.f32 %v2943, 1e-05
          %v2976 = vadd.f32 %v2944, 1e-05
          %v2977 = vadd.f32 %v2945, 1e-05
          %v2978 = vadd.f32 %v2946, 1e-05
          %v2979 = vadd.f32 %v2947, 1e-05
          %v2980 = vadd.f32 %v2948, 1e-05
          %v2981 = vadd.f32 %v2949, 1e-05
          %v2982 = vadd.f32 %v2950, 1e-05
          %v2983 = vadd.f32 %v2951, 1e-05
          %v2984 = vadd.f32 %v2952, 1e-05
          %v2985 = vadd.f32 %v2953, 1e-05
          %v2986 = vadd.f32 %v2954, 1e-05
          %v2987 = vadd.f32 %v2955, 1e-05
          %v2988 = vadd.f32 %v2956, 1e-05
          %v2989 = vadd.f32 %v2957, 1e-05
          %v2990 = vrsqrt.pop %v2974
          %v2991 = vrsqrt.pop %v2975
          %v2992 = vrsqrt.pop %v2976
          %v2993 = vrsqrt.pop %v2977
          %v2994 = vrsqrt.pop %v2978
          %v2995 = vrsqrt.pop %v2979
          %v2996 = vrsqrt.pop %v2980
          %v2997 = vrsqrt.pop %v2981
          %v2998 = vrsqrt.pop %v2982
          %v2999 = vrsqrt.pop %v2983
          %v3000 = vrsqrt.pop %v2984
          %v3001 = vrsqrt.pop %v2985
          %v3002 = vrsqrt.pop %v2986
          %v3003 = vrsqrt.pop %v2987
          %v3004 = vrsqrt.pop %v2988
          %v3005 = vrsqrt.pop %v2989
          %v3006 = vmul.f32 %v2958, %v2990
          %v3007 = vmul.f32 %v2959, %v2991
          %v3008 = vmul.f32 %v2960, %v2992
          %v3009 = vmul.f32 %v2961, %v2993
          %v3010 = vmul.f32 %v2962, %v2994
          %v3011 = vmul.f32 %v2963, %v2995
          %v3012 = vmul.f32 %v2964, %v2996
          %v3013 = vmul.f32 %v2965, %v2997
          %v3014 = vmul.f32 %v2966, %v2998
          %v3015 = vmul.f32 %v2967, %v2999
          %v3016 = vmul.f32 %v2968, %v3000
          %v3017 = vmul.f32 %v2969, %v3001
          %v3018 = vmul.f32 %v2970, %v3002
          %v3019 = vmul.f32 %v2971, %v3003
          %v3020 = vmul.f32 %v2972, %v3004
          %v3021 = vmul.f32 %v2973, %v3005
          %s3022 = scalar_lea.vmem [#allocation9], %s2813
          %v3023 = vld [vmem:[%s3022] sm:$0x1]
          %v3025 = vlaneseq
          %v3026 = vshrl.u32 %v3025, 7
          %v3027 = vsub.s32 0, %v3026
          %v3028 = vrot.slane %v3023, %v3027
          %v3030 = vmul.f32 %v3006, %v3028
          %v3031 = vmul.f32 %v3007, %v3028
          %v3032 = vmul.f32 %v3008, %v3028
          %v3033 = vmul.f32 %v3009, %v3028
          %v3034 = vmul.f32 %v3010, %v3028
          %v3035 = vmul.f32 %v3011, %v3028
          %v3036 = vmul.f32 %v3012, %v3028
          %v3037 = vmul.f32 %v3013, %v3028
          %v3038 = vmul.f32 %v3014, %v3028
          %v3039 = vmul.f32 %v3015, %v3028
          %v3040 = vmul.f32 %v3016, %v3028
          %v3041 = vmul.f32 %v3017, %v3028
          %v3042 = vmul.f32 %v3018, %v3028
          %v3043 = vmul.f32 %v3019, %v3028
          %v3044 = vmul.f32 %v3020, %v3028
          %v3045 = vmul.f32 %v3021, %v3028
          %s3046 = scalar_lea.vmem [#allocation11], %s2813
          %v3047 = vld [vmem:[%s3046] sm:$0x1]
          %v3049 = vlaneseq
          %v3050 = vshrl.u32 %v3049, 7
          %v3051 = vsub.s32 0, %v3050
          %v3052 = vrot.slane %v3047, %v3051
          %v3054 = vadd.f32 %v3030, %v3052
          %v3055 = vadd.f32 %v3031, %v3052
          %v3056 = vadd.f32 %v3032, %v3052
          %v3057 = vadd.f32 %v3033, %v3052
          %v3058 = vadd.f32 %v3034, %v3052
          %v3059 = vadd.f32 %v3035, %v3052
          %v3060 = vadd.f32 %v3036, %v3052
          %v3061 = vadd.f32 %v3037, %v3052
          %v3062 = vadd.f32 %v3038, %v3052
          %v3063 = vadd.f32 %v3039, %v3052
          %v3064 = vadd.f32 %v3040, %v3052
          %v3065 = vadd.f32 %v3041, %v3052
          %v3066 = vadd.f32 %v3042, %v3052
          %v3067 = vadd.f32 %v3043, %v3052
          %v3068 = vadd.f32 %v3044, %v3052
          %v3069 = vadd.f32 %v3045, %v3052
          %v3070 = vpack.c.bf16 %v3055, %v3054
          %v3071 = vpack.c.bf16 %v3057, %v3056
          %v3072 = vpack.c.bf16 %v3059, %v3058
          %v3073 = vpack.c.bf16 %v3061, %v3060
          %v3074 = vpack.c.bf16 %v3063, %v3062
          %v3075 = vpack.c.bf16 %v3065, %v3064
          %v3076 = vpack.c.bf16 %v3067, %v3066
          %v3077 = vpack.c.bf16 %v3069, %v3068
          %3078 = vst [vmem:[#allocation2 + $0x80] sm:$0xff] %v3070
          %3079 = vst [vmem:[#allocation2 + $0x88] sm:$0xff] %v3071
          %3080 = vst [vmem:[#allocation2 + $0x90] sm:$0xff] %v3072
          %3081 = vst [vmem:[#allocation2 + $0x98] sm:$0xff] %v3073
          %3082 = vst [vmem:[#allocation2 + $0xa0] sm:$0xff] %v3074
          %3083 = vst [vmem:[#allocation2 + $0xa8] sm:$0xff] %v3075
          %3084 = vst [vmem:[#allocation2 + $0xb0] sm:$0xff] %v3076
          %3085 = vst [vmem:[#allocation2 + $0xb8] sm:$0xff] %v3077
          %v3086 = vld [vmem:[#allocation2 + $0x78] sm:$0xc0]
          %v3087 = vld [vmem:[#allocation2 + $0x80] sm:$0xff]
          %v3088 = vld [vmem:[#allocation2 + $0x88] sm:$0xff]
          %v3089 = vld [vmem:[#allocation2 + $0x90] sm:$0xff]
          %v3090 = vld [vmem:[#allocation2 + $0x98] sm:$0xff]
          %v3091 = vld [vmem:[#allocation2 + $0xa0] sm:$0xff]
          %v3092 = vld [vmem:[#allocation2 + $0xa8] sm:$0xff]
          %v3093 = vld [vmem:[#allocation2 + $0xb0] sm:$0xff]
          %v3094 = vld [vmem:[#allocation2 + $0xb8] sm:$0x3f]
          %v3095 = vld [vmem:[#allocation2 + $0xb8] sm:$0x7f]
          %v3096 = vld [vmem:[#allocation2 + $0x78] sm:$0x80]
          %v3097 = vld [vmem:[#allocation2 + $0xb8] sm:$0xff]
          %v3098 = vld [vmem:[#allocation2 + $0xc0] sm:$0x1]
          %v3099 = vld [vmem:[#allocation2 + $0x80] sm:$0xfe]
          %v3100 = vld [vmem:[#allocation2 + $0xc0] sm:$0x3]
          %v3101 = vld [vmem:[#allocation2 + $0x80] sm:$0xfc]
          %v3103 = vshrl.u32 %v3086, 16
          %v3105 = vshll.u32 %v3086, 16
          %v3107 = vrot.slane %v3105, 1
          %v3108 = vor.u32 %v3103, %v3107
          %v3110 = vshll.u32 %v3087, 16
          %v3112 = vrot.slane %v3110, 1
          %v3113 = vsel %vm1136, %v3108, %v3112
          %v3114 = vshrl.u32 %v3087, 16
          %v3116 = vor.u32 %v3114, %v3112
          %v3118 = vshll.u32 %v3088, 16
          %v3120 = vrot.slane %v3118, 1
          %v3121 = vsel %vm1136, %v3116, %v3120
          %v3122 = vshrl.u32 %v3088, 16
          %v3124 = vor.u32 %v3122, %v3120
          %v3126 = vshll.u32 %v3089, 16
          %v3128 = vrot.slane %v3126, 1
          %v3129 = vsel %vm1136, %v3124, %v3128
          %v3130 = vshrl.u32 %v3089, 16
          %v3132 = vor.u32 %v3130, %v3128
          %v3134 = vshll.u32 %v3090, 16
          %v3136 = vrot.slane %v3134, 1
          %v3137 = vsel %vm1136, %v3132, %v3136
          %v3138 = vshrl.u32 %v3090, 16
          %v3140 = vor.u32 %v3138, %v3136
          %v3142 = vshll.u32 %v3091, 16
          %v3144 = vrot.slane %v3142, 1
          %v3145 = vsel %vm1136, %v3140, %v3144
          %v3146 = vshrl.u32 %v3091, 16
          %v3148 = vor.u32 %v3146, %v3144
          %v3150 = vshll.u32 %v3092, 16
          %v3152 = vrot.slane %v3150, 1
          %v3153 = vsel %vm1136, %v3148, %v3152
          %v3154 = vshrl.u32 %v3092, 16
          %v3156 = vor.u32 %v3154, %v3152
          %v3158 = vshll.u32 %v3093, 16
          %v3160 = vrot.slane %v3158, 1
          %v3161 = vsel %vm1136, %v3156, %v3160
          %v3162 = vshrl.u32 %v3093, 16
          %v3164 = vor.u32 %v3162, %v3160
          %v3166 = vshll.u32 %v3095, 16
          %v3168 = vrot.slane %v3166, 1
          %v3169 = vsel %vm1136, %v3164, %v3168
          %v3170 = vshrl.u32 %v3095, 16
          %v3172 = vor.u32 %v3170, %v3168
          %v3182 = vrot.slane %v3096, 1
          %v3183 = vrot.slane %v3087, 1
          %v3184 = vsel %vm1217, %v3182, %v3183
          %v3185 = vrot.slane %v3088, 1
          %v3186 = vsel %vm1217, %v3183, %v3185
          %v3187 = vrot.slane %v3089, 1
          %v3188 = vsel %vm1217, %v3185, %v3187
          %v3189 = vrot.slane %v3090, 1
          %v3190 = vsel %vm1217, %v3187, %v3189
          %v3191 = vrot.slane %v3091, 1
          %v3192 = vsel %vm1217, %v3189, %v3191
          %v3193 = vrot.slane %v3092, 1
          %v3194 = vsel %vm1217, %v3191, %v3193
          %v3195 = vrot.slane %v3093, 1
          %v3196 = vsel %vm1217, %v3193, %v3195
          %v3197 = vrot.slane %v3095, 1
          %v3198 = vsel %vm1217, %v3195, %v3197
          %v3200 = vshrl.u32 %v3096, 16
          %v3202 = vrot.slane %v3200, 1
          %v3203 = vrot.slane %v3114, 1
          %v3204 = vrot.slane %v3110, 2
          %v3205 = vor.u32 %v3203, %v3204
          %v3206 = vsel %vm1235, %v3202, %v3205
          %v3207 = vrot.slane %v3122, 1
          %v3208 = vrot.slane %v3118, 2
          %v3209 = vor.u32 %v3207, %v3208
          %v3210 = vsel %vm1235, %v3205, %v3209
          %v3211 = vrot.slane %v3130, 1
          %v3212 = vrot.slane %v3126, 2
          %v3213 = vor.u32 %v3211, %v3212
          %v3214 = vsel %vm1235, %v3209, %v3213
          %v3215 = vrot.slane %v3138, 1
          %v3216 = vrot.slane %v3134, 2
          %v3217 = vor.u32 %v3215, %v3216
          %v3218 = vsel %vm1235, %v3213, %v3217
          %v3219 = vrot.slane %v3146, 1
          %v3220 = vrot.slane %v3142, 2
          %v3221 = vor.u32 %v3219, %v3220
          %v3222 = vsel %vm1235, %v3217, %v3221
          %v3223 = vrot.slane %v3154, 1
          %v3224 = vrot.slane %v3150, 2
          %v3225 = vor.u32 %v3223, %v3224
          %v3226 = vsel %vm1235, %v3221, %v3225
          %v3227 = vrot.slane %v3162, 1
          %v3228 = vrot.slane %v3158, 2
          %v3229 = vor.u32 %v3227, %v3228
          %v3230 = vsel %vm1235, %v3225, %v3229
          %v3232 = vshrl.u32 %v3097, 16
          %v3234 = vrot.slane %v3232, 1
          %v3235 = vshll.u32 %v3097, 16
          %v3237 = vrot.slane %v3235, 2
          %v3238 = vor.u32 %v3234, %v3237
          %v3239 = vsel %vm1235, %v3229, %v3238
          %v3241 = vrot.slane %v3087, 2
          %v3242 = vrot.slane %v3088, 2
          %v3243 = vsel %vm1278, %v3241, %v3242
          %v3244 = vrot.slane %v3089, 2
          %v3245 = vsel %vm1278, %v3242, %v3244
          %v3246 = vrot.slane %v3090, 2
          %v3247 = vsel %vm1278, %v3244, %v3246
          %v3248 = vrot.slane %v3091, 2
          %v3249 = vsel %vm1278, %v3246, %v3248
          %v3250 = vrot.slane %v3092, 2
          %v3251 = vsel %vm1278, %v3248, %v3250
          %v3252 = vrot.slane %v3093, 2
          %v3253 = vsel %vm1278, %v3250, %v3252
          %v3254 = vrot.slane %v3097, 2
          %v3255 = vsel %vm1278, %v3252, %v3254
          %v3256 = vrot.slane %v3114, 2
          %v3257 = vrot.slane %v3110, 3
          %v3258 = vor.u32 %v3256, %v3257
          %v3259 = vrot.slane %v3122, 2
          %v3260 = vrot.slane %v3118, 3
          %v3261 = vor.u32 %v3259, %v3260
          %v3262 = vsel %vm1294, %v3258, %v3261
          %v3263 = vrot.slane %v3130, 2
          %v3264 = vrot.slane %v3126, 3
          %v3265 = vor.u32 %v3263, %v3264
          %v3266 = vsel %vm1294, %v3261, %v3265
          %v3267 = vrot.slane %v3138, 2
          %v3268 = vrot.slane %v3134, 3
          %v3269 = vor.u32 %v3267, %v3268
          %v3270 = vsel %vm1294, %v3265, %v3269
          %v3271 = vrot.slane %v3146, 2
          %v3272 = vrot.slane %v3142, 3
          %v3273 = vor.u32 %v3271, %v3272
          %v3274 = vsel %vm1294, %v3269, %v3273
          %v3275 = vrot.slane %v3154, 2
          %v3276 = vrot.slane %v3150, 3
          %v3277 = vor.u32 %v3275, %v3276
          %v3278 = vsel %vm1294, %v3273, %v3277
          %v3279 = vrot.slane %v3162, 2
          %v3280 = vrot.slane %v3158, 3
          %v3281 = vor.u32 %v3279, %v3280
          %v3282 = vsel %vm1294, %v3277, %v3281
          %v3283 = vrot.slane %v3232, 2
          %v3284 = vrot.slane %v3235, 3
          %v3285 = vor.u32 %v3283, %v3284
          %v3286 = vsel %vm1294, %v3281, %v3285
          %v3288 = vshll.u32 %v3098, 16
          %v3290 = vrot.slane %v3288, 3
          %v3291 = vsel %vm1294, %v3285, %v3290
          %v3294 = vrot.slane %v3099, 3
          %v3295 = vrot.slane %v3088, 3
          %v3296 = vsel %vm1333, %v3294, %v3295
          %v3297 = vrot.slane %v3089, 3
          %v3298 = vsel %vm1333, %v3295, %v3297
          %v3299 = vrot.slane %v3090, 3
          %v3300 = vsel %vm1333, %v3297, %v3299
          %v3301 = vrot.slane %v3091, 3
          %v3302 = vsel %vm1333, %v3299, %v3301
          %v3303 = vrot.slane %v3092, 3
          %v3304 = vsel %vm1333, %v3301, %v3303
          %v3305 = vrot.slane %v3093, 3
          %v3306 = vsel %vm1333, %v3303, %v3305
          %v3307 = vrot.slane %v3097, 3
          %v3308 = vsel %vm1333, %v3305, %v3307
          %v3309 = vrot.slane %v3098, 3
          %v3310 = vsel %vm1333, %v3307, %v3309
          %v3312 = vshrl.u32 %v3099, 16
          %v3314 = vrot.slane %v3312, 3
          %v3315 = vshll.u32 %v3099, 16
          %v3317 = vrot.slane %v3315, 4
          %v3318 = vor.u32 %v3314, %v3317
          %v3319 = vrot.slane %v3122, 3
          %v3320 = vrot.slane %v3118, 4
          %v3321 = vor.u32 %v3319, %v3320
          %v3322 = vsel %vm1351, %v3318, %v3321
          %v3323 = vrot.slane %v3130, 3
          %v3324 = vrot.slane %v3126, 4
          %v3325 = vor.u32 %v3323, %v3324
          %v3326 = vsel %vm1351, %v3321, %v3325
          %v3327 = vrot.slane %v3138, 3
          %v3328 = vrot.slane %v3134, 4
          %v3329 = vor.u32 %v3327, %v3328
          %v3330 = vsel %vm1351, %v3325, %v3329
          %v3331 = vrot.slane %v3146, 3
          %v3332 = vrot.slane %v3142, 4
          %v3333 = vor.u32 %v3331, %v3332
          %v3334 = vsel %vm1351, %v3329, %v3333
          %v3335 = vrot.slane %v3154, 3
          %v3336 = vrot.slane %v3150, 4
          %v3337 = vor.u32 %v3335, %v3336
          %v3338 = vsel %vm1351, %v3333, %v3337
          %v3339 = vrot.slane %v3162, 3
          %v3340 = vrot.slane %v3158, 4
          %v3341 = vor.u32 %v3339, %v3340
          %v3342 = vsel %vm1351, %v3337, %v3341
          %v3343 = vrot.slane %v3232, 3
          %v3344 = vrot.slane %v3235, 4
          %v3345 = vor.u32 %v3343, %v3344
          %v3346 = vsel %vm1351, %v3341, %v3345
          %v3348 = vshrl.u32 %v3100, 16
          %v3350 = vrot.slane %v3348, 3
          %v3351 = vshll.u32 %v3100, 16
          %v3353 = vrot.slane %v3351, 4
          %v3354 = vor.u32 %v3350, %v3353
          %v3355 = vsel %vm1351, %v3345, %v3354
          %v3358 = vrot.slane %v3101, 4
          %v3359 = vrot.slane %v3088, 4
          %v3360 = vsel %vm1399, %v3358, %v3359
          %v3361 = vrot.slane %v3089, 4
          %v3362 = vsel %vm1399, %v3359, %v3361
          %v3363 = vrot.slane %v3090, 4
          %v3364 = vsel %vm1399, %v3361, %v3363
          %v3365 = vrot.slane %v3091, 4
          %v3366 = vsel %vm1399, %v3363, %v3365
          %v3367 = vrot.slane %v3092, 4
          %v3368 = vsel %vm1399, %v3365, %v3367
          %v3369 = vrot.slane %v3093, 4
          %v3370 = vsel %vm1399, %v3367, %v3369
          %v3371 = vrot.slane %v3097, 4
          %v3372 = vsel %vm1399, %v3369, %v3371
          %v3373 = vrot.slane %v3100, 4
          %v3374 = vsel %vm1399, %v3371, %v3373
          %s3375 = smul.u32 %s2813, 144
          %s3376 = smul.addr %s3375, 4
          %s3377 = scalar_lea.vmem [#allocation12], %s3376
          %v3378 = vld [vmem:[%s3377] sm:$0xf]
          %v3379 = vld [vmem:[%s3377 + $0x4] sm:$0xf]
          %v3380 = vld [vmem:[%s3377 + $0x8] sm:$0xf]
          %v3381 = vld [vmem:[%s3377 + $0xc] sm:$0xf]
          %v3382 = vld [vmem:[%s3377 + $0x10] sm:$0xf]
          %v3383 = vld [vmem:[%s3377 + $0x14] sm:$0xf]
          %v3384 = vld [vmem:[%s3377 + $0x18] sm:$0xf]
          %v3385 = vld [vmem:[%s3377 + $0x1c] sm:$0xf]
          %v3386 = vld [vmem:[%s3377 + $0x20] sm:$0xf]
          %v3387 = vld [vmem:[%s3377 + $0x24] sm:$0xf]
          %v3388 = vld [vmem:[%s3377 + $0x28] sm:$0xf]
          %v3389 = vld [vmem:[%s3377 + $0x2c] sm:$0xf]
          %v3390 = vld [vmem:[%s3377 + $0x30] sm:$0xf]
          %v3391 = vld [vmem:[%s3377 + $0x34] sm:$0xf]
          %v3392 = vld [vmem:[%s3377 + $0x38] sm:$0xf]
          %v3393 = vld [vmem:[%s3377 + $0x3c] sm:$0xf]
          %v3394 = vld [vmem:[%s3377 + $0x40] sm:$0xf]
          %v3395 = vld [vmem:[%s3377 + $0x44] sm:$0xf]
          %v3396 = vld [vmem:[%s3377 + $0x48] sm:$0xf]
          %v3397 = vld [vmem:[%s3377 + $0x4c] sm:$0xf]
          %v3398 = vld [vmem:[%s3377 + $0x50] sm:$0xf]
          %v3399 = vld [vmem:[%s3377 + $0x54] sm:$0xf]
          %v3400 = vld [vmem:[%s3377 + $0x58] sm:$0xf]
          %v3401 = vld [vmem:[%s3377 + $0x5c] sm:$0xf]
          %v3402 = vld [vmem:[%s3377 + $0x60] sm:$0xf]
          %v3403 = vld [vmem:[%s3377 + $0x64] sm:$0xf]
          %v3404 = vld [vmem:[%s3377 + $0x68] sm:$0xf]
          %v3405 = vld [vmem:[%s3377 + $0x6c] sm:$0xf]
          %v3406 = vld [vmem:[%s3377 + $0x70] sm:$0xf]
          %v3407 = vld [vmem:[%s3377 + $0x74] sm:$0xf]
          %v3408 = vld [vmem:[%s3377 + $0x78] sm:$0xf]
          %v3409 = vld [vmem:[%s3377 + $0x7c] sm:$0xf]
          %v3410 = vld [vmem:[%s3377 + $0x80] sm:$0xf]
          %v3411 = vld [vmem:[%s3377 + $0x84] sm:$0xf]
          %v3412 = vld [vmem:[%s3377 + $0x88] sm:$0xf]
          %v3413 = vld [vmem:[%s3377 + $0x8c] sm:$0xf]
          %v3414 = vld [vmem:[%s3377 + $0x90] sm:$0xf]
          %v3415 = vld [vmem:[%s3377 + $0x94] sm:$0xf]
          %v3416 = vld [vmem:[%s3377 + $0x98] sm:$0xf]
          %v3417 = vld [vmem:[%s3377 + $0x9c] sm:$0xf]
          %v3418 = vld [vmem:[%s3377 + $0xa0] sm:$0xf]
          %v3419 = vld [vmem:[%s3377 + $0xa4] sm:$0xf]
          %v3420 = vld [vmem:[%s3377 + $0xa8] sm:$0xf]
          %v3421 = vld [vmem:[%s3377 + $0xac] sm:$0xf]
          %v3422 = vld [vmem:[%s3377 + $0xb0] sm:$0xf]
          %v3423 = vld [vmem:[%s3377 + $0xb4] sm:$0xf]
          %v3424 = vld [vmem:[%s3377 + $0xb8] sm:$0xf]
          %v3425 = vld [vmem:[%s3377 + $0xbc] sm:$0xf]
          %v3426 = vld [vmem:[%s3377 + $0xc0] sm:$0xf]
          %v3427 = vld [vmem:[%s3377 + $0xc4] sm:$0xf]
          %v3428 = vld [vmem:[%s3377 + $0xc8] sm:$0xf]
          %v3429 = vld [vmem:[%s3377 + $0xcc] sm:$0xf]
          %v3430 = vld [vmem:[%s3377 + $0xd0] sm:$0xf]
          %v3431 = vld [vmem:[%s3377 + $0xd4] sm:$0xf]
          %v3432 = vld [vmem:[%s3377 + $0xd8] sm:$0xf]
          %v3433 = vld [vmem:[%s3377 + $0xdc] sm:$0xf]
          %v3434 = vld [vmem:[%s3377 + $0xe0] sm:$0xf]
          %v3435 = vld [vmem:[%s3377 + $0xe4] sm:$0xf]
          %v3436 = vld [vmem:[%s3377 + $0xe8] sm:$0xf]
          %v3437 = vld [vmem:[%s3377 + $0xec] sm:$0xf]
          %v3438 = vld [vmem:[%s3377 + $0xf0] sm:$0xf]
          %v3439 = vld [vmem:[%s3377 + $0xf4] sm:$0xf]
          %v3440 = vld [vmem:[%s3377 + $0xf8] sm:$0xf]
          %v3441 = vld [vmem:[%s3377 + $0xfc] sm:$0xf]
          %v3442 = vld [vmem:[%s3377 + $0x100] sm:$0xf]
          %v3443 = vld [vmem:[%s3377 + $0x104] sm:$0xf]
          %v3444 = vld [vmem:[%s3377 + $0x108] sm:$0xf]
          %v3445 = vld [vmem:[%s3377 + $0x10c] sm:$0xf]
          %v3446 = vld [vmem:[%s3377 + $0x110] sm:$0xf]
          %v3447 = vld [vmem:[%s3377 + $0x114] sm:$0xf]
          %v3448 = vld [vmem:[%s3377 + $0x118] sm:$0xf]
          %v3449 = vld [vmem:[%s3377 + $0x11c] sm:$0xf]
          %v3450 = vld [vmem:[%s3377 + $0x120] sm:$0xf]
          %v3451 = vld [vmem:[%s3377 + $0x124] sm:$0xf]
          %v3452 = vld [vmem:[%s3377 + $0x128] sm:$0xf]
          %v3453 = vld [vmem:[%s3377 + $0x12c] sm:$0xf]
          %v3454 = vld [vmem:[%s3377 + $0x130] sm:$0xf]
          %v3455 = vld [vmem:[%s3377 + $0x134] sm:$0xf]
          %v3456 = vld [vmem:[%s3377 + $0x138] sm:$0xf]
          %v3457 = vld [vmem:[%s3377 + $0x13c] sm:$0xf]
          %v3458 = vld [vmem:[%s3377 + $0x140] sm:$0xf]
          %v3459 = vld [vmem:[%s3377 + $0x144] sm:$0xf]
          %v3460 = vld [vmem:[%s3377 + $0x148] sm:$0xf]
          %v3461 = vld [vmem:[%s3377 + $0x14c] sm:$0xf]
          %v3462 = vld [vmem:[%s3377 + $0x150] sm:$0xf]
          %v3463 = vld [vmem:[%s3377 + $0x154] sm:$0xf]
          %v3464 = vld [vmem:[%s3377 + $0x158] sm:$0xf]
          %v3465 = vld [vmem:[%s3377 + $0x15c] sm:$0xf]
          %v3466 = vld [vmem:[%s3377 + $0x160] sm:$0xf]
          %v3467 = vld [vmem:[%s3377 + $0x164] sm:$0xf]
          %v3468 = vld [vmem:[%s3377 + $0x168] sm:$0xf]
          %v3469 = vld [vmem:[%s3377 + $0x16c] sm:$0xf]
          %v3470 = vld [vmem:[%s3377 + $0x170] sm:$0xf]
          %v3471 = vld [vmem:[%s3377 + $0x174] sm:$0xf]
          %v3472 = vld [vmem:[%s3377 + $0x178] sm:$0xf]
          %v3473 = vld [vmem:[%s3377 + $0x17c] sm:$0xf]
          %v3474 = vld [vmem:[%s3377 + $0x180] sm:$0xf]
          %v3475 = vld [vmem:[%s3377 + $0x184] sm:$0xf]
          %v3476 = vld [vmem:[%s3377 + $0x188] sm:$0xf]
          %v3477 = vld [vmem:[%s3377 + $0x18c] sm:$0xf]
          %v3478 = vld [vmem:[%s3377 + $0x190] sm:$0xf]
          %v3479 = vld [vmem:[%s3377 + $0x194] sm:$0xf]
          %v3480 = vld [vmem:[%s3377 + $0x198] sm:$0xf]
          %v3481 = vld [vmem:[%s3377 + $0x19c] sm:$0xf]
          %v3482 = vld [vmem:[%s3377 + $0x1a0] sm:$0xf]
          %v3483 = vld [vmem:[%s3377 + $0x1a4] sm:$0xf]
          %v3484 = vld [vmem:[%s3377 + $0x1a8] sm:$0xf]
          %v3485 = vld [vmem:[%s3377 + $0x1ac] sm:$0xf]
          %v3486 = vld [vmem:[%s3377 + $0x1b0] sm:$0xf]
          %v3487 = vld [vmem:[%s3377 + $0x1b4] sm:$0xf]
          %v3488 = vld [vmem:[%s3377 + $0x1b8] sm:$0xf]
          %v3489 = vld [vmem:[%s3377 + $0x1bc] sm:$0xf]
          %v3490 = vld [vmem:[%s3377 + $0x1c0] sm:$0xf]
          %v3491 = vld [vmem:[%s3377 + $0x1c4] sm:$0xf]
          %v3492 = vld [vmem:[%s3377 + $0x1c8] sm:$0xf]
          %v3493 = vld [vmem:[%s3377 + $0x1cc] sm:$0xf]
          %v3494 = vld [vmem:[%s3377 + $0x1d0] sm:$0xf]
          %v3495 = vld [vmem:[%s3377 + $0x1d4] sm:$0xf]
          %v3496 = vld [vmem:[%s3377 + $0x1d8] sm:$0xf]
          %v3497 = vld [vmem:[%s3377 + $0x1dc] sm:$0xf]
          %v3498 = vld [vmem:[%s3377 + $0x1e0] sm:$0xf]
          %v3499 = vld [vmem:[%s3377 + $0x1e4] sm:$0xf]
          %v3500 = vld [vmem:[%s3377 + $0x1e8] sm:$0xf]
          %v3501 = vld [vmem:[%s3377 + $0x1ec] sm:$0xf]
          %v3502 = vld [vmem:[%s3377 + $0x1f0] sm:$0xf]
          %v3503 = vld [vmem:[%s3377 + $0x1f4] sm:$0xf]
          %v3504 = vld [vmem:[%s3377 + $0x1f8] sm:$0xf]
          %v3505 = vld [vmem:[%s3377 + $0x1fc] sm:$0xf]
          %v3506 = vld [vmem:[%s3377 + $0x200] sm:$0xf]
          %v3507 = vld [vmem:[%s3377 + $0x204] sm:$0xf]
          %v3508 = vld [vmem:[%s3377 + $0x208] sm:$0xf]
          %v3509 = vld [vmem:[%s3377 + $0x20c] sm:$0xf]
          %v3510 = vld [vmem:[%s3377 + $0x210] sm:$0xf]
          %v3511 = vld [vmem:[%s3377 + $0x214] sm:$0xf]
          %v3512 = vld [vmem:[%s3377 + $0x218] sm:$0xf]
          %v3513 = vld [vmem:[%s3377 + $0x21c] sm:$0xf]
          %v3514 = vld [vmem:[%s3377 + $0x220] sm:$0xf]
          %v3515 = vld [vmem:[%s3377 + $0x224] sm:$0xf]
          %v3516 = vld [vmem:[%s3377 + $0x228] sm:$0xf]
          %v3517 = vld [vmem:[%s3377 + $0x22c] sm:$0xf]
          %v3518 = vld [vmem:[%s3377 + $0x230] sm:$0xf]
          %v3519 = vld [vmem:[%s3377 + $0x234] sm:$0xf]
          %v3520 = vld [vmem:[%s3377 + $0x238] sm:$0xf]
          %v3521 = vld [vmem:[%s3377 + $0x23c] sm:$0xf]
          %s3522 = scalar_lea.vmem [#allocation14], %s2813
          %v3523 = vld [vmem:[%s3522] sm:$0x1]
          %v3525 = vlaneseq
          %v3526 = vshrl.u32 %v3525, 7
          %v3527 = vsub.s32 0, %v3526
          %v3528 = vrot.slane %v3523, %v3527
          %v3532 = vrot.slane %v3086, 6
          %v3533 = vrot.slane %v3087, 6
          %v3534 = vsel %vm1574, %v3532, %v3533
          %v3535 = vrot.slane %v3113, 6
          %v3536 = vrot.slane %v3121, 6
          %v3537 = vsel %vm1574, %v3535, %v3536
          %v3538 = vrot.slane %v3184, 6
          %v3539 = vrot.slane %v3186, 6
          %v3540 = vsel %vm1574, %v3538, %v3539
          %v3541 = vrot.slane %v3206, 6
          %v3542 = vrot.slane %v3210, 6
          %v3543 = vsel %vm1574, %v3541, %v3542
          %v3544 = vrot.slane %v3241, 6
          %v3545 = vrot.slane %v3243, 6
          %v3546 = vsel %vm1574, %v3544, %v3545
          %v3547 = vrot.slane %v3258, 6
          %v3548 = vrot.slane %v3262, 6
          %v3549 = vsel %vm1574, %v3547, %v3548
          %v3550 = vrot.slane %v3294, 6
          %v3551 = vrot.slane %v3296, 6
          %v3552 = vsel %vm1574, %v3550, %v3551
          %v3553 = vrot.slane %v3318, 6
          %v3554 = vrot.slane %v3322, 6
          %v3555 = vsel %vm1574, %v3553, %v3554
          %v3556 = vrot.slane %v3358, 6
          %v3557 = vrot.slane %v3360, 6
          %v3558 = vsel %vm1574, %v3556, %v3557
          %v3559 = vrot.slane %v3088, 6
          %v3560 = vsel %vm1574, %v3533, %v3559
          %v3561 = vrot.slane %v3129, 6
          %v3562 = vsel %vm1574, %v3536, %v3561
          %v3563 = vrot.slane %v3188, 6
          %v3564 = vsel %vm1574, %v3539, %v3563
          %v3565 = vrot.slane %v3214, 6
          %v3566 = vsel %vm1574, %v3542, %v3565
          %v3567 = vrot.slane %v3245, 6
          %v3568 = vsel %vm1574, %v3545, %v3567
          %v3569 = vrot.slane %v3266, 6
          %v3570 = vsel %vm1574, %v3548, %v3569
          %v3571 = vrot.slane %v3298, 6
          %v3572 = vsel %vm1574, %v3551, %v3571
          %v3573 = vrot.slane %v3326, 6
          %v3574 = vsel %vm1574, %v3554, %v3573
          %v3575 = vrot.slane %v3362, 6
          %v3576 = vsel %vm1574, %v3557, %v3575
          %v3577 = vrot.slane %v3089, 6
          %v3578 = vsel %vm1574, %v3559, %v3577
          %v3579 = vrot.slane %v3137, 6
          %v3580 = vsel %vm1574, %v3561, %v3579
          %v3581 = vrot.slane %v3190, 6
          %v3582 = vsel %vm1574, %v3563, %v3581
          %v3583 = vrot.slane %v3218, 6
          %v3584 = vsel %vm1574, %v3565, %v3583
          %v3585 = vrot.slane %v3247, 6
          %v3586 = vsel %vm1574, %v3567, %v3585
          %v3587 = vrot.slane %v3270, 6
          %v3588 = vsel %vm1574, %v3569, %v3587
          %v3589 = vrot.slane %v3300, 6
          %v3590 = vsel %vm1574, %v3571, %v3589
          %v3591 = vrot.slane %v3330, 6
          %v3592 = vsel %vm1574, %v3573, %v3591
          %v3593 = vrot.slane %v3364, 6
          %v3594 = vsel %vm1574, %v3575, %v3593
          %v3595 = vrot.slane %v3090, 6
          %v3596 = vsel %vm1574, %v3577, %v3595
          %v3597 = vrot.slane %v3145, 6
          %v3598 = vsel %vm1574, %v3579, %v3597
          %v3599 = vrot.slane %v3192, 6
          %v3600 = vsel %vm1574, %v3581, %v3599
          %v3601 = vrot.slane %v3222, 6
          %v3602 = vsel %vm1574, %v3583, %v3601
          %v3603 = vrot.slane %v3249, 6
          %v3604 = vsel %vm1574, %v3585, %v3603
          %v3605 = vrot.slane %v3274, 6
          %v3606 = vsel %vm1574, %v3587, %v3605
          %v3607 = vrot.slane %v3302, 6
          %v3608 = vsel %vm1574, %v3589, %v3607
          %v3609 = vrot.slane %v3334, 6
          %v3610 = vsel %vm1574, %v3591, %v3609
          %v3611 = vrot.slane %v3366, 6
          %v3612 = vsel %vm1574, %v3593, %v3611
          %v3613 = vrot.slane %v3091, 6
          %v3614 = vsel %vm1574, %v3595, %v3613
          %v3615 = vrot.slane %v3153, 6
          %v3616 = vsel %vm1574, %v3597, %v3615
          %v3617 = vrot.slane %v3194, 6
          %v3618 = vsel %vm1574, %v3599, %v3617
          %v3619 = vrot.slane %v3226, 6
          %v3620 = vsel %vm1574, %v3601, %v3619
          %v3621 = vrot.slane %v3251, 6
          %v3622 = vsel %vm1574, %v3603, %v3621
          %v3623 = vrot.slane %v3278, 6
          %v3624 = vsel %vm1574, %v3605, %v3623
          %v3625 = vrot.slane %v3304, 6
          %v3626 = vsel %vm1574, %v3607, %v3625
          %v3627 = vrot.slane %v3338, 6
          %v3628 = vsel %vm1574, %v3609, %v3627
          %v3629 = vrot.slane %v3368, 6
          %v3630 = vsel %vm1574, %v3611, %v3629
          %v3631 = vrot.slane %v3092, 6
          %v3632 = vsel %vm1574, %v3613, %v3631
          %v3633 = vrot.slane %v3161, 6
          %v3634 = vsel %vm1574, %v3615, %v3633
          %v3635 = vrot.slane %v3196, 6
          %v3636 = vsel %vm1574, %v3617, %v3635
          %v3637 = vrot.slane %v3230, 6
          %v3638 = vsel %vm1574, %v3619, %v3637
          %v3639 = vrot.slane %v3253, 6
          %v3640 = vsel %vm1574, %v3621, %v3639
          %v3641 = vrot.slane %v3282, 6
          %v3642 = vsel %vm1574, %v3623, %v3641
          %v3643 = vrot.slane %v3306, 6
          %v3644 = vsel %vm1574, %v3625, %v3643
          %v3645 = vrot.slane %v3342, 6
          %v3646 = vsel %vm1574, %v3627, %v3645
          %v3647 = vrot.slane %v3370, 6
          %v3648 = vsel %vm1574, %v3629, %v3647
          %v3649 = vrot.slane %v3093, 6
          %v3650 = vsel %vm1574, %v3631, %v3649
          %v3651 = vrot.slane %v3169, 6
          %v3652 = vsel %vm1574, %v3633, %v3651
          %v3653 = vrot.slane %v3198, 6
          %v3654 = vsel %vm1574, %v3635, %v3653
          %v3655 = vrot.slane %v3239, 6
          %v3656 = vsel %vm1574, %v3637, %v3655
          %v3657 = vrot.slane %v3255, 6
          %v3658 = vsel %vm1574, %v3639, %v3657
          %v3659 = vrot.slane %v3286, 6
          %v3660 = vsel %vm1574, %v3641, %v3659
          %v3661 = vrot.slane %v3308, 6
          %v3662 = vsel %vm1574, %v3643, %v3661
          %v3663 = vrot.slane %v3346, 6
          %v3664 = vsel %vm1574, %v3645, %v3663
          %v3665 = vrot.slane %v3372, 6
          %v3666 = vsel %vm1574, %v3647, %v3665
          %v3667 = vrot.slane %v3094, 6
          %v3668 = vsel %vm1574, %v3649, %v3667
          %v3669 = vrot.slane %v3172, 6
          %v3670 = vsel %vm1574, %v3651, %v3669
          %v3671 = vrot.slane %v3197, 6
          %v3672 = vsel %vm1574, %v3653, %v3671
          %v3673 = vrot.slane %v3238, 6
          %v3674 = vsel %vm1574, %v3655, %v3673
          %v3675 = vrot.slane %v3254, 6
          %v3676 = vsel %vm1574, %v3657, %v3675
          %v3677 = vrot.slane %v3291, 6
          %v3678 = vsel %vm1574, %v3659, %v3677
          %v3679 = vrot.slane %v3310, 6
          %v3680 = vsel %vm1574, %v3661, %v3679
          %v3681 = vrot.slane %v3355, 6
          %v3682 = vsel %vm1574, %v3663, %v3681
          %v3683 = vrot.slane %v3374, 6
          %v3684 = vsel %vm1574, %v3665, %v3683
          %v3901 = vunpack.c.l.b16 %v3378
          %v3902 = vunpack.c.l.b16 %v3379
          %v3903 = vunpack.c.l.b16 %v3380
          %v3904 = vunpack.c.l.b16 %v3381
          %v3905 = vunpack.c.l.b16 %v3382
          %v3906 = vunpack.c.l.b16 %v3383
          %v3907 = vunpack.c.l.b16 %v3384
          %v3908 = vunpack.c.l.b16 %v3385
          %v3909 = vunpack.c.l.b16 %v3386
          %v3910 = vunpack.c.l.b16 %v3387
          %v3911 = vunpack.c.l.b16 %v3388
          %v3912 = vunpack.c.l.b16 %v3389
          %v3913 = vunpack.c.l.b16 %v3390
          %v3914 = vunpack.c.l.b16 %v3391
          %v3915 = vunpack.c.l.b16 %v3392
          %v3916 = vunpack.c.l.b16 %v3393
          %v3917 = vunpack.c.l.b16 %v3394
          %v3918 = vunpack.c.l.b16 %v3395
          %v3919 = vunpack.c.l.b16 %v3396
          %v3920 = vunpack.c.l.b16 %v3397
          %v3921 = vunpack.c.l.b16 %v3398
          %v3922 = vunpack.c.l.b16 %v3399
          %v3923 = vunpack.c.l.b16 %v3400
          %v3924 = vunpack.c.l.b16 %v3401
          %v3925 = vunpack.c.l.b16 %v3402
          %v3926 = vunpack.c.l.b16 %v3403
          %v3927 = vunpack.c.l.b16 %v3404
          %v3928 = vunpack.c.l.b16 %v3405
          %v3929 = vunpack.c.l.b16 %v3406
          %v3930 = vunpack.c.l.b16 %v3407
          %v3931 = vunpack.c.l.b16 %v3408
          %v3932 = vunpack.c.l.b16 %v3409
          %v3933 = vunpack.c.l.b16 %v3410
          %v3934 = vunpack.c.l.b16 %v3411
          %v3935 = vunpack.c.l.b16 %v3412
          %v3936 = vunpack.c.l.b16 %v3413
          %v3937 = vunpack.c.l.b16 %v3414
          %v3938 = vunpack.c.l.b16 %v3415
          %v3939 = vunpack.c.l.b16 %v3416
          %v3940 = vunpack.c.l.b16 %v3417
          %v3941 = vunpack.c.l.b16 %v3418
          %v3942 = vunpack.c.l.b16 %v3419
          %v3943 = vunpack.c.l.b16 %v3420
          %v3944 = vunpack.c.l.b16 %v3421
          %v3945 = vunpack.c.l.b16 %v3422
          %v3946 = vunpack.c.l.b16 %v3423
          %v3947 = vunpack.c.l.b16 %v3424
          %v3948 = vunpack.c.l.b16 %v3425
          %v3949 = vunpack.c.l.b16 %v3426
          %v3950 = vunpack.c.l.b16 %v3427
          %v3951 = vunpack.c.l.b16 %v3428
          %v3952 = vunpack.c.l.b16 %v3429
          %v3953 = vunpack.c.l.b16 %v3430
          %v3954 = vunpack.c.l.b16 %v3431
          %v3955 = vunpack.c.l.b16 %v3432
          %v3956 = vunpack.c.l.b16 %v3433
          %v3957 = vunpack.c.l.b16 %v3434
          %v3958 = vunpack.c.l.b16 %v3435
          %v3959 = vunpack.c.l.b16 %v3436
          %v3960 = vunpack.c.l.b16 %v3437
          %v3961 = vunpack.c.l.b16 %v3438
          %v3962 = vunpack.c.l.b16 %v3439
          %v3963 = vunpack.c.l.b16 %v3440
          %v3964 = vunpack.c.l.b16 %v3441
          %v3965 = vunpack.c.l.b16 %v3442
          %v3966 = vunpack.c.l.b16 %v3443
          %v3967 = vunpack.c.l.b16 %v3444
          %v3968 = vunpack.c.l.b16 %v3445
          %v3969 = vunpack.c.l.b16 %v3446
          %v3970 = vunpack.c.l.b16 %v3447
          %v3971 = vunpack.c.l.b16 %v3448
          %v3972 = vunpack.c.l.b16 %v3449
          %v3973 = vunpack.c.l.b16 %v3450
          %v3974 = vunpack.c.l.b16 %v3451
          %v3975 = vunpack.c.l.b16 %v3452
          %v3976 = vunpack.c.l.b16 %v3453
          %v3977 = vunpack.c.l.b16 %v3454
          %v3978 = vunpack.c.l.b16 %v3455
          %v3979 = vunpack.c.l.b16 %v3456
          %v3980 = vunpack.c.l.b16 %v3457
          %v3981 = vunpack.c.l.b16 %v3458
          %v3982 = vunpack.c.l.b16 %v3459
          %v3983 = vunpack.c.l.b16 %v3460
          %v3984 = vunpack.c.l.b16 %v3461
          %v3985 = vunpack.c.l.b16 %v3462
          %v3986 = vunpack.c.l.b16 %v3463
          %v3987 = vunpack.c.l.b16 %v3464
          %v3988 = vunpack.c.l.b16 %v3465
          %v3989 = vunpack.c.l.b16 %v3466
          %v3990 = vunpack.c.l.b16 %v3467
          %v3991 = vunpack.c.l.b16 %v3468
          %v3992 = vunpack.c.l.b16 %v3469
          %v3993 = vunpack.c.l.b16 %v3470
          %v3994 = vunpack.c.l.b16 %v3471
          %v3995 = vunpack.c.l.b16 %v3472
          %v3996 = vunpack.c.l.b16 %v3473
          %v3997 = vunpack.c.l.b16 %v3474
          %v3998 = vunpack.c.l.b16 %v3475
          %v3999 = vunpack.c.l.b16 %v3476
          %v4000 = vunpack.c.l.b16 %v3477
          %v4001 = vunpack.c.l.b16 %v3478
          %v4002 = vunpack.c.l.b16 %v3479
          %v4003 = vunpack.c.l.b16 %v3480
          %v4004 = vunpack.c.l.b16 %v3481
          %v4005 = vunpack.c.l.b16 %v3482
          %v4006 = vunpack.c.l.b16 %v3483
          %v4007 = vunpack.c.l.b16 %v3484
          %v4008 = vunpack.c.l.b16 %v3485
          %v4009 = vunpack.c.l.b16 %v3486
          %v4010 = vunpack.c.l.b16 %v3487
          %v4011 = vunpack.c.l.b16 %v3488
          %v4012 = vunpack.c.l.b16 %v3489
          %v4013 = vunpack.c.l.b16 %v3490
          %v4014 = vunpack.c.l.b16 %v3491
          %v4015 = vunpack.c.l.b16 %v3492
          %v4016 = vunpack.c.l.b16 %v3493
          %v4017 = vunpack.c.l.b16 %v3494
          %v4018 = vunpack.c.l.b16 %v3495
          %v4019 = vunpack.c.l.b16 %v3496
          %v4020 = vunpack.c.l.b16 %v3497
          %v4021 = vunpack.c.l.b16 %v3498
          %v4022 = vunpack.c.l.b16 %v3499
          %v4023 = vunpack.c.l.b16 %v3500
          %v4024 = vunpack.c.l.b16 %v3501
          %v4025 = vunpack.c.l.b16 %v3502
          %v4026 = vunpack.c.l.b16 %v3503
          %v4027 = vunpack.c.l.b16 %v3504
          %v4028 = vunpack.c.l.b16 %v3505
          %v4029 = vunpack.c.l.b16 %v3506
          %v4030 = vunpack.c.l.b16 %v3507
          %v4031 = vunpack.c.l.b16 %v3508
          %v4032 = vunpack.c.l.b16 %v3509
          %v4033 = vunpack.c.l.b16 %v3510
          %v4034 = vunpack.c.l.b16 %v3511
          %v4035 = vunpack.c.l.b16 %v3512
          %v4036 = vunpack.c.l.b16 %v3513
          %v4037 = vunpack.c.l.b16 %v3514
          %v4038 = vunpack.c.l.b16 %v3515
          %v4039 = vunpack.c.l.b16 %v3516
          %v4040 = vunpack.c.l.b16 %v3517
          %v4041 = vunpack.c.l.b16 %v3518
          %v4042 = vunpack.c.l.b16 %v3519
          %v4043 = vunpack.c.l.b16 %v3520
          %v4044 = vunpack.c.l.b16 %v3521
          %v4045 = vpack.c.b16 %v3902, %v3901
          %v4046 = vpack.c.b16 %v3904, %v3903
          %v4047 = vpack.c.b16 %v3906, %v3905
          %v4048 = vpack.c.b16 %v3908, %v3907
          %v4049 = vpack.c.b16 %v3910, %v3909
          %v4050 = vpack.c.b16 %v3912, %v3911
          %v4051 = vpack.c.b16 %v3914, %v3913
          %v4052 = vpack.c.b16 %v3916, %v3915
          %v4053 = vpack.c.b16 %v3918, %v3917
          %v4054 = vpack.c.b16 %v3920, %v3919
          %v4055 = vpack.c.b16 %v3922, %v3921
          %v4056 = vpack.c.b16 %v3924, %v3923
          %v4057 = vpack.c.b16 %v3926, %v3925
          %v4058 = vpack.c.b16 %v3928, %v3927
          %v4059 = vpack.c.b16 %v3930, %v3929
          %v4060 = vpack.c.b16 %v3932, %v3931
          %v4061 = vpack.c.b16 %v3934, %v3933
          %v4062 = vpack.c.b16 %v3936, %v3935
          %v4063 = vpack.c.b16 %v3938, %v3937
          %v4064 = vpack.c.b16 %v3940, %v3939
          %v4065 = vpack.c.b16 %v3942, %v3941
          %v4066 = vpack.c.b16 %v3944, %v3943
          %v4067 = vpack.c.b16 %v3946, %v3945
          %v4068 = vpack.c.b16 %v3948, %v3947
          %v4069 = vpack.c.b16 %v3950, %v3949
          %v4070 = vpack.c.b16 %v3952, %v3951
          %v4071 = vpack.c.b16 %v3954, %v3953
          %v4072 = vpack.c.b16 %v3956, %v3955
          %v4073 = vpack.c.b16 %v3958, %v3957
          %v4074 = vpack.c.b16 %v3960, %v3959
          %v4075 = vpack.c.b16 %v3962, %v3961
          %v4076 = vpack.c.b16 %v3964, %v3963
          %v4077 = vpack.c.b16 %v3966, %v3965
          %v4078 = vpack.c.b16 %v3968, %v3967
          %v4079 = vpack.c.b16 %v3970, %v3969
          %v4080 = vpack.c.b16 %v3972, %v3971
          %v4081 = vpack.c.b16 %v3974, %v3973
          %v4082 = vpack.c.b16 %v3976, %v3975
          %v4083 = vpack.c.b16 %v3978, %v3977
          %v4084 = vpack.c.b16 %v3980, %v3979
          %v4085 = vpack.c.b16 %v3982, %v3981
          %v4086 = vpack.c.b16 %v3984, %v3983
          %v4087 = vpack.c.b16 %v3986, %v3985
          %v4088 = vpack.c.b16 %v3988, %v3987
          %v4089 = vpack.c.b16 %v3990, %v3989
          %v4090 = vpack.c.b16 %v3992, %v3991
          %v4091 = vpack.c.b16 %v3994, %v3993
          %v4092 = vpack.c.b16 %v3996, %v3995
          %v4093 = vpack.c.b16 %v3998, %v3997
          %v4094 = vpack.c.b16 %v4000, %v3999
          %v4095 = vpack.c.b16 %v4002, %v4001
          %v4096 = vpack.c.b16 %v4004, %v4003
          %v4097 = vpack.c.b16 %v4006, %v4005
          %v4098 = vpack.c.b16 %v4008, %v4007
          %v4099 = vpack.c.b16 %v4010, %v4009
          %v4100 = vpack.c.b16 %v4012, %v4011
          %v4101 = vpack.c.b16 %v4014, %v4013
          %v4102 = vpack.c.b16 %v4016, %v4015
          %v4103 = vpack.c.b16 %v4018, %v4017
          %v4104 = vpack.c.b16 %v4020, %v4019
          %v4105 = vpack.c.b16 %v4022, %v4021
          %v4106 = vpack.c.b16 %v4024, %v4023
          %v4107 = vpack.c.b16 %v4026, %v4025
          %v4108 = vpack.c.b16 %v4028, %v4027
          %v4109 = vpack.c.b16 %v4030, %v4029
          %v4110 = vpack.c.b16 %v4032, %v4031
          %v4111 = vpack.c.b16 %v4034, %v4033
          %v4112 = vpack.c.b16 %v4036, %v4035
          %v4113 = vpack.c.b16 %v4038, %v4037
          %v4114 = vpack.c.b16 %v4040, %v4039
          %v4115 = vpack.c.b16 %v4042, %v4041
          %v4116 = vpack.c.b16 %v4044, %v4043
          %4189 = vmatprep.subr.bf16.mxu0 0
          %4190 = vmatpush1.bf16.msra.mxu0 %v4045
          %4191 = vmatprep.subr.bf16.mxu0 0
          %4192 = vmatpush1.bf16.msra.mxu0 %v4046
          %4193 = vmatprep.subr.bf16.mxu0 0
          %4194 = vmatpush1.bf16.msra.mxu0 %v4047
          %4195 = vmatprep.subr.bf16.mxu0 0
          %4196 = vmatpush1.bf16.msra.mxu0 %v4048
          %4197 = vmatprep.subr.bf16.mxu0 0
          %4198 = vmatpush1.bf16.msra.mxu0 %v4049
          %4199 = vmatprep.subr.bf16.mxu0 0
          %4200 = vmatpush1.bf16.msra.mxu0 %v4050
          %4201 = vmatprep.subr.bf16.mxu0 0
          %4202 = vmatpush1.bf16.msra.mxu0 %v4051
          %4203 = vmatprep.subr.bf16.mxu0 0
          %4204 = vmatpush1.bf16.msra.mxu0 %v4052
          %4205 = vmatprep.subr.bf16.mxu0 0
          %4206 = vmatpush1.bf16.msra.mxu0 %v4053
          %4207 = vmatprep.subr.bf16.mxu0 0
          %4208 = vmatpush1.bf16.msra.mxu0 %v4054
          %4209 = vmatprep.subr.bf16.mxu0 0
          %4210 = vmatpush1.bf16.msra.mxu0 %v4055
          %4211 = vmatprep.subr.bf16.mxu0 0
          %4212 = vmatpush1.bf16.msra.mxu0 %v4056
          %4213 = vmatprep.subr.bf16.mxu0 0
          %4214 = vmatpush1.bf16.msra.mxu0 %v4057
          %4215 = vmatprep.subr.bf16.mxu0 0
          %4216 = vmatpush1.bf16.msra.mxu0 %v4058
          %4217 = vmatprep.subr.bf16.mxu0 0
          %4218 = vmatpush1.bf16.msra.mxu0 %v4059
          %4219 = vmatprep.subr.bf16.mxu0 0
          %4220 = vmatpush1.bf16.msra.mxu0 %v4060
          %4221 = vmatprep.mubr.bf16.mxu0 %v3537
          %4222 = vmatmul.mubr.bf16.gmra.mrb[0].mxu0 %v3534
          %v4223 = vpop.f32.mrb[0].mxu0
          %v4224 = vadd.f32 %v3528, %v4223
          %v4225 = vpop.f32.mrb[0].mxu0
          %v4226 = vpop.f32.mrb[0].mxu0
          %v4227 = vadd.f32 %v3528, %v4226
          %v4228 = vpop.f32.mrb[0].mxu0
          %4229 = vmatprep.mubr.bf16.mxu0 %v3562
          %4230 = vmatmul.mubr.bf16.gmra.mrb[0].mxu0 %v3560
          %v4231 = vpop.f32.mrb[0].mxu0
          %v4232 = vadd.f32 %v3528, %v4231
          %v4233 = vpop.f32.mrb[0].mxu0
          %v4234 = vpop.f32.mrb[0].mxu0
          %v4235 = vadd.f32 %v3528, %v4234
          %v4236 = vpop.f32.mrb[0].mxu0
          %4237 = vmatprep.mubr.bf16.mxu0 %v3580
          %4238 = vmatmul.mubr.bf16.gmra.mrb[0].mxu0 %v3578
          %v4239 = vpop.f32.mrb[0].mxu0
          %v4240 = vadd.f32 %v3528, %v4239
          %v4241 = vpop.f32.mrb[0].mxu0
          %v4242 = vpop.f32.mrb[0].mxu0
          %v4243 = vadd.f32 %v3528, %v4242
          %v4244 = vpop.f32.mrb[0].mxu0
          %4245 = vmatprep.mubr.bf16.mxu0 %v3598
          %4246 = vmatmul.mubr.bf16.gmra.mrb[0].mxu0 %v3596
          %v4247 = vpop.f32.mrb[0].mxu0
          %v4248 = vadd.f32 %v3528, %v4247
          %v4249 = vpop.f32.mrb[0].mxu0
          %v4250 = vpop.f32.mrb[0].mxu0
          %v4251 = vadd.f32 %v3528, %v4250
          %v4252 = vpop.f32.mrb[0].mxu0
          %4253 = vmatprep.mubr.bf16.mxu0 %v3616
          %4254 = vmatmul.mubr.bf16.gmra.mrb[0].mxu0 %v3614
          %v4255 = vpop.f32.mrb[0].mxu0
          %v4256 = vadd.f32 %v3528, %v4255
          %v4257 = vpop.f32.mrb[0].mxu0
          %v4258 = vpop.f32.mrb[0].mxu0
          %v4259 = vadd.f32 %v3528, %v4258
          %v4260 = vpop.f32.mrb[0].mxu0
          %4261 = vmatprep.mubr.bf16.mxu0 %v3634
          %4262 = vmatmul.mubr.bf16.gmra.mrb[0].mxu0 %v3632
          %v4263 = vpop.f32.mrb[0].mxu0
          %v4264 = vadd.f32 %v3528, %v4263
          %v4265 = vpop.f32.mrb[0].mxu0
          %v4266 = vpop.f32.mrb[0].mxu0
          %v4267 = vadd.f32 %v3528, %v4266
          %v4268 = vpop.f32.mrb[0].mxu0
          %4269 = vmatprep.mubr.bf16.mxu0 %v3652
          %4270 = vmatmul.mubr.bf16.gmra.mrb[0].mxu0 %v3650
          %v4271 = vpop.f32.mrb[0].mxu0
          %v4272 = vadd.f32 %v3528, %v4271
          %v4273 = vpop.f32.mrb[0].mxu0
          %v4274 = vpop.f32.mrb[0].mxu0
          %v4275 = vadd.f32 %v3528, %v4274
          %v4276 = vpop.f32.mrb[0].mxu0
          %4277 = vmatprep.mubr.bf16.mxu0 %v3670
          %4278 = vmatmul.mubr.bf16.gmra.mrb[0].mxu0 %v3668
          %v4279 = vpop.f32.mrb[0].mxu0
          %v4280 = vadd.f32 %v3528, %v4279
          %v4281 = vpop.f32.mrb[0].mxu0
          %v4282 = vpop.f32.mrb[0].mxu0
          %v4283 = vadd.f32 %v3528, %v4282
          %v4284 = vpop.f32.mrb[0].mxu0
          %4285 = vdwg.mxu0
          %4286 = vmatprep.subr.bf16.mxu0 0
          %4287 = vmatpush1.bf16.msra.mxu0 %v4061
          %4288 = vmatprep.subr.bf16.mxu0 0
          %4289 = vmatpush1.bf16.msra.mxu0 %v4062
          %4290 = vmatprep.subr.bf16.mxu0 0
          %4291 = vmatpush1.bf16.msra.mxu0 %v4063
          %4292 = vmatprep.subr.bf16.mxu0 0
          %4293 = vmatpush1.bf16.msra.mxu0 %v4064
          %4294 = vmatprep.subr.bf16.mxu0 0
          %4295 = vmatpush1.bf16.msra.mxu0 %v4065
          %4296 = vmatprep.subr.bf16.mxu0 0
          %4297 = vmatpush1.bf16.msra.mxu0 %v4066
          %4298 = vmatprep.subr.bf16.mxu0 0
          %4299 = vmatpush1.bf16.msra.mxu0 %v4067
          %4300 = vmatprep.subr.bf16.mxu0 0
          %4301 = vmatpush1.bf16.msra.mxu0 %v4068
          %4302 = vmatprep.subr.bf16.mxu0 0
          %4303 = vmatpush1.bf16.msra.mxu0 %v4069
          %4304 = vmatprep.subr.bf16.mxu0 0
          %4305 = vmatpush1.bf16.msra.mxu0 %v4070
          %4306 = vmatprep.subr.bf16.mxu0 0
          %4307 = vmatpush1.bf16.msra.mxu0 %v4071
          %4308 = vmatprep.subr.bf16.mxu0 0
          %4309 = vmatpush1.bf16.msra.mxu0 %v4072
          %4310 = vmatprep.subr.bf16.mxu0 0
          %4311 = vmatpush1.bf16.msra.mxu0 %v4073
          %4312 = vmatprep.subr.bf16.mxu0 0
          %4313 = vmatpush1.bf16.msra.mxu0 %v4074
          %4314 = vmatprep.subr.bf16.mxu0 0
          %4315 = vmatpush1.bf16.msra.mxu0 %v4075
          %4316 = vmatprep.subr.bf16.mxu0 0
          %4317 = vmatpush1.bf16.msra.mxu0 %v4076
          %4318 = vmatprep.mubr.bf16.mxu0 %v3543
          %4319 = vmatmul.mubr.bf16.gmra.mrb[0].mxu0 %v3540
          %v4320 = vpop.f32.mrb[0].mxu0
          %v4321 = vadd.f32 %v4224, %v4320
          %v4322 = vpop.f32.mrb[0].mxu0
          %v4323 = vpop.f32.mrb[0].mxu0
          %v4324 = vadd.f32 %v4227, %v4323
          %v4325 = vpop.f32.mrb[0].mxu0
          %4326 = vmatprep.mubr.bf16.mxu0 %v3566
          %4327 = vmatmul.mubr.bf16.gmra.mrb[0].mxu0 %v3564
          %v4328 = vpop.f32.mrb[0].mxu0
          %v4329 = vadd.f32 %v4232, %v4328
          %v4330 = vpop.f32.mrb[0].mxu0
          %v4331 = vpop.f32.mrb[0].mxu0
          %v4332 = vadd.f32 %v4235, %v4331
          %v4333 = vpop.f32.mrb[0].mxu0
          %4334 = vmatprep.mubr.bf16.mxu0 %v3584
          %4335 = vmatmul.mubr.bf16.gmra.mrb[0].mxu0 %v3582
          %v4336 = vpop.f32.mrb[0].mxu0
          %v4337 = vadd.f32 %v4240, %v4336
          %v4338 = vpop.f32.mrb[0].mxu0
          %v4339 = vpop.f32.mrb[0].mxu0
          %v4340 = vadd.f32 %v4243, %v4339
          %v4341 = vpop.f32.mrb[0].mxu0
          %4342 = vmatprep.mubr.bf16.mxu0 %v3602
          %4343 = vmatmul.mubr.bf16.gmra.mrb[0].mxu0 %v3600
          %v4344 = vpop.f32.mrb[0].mxu0
          %v4345 = vadd.f32 %v4248, %v4344
          %v4346 = vpop.f32.mrb[0].mxu0
          %v4347 = vpop.f32.mrb[0].mxu0
          %v4348 = vadd.f32 %v4251, %v4347
          %v4349 = vpop.f32.mrb[0].mxu0
          %4350 = vmatprep.mubr.bf16.mxu0 %v3620
          %4351 = vmatmul.mubr.bf16.gmra.mrb[0].mxu0 %v3618
          %v4352 = vpop.f32.mrb[0].mxu0
          %v4353 = vadd.f32 %v4256, %v4352
          %v4354 = vpop.f32.mrb[0].mxu0
          %v4355 = vpop.f32.mrb[0].mxu0
          %v4356 = vadd.f32 %v4259, %v4355
          %v4357 = vpop.f32.mrb[0].mxu0
          %4358 = vmatprep.mubr.bf16.mxu0 %v3638
          %4359 = vmatmul.mubr.bf16.gmra.mrb[0].mxu0 %v3636
          %v4360 = vpop.f32.mrb[0].mxu0
          %v4361 = vadd.f32 %v4264, %v4360
          %v4362 = vpop.f32.mrb[0].mxu0
          %v4363 = vpop.f32.mrb[0].mxu0
          %v4364 = vadd.f32 %v4267, %v4363
          %v4365 = vpop.f32.mrb[0].mxu0
          %4366 = vmatprep.mubr.bf16.mxu0 %v3656
          %4367 = vmatmul.mubr.bf16.gmra.mrb[0].mxu0 %v3654
          %v4368 = vpop.f32.mrb[0].mxu0
          %v4369 = vadd.f32 %v4272, %v4368
          %v4370 = vpop.f32.mrb[0].mxu0
          %v4371 = vpop.f32.mrb[0].mxu0
          %v4372 = vadd.f32 %v4275, %v4371
          %v4373 = vpop.f32.mrb[0].mxu0
          %4374 = vmatprep.mubr.bf16.mxu0 %v3674
          %4375 = vmatmul.mubr.bf16.gmra.mrb[0].mxu0 %v3672
          %v4376 = vpop.f32.mrb[0].mxu0
          %v4377 = vadd.f32 %v4280, %v4376
          %v4378 = vpop.f32.mrb[0].mxu0
          %v4379 = vpop.f32.mrb[0].mxu0
          %v4380 = vadd.f32 %v4283, %v4379
          %v4381 = vpop.f32.mrb[0].mxu0
          %4382 = vdwg.mxu0
          %4383 = vmatprep.subr.bf16.mxu0 0
          %4384 = vmatpush1.bf16.msra.mxu0 %v4077
          %4385 = vmatprep.subr.bf16.mxu0 0
          %4386 = vmatpush1.bf16.msra.mxu0 %v4078
          %4387 = vmatprep.subr.bf16.mxu0 0
          %4388 = vmatpush1.bf16.msra.mxu0 %v4079
          %4389 = vmatprep.subr.bf16.mxu0 0
          %4390 = vmatpush1.bf16.msra.mxu0 %v4080
          %4391 = vmatprep.subr.bf16.mxu0 0
          %4392 = vmatpush1.bf16.msra.mxu0 %v4081
          %4393 = vmatprep.subr.bf16.mxu0 0
          %4394 = vmatpush1.bf16.msra.mxu0 %v4082
          %4395 = vmatprep.subr.bf16.mxu0 0
          %4396 = vmatpush1.bf16.msra.mxu0 %v4083
          %4397 = vmatprep.subr.bf16.mxu0 0
          %4398 = vmatpush1.bf16.msra.mxu0 %v4084
          %4399 = vmatprep.subr.bf16.mxu0 0
          %4400 = vmatpush1.bf16.msra.mxu0 %v4085
          %4401 = vmatprep.subr.bf16.mxu0 0
          %4402 = vmatpush1.bf16.msra.mxu0 %v4086
          %4403 = vmatprep.subr.bf16.mxu0 0
          %4404 = vmatpush1.bf16.msra.mxu0 %v4087
          %4405 = vmatprep.subr.bf16.mxu0 0
          %4406 = vmatpush1.bf16.msra.mxu0 %v4088
          %4407 = vmatprep.subr.bf16.mxu0 0
          %4408 = vmatpush1.bf16.msra.mxu0 %v4089
          %4409 = vmatprep.subr.bf16.mxu0 0
          %4410 = vmatpush1.bf16.msra.mxu0 %v4090
          %4411 = vmatprep.subr.bf16.mxu0 0
          %4412 = vmatpush1.bf16.msra.mxu0 %v4091
          %4413 = vmatprep.subr.bf16.mxu0 0
          %4414 = vmatpush1.bf16.msra.mxu0 %v4092
          %4415 = vmatprep.mubr.bf16.mxu0 %v3549
          %4416 = vmatmul.mubr.bf16.gmra.mrb[0].mxu0 %v3546
          %v4417 = vpop.f32.mrb[0].mxu0
          %v4418 = vadd.f32 %v4321, %v4417
          %v4419 = vpop.f32.mrb[0].mxu0
          %v4420 = vpop.f32.mrb[0].mxu0
          %v4421 = vadd.f32 %v4324, %v4420
          %v4422 = vpop.f32.mrb[0].mxu0
          %4423 = vmatprep.mubr.bf16.mxu0 %v3570
          %4424 = vmatmul.mubr.bf16.gmra.mrb[0].mxu0 %v3568
          %v4425 = vpop.f32.mrb[0].mxu0
          %v4426 = vadd.f32 %v4329, %v4425
          %v4427 = vpop.f32.mrb[0].mxu0
          %v4428 = vpop.f32.mrb[0].mxu0
          %v4429 = vadd.f32 %v4332, %v4428
          %v4430 = vpop.f32.mrb[0].mxu0
          %4431 = vmatprep.mubr.bf16.mxu0 %v3588
          %4432 = vmatmul.mubr.bf16.gmra.mrb[0].mxu0 %v3586
          %v4433 = vpop.f32.mrb[0].mxu0
          %v4434 = vadd.f32 %v4337, %v4433
          %v4435 = vpop.f32.mrb[0].mxu0
          %v4436 = vpop.f32.mrb[0].mxu0
          %v4437 = vadd.f32 %v4340, %v4436
          %v4438 = vpop.f32.mrb[0].mxu0
          %4439 = vmatprep.mubr.bf16.mxu0 %v3606
          %4440 = vmatmul.mubr.bf16.gmra.mrb[0].mxu0 %v3604
          %v4441 = vpop.f32.mrb[0].mxu0
          %v4442 = vadd.f32 %v4345, %v4441
          %v4443 = vpop.f32.mrb[0].mxu0
          %v4444 = vpop.f32.mrb[0].mxu0
          %v4445 = vadd.f32 %v4348, %v4444
          %v4446 = vpop.f32.mrb[0].mxu0
          %4447 = vmatprep.mubr.bf16.mxu0 %v3624
          %4448 = vmatmul.mubr.bf16.gmra.mrb[0].mxu0 %v3622
          %v4449 = vpop.f32.mrb[0].mxu0
          %v4450 = vadd.f32 %v4353, %v4449
          %v4451 = vpop.f32.mrb[0].mxu0
          %v4452 = vpop.f32.mrb[0].mxu0
          %v4453 = vadd.f32 %v4356, %v4452
          %v4454 = vpop.f32.mrb[0].mxu0
          %4455 = vmatprep.mubr.bf16.mxu0 %v3642
          %4456 = vmatmul.mubr.bf16.gmra.mrb[0].mxu0 %v3640
          %v4457 = vpop.f32.mrb[0].mxu0
          %v4458 = vadd.f32 %v4361, %v4457
          %v4459 = vpop.f32.mrb[0].mxu0
          %v4460 = vpop.f32.mrb[0].mxu0
          %v4461 = vadd.f32 %v4364, %v4460
          %v4462 = vpop.f32.mrb[0].mxu0
          %4463 = vmatprep.mubr.bf16.mxu0 %v3660
          %4464 = vmatmul.mubr.bf16.gmra.mrb[0].mxu0 %v3658
          %v4465 = vpop.f32.mrb[0].mxu0
          %v4466 = vadd.f32 %v4369, %v4465
          %v4467 = vpop.f32.mrb[0].mxu0
          %v4468 = vpop.f32.mrb[0].mxu0
          %v4469 = vadd.f32 %v4372, %v4468
          %v4470 = vpop.f32.mrb[0].mxu0
          %4471 = vmatprep.mubr.bf16.mxu0 %v3678
          %4472 = vmatmul.mubr.bf16.gmra.mrb[0].mxu0 %v3676
          %v4473 = vpop.f32.mrb[0].mxu0
          %v4474 = vadd.f32 %v4377, %v4473
          %v4475 = vpop.f32.mrb[0].mxu0
          %v4476 = vpop.f32.mrb[0].mxu0
          %v4477 = vadd.f32 %v4380, %v4476
          %v4478 = vpop.f32.mrb[0].mxu0
          %4479 = vdwg.mxu0
          %4480 = vmatprep.subr.bf16.mxu0 0
          %4481 = vmatpush1.bf16.msra.mxu0 %v4093
          %4482 = vmatprep.subr.bf16.mxu0 0
          %4483 = vmatpush1.bf16.msra.mxu0 %v4094
          %4484 = vmatprep.subr.bf16.mxu0 0
          %4485 = vmatpush1.bf16.msra.mxu0 %v4095
          %4486 = vmatprep.subr.bf16.mxu0 0
          %4487 = vmatpush1.bf16.msra.mxu0 %v4096
          %4488 = vmatprep.subr.bf16.mxu0 0
          %4489 = vmatpush1.bf16.msra.mxu0 %v4097
          %4490 = vmatprep.subr.bf16.mxu0 0
          %4491 = vmatpush1.bf16.msra.mxu0 %v4098
          %4492 = vmatprep.subr.bf16.mxu0 0
          %4493 = vmatpush1.bf16.msra.mxu0 %v4099
          %4494 = vmatprep.subr.bf16.mxu0 0
          %4495 = vmatpush1.bf16.msra.mxu0 %v4100
          %4496 = vmatprep.subr.bf16.mxu0 0
          %4497 = vmatpush1.bf16.msra.mxu0 %v4101
          %4498 = vmatprep.subr.bf16.mxu0 0
          %4499 = vmatpush1.bf16.msra.mxu0 %v4102
          %4500 = vmatprep.subr.bf16.mxu0 0
          %4501 = vmatpush1.bf16.msra.mxu0 %v4103
          %4502 = vmatprep.subr.bf16.mxu0 0
          %4503 = vmatpush1.bf16.msra.mxu0 %v4104
          %4504 = vmatprep.subr.bf16.mxu0 0
          %4505 = vmatpush1.bf16.msra.mxu0 %v4105
          %4506 = vmatprep.subr.bf16.mxu0 0
          %4507 = vmatpush1.bf16.msra.mxu0 %v4106
          %4508 = vmatprep.subr.bf16.mxu0 0
          %4509 = vmatpush1.bf16.msra.mxu0 %v4107
          %4510 = vmatprep.subr.bf16.mxu0 0
          %4511 = vmatpush1.bf16.msra.mxu0 %v4108
          %4512 = vmatprep.mubr.bf16.mxu0 %v3555
          %4513 = vmatmul.mubr.bf16.gmra.mrb[0].mxu0 %v3552
          %v4514 = vpop.f32.mrb[0].mxu0
          %v4515 = vadd.f32 %v4418, %v4514
          %v4516 = vpop.f32.mrb[0].mxu0
          %v4517 = vpop.f32.mrb[0].mxu0
          %v4518 = vadd.f32 %v4421, %v4517
          %v4519 = vpop.f32.mrb[0].mxu0
          %4520 = vmatprep.mubr.bf16.mxu0 %v3574
          %4521 = vmatmul.mubr.bf16.gmra.mrb[0].mxu0 %v3572
          %v4522 = vpop.f32.mrb[0].mxu0
          %v4523 = vadd.f32 %v4426, %v4522
          %v4524 = vpop.f32.mrb[0].mxu0
          %v4525 = vpop.f32.mrb[0].mxu0
          %v4526 = vadd.f32 %v4429, %v4525
          %v4527 = vpop.f32.mrb[0].mxu0
          %4528 = vmatprep.mubr.bf16.mxu0 %v3592
          %4529 = vmatmul.mubr.bf16.gmra.mrb[0].mxu0 %v3590
          %v4530 = vpop.f32.mrb[0].mxu0
          %v4531 = vadd.f32 %v4434, %v4530
          %v4532 = vpop.f32.mrb[0].mxu0
          %v4533 = vpop.f32.mrb[0].mxu0
          %v4534 = vadd.f32 %v4437, %v4533
          %v4535 = vpop.f32.mrb[0].mxu0
          %4536 = vmatprep.mubr.bf16.mxu0 %v3610
          %4537 = vmatmul.mubr.bf16.gmra.mrb[0].mxu0 %v3608
          %v4538 = vpop.f32.mrb[0].mxu0
          %v4539 = vadd.f32 %v4442, %v4538
          %v4540 = vpop.f32.mrb[0].mxu0
          %v4541 = vpop.f32.mrb[0].mxu0
          %v4542 = vadd.f32 %v4445, %v4541
          %v4543 = vpop.f32.mrb[0].mxu0
          %4544 = vmatprep.mubr.bf16.mxu0 %v3628
          %4545 = vmatmul.mubr.bf16.gmra.mrb[0].mxu0 %v3626
          %v4546 = vpop.f32.mrb[0].mxu0
          %v4547 = vadd.f32 %v4450, %v4546
          %v4548 = vpop.f32.mrb[0].mxu0
          %v4549 = vpop.f32.mrb[0].mxu0
          %v4550 = vadd.f32 %v4453, %v4549
          %v4551 = vpop.f32.mrb[0].mxu0
          %4552 = vmatprep.mubr.bf16.mxu0 %v3646
          %4553 = vmatmul.mubr.bf16.gmra.mrb[0].mxu0 %v3644
          %v4554 = vpop.f32.mrb[0].mxu0
          %v4555 = vadd.f32 %v4458, %v4554
          %v4556 = vpop.f32.mrb[0].mxu0
          %v4557 = vpop.f32.mrb[0].mxu0
          %v4558 = vadd.f32 %v4461, %v4557
          %v4559 = vpop.f32.mrb[0].mxu0
          %4560 = vmatprep.mubr.bf16.mxu0 %v3664
          %4561 = vmatmul.mubr.bf16.gmra.mrb[0].mxu0 %v3662
          %v4562 = vpop.f32.mrb[0].mxu0
          %v4563 = vadd.f32 %v4466, %v4562
          %v4564 = vpop.f32.mrb[0].mxu0
          %v4565 = vpop.f32.mrb[0].mxu0
          %v4566 = vadd.f32 %v4469, %v4565
          %v4567 = vpop.f32.mrb[0].mxu0
          %4568 = vmatprep.mubr.bf16.mxu0 %v3682
          %4569 = vmatmul.mubr.bf16.gmra.mrb[0].mxu0 %v3680
          %v4570 = vpop.f32.mrb[0].mxu0
          %v4571 = vadd.f32 %v4474, %v4570
          %v4572 = vpop.f32.mrb[0].mxu0
          %v4573 = vpop.f32.mrb[0].mxu0
          %v4574 = vadd.f32 %v4477, %v4573
          %v4575 = vpop.f32.mrb[0].mxu0
          %4576 = vdwg.mxu0
          %4577 = vmatprep.subr.bf16.mxu0 0
          %4578 = vmatpush1.bf16.msra.mxu0 %v4109
          %4579 = vmatprep.subr.bf16.mxu0 0
          %4580 = vmatpush1.bf16.msra.mxu0 %v4110
          %4581 = vmatprep.subr.bf16.mxu0 0
          %4582 = vmatpush1.bf16.msra.mxu0 %v4111
          %4583 = vmatprep.subr.bf16.mxu0 0
          %4584 = vmatpush1.bf16.msra.mxu0 %v4112
          %4585 = vmatprep.subr.bf16.mxu0 0
          %4586 = vmatpush1.bf16.msra.mxu0 %v4113
          %4587 = vmatprep.subr.bf16.mxu0 0
          %4588 = vmatpush1.bf16.msra.mxu0 %v4114
          %4589 = vmatprep.subr.bf16.mxu0 0
          %4590 = vmatpush1.bf16.msra.mxu0 %v4115
          %4591 = vmatprep.subr.bf16.mxu0 0
          %4592 = vmatpush1.bf16.msra.mxu0 %v4116
          %4593 = vmatprep.subr.bf16.mxu0 0
          %4594 = vmatpush1.bf16.msra.mxu0 0
          %4595 = vmatprep.subr.bf16.mxu0 0
          %4596 = vmatpush1.bf16.msra.mxu0 0
          %4597 = vmatprep.subr.bf16.mxu0 0
          %4598 = vmatpush1.bf16.msra.mxu0 0
          %4599 = vmatprep.subr.bf16.mxu0 0
          %4600 = vmatpush1.bf16.msra.mxu0 0
          %4601 = vmatprep.subr.bf16.mxu0 0
          %4602 = vmatpush1.bf16.msra.mxu0 0
          %4603 = vmatprep.subr.bf16.mxu0 0
          %4604 = vmatpush1.bf16.msra.mxu0 0
          %4605 = vmatprep.subr.bf16.mxu0 0
          %4606 = vmatpush1.bf16.msra.mxu0 0
          %4607 = vmatprep.subr.bf16.mxu0 0
          %4608 = vmatpush1.bf16.msra.mxu0 0
          %4609 = vmatprep.mubr.bf16.mxu0 0
          %4610 = vmatmul.mubr.bf16.gmra.mrb[0].mxu0 %v3558
          %v4611 = vpop.f32.mrb[0].mxu0
          %v4612 = vadd.f32 %v4515, %v4611
          %v4613 = vpop.f32.mrb[0].mxu0
          %v4614 = vpop.f32.mrb[0].mxu0
          %v4615 = vadd.f32 %v4518, %v4614
          %v4616 = vpop.f32.mrb[0].mxu0
          %4617 = vmatprep.mubr.bf16.mxu0 0
          %4618 = vmatmul.mubr.bf16.gmra.mrb[0].mxu0 %v3576
          %v4619 = vpop.f32.mrb[0].mxu0
          %v4620 = vadd.f32 %v4523, %v4619
          %v4621 = vpop.f32.mrb[0].mxu0
          %v4622 = vpop.f32.mrb[0].mxu0
          %v4623 = vadd.f32 %v4526, %v4622
          %v4624 = vpop.f32.mrb[0].mxu0
          %4625 = vmatprep.mubr.bf16.mxu0 0
          %4626 = vmatmul.mubr.bf16.gmra.mrb[0].mxu0 %v3594
          %v4627 = vpop.f32.mrb[0].mxu0
          %v4628 = vadd.f32 %v4531, %v4627
          %v4629 = vpop.f32.mrb[0].mxu0
          %v4630 = vpop.f32.mrb[0].mxu0
          %v4631 = vadd.f32 %v4534, %v4630
          %v4632 = vpop.f32.mrb[0].mxu0
          %4633 = vmatprep.mubr.bf16.mxu0 0
          %4634 = vmatmul.mubr.bf16.gmra.mrb[0].mxu0 %v3612
          %v4635 = vpop.f32.mrb[0].mxu0
          %v4636 = vadd.f32 %v4539, %v4635
          %v4637 = vpop.f32.mrb[0].mxu0
          %v4638 = vpop.f32.mrb[0].mxu0
          %v4639 = vadd.f32 %v4542, %v4638
          %v4640 = vpop.f32.mrb[0].mxu0
          %4641 = vmatprep.mubr.bf16.mxu0 0
          %4642 = vmatmul.mubr.bf16.gmra.mrb[0].mxu0 %v3630
          %v4643 = vpop.f32.mrb[0].mxu0
          %v4644 = vadd.f32 %v4547, %v4643
          %v4645 = vpop.f32.mrb[0].mxu0
          %v4646 = vpop.f32.mrb[0].mxu0
          %v4647 = vadd.f32 %v4550, %v4646
          %v4648 = vpop.f32.mrb[0].mxu0
          %4649 = vmatprep.mubr.bf16.mxu0 0
          %4650 = vmatmul.mubr.bf16.gmra.mrb[0].mxu0 %v3648
          %v4651 = vpop.f32.mrb[0].mxu0
          %v4652 = vadd.f32 %v4555, %v4651
          %v4653 = vpop.f32.mrb[0].mxu0
          %v4654 = vpop.f32.mrb[0].mxu0
          %v4655 = vadd.f32 %v4558, %v4654
          %v4656 = vpop.f32.mrb[0].mxu0
          %4657 = vmatprep.mubr.bf16.mxu0 0
          %4658 = vmatmul.mubr.bf16.gmra.mrb[0].mxu0 %v3666
          %v4659 = vpop.f32.mrb[0].mxu0
          %v4660 = vadd.f32 %v4563, %v4659
          %v4661 = vpop.f32.mrb[0].mxu0
          %v4662 = vpop.f32.mrb[0].mxu0
          %v4663 = vadd.f32 %v4566, %v4662
          %v4664 = vpop.f32.mrb[0].mxu0
          %4665 = vmatprep.mubr.bf16.mxu0 0
          %4666 = vmatmul.mubr.bf16.gmra.mrb[0].mxu0 %v3684
          %v4667 = vpop.f32.mrb[0].mxu0
          %v4668 = vadd.f32 %v4571, %v4667
          %v4669 = vpop.f32.mrb[0].mxu0
          %v4670 = vpop.f32.mrb[0].mxu0
          %v4671 = vadd.f32 %v4574, %v4670
          %v4672 = vpop.f32.mrb[0].mxu0
          %4673 = vdwg.mxu0
          %v4674 = vmul.f32 %v4612, 0.5
          %v4675 = vmul.f32 %v4615, 0.5
          %v4676 = vmul.f32 %v4620, 0.5
          %v4677 = vmul.f32 %v4623, 0.5
          %v4678 = vmul.f32 %v4628, 0.5
          %v4679 = vmul.f32 %v4631, 0.5
          %v4680 = vmul.f32 %v4636, 0.5
          %v4681 = vmul.f32 %v4639, 0.5
          %v4682 = vmul.f32 %v4644, 0.5
          %v4683 = vmul.f32 %v4647, 0.5
          %v4684 = vmul.f32 %v4652, 0.5
          %v4685 = vmul.f32 %v4655, 0.5
          %v4686 = vmul.f32 %v4660, 0.5
          %v4687 = vmul.f32 %v4663, 0.5
          %v4688 = vmul.f32 %v4668, 0.5
          %v4689 = vmul.f32 %v4671, 0.5
          %v4690 = vmul.f32 %v4612, 0.70710677
          %v4691 = vmul.f32 %v4615, 0.70710677
          %v4692 = vmul.f32 %v4620, 0.70710677
          %v4693 = vmul.f32 %v4623, 0.70710677
          %v4694 = vmul.f32 %v4628, 0.70710677
          %v4695 = vmul.f32 %v4631, 0.70710677
          %v4696 = vmul.f32 %v4636, 0.70710677
          %v4697 = vmul.f32 %v4639, 0.70710677
          %v4698 = vmul.f32 %v4644, 0.70710677
          %v4699 = vmul.f32 %v4647, 0.70710677
          %v4700 = vmul.f32 %v4652, 0.70710677
          %v4701 = vmul.f32 %v4655, 0.70710677
          %v4702 = vmul.f32 %v4660, 0.70710677
          %v4703 = vmul.f32 %v4663, 0.70710677
          %v4704 = vmul.f32 %v4668, 0.70710677
          %v4705 = vmul.f32 %v4671, 0.70710677
          %v4706 = verf.f32.pop %v4690
          %v4707 = verf.f32.pop %v4691
          %v4708 = verf.f32.pop %v4692
          %v4709 = verf.f32.pop %v4693
          %v4710 = verf.f32.pop %v4694
          %v4711 = verf.f32.pop %v4695
          %v4712 = verf.f32.pop %v4696
          %v4713 = verf.f32.pop %v4697
          %v4714 = verf.f32.pop %v4698
          %v4715 = verf.f32.pop %v4699
          %v4716 = verf.f32.pop %v4700
          %v4717 = verf.f32.pop %v4701
          %v4718 = verf.f32.pop %v4702
          %v4719 = verf.f32.pop %v4703
          %v4720 = verf.f32.pop %v4704
          %v4721 = verf.f32.pop %v4705
          %v4722 = vadd.f32 %v4706, 1.0
          %v4723 = vadd.f32 %v4707, 1.0
          %v4724 = vadd.f32 %v4708, 1.0
          %v4725 = vadd.f32 %v4709, 1.0
          %v4726 = vadd.f32 %v4710, 1.0
          %v4727 = vadd.f32 %v4711, 1.0
          %v4728 = vadd.f32 %v4712, 1.0
          %v4729 = vadd.f32 %v4713, 1.0
          %v4730 = vadd.f32 %v4714, 1.0
          %v4731 = vadd.f32 %v4715, 1.0
          %v4732 = vadd.f32 %v4716, 1.0
          %v4733 = vadd.f32 %v4717, 1.0
          %v4734 = vadd.f32 %v4718, 1.0
          %v4735 = vadd.f32 %v4719, 1.0
          %v4736 = vadd.f32 %v4720, 1.0
          %v4737 = vadd.f32 %v4721, 1.0
          %v4738 = vmul.f32 %v4674, %v4722
          %v4739 = vmul.f32 %v4675, %v4723
          %v4740 = vmul.f32 %v4676, %v4724
          %v4741 = vmul.f32 %v4677, %v4725
          %v4742 = vmul.f32 %v4678, %v4726
          %v4743 = vmul.f32 %v4679, %v4727
          %v4744 = vmul.f32 %v4680, %v4728
          %v4745 = vmul.f32 %v4681, %v4729
          %v4746 = vmul.f32 %v4682, %v4730
          %v4747 = vmul.f32 %v4683, %v4731
          %v4748 = vmul.f32 %v4684, %v4732
          %v4749 = vmul.f32 %v4685, %v4733
          %v4750 = vmul.f32 %v4686, %v4734
          %v4751 = vmul.f32 %v4687, %v4735
          %v4752 = vmul.f32 %v4688, %v4736
          %v4753 = vmul.f32 %v4689, %v4737
          %v4754 = vadd.f32 %v2797, %v4738
          %v4755 = vadd.f32 %v2798, %v4739
          %v4756 = vadd.f32 %v2799, %v4740
          %v4757 = vadd.f32 %v2800, %v4741
          %v4758 = vadd.f32 %v2801, %v4742
          %v4759 = vadd.f32 %v2802, %v4743
          %v4760 = vadd.f32 %v2803, %v4744
          %v4761 = vadd.f32 %v2804, %v4745
          %v4762 = vadd.f32 %v2805, %v4746
          %v4763 = vadd.f32 %v2806, %v4747
          %v4764 = vadd.f32 %v2807, %v4748
          %v4765 = vadd.f32 %v2808, %v4749
          %v4766 = vadd.f32 %v2809, %v4750
          %v4767 = vadd.f32 %v2810, %v4751
          %v4768 = vadd.f32 %v2811, %v4752
          %v4769 = vadd.f32 %v2812, %v4753
          %s4770 = sadd.s32 %s847, 2
          %4771 = vadd.xlane.f32.xlu0 %v4754
          %v4772 = vpop.xlane.xlu0 %4771
          %4773 = vadd.xlane.f32.xlu0 %v4755
          %v4774 = vpop.xlane.xlu0 %4773
          %4775 = vadd.xlane.f32.xlu0 %v4756
          %v4776 = vpop.xlane.xlu0 %4775
          %4777 = vadd.xlane.f32.xlu0 %v4757
          %v4778 = vpop.xlane.xlu0 %4777
          %4779 = vadd.xlane.f32.xlu0 %v4758
          %v4780 = vpop.xlane.xlu0 %4779
          %4781 = vadd.xlane.f32.xlu0 %v4759
          %v4782 = vpop.xlane.xlu0 %4781
          %4783 = vadd.xlane.f32.xlu0 %v4760
          %v4784 = vpop.xlane.xlu0 %4783
          %4785 = vadd.xlane.f32.xlu0 %v4761
          %v4786 = vpop.xlane.xlu0 %4785
          %4787 = vadd.xlane.f32.xlu0 %v4762
          %v4788 = vpop.xlane.xlu0 %4787
          %4789 = vadd.xlane.f32.xlu0 %v4763
          %v4790 = vpop.xlane.xlu0 %4789
          %4791 = vadd.xlane.f32.xlu0 %v4764
          %v4792 = vpop.xlane.xlu0 %4791
          %4793 = vadd.xlane.f32.xlu0 %v4765
          %v4794 = vpop.xlane.xlu0 %4793
          %4795 = vadd.xlane.f32.xlu0 %v4766
          %v4796 = vpop.xlane.xlu0 %4795
          %4797 = vadd.xlane.f32.xlu0 %v4767
          %v4798 = vpop.xlane.xlu0 %4797
          %4799 = vadd.xlane.f32.xlu0 %v4768
          %v4800 = vpop.xlane.xlu0 %4799
          %4801 = vadd.xlane.f32.xlu0 %v4769
          %v4802 = vpop.xlane.xlu0 %4801
          %v4803 = vmul.f32 %v4772, 0.0078125
          %v4804 = vmul.f32 %v4774, 0.0078125
          %v4805 = vmul.f32 %v4776, 0.0078125
          %v4806 = vmul.f32 %v4778, 0.0078125
          %v4807 = vmul.f32 %v4780, 0.0078125
          %v4808 = vmul.f32 %v4782, 0.0078125
          %v4809 = vmul.f32 %v4784, 0.0078125
          %v4810 = vmul.f32 %v4786, 0.0078125
          %v4811 = vmul.f32 %v4788, 0.0078125
          %v4812 = vmul.f32 %v4790, 0.0078125
          %v4813 = vmul.f32 %v4792, 0.0078125
          %v4814 = vmul.f32 %v4794, 0.0078125
          %v4815 = vmul.f32 %v4796, 0.0078125
          %v4816 = vmul.f32 %v4798, 0.0078125
          %v4817 = vmul.f32 %v4800, 0.0078125
          %v4818 = vmul.f32 %v4802, 0.0078125
          %v4819 = vmul.f32 %v4754, %v4754
          %v4820 = vmul.f32 %v4755, %v4755
          %v4821 = vmul.f32 %v4756, %v4756
          %v4822 = vmul.f32 %v4757, %v4757
          %v4823 = vmul.f32 %v4758, %v4758
          %v4824 = vmul.f32 %v4759, %v4759
          %v4825 = vmul.f32 %v4760, %v4760
          %v4826 = vmul.f32 %v4761, %v4761
          %v4827 = vmul.f32 %v4762, %v4762
          %v4828 = vmul.f32 %v4763, %v4763
          %v4829 = vmul.f32 %v4764, %v4764
          %v4830 = vmul.f32 %v4765, %v4765
          %v4831 = vmul.f32 %v4766, %v4766
          %v4832 = vmul.f32 %v4767, %v4767
          %v4833 = vmul.f32 %v4768, %v4768
          %v4834 = vmul.f32 %v4769, %v4769
          %4835 = vadd.xlane.f32.xlu0 %v4819
          %v4836 = vpop.xlane.xlu0 %4835
          %4837 = vadd.xlane.f32.xlu0 %v4820
          %v4838 = vpop.xlane.xlu0 %4837
          %4839 = vadd.xlane.f32.xlu0 %v4821
          %v4840 = vpop.xlane.xlu0 %4839
          %4841 = vadd.xlane.f32.xlu0 %v4822
          %v4842 = vpop.xlane.xlu0 %4841
          %4843 = vadd.xlane.f32.xlu0 %v4823
          %v4844 = vpop.xlane.xlu0 %4843
          %4845 = vadd.xlane.f32.xlu0 %v4824
          %v4846 = vpop.xlane.xlu0 %4845
          %4847 = vadd.xlane.f32.xlu0 %v4825
          %v4848 = vpop.xlane.xlu0 %4847
          %4849 = vadd.xlane.f32.xlu0 %v4826
          %v4850 = vpop.xlane.xlu0 %4849
          %4851 = vadd.xlane.f32.xlu0 %v4827
          %v4852 = vpop.xlane.xlu0 %4851
          %4853 = vadd.xlane.f32.xlu0 %v4828
          %v4854 = vpop.xlane.xlu0 %4853
          %4855 = vadd.xlane.f32.xlu0 %v4829
          %v4856 = vpop.xlane.xlu0 %4855
          %4857 = vadd.xlane.f32.xlu0 %v4830
          %v4858 = vpop.xlane.xlu0 %4857
          %4859 = vadd.xlane.f32.xlu0 %v4831
          %v4860 = vpop.xlane.xlu0 %4859
          %4861 = vadd.xlane.f32.xlu0 %v4832
          %v4862 = vpop.xlane.xlu0 %4861
          %4863 = vadd.xlane.f32.xlu0 %v4833
          %v4864 = vpop.xlane.xlu0 %4863
          %4865 = vadd.xlane.f32.xlu0 %v4834
          %v4866 = vpop.xlane.xlu0 %4865
          %v4867 = vmul.f32 %v4836, 0.0078125
          %v4868 = vmul.f32 %v4838, 0.0078125
          %v4869 = vmul.f32 %v4840, 0.0078125
          %v4870 = vmul.f32 %v4842, 0.0078125
          %v4871 = vmul.f32 %v4844, 0.0078125
          %v4872 = vmul.f32 %v4846, 0.0078125
          %v4873 = vmul.f32 %v4848, 0.0078125
          %v4874 = vmul.f32 %v4850, 0.0078125
          %v4875 = vmul.f32 %v4852, 0.0078125
          %v4876 = vmul.f32 %v4854, 0.0078125
          %v4877 = vmul.f32 %v4856, 0.0078125
          %v4878 = vmul.f32 %v4858, 0.0078125
          %v4879 = vmul.f32 %v4860, 0.0078125
          %v4880 = vmul.f32 %v4862, 0.0078125
          %v4881 = vmul.f32 %v4864, 0.0078125
          %v4882 = vmul.f32 %v4866, 0.0078125
          %v4883 = vmul.f32 %v4803, %v4803
          %v4884 = vmul.f32 %v4804, %v4804
          %v4885 = vmul.f32 %v4805, %v4805
          %v4886 = vmul.f32 %v4806, %v4806
          %v4887 = vmul.f32 %v4807, %v4807
          %v4888 = vmul.f32 %v4808, %v4808
          %v4889 = vmul.f32 %v4809, %v4809
          %v4890 = vmul.f32 %v4810, %v4810
          %v4891 = vmul.f32 %v4811, %v4811
          %v4892 = vmul.f32 %v4812, %v4812
          %v4893 = vmul.f32 %v4813, %v4813
          %v4894 = vmul.f32 %v4814, %v4814
          %v4895 = vmul.f32 %v4815, %v4815
          %v4896 = vmul.f32 %v4816, %v4816
          %v4897 = vmul.f32 %v4817, %v4817
          %v4898 = vmul.f32 %v4818, %v4818
          %v4899 = vsub.f32 %v4867, %v4883
          %v4900 = vsub.f32 %v4868, %v4884
          %v4901 = vsub.f32 %v4869, %v4885
          %v4902 = vsub.f32 %v4870, %v4886
          %v4903 = vsub.f32 %v4871, %v4887
          %v4904 = vsub.f32 %v4872, %v4888
          %v4905 = vsub.f32 %v4873, %v4889
          %v4906 = vsub.f32 %v4874, %v4890
          %v4907 = vsub.f32 %v4875, %v4891
          %v4908 = vsub.f32 %v4876, %v4892
          %v4909 = vsub.f32 %v4877, %v4893
          %v4910 = vsub.f32 %v4878, %v4894
          %v4911 = vsub.f32 %v4879, %v4895
          %v4912 = vsub.f32 %v4880, %v4896
          %v4913 = vsub.f32 %v4881, %v4897
          %v4914 = vsub.f32 %v4882, %v4898
          %v4915 = vsub.f32 %v4754, %v4803
          %v4916 = vsub.f32 %v4755, %v4804
          %v4917 = vsub.f32 %v4756, %v4805
          %v4918 = vsub.f32 %v4757, %v4806
          %v4919 = vsub.f32 %v4758, %v4807
          %v4920 = vsub.f32 %v4759, %v4808
          %v4921 = vsub.f32 %v4760, %v4809
          %v4922 = vsub.f32 %v4761, %v4810
          %v4923 = vsub.f32 %v4762, %v4811
          %v4924 = vsub.f32 %v4763, %v4812
          %v4925 = vsub.f32 %v4764, %v4813
          %v4926 = vsub.f32 %v4765, %v4814
          %v4927 = vsub.f32 %v4766, %v4815
          %v4928 = vsub.f32 %v4767, %v4816
          %v4929 = vsub.f32 %v4768, %v4817
          %v4930 = vsub.f32 %v4769, %v4818
          %v4931 = vadd.f32 %v4899, 1e-05
          %v4932 = vadd.f32 %v4900, 1e-05
          %v4933 = vadd.f32 %v4901, 1e-05
          %v4934 = vadd.f32 %v4902, 1e-05
          %v4935 = vadd.f32 %v4903, 1e-05
          %v4936 = vadd.f32 %v4904, 1e-05
          %v4937 = vadd.f32 %v4905, 1e-05
          %v4938 = vadd.f32 %v4906, 1e-05
          %v4939 = vadd.f32 %v4907, 1e-05
          %v4940 = vadd.f32 %v4908, 1e-05
          %v4941 = vadd.f32 %v4909, 1e-05
          %v4942 = vadd.f32 %v4910, 1e-05
          %v4943 = vadd.f32 %v4911, 1e-05
          %v4944 = vadd.f32 %v4912, 1e-05
          %v4945 = vadd.f32 %v4913, 1e-05
          %v4946 = vadd.f32 %v4914, 1e-05
          %v4947 = vrsqrt.pop %v4931
          %v4948 = vrsqrt.pop %v4932
          %v4949 = vrsqrt.pop %v4933
          %v4950 = vrsqrt.pop %v4934
          %v4951 = vrsqrt.pop %v4935
          %v4952 = vrsqrt.pop %v4936
          %v4953 = vrsqrt.pop %v4937
          %v4954 = vrsqrt.pop %v4938
          %v4955 = vrsqrt.pop %v4939
          %v4956 = vrsqrt.pop %v4940
          %v4957 = vrsqrt.pop %v4941
          %v4958 = vrsqrt.pop %v4942
          %v4959 = vrsqrt.pop %v4943
          %v4960 = vrsqrt.pop %v4944
          %v4961 = vrsqrt.pop %v4945
          %v4962 = vrsqrt.pop %v4946
          %v4963 = vmul.f32 %v4915, %v4947
          %v4964 = vmul.f32 %v4916, %v4948
          %v4965 = vmul.f32 %v4917, %v4949
          %v4966 = vmul.f32 %v4918, %v4950
          %v4967 = vmul.f32 %v4919, %v4951
          %v4968 = vmul.f32 %v4920, %v4952
          %v4969 = vmul.f32 %v4921, %v4953
          %v4970 = vmul.f32 %v4922, %v4954
          %v4971 = vmul.f32 %v4923, %v4955
          %v4972 = vmul.f32 %v4924, %v4956
          %v4973 = vmul.f32 %v4925, %v4957
          %v4974 = vmul.f32 %v4926, %v4958
          %v4975 = vmul.f32 %v4927, %v4959
          %v4976 = vmul.f32 %v4928, %v4960
          %v4977 = vmul.f32 %v4929, %v4961
          %v4978 = vmul.f32 %v4930, %v4962
          %s4979 = scalar_lea.vmem [#allocation9], %s4770
          %v4980 = vld [vmem:[%s4979] sm:$0x1]
          %v4982 = vlaneseq
          %v4983 = vshrl.u32 %v4982, 7
          %v4984 = vsub.s32 0, %v4983
          %v4985 = vrot.slane %v4980, %v4984
          %v4987 = vmul.f32 %v4963, %v4985
          %v4988 = vmul.f32 %v4964, %v4985
          %v4989 = vmul.f32 %v4965, %v4985
          %v4990 = vmul.f32 %v4966, %v4985
          %v4991 = vmul.f32 %v4967, %v4985
          %v4992 = vmul.f32 %v4968, %v4985
          %v4993 = vmul.f32 %v4969, %v4985
          %v4994 = vmul.f32 %v4970, %v4985
          %v4995 = vmul.f32 %v4971, %v4985
          %v4996 = vmul.f32 %v4972, %v4985
          %v4997 = vmul.f32 %v4973, %v4985
          %v4998 = vmul.f32 %v4974, %v4985
          %v4999 = vmul.f32 %v4975, %v4985
          %v5000 = vmul.f32 %v4976, %v4985
          %v5001 = vmul.f32 %v4977, %v4985
          %v5002 = vmul.f32 %v4978, %v4985
          %s5003 = scalar_lea.vmem [#allocation11], %s4770
          %v5004 = vld [vmem:[%s5003] sm:$0x1]
          %v5006 = vlaneseq
          %v5007 = vshrl.u32 %v5006, 7
          %v5008 = vsub.s32 0, %v5007
          %v5009 = vrot.slane %v5004, %v5008
          %v5011 = vadd.f32 %v4987, %v5009
          %v5012 = vadd.f32 %v4988, %v5009
          %v5013 = vadd.f32 %v4989, %v5009
          %v5014 = vadd.f32 %v4990, %v5009
          %v5015 = vadd.f32 %v4991, %v5009
          %v5016 = vadd.f32 %v4992, %v5009
          %v5017 = vadd.f32 %v4993, %v5009
          %v5018 = vadd.f32 %v4994, %v5009
          %v5019 = vadd.f32 %v4995, %v5009
          %v5020 = vadd.f32 %v4996, %v5009
          %v5021 = vadd.f32 %v4997, %v5009
          %v5022 = vadd.f32 %v4998, %v5009
          %v5023 = vadd.f32 %v4999, %v5009
          %v5024 = vadd.f32 %v5000, %v5009
          %v5025 = vadd.f32 %v5001, %v5009
          %v5026 = vadd.f32 %v5002, %v5009
          %v5027 = vpack.c.bf16 %v5012, %v5011
          %v5028 = vpack.c.bf16 %v5014, %v5013
          %v5029 = vpack.c.bf16 %v5016, %v5015
          %v5030 = vpack.c.bf16 %v5018, %v5017
          %v5031 = vpack.c.bf16 %v5020, %v5019
          %v5032 = vpack.c.bf16 %v5022, %v5021
          %v5033 = vpack.c.bf16 %v5024, %v5023
          %v5034 = vpack.c.bf16 %v5026, %v5025
          %5035 = vst [vmem:[#allocation2 + $0x80] sm:$0xff] %v5027
          %5036 = vst [vmem:[#allocation2 + $0x88] sm:$0xff] %v5028
          %5037 = vst [vmem:[#allocation2 + $0x90] sm:$0xff] %v5029
          %5038 = vst [vmem:[#allocation2 + $0x98] sm:$0xff] %v5030
          %5039 = vst [vmem:[#allocation2 + $0xa0] sm:$0xff] %v5031
          %5040 = vst [vmem:[#allocation2 + $0xa8] sm:$0xff] %v5032
          %5041 = vst [vmem:[#allocation2 + $0xb0] sm:$0xff] %v5033
          %5042 = vst [vmem:[#allocation2 + $0xb8] sm:$0xff] %v5034
          %v5043 = vld [vmem:[#allocation2 + $0x78] sm:$0xff]
          %v5044 = vld [vmem:[#allocation2 + $0x80] sm:$0xff]
          %v5045 = vld [vmem:[#allocation2 + $0x88] sm:$0xff]
          %v5046 = vld [vmem:[#allocation2 + $0x90] sm:$0xff]
          %v5047 = vld [vmem:[#allocation2 + $0x98] sm:$0xff]
          %v5048 = vld [vmem:[#allocation2 + $0xa0] sm:$0xff]
          %v5049 = vld [vmem:[#allocation2 + $0xa8] sm:$0xff]
          %v5050 = vld [vmem:[#allocation2 + $0xb0] sm:$0xff]
          %v5051 = vld [vmem:[#allocation2 + $0x78] sm:$0xfc]
          %v5052 = vld [vmem:[#allocation2 + $0xb8] sm:$0x3]
          %v5053 = vld [vmem:[#allocation2 + $0x78] sm:$0xf0]
          %v5054 = vld [vmem:[#allocation2 + $0xb8] sm:$0xf]
          %v5055 = vld [vmem:[#allocation2 + $0x78] sm:$0xc0]
          %v5056 = vld [vmem:[#allocation2 + $0xb8] sm:$0x3f]
          %v5057 = vld [vmem:[#allocation2 + $0xb8] sm:$0xff]
          %v5058 = vld [vmem:[#allocation2 + $0x80] sm:$0xfc]
          %v5059 = vld [vmem:[#allocation2 + $0xc0] sm:$0x3]
          %v5060 = vld [vmem:[#allocation2 + $0x80] sm:$0xf0]
          %v5061 = vld [vmem:[#allocation2 + $0xc0] sm:$0xf]
          %v5062 = vld [vmem:[#allocation2 + $0x80] sm:$0xc0]
          %v5063 = vld [vmem:[#allocation2 + $0xc0] sm:$0x3f]
          %v5064 = vld [vmem:[#allocation2 + $0xc0] sm:$0xff]
          %v5074 = vrot.slane %v5051, 2
          %v5075 = vrot.slane %v5044, 2
          %v5076 = vsel %vm1278, %v5074, %v5075
          %v5077 = vrot.slane %v5045, 2
          %v5078 = vsel %vm1278, %v5075, %v5077
          %v5079 = vrot.slane %v5046, 2
          %v5080 = vsel %vm1278, %v5077, %v5079
          %v5081 = vrot.slane %v5047, 2
          %v5082 = vsel %vm1278, %v5079, %v5081
          %v5083 = vrot.slane %v5048, 2
          %v5084 = vsel %vm1278, %v5081, %v5083
          %v5085 = vrot.slane %v5049, 2
          %v5086 = vsel %vm1278, %v5083, %v5085
          %v5087 = vrot.slane %v5050, 2
          %v5088 = vsel %vm1278, %v5085, %v5087
          %v5089 = vrot.slane %v5052, 2
          %v5090 = vsel %vm1278, %v5087, %v5089
          %v5101 = vrot.slane %v5053, 4
          %v5102 = vrot.slane %v5044, 4
          %v5103 = vsel %vm1399, %v5101, %v5102
          %v5104 = vrot.slane %v5045, 4
          %v5105 = vsel %vm1399, %v5102, %v5104
          %v5106 = vrot.slane %v5046, 4
          %v5107 = vsel %vm1399, %v5104, %v5106
          %v5108 = vrot.slane %v5047, 4
          %v5109 = vsel %vm1399, %v5106, %v5108
          %v5110 = vrot.slane %v5048, 4
          %v5111 = vsel %vm1399, %v5108, %v5110
          %v5112 = vrot.slane %v5049, 4
          %v5113 = vsel %vm1399, %v5110, %v5112
          %v5114 = vrot.slane %v5050, 4
          %v5115 = vsel %vm1399, %v5112, %v5114
          %v5116 = vrot.slane %v5054, 4
          %v5117 = vsel %vm1399, %v5114, %v5116
          %v5128 = vrot.slane %v5055, 6
          %v5129 = vrot.slane %v5044, 6
          %v5130 = vsel %vm1574, %v5128, %v5129
          %v5131 = vrot.slane %v5045, 6
          %v5132 = vsel %vm1574, %v5129, %v5131
          %v5133 = vrot.slane %v5046, 6
          %v5134 = vsel %vm1574, %v5131, %v5133
          %v5135 = vrot.slane %v5047, 6
          %v5136 = vsel %vm1574, %v5133, %v5135
          %v5137 = vrot.slane %v5048, 6
          %v5138 = vsel %vm1574, %v5135, %v5137
          %v5139 = vrot.slane %v5049, 6
          %v5140 = vsel %vm1574, %v5137, %v5139
          %v5141 = vrot.slane %v5050, 6
          %v5142 = vsel %vm1574, %v5139, %v5141
          %v5143 = vrot.slane %v5056, 6
          %v5144 = vsel %vm1574, %v5141, %v5143
          %v5156 = vrot.slane %v5058, 2
          %v5157 = vsel %vm1278, %v5156, %v5077
          %v5158 = vrot.slane %v5057, 2
          %v5159 = vsel %vm1278, %v5087, %v5158
          %v5160 = vrot.slane %v5059, 2
          %v5161 = vsel %vm1278, %v5158, %v5160
          %v5167 = vrot.slane %v5060, 4
          %v5168 = vsel %vm1399, %v5167, %v5104
          %v5169 = vrot.slane %v5057, 4
          %v5170 = vsel %vm1399, %v5114, %v5169
          %v5171 = vrot.slane %v5061, 4
          %v5172 = vsel %vm1399, %v5169, %v5171
          %v5178 = vrot.slane %v5062, 6
          %v5179 = vsel %vm1574, %v5178, %v5131
          %v5180 = vrot.slane %v5057, 6
          %v5181 = vsel %vm1574, %v5141, %v5180
          %v5182 = vrot.slane %v5063, 6
          %v5183 = vsel %vm1574, %v5180, %v5182
          %s5187 = smul.u32 %s4770, 144
          %s5188 = smul.addr %s5187, 4
          %s5189 = scalar_lea.vmem [#allocation12], %s5188
          %v5190 = vld [vmem:[%s5189] sm:$0xf]
          %v5191 = vld [vmem:[%s5189 + $0x4] sm:$0xf]
          %v5192 = vld [vmem:[%s5189 + $0x8] sm:$0xf]
          %v5193 = vld [vmem:[%s5189 + $0xc] sm:$0xf]
          %v5194 = vld [vmem:[%s5189 + $0x10] sm:$0xf]
          %v5195 = vld [vmem:[%s5189 + $0x14] sm:$0xf]
          %v5196 = vld [vmem:[%s5189 + $0x18] sm:$0xf]
          %v5197 = vld [vmem:[%s5189 + $0x1c] sm:$0xf]
          %v5198 = vld [vmem:[%s5189 + $0x20] sm:$0xf]
          %v5199 = vld [vmem:[%s5189 + $0x24] sm:$0xf]
          %v5200 = vld [vmem:[%s5189 + $0x28] sm:$0xf]
          %v5201 = vld [vmem:[%s5189 + $0x2c] sm:$0xf]
          %v5202 = vld [vmem:[%s5189 + $0x30] sm:$0xf]
          %v5203 = vld [vmem:[%s5189 + $0x34] sm:$0xf]
          %v5204 = vld [vmem:[%s5189 + $0x38] sm:$0xf]
          %v5205 = vld [vmem:[%s5189 + $0x3c] sm:$0xf]
          %v5206 = vld [vmem:[%s5189 + $0x40] sm:$0xf]
          %v5207 = vld [vmem:[%s5189 + $0x44] sm:$0xf]
          %v5208 = vld [vmem:[%s5189 + $0x48] sm:$0xf]
          %v5209 = vld [vmem:[%s5189 + $0x4c] sm:$0xf]
          %v5210 = vld [vmem:[%s5189 + $0x50] sm:$0xf]
          %v5211 = vld [vmem:[%s5189 + $0x54] sm:$0xf]
          %v5212 = vld [vmem:[%s5189 + $0x58] sm:$0xf]
          %v5213 = vld [vmem:[%s5189 + $0x5c] sm:$0xf]
          %v5214 = vld [vmem:[%s5189 + $0x60] sm:$0xf]
          %v5215 = vld [vmem:[%s5189 + $0x64] sm:$0xf]
          %v5216 = vld [vmem:[%s5189 + $0x68] sm:$0xf]
          %v5217 = vld [vmem:[%s5189 + $0x6c] sm:$0xf]
          %v5218 = vld [vmem:[%s5189 + $0x70] sm:$0xf]
          %v5219 = vld [vmem:[%s5189 + $0x74] sm:$0xf]
          %v5220 = vld [vmem:[%s5189 + $0x78] sm:$0xf]
          %v5221 = vld [vmem:[%s5189 + $0x7c] sm:$0xf]
          %v5222 = vld [vmem:[%s5189 + $0x80] sm:$0xf]
          %v5223 = vld [vmem:[%s5189 + $0x84] sm:$0xf]
          %v5224 = vld [vmem:[%s5189 + $0x88] sm:$0xf]
          %v5225 = vld [vmem:[%s5189 + $0x8c] sm:$0xf]
          %v5226 = vld [vmem:[%s5189 + $0x90] sm:$0xf]
          %v5227 = vld [vmem:[%s5189 + $0x94] sm:$0xf]
          %v5228 = vld [vmem:[%s5189 + $0x98] sm:$0xf]
          %v5229 = vld [vmem:[%s5189 + $0x9c] sm:$0xf]
          %v5230 = vld [vmem:[%s5189 + $0xa0] sm:$0xf]
          %v5231 = vld [vmem:[%s5189 + $0xa4] sm:$0xf]
          %v5232 = vld [vmem:[%s5189 + $0xa8] sm:$0xf]
          %v5233 = vld [vmem:[%s5189 + $0xac] sm:$0xf]
          %v5234 = vld [vmem:[%s5189 + $0xb0] sm:$0xf]
          %v5235 = vld [vmem:[%s5189 + $0xb4] sm:$0xf]
          %v5236 = vld [vmem:[%s5189 + $0xb8] sm:$0xf]
          %v5237 = vld [vmem:[%s5189 + $0xbc] sm:$0xf]
          %v5238 = vld [vmem:[%s5189 + $0xc0] sm:$0xf]
          %v5239 = vld [vmem:[%s5189 + $0xc4] sm:$0xf]
          %v5240 = vld [vmem:[%s5189 + $0xc8] sm:$0xf]
          %v5241 = vld [vmem:[%s5189 + $0xcc] sm:$0xf]
          %v5242 = vld [vmem:[%s5189 + $0xd0] sm:$0xf]
          %v5243 = vld [vmem:[%s5189 + $0xd4] sm:$0xf]
          %v5244 = vld [vmem:[%s5189 + $0xd8] sm:$0xf]
          %v5245 = vld [vmem:[%s5189 + $0xdc] sm:$0xf]
          %v5246 = vld [vmem:[%s5189 + $0xe0] sm:$0xf]
          %v5247 = vld [vmem:[%s5189 + $0xe4] sm:$0xf]
          %v5248 = vld [vmem:[%s5189 + $0xe8] sm:$0xf]
          %v5249 = vld [vmem:[%s5189 + $0xec] sm:$0xf]
          %v5250 = vld [vmem:[%s5189 + $0xf0] sm:$0xf]
          %v5251 = vld [vmem:[%s5189 + $0xf4] sm:$0xf]
          %v5252 = vld [vmem:[%s5189 + $0xf8] sm:$0xf]
          %v5253 = vld [vmem:[%s5189 + $0xfc] sm:$0xf]
          %v5254 = vld [vmem:[%s5189 + $0x100] sm:$0xf]
          %v5255 = vld [vmem:[%s5189 + $0x104] sm:$0xf]
          %v5256 = vld [vmem:[%s5189 + $0x108] sm:$0xf]
          %v5257 = vld [vmem:[%s5189 + $0x10c] sm:$0xf]
          %v5258 = vld [vmem:[%s5189 + $0x110] sm:$0xf]
          %v5259 = vld [vmem:[%s5189 + $0x114] sm:$0xf]
          %v5260 = vld [vmem:[%s5189 + $0x118] sm:$0xf]
          %v5261 = vld [vmem:[%s5189 + $0x11c] sm:$0xf]
          %v5262 = vld [vmem:[%s5189 + $0x120] sm:$0xf]
          %v5263 = vld [vmem:[%s5189 + $0x124] sm:$0xf]
          %v5264 = vld [vmem:[%s5189 + $0x128] sm:$0xf]
          %v5265 = vld [vmem:[%s5189 + $0x12c] sm:$0xf]
          %v5266 = vld [vmem:[%s5189 + $0x130] sm:$0xf]
          %v5267 = vld [vmem:[%s5189 + $0x134] sm:$0xf]
          %v5268 = vld [vmem:[%s5189 + $0x138] sm:$0xf]
          %v5269 = vld [vmem:[%s5189 + $0x13c] sm:$0xf]
          %v5270 = vld [vmem:[%s5189 + $0x140] sm:$0xf]
          %v5271 = vld [vmem:[%s5189 + $0x144] sm:$0xf]
          %v5272 = vld [vmem:[%s5189 + $0x148] sm:$0xf]
          %v5273 = vld [vmem:[%s5189 + $0x14c] sm:$0xf]
          %v5274 = vld [vmem:[%s5189 + $0x150] sm:$0xf]
          %v5275 = vld [vmem:[%s5189 + $0x154] sm:$0xf]
          %v5276 = vld [vmem:[%s5189 + $0x158] sm:$0xf]
          %v5277 = vld [vmem:[%s5189 + $0x15c] sm:$0xf]
          %v5278 = vld [vmem:[%s5189 + $0x160] sm:$0xf]
          %v5279 = vld [vmem:[%s5189 + $0x164] sm:$0xf]
          %v5280 = vld [vmem:[%s5189 + $0x168] sm:$0xf]
          %v5281 = vld [vmem:[%s5189 + $0x16c] sm:$0xf]
          %v5282 = vld [vmem:[%s5189 + $0x170] sm:$0xf]
          %v5283 = vld [vmem:[%s5189 + $0x174] sm:$0xf]
          %v5284 = vld [vmem:[%s5189 + $0x178] sm:$0xf]
          %v5285 = vld [vmem:[%s5189 + $0x17c] sm:$0xf]
          %v5286 = vld [vmem:[%s5189 + $0x180] sm:$0xf]
          %v5287 = vld [vmem:[%s5189 + $0x184] sm:$0xf]
          %v5288 = vld [vmem:[%s5189 + $0x188] sm:$0xf]
          %v5289 = vld [vmem:[%s5189 + $0x18c] sm:$0xf]
          %v5290 = vld [vmem:[%s5189 + $0x190] sm:$0xf]
          %v5291 = vld [vmem:[%s5189 + $0x194] sm:$0xf]
          %v5292 = vld [vmem:[%s5189 + $0x198] sm:$0xf]
          %v5293 = vld [vmem:[%s5189 + $0x19c] sm:$0xf]
          %v5294 = vld [vmem:[%s5189 + $0x1a0] sm:$0xf]
          %v5295 = vld [vmem:[%s5189 + $0x1a4] sm:$0xf]
          %v5296 = vld [vmem:[%s5189 + $0x1a8] sm:$0xf]
          %v5297 = vld [vmem:[%s5189 + $0x1ac] sm:$0xf]
          %v5298 = vld [vmem:[%s5189 + $0x1b0] sm:$0xf]
          %v5299 = vld [vmem:[%s5189 + $0x1b4] sm:$0xf]
          %v5300 = vld [vmem:[%s5189 + $0x1b8] sm:$0xf]
          %v5301 = vld [vmem:[%s5189 + $0x1bc] sm:$0xf]
          %v5302 = vld [vmem:[%s5189 + $0x1c0] sm:$0xf]
          %v5303 = vld [vmem:[%s5189 + $0x1c4] sm:$0xf]
          %v5304 = vld [vmem:[%s5189 + $0x1c8] sm:$0xf]
          %v5305 = vld [vmem:[%s5189 + $0x1cc] sm:$0xf]
          %v5306 = vld [vmem:[%s5189 + $0x1d0] sm:$0xf]
          %v5307 = vld [vmem:[%s5189 + $0x1d4] sm:$0xf]
          %v5308 = vld [vmem:[%s5189 + $0x1d8] sm:$0xf]
          %v5309 = vld [vmem:[%s5189 + $0x1dc] sm:$0xf]
          %v5310 = vld [vmem:[%s5189 + $0x1e0] sm:$0xf]
          %v5311 = vld [vmem:[%s5189 + $0x1e4] sm:$0xf]
          %v5312 = vld [vmem:[%s5189 + $0x1e8] sm:$0xf]
          %v5313 = vld [vmem:[%s5189 + $0x1ec] sm:$0xf]
          %v5314 = vld [vmem:[%s5189 + $0x1f0] sm:$0xf]
          %v5315 = vld [vmem:[%s5189 + $0x1f4] sm:$0xf]
          %v5316 = vld [vmem:[%s5189 + $0x1f8] sm:$0xf]
          %v5317 = vld [vmem:[%s5189 + $0x1fc] sm:$0xf]
          %v5318 = vld [vmem:[%s5189 + $0x200] sm:$0xf]
          %v5319 = vld [vmem:[%s5189 + $0x204] sm:$0xf]
          %v5320 = vld [vmem:[%s5189 + $0x208] sm:$0xf]
          %v5321 = vld [vmem:[%s5189 + $0x20c] sm:$0xf]
          %v5322 = vld [vmem:[%s5189 + $0x210] sm:$0xf]
          %v5323 = vld [vmem:[%s5189 + $0x214] sm:$0xf]
          %v5324 = vld [vmem:[%s5189 + $0x218] sm:$0xf]
          %v5325 = vld [vmem:[%s5189 + $0x21c] sm:$0xf]
          %v5326 = vld [vmem:[%s5189 + $0x220] sm:$0xf]
          %v5327 = vld [vmem:[%s5189 + $0x224] sm:$0xf]
          %v5328 = vld [vmem:[%s5189 + $0x228] sm:$0xf]
          %v5329 = vld [vmem:[%s5189 + $0x22c] sm:$0xf]
          %v5330 = vld [vmem:[%s5189 + $0x230] sm:$0xf]
          %v5331 = vld [vmem:[%s5189 + $0x234] sm:$0xf]
          %v5332 = vld [vmem:[%s5189 + $0x238] sm:$0xf]
          %v5333 = vld [vmem:[%s5189 + $0x23c] sm:$0xf]
          %s5334 = scalar_lea.vmem [#allocation14], %s4770
          %v5335 = vld [vmem:[%s5334] sm:$0x1]
          %v5337 = vlaneseq
          %v5338 = vshrl.u32 %v5337, 7
          %v5339 = vsub.s32 0, %v5338
          %v5340 = vrot.slane %v5335, %v5339
          %v5486 = vunpack.c.l.b16 %v5190
          %v5487 = vunpack.c.l.b16 %v5191
          %v5488 = vunpack.c.l.b16 %v5192
          %v5489 = vunpack.c.l.b16 %v5193
          %v5490 = vunpack.c.l.b16 %v5194
          %v5491 = vunpack.c.l.b16 %v5195
          %v5492 = vunpack.c.l.b16 %v5196
          %v5493 = vunpack.c.l.b16 %v5197
          %v5494 = vunpack.c.l.b16 %v5198
          %v5495 = vunpack.c.l.b16 %v5199
          %v5496 = vunpack.c.l.b16 %v5200
          %v5497 = vunpack.c.l.b16 %v5201
          %v5498 = vunpack.c.l.b16 %v5202
          %v5499 = vunpack.c.l.b16 %v5203
          %v5500 = vunpack.c.l.b16 %v5204
          %v5501 = vunpack.c.l.b16 %v5205
          %v5502 = vunpack.c.l.b16 %v5206
          %v5503 = vunpack.c.l.b16 %v5207
          %v5504 = vunpack.c.l.b16 %v5208
          %v5505 = vunpack.c.l.b16 %v5209
          %v5506 = vunpack.c.l.b16 %v5210
          %v5507 = vunpack.c.l.b16 %v5211
          %v5508 = vunpack.c.l.b16 %v5212
          %v5509 = vunpack.c.l.b16 %v5213
          %v5510 = vunpack.c.l.b16 %v5214
          %v5511 = vunpack.c.l.b16 %v5215
          %v5512 = vunpack.c.l.b16 %v5216
          %v5513 = vunpack.c.l.b16 %v5217
          %v5514 = vunpack.c.l.b16 %v5218
          %v5515 = vunpack.c.l.b16 %v5219
          %v5516 = vunpack.c.l.b16 %v5220
          %v5517 = vunpack.c.l.b16 %v5221
          %v5518 = vunpack.c.l.b16 %v5222
          %v5519 = vunpack.c.l.b16 %v5223
          %v5520 = vunpack.c.l.b16 %v5224
          %v5521 = vunpack.c.l.b16 %v5225
          %v5522 = vunpack.c.l.b16 %v5226
          %v5523 = vunpack.c.l.b16 %v5227
          %v5524 = vunpack.c.l.b16 %v5228
          %v5525 = vunpack.c.l.b16 %v5229
          %v5526 = vunpack.c.l.b16 %v5230
          %v5527 = vunpack.c.l.b16 %v5231
          %v5528 = vunpack.c.l.b16 %v5232
          %v5529 = vunpack.c.l.b16 %v5233
          %v5530 = vunpack.c.l.b16 %v5234
          %v5531 = vunpack.c.l.b16 %v5235
          %v5532 = vunpack.c.l.b16 %v5236
          %v5533 = vunpack.c.l.b16 %v5237
          %v5534 = vunpack.c.l.b16 %v5238
          %v5535 = vunpack.c.l.b16 %v5239
          %v5536 = vunpack.c.l.b16 %v5240
          %v5537 = vunpack.c.l.b16 %v5241
          %v5538 = vunpack.c.l.b16 %v5242
          %v5539 = vunpack.c.l.b16 %v5243
          %v5540 = vunpack.c.l.b16 %v5244
          %v5541 = vunpack.c.l.b16 %v5245
          %v5542 = vunpack.c.l.b16 %v5246
          %v5543 = vunpack.c.l.b16 %v5247
          %v5544 = vunpack.c.l.b16 %v5248
          %v5545 = vunpack.c.l.b16 %v5249
          %v5546 = vunpack.c.l.b16 %v5250
          %v5547 = vunpack.c.l.b16 %v5251
          %v5548 = vunpack.c.l.b16 %v5252
          %v5549 = vunpack.c.l.b16 %v5253
          %v5550 = vunpack.c.l.b16 %v5254
          %v5551 = vunpack.c.l.b16 %v5255
          %v5552 = vunpack.c.l.b16 %v5256
          %v5553 = vunpack.c.l.b16 %v5257
          %v5554 = vunpack.c.l.b16 %v5258
          %v5555 = vunpack.c.l.b16 %v5259
          %v5556 = vunpack.c.l.b16 %v5260
          %v5557 = vunpack.c.l.b16 %v5261
          %v5558 = vunpack.c.l.b16 %v5262
          %v5559 = vunpack.c.l.b16 %v5263
          %v5560 = vunpack.c.l.b16 %v5264
          %v5561 = vunpack.c.l.b16 %v5265
          %v5562 = vunpack.c.l.b16 %v5266
          %v5563 = vunpack.c.l.b16 %v5267
          %v5564 = vunpack.c.l.b16 %v5268
          %v5565 = vunpack.c.l.b16 %v5269
          %v5566 = vunpack.c.l.b16 %v5270
          %v5567 = vunpack.c.l.b16 %v5271
          %v5568 = vunpack.c.l.b16 %v5272
          %v5569 = vunpack.c.l.b16 %v5273
          %v5570 = vunpack.c.l.b16 %v5274
          %v5571 = vunpack.c.l.b16 %v5275
          %v5572 = vunpack.c.l.b16 %v5276
          %v5573 = vunpack.c.l.b16 %v5277
          %v5574 = vunpack.c.l.b16 %v5278
          %v5575 = vunpack.c.l.b16 %v5279
          %v5576 = vunpack.c.l.b16 %v5280
          %v5577 = vunpack.c.l.b16 %v5281
          %v5578 = vunpack.c.l.b16 %v5282
          %v5579 = vunpack.c.l.b16 %v5283
          %v5580 = vunpack.c.l.b16 %v5284
          %v5581 = vunpack.c.l.b16 %v5285
          %v5582 = vunpack.c.l.b16 %v5286
          %v5583 = vunpack.c.l.b16 %v5287
          %v5584 = vunpack.c.l.b16 %v5288
          %v5585 = vunpack.c.l.b16 %v5289
          %v5586 = vunpack.c.l.b16 %v5290
          %v5587 = vunpack.c.l.b16 %v5291
          %v5588 = vunpack.c.l.b16 %v5292
          %v5589 = vunpack.c.l.b16 %v5293
          %v5590 = vunpack.c.l.b16 %v5294
          %v5591 = vunpack.c.l.b16 %v5295
          %v5592 = vunpack.c.l.b16 %v5296
          %v5593 = vunpack.c.l.b16 %v5297
          %v5594 = vunpack.c.l.b16 %v5298
          %v5595 = vunpack.c.l.b16 %v5299
          %v5596 = vunpack.c.l.b16 %v5300
          %v5597 = vunpack.c.l.b16 %v5301
          %v5598 = vunpack.c.l.b16 %v5302
          %v5599 = vunpack.c.l.b16 %v5303
          %v5600 = vunpack.c.l.b16 %v5304
          %v5601 = vunpack.c.l.b16 %v5305
          %v5602 = vunpack.c.l.b16 %v5306
          %v5603 = vunpack.c.l.b16 %v5307
          %v5604 = vunpack.c.l.b16 %v5308
          %v5605 = vunpack.c.l.b16 %v5309
          %v5606 = vunpack.c.l.b16 %v5310
          %v5607 = vunpack.c.l.b16 %v5311
          %v5608 = vunpack.c.l.b16 %v5312
          %v5609 = vunpack.c.l.b16 %v5313
          %v5610 = vunpack.c.l.b16 %v5314
          %v5611 = vunpack.c.l.b16 %v5315
          %v5612 = vunpack.c.l.b16 %v5316
          %v5613 = vunpack.c.l.b16 %v5317
          %v5614 = vunpack.c.l.b16 %v5318
          %v5615 = vunpack.c.l.b16 %v5319
          %v5616 = vunpack.c.l.b16 %v5320
          %v5617 = vunpack.c.l.b16 %v5321
          %v5618 = vunpack.c.l.b16 %v5322
          %v5619 = vunpack.c.l.b16 %v5323
          %v5620 = vunpack.c.l.b16 %v5324
          %v5621 = vunpack.c.l.b16 %v5325
          %v5622 = vunpack.c.l.b16 %v5326
          %v5623 = vunpack.c.l.b16 %v5327
          %v5624 = vunpack.c.l.b16 %v5328
          %v5625 = vunpack.c.l.b16 %v5329
          %v5626 = vunpack.c.l.b16 %v5330
          %v5627 = vunpack.c.l.b16 %v5331
          %v5628 = vunpack.c.l.b16 %v5332
          %v5629 = vunpack.c.l.b16 %v5333
          %v5630 = vpack.c.b16 %v5487, %v5486
          %v5631 = vpack.c.b16 %v5489, %v5488
          %v5632 = vpack.c.b16 %v5491, %v5490
          %v5633 = vpack.c.b16 %v5493, %v5492
          %v5634 = vpack.c.b16 %v5495, %v5494
          %v5635 = vpack.c.b16 %v5497, %v5496
          %v5636 = vpack.c.b16 %v5499, %v5498
          %v5637 = vpack.c.b16 %v5501, %v5500
          %v5638 = vpack.c.b16 %v5503, %v5502
          %v5639 = vpack.c.b16 %v5505, %v5504
          %v5640 = vpack.c.b16 %v5507, %v5506
          %v5641 = vpack.c.b16 %v5509, %v5508
          %v5642 = vpack.c.b16 %v5511, %v5510
          %v5643 = vpack.c.b16 %v5513, %v5512
          %v5644 = vpack.c.b16 %v5515, %v5514
          %v5645 = vpack.c.b16 %v5517, %v5516
          %v5646 = vpack.c.b16 %v5519, %v5518
          %v5647 = vpack.c.b16 %v5521, %v5520
          %v5648 = vpack.c.b16 %v5523, %v5522
          %v5649 = vpack.c.b16 %v5525, %v5524
          %v5650 = vpack.c.b16 %v5527, %v5526
          %v5651 = vpack.c.b16 %v5529, %v5528
          %v5652 = vpack.c.b16 %v5531, %v5530
          %v5653 = vpack.c.b16 %v5533, %v5532
          %v5654 = vpack.c.b16 %v5535, %v5534
          %v5655 = vpack.c.b16 %v5537, %v5536
          %v5656 = vpack.c.b16 %v5539, %v5538
          %v5657 = vpack.c.b16 %v5541, %v5540
          %v5658 = vpack.c.b16 %v5543, %v5542
          %v5659 = vpack.c.b16 %v5545, %v5544
          %v5660 = vpack.c.b16 %v5547, %v5546
          %v5661 = vpack.c.b16 %v5549, %v5548
          %v5662 = vpack.c.b16 %v5551, %v5550
          %v5663 = vpack.c.b16 %v5553, %v5552
          %v5664 = vpack.c.b16 %v5555, %v5554
          %v5665 = vpack.c.b16 %v5557, %v5556
          %v5666 = vpack.c.b16 %v5559, %v5558
          %v5667 = vpack.c.b16 %v5561, %v5560
          %v5668 = vpack.c.b16 %v5563, %v5562
          %v5669 = vpack.c.b16 %v5565, %v5564
          %v5670 = vpack.c.b16 %v5567, %v5566
          %v5671 = vpack.c.b16 %v5569, %v5568
          %v5672 = vpack.c.b16 %v5571, %v5570
          %v5673 = vpack.c.b16 %v5573, %v5572
          %v5674 = vpack.c.b16 %v5575, %v5574
          %v5675 = vpack.c.b16 %v5577, %v5576
          %v5676 = vpack.c.b16 %v5579, %v5578
          %v5677 = vpack.c.b16 %v5581, %v5580
          %v5678 = vpack.c.b16 %v5583, %v5582
          %v5679 = vpack.c.b16 %v5585, %v5584
          %v5680 = vpack.c.b16 %v5587, %v5586
          %v5681 = vpack.c.b16 %v5589, %v5588
          %v5682 = vpack.c.b16 %v5591, %v5590
          %v5683 = vpack.c.b16 %v5593, %v5592
          %v5684 = vpack.c.b16 %v5595, %v5594
          %v5685 = vpack.c.b16 %v5597, %v5596
          %v5686 = vpack.c.b16 %v5599, %v5598
          %v5687 = vpack.c.b16 %v5601, %v5600
          %v5688 = vpack.c.b16 %v5603, %v5602
          %v5689 = vpack.c.b16 %v5605, %v5604
          %v5690 = vpack.c.b16 %v5607, %v5606
          %v5691 = vpack.c.b16 %v5609, %v5608
          %v5692 = vpack.c.b16 %v5611, %v5610
          %v5693 = vpack.c.b16 %v5613, %v5612
          %v5694 = vpack.c.b16 %v5615, %v5614
          %v5695 = vpack.c.b16 %v5617, %v5616
          %v5696 = vpack.c.b16 %v5619, %v5618
          %v5697 = vpack.c.b16 %v5621, %v5620
          %v5698 = vpack.c.b16 %v5623, %v5622
          %v5699 = vpack.c.b16 %v5625, %v5624
          %v5700 = vpack.c.b16 %v5627, %v5626
          %v5701 = vpack.c.b16 %v5629, %v5628
          %5774 = vmatprep.subr.bf16.mxu0 0
          %5775 = vmatpush1.bf16.msra.mxu0 %v5630
          %5776 = vmatprep.subr.bf16.mxu0 0
          %5777 = vmatpush1.bf16.msra.mxu0 %v5631
          %5778 = vmatprep.subr.bf16.mxu0 0
          %5779 = vmatpush1.bf16.msra.mxu0 %v5632
          %5780 = vmatprep.subr.bf16.mxu0 0
          %5781 = vmatpush1.bf16.msra.mxu0 %v5633
          %5782 = vmatprep.subr.bf16.mxu0 0
          %5783 = vmatpush1.bf16.msra.mxu0 %v5634
          %5784 = vmatprep.subr.bf16.mxu0 0
          %5785 = vmatpush1.bf16.msra.mxu0 %v5635
          %5786 = vmatprep.subr.bf16.mxu0 0
          %5787 = vmatpush1.bf16.msra.mxu0 %v5636
          %5788 = vmatprep.subr.bf16.mxu0 0
          %5789 = vmatpush1.bf16.msra.mxu0 %v5637
          %5790 = vmatprep.subr.bf16.mxu0 0
          %5791 = vmatpush1.bf16.msra.mxu0 %v5638
          %5792 = vmatprep.subr.bf16.mxu0 0
          %5793 = vmatpush1.bf16.msra.mxu0 %v5639
          %5794 = vmatprep.subr.bf16.mxu0 0
          %5795 = vmatpush1.bf16.msra.mxu0 %v5640
          %5796 = vmatprep.subr.bf16.mxu0 0
          %5797 = vmatpush1.bf16.msra.mxu0 %v5641
          %5798 = vmatprep.subr.bf16.mxu0 0
          %5799 = vmatpush1.bf16.msra.mxu0 %v5642
          %5800 = vmatprep.subr.bf16.mxu0 0
          %5801 = vmatpush1.bf16.msra.mxu0 %v5643
          %5802 = vmatprep.subr.bf16.mxu0 0
          %5803 = vmatpush1.bf16.msra.mxu0 %v5644
          %5804 = vmatprep.subr.bf16.mxu0 0
          %5805 = vmatpush1.bf16.msra.mxu0 %v5645
          %5806 = vmatprep.mubr.bf16.mxu0 %v5076
          %5807 = vmatmul.mubr.bf16.gmra.mrb[0].mxu0 %v5043
          %v5808 = vpop.f32.mrb[0].mxu0
          %v5809 = vadd.f32 %v5340, %v5808
          %v5810 = vpop.f32.mrb[0].mxu0
          %v5811 = vpop.f32.mrb[0].mxu0
          %v5812 = vadd.f32 %v5340, %v5811
          %v5813 = vpop.f32.mrb[0].mxu0
          %5814 = vmatprep.mubr.bf16.mxu0 %v5078
          %5815 = vmatmul.mubr.bf16.gmra.mrb[0].mxu0 %v5044
          %v5816 = vpop.f32.mrb[0].mxu0
          %v5817 = vadd.f32 %v5340, %v5816
          %v5818 = vpop.f32.mrb[0].mxu0
          %v5819 = vpop.f32.mrb[0].mxu0
          %v5820 = vadd.f32 %v5340, %v5819
          %v5821 = vpop.f32.mrb[0].mxu0
          %5822 = vmatprep.mubr.bf16.mxu0 %v5080
          %5823 = vmatmul.mubr.bf16.gmra.mrb[0].mxu0 %v5045
          %v5824 = vpop.f32.mrb[0].mxu0
          %v5825 = vadd.f32 %v5340, %v5824
          %v5826 = vpop.f32.mrb[0].mxu0
          %v5827 = vpop.f32.mrb[0].mxu0
          %v5828 = vadd.f32 %v5340, %v5827
          %v5829 = vpop.f32.mrb[0].mxu0
          %5830 = vmatprep.mubr.bf16.mxu0 %v5082
          %5831 = vmatmul.mubr.bf16.gmra.mrb[0].mxu0 %v5046
          %v5832 = vpop.f32.mrb[0].mxu0
          %v5833 = vadd.f32 %v5340, %v5832
          %v5834 = vpop.f32.mrb[0].mxu0
          %v5835 = vpop.f32.mrb[0].mxu0
          %v5836 = vadd.f32 %v5340, %v5835
          %v5837 = vpop.f32.mrb[0].mxu0
          %5838 = vmatprep.mubr.bf16.mxu0 %v5084
          %5839 = vmatmul.mubr.bf16.gmra.mrb[0].mxu0 %v5047
          %v5840 = vpop.f32.mrb[0].mxu0
          %v5841 = vadd.f32 %v5340, %v5840
          %v5842 = vpop.f32.mrb[0].mxu0
          %v5843 = vpop.f32.mrb[0].mxu0
          %v5844 = vadd.f32 %v5340, %v5843
          %v5845 = vpop.f32.mrb[0].mxu0
          %5846 = vmatprep.mubr.bf16.mxu0 %v5086
          %5847 = vmatmul.mubr.bf16.gmra.mrb[0].mxu0 %v5048
          %v5848 = vpop.f32.mrb[0].mxu0
          %v5849 = vadd.f32 %v5340, %v5848
          %v5850 = vpop.f32.mrb[0].mxu0
          %v5851 = vpop.f32.mrb[0].mxu0
          %v5852 = vadd.f32 %v5340, %v5851
          %v5853 = vpop.f32.mrb[0].mxu0
          %5854 = vmatprep.mubr.bf16.mxu0 %v5088
          %5855 = vmatmul.mubr.bf16.gmra.mrb[0].mxu0 %v5049
          %v5856 = vpop.f32.mrb[0].mxu0
          %v5857 = vadd.f32 %v5340, %v5856
          %v5858 = vpop.f32.mrb[0].mxu0
          %v5859 = vpop.f32.mrb[0].mxu0
          %v5860 = vadd.f32 %v5340, %v5859
          %v5861 = vpop.f32.mrb[0].mxu0
          %5862 = vmatprep.mubr.bf16.mxu0 %v5090
          %5863 = vmatmul.mubr.bf16.gmra.mrb[0].mxu0 %v5050
          %v5864 = vpop.f32.mrb[0].mxu0
          %v5865 = vadd.f32 %v5340, %v5864
          %v5866 = vpop.f32.mrb[0].mxu0
          %v5867 = vpop.f32.mrb[0].mxu0
          %v5868 = vadd.f32 %v5340, %v5867
          %v5869 = vpop.f32.mrb[0].mxu0
          %5870 = vdwg.mxu0
          %5871 = vmatprep.subr.bf16.mxu0 0
          %5872 = vmatpush1.bf16.msra.mxu0 %v5646
          %5873 = vmatprep.subr.bf16.mxu0 0
          %5874 = vmatpush1.bf16.msra.mxu0 %v5647
          %5875 = vmatprep.subr.bf16.mxu0 0
          %5876 = vmatpush1.bf16.msra.mxu0 %v5648
          %5877 = vmatprep.subr.bf16.mxu0 0
          %5878 = vmatpush1.bf16.msra.mxu0 %v5649
          %5879 = vmatprep.subr.bf16.mxu0 0
          %5880 = vmatpush1.bf16.msra.mxu0 %v5650
          %5881 = vmatprep.subr.bf16.mxu0 0
          %5882 = vmatpush1.bf16.msra.mxu0 %v5651
          %5883 = vmatprep.subr.bf16.mxu0 0
          %5884 = vmatpush1.bf16.msra.mxu0 %v5652
          %5885 = vmatprep.subr.bf16.mxu0 0
          %5886 = vmatpush1.bf16.msra.mxu0 %v5653
          %5887 = vmatprep.subr.bf16.mxu0 0
          %5888 = vmatpush1.bf16.msra.mxu0 %v5654
          %5889 = vmatprep.subr.bf16.mxu0 0
          %5890 = vmatpush1.bf16.msra.mxu0 %v5655
          %5891 = vmatprep.subr.bf16.mxu0 0
          %5892 = vmatpush1.bf16.msra.mxu0 %v5656
          %5893 = vmatprep.subr.bf16.mxu0 0
          %5894 = vmatpush1.bf16.msra.mxu0 %v5657
          %5895 = vmatprep.subr.bf16.mxu0 0
          %5896 = vmatpush1.bf16.msra.mxu0 %v5658
          %5897 = vmatprep.subr.bf16.mxu0 0
          %5898 = vmatpush1.bf16.msra.mxu0 %v5659
          %5899 = vmatprep.subr.bf16.mxu0 0
          %5900 = vmatpush1.bf16.msra.mxu0 %v5660
          %5901 = vmatprep.subr.bf16.mxu0 0
          %5902 = vmatpush1.bf16.msra.mxu0 %v5661
          %5903 = vmatprep.mubr.bf16.mxu0 %v5130
          %5904 = vmatmul.mubr.bf16.gmra.mrb[0].mxu0 %v5103
          %v5905 = vpop.f32.mrb[0].mxu0
          %v5906 = vadd.f32 %v5809, %v5905
          %v5907 = vpop.f32.mrb[0].mxu0
          %v5908 = vpop.f32.mrb[0].mxu0
          %v5909 = vadd.f32 %v5812, %v5908
          %v5910 = vpop.f32.mrb[0].mxu0
          %5911 = vmatprep.mubr.bf16.mxu0 %v5132
          %5912 = vmatmul.mubr.bf16.gmra.mrb[0].mxu0 %v5105
          %v5913 = vpop.f32.mrb[0].mxu0
          %v5914 = vadd.f32 %v5817, %v5913
          %v5915 = vpop.f32.mrb[0].mxu0
          %v5916 = vpop.f32.mrb[0].mxu0
          %v5917 = vadd.f32 %v5820, %v5916
          %v5918 = vpop.f32.mrb[0].mxu0
          %5919 = vmatprep.mubr.bf16.mxu0 %v5134
          %5920 = vmatmul.mubr.bf16.gmra.mrb[0].mxu0 %v5107
          %v5921 = vpop.f32.mrb[0].mxu0
          %v5922 = vadd.f32 %v5825, %v5921
          %v5923 = vpop.f32.mrb[0].mxu0
          %v5924 = vpop.f32.mrb[0].mxu0
          %v5925 = vadd.f32 %v5828, %v5924
          %v5926 = vpop.f32.mrb[0].mxu0
          %5927 = vmatprep.mubr.bf16.mxu0 %v5136
          %5928 = vmatmul.mubr.bf16.gmra.mrb[0].mxu0 %v5109
          %v5929 = vpop.f32.mrb[0].mxu0
          %v5930 = vadd.f32 %v5833, %v5929
          %v5931 = vpop.f32.mrb[0].mxu0
          %v5932 = vpop.f32.mrb[0].mxu0
          %v5933 = vadd.f32 %v5836, %v5932
          %v5934 = vpop.f32.mrb[0].mxu0
          %5935 = vmatprep.mubr.bf16.mxu0 %v5138
          %5936 = vmatmul.mubr.bf16.gmra.mrb[0].mxu0 %v5111
          %v5937 = vpop.f32.mrb[0].mxu0
          %v5938 = vadd.f32 %v5841, %v5937
          %v5939 = vpop.f32.mrb[0].mxu0
          %v5940 = vpop.f32.mrb[0].mxu0
          %v5941 = vadd.f32 %v5844, %v5940
          %v5942 = vpop.f32.mrb[0].mxu0
          %5943 = vmatprep.mubr.bf16.mxu0 %v5140
          %5944 = vmatmul.mubr.bf16.gmra.mrb[0].mxu0 %v5113
          %v5945 = vpop.f32.mrb[0].mxu0
          %v5946 = vadd.f32 %v5849, %v5945
          %v5947 = vpop.f32.mrb[0].mxu0
          %v5948 = vpop.f32.mrb[0].mxu0
          %v5949 = vadd.f32 %v5852, %v5948
          %v5950 = vpop.f32.mrb[0].mxu0
          %5951 = vmatprep.mubr.bf16.mxu0 %v5142
          %5952 = vmatmul.mubr.bf16.gmra.mrb[0].mxu0 %v5115
          %v5953 = vpop.f32.mrb[0].mxu0
          %v5954 = vadd.f32 %v5857, %v5953
          %v5955 = vpop.f32.mrb[0].mxu0
          %v5956 = vpop.f32.mrb[0].mxu0
          %v5957 = vadd.f32 %v5860, %v5956
          %v5958 = vpop.f32.mrb[0].mxu0
          %5959 = vmatprep.mubr.bf16.mxu0 %v5144
          %5960 = vmatmul.mubr.bf16.gmra.mrb[0].mxu0 %v5117
          %v5961 = vpop.f32.mrb[0].mxu0
          %v5962 = vadd.f32 %v5865, %v5961
          %v5963 = vpop.f32.mrb[0].mxu0
          %v5964 = vpop.f32.mrb[0].mxu0
          %v5965 = vadd.f32 %v5868, %v5964
          %v5966 = vpop.f32.mrb[0].mxu0
          %5967 = vdwg.mxu0
          %5968 = vmatprep.subr.bf16.mxu0 0
          %5969 = vmatpush1.bf16.msra.mxu0 %v5662
          %5970 = vmatprep.subr.bf16.mxu0 0
          %5971 = vmatpush1.bf16.msra.mxu0 %v5663
          %5972 = vmatprep.subr.bf16.mxu0 0
          %5973 = vmatpush1.bf16.msra.mxu0 %v5664
          %5974 = vmatprep.subr.bf16.mxu0 0
          %5975 = vmatpush1.bf16.msra.mxu0 %v5665
          %5976 = vmatprep.subr.bf16.mxu0 0
          %5977 = vmatpush1.bf16.msra.mxu0 %v5666
          %5978 = vmatprep.subr.bf16.mxu0 0
          %5979 = vmatpush1.bf16.msra.mxu0 %v5667
          %5980 = vmatprep.subr.bf16.mxu0 0
          %5981 = vmatpush1.bf16.msra.mxu0 %v5668
          %5982 = vmatprep.subr.bf16.mxu0 0
          %5983 = vmatpush1.bf16.msra.mxu0 %v5669
          %5984 = vmatprep.subr.bf16.mxu0 0
          %5985 = vmatpush1.bf16.msra.mxu0 %v5670
          %5986 = vmatprep.subr.bf16.mxu0 0
          %5987 = vmatpush1.bf16.msra.mxu0 %v5671
          %5988 = vmatprep.subr.bf16.mxu0 0
          %5989 = vmatpush1.bf16.msra.mxu0 %v5672
          %5990 = vmatprep.subr.bf16.mxu0 0
          %5991 = vmatpush1.bf16.msra.mxu0 %v5673
          %5992 = vmatprep.subr.bf16.mxu0 0
          %5993 = vmatpush1.bf16.msra.mxu0 %v5674
          %5994 = vmatprep.subr.bf16.mxu0 0
          %5995 = vmatpush1.bf16.msra.mxu0 %v5675
          %5996 = vmatprep.subr.bf16.mxu0 0
          %5997 = vmatpush1.bf16.msra.mxu0 %v5676
          %5998 = vmatprep.subr.bf16.mxu0 0
          %5999 = vmatpush1.bf16.msra.mxu0 %v5677
          %6000 = vmatprep.mubr.bf16.mxu0 %v5157
          %6001 = vmatmul.mubr.bf16.gmra.mrb[0].mxu0 %v5044
          %v6002 = vpop.f32.mrb[0].mxu0
          %v6003 = vadd.f32 %v5906, %v6002
          %v6004 = vpop.f32.mrb[0].mxu0
          %v6005 = vpop.f32.mrb[0].mxu0
          %v6006 = vadd.f32 %v5909, %v6005
          %v6007 = vpop.f32.mrb[0].mxu0
          %6008 = vmatprep.mubr.bf16.mxu0 %v5080
          %6009 = vmatmul.mubr.bf16.gmra.mrb[0].mxu0 %v5045
          %v6010 = vpop.f32.mrb[0].mxu0
          %v6011 = vadd.f32 %v5914, %v6010
          %v6012 = vpop.f32.mrb[0].mxu0
          %v6013 = vpop.f32.mrb[0].mxu0
          %v6014 = vadd.f32 %v5917, %v6013
          %v6015 = vpop.f32.mrb[0].mxu0
          %6016 = vmatprep.mubr.bf16.mxu0 %v5082
          %6017 = vmatmul.mubr.bf16.gmra.mrb[0].mxu0 %v5046
          %v6018 = vpop.f32.mrb[0].mxu0
          %v6019 = vadd.f32 %v5922, %v6018
          %v6020 = vpop.f32.mrb[0].mxu0
          %v6021 = vpop.f32.mrb[0].mxu0
          %v6022 = vadd.f32 %v5925, %v6021
          %v6023 = vpop.f32.mrb[0].mxu0
          %6024 = vmatprep.mubr.bf16.mxu0 %v5084
          %6025 = vmatmul.mubr.bf16.gmra.mrb[0].mxu0 %v5047
          %v6026 = vpop.f32.mrb[0].mxu0
          %v6027 = vadd.f32 %v5930, %v6026
          %v6028 = vpop.f32.mrb[0].mxu0
          %v6029 = vpop.f32.mrb[0].mxu0
          %v6030 = vadd.f32 %v5933, %v6029
          %v6031 = vpop.f32.mrb[0].mxu0
          %6032 = vmatprep.mubr.bf16.mxu0 %v5086
          %6033 = vmatmul.mubr.bf16.gmra.mrb[0].mxu0 %v5048
          %v6034 = vpop.f32.mrb[0].mxu0
          %v6035 = vadd.f32 %v5938, %v6034
          %v6036 = vpop.f32.mrb[0].mxu0
          %v6037 = vpop.f32.mrb[0].mxu0
          %v6038 = vadd.f32 %v5941, %v6037
          %v6039 = vpop.f32.mrb[0].mxu0
          %6040 = vmatprep.mubr.bf16.mxu0 %v5088
          %6041 = vmatmul.mubr.bf16.gmra.mrb[0].mxu0 %v5049
          %v6042 = vpop.f32.mrb[0].mxu0
          %v6043 = vadd.f32 %v5946, %v6042
          %v6044 = vpop.f32.mrb[0].mxu0
          %v6045 = vpop.f32.mrb[0].mxu0
          %v6046 = vadd.f32 %v5949, %v6045
          %v6047 = vpop.f32.mrb[0].mxu0
          %6048 = vmatprep.mubr.bf16.mxu0 %v5159
          %6049 = vmatmul.mubr.bf16.gmra.mrb[0].mxu0 %v5050
          %v6050 = vpop.f32.mrb[0].mxu0
          %v6051 = vadd.f32 %v5954, %v6050
          %v6052 = vpop.f32.mrb[0].mxu0
          %v6053 = vpop.f32.mrb[0].mxu0
          %v6054 = vadd.f32 %v5957, %v6053
          %v6055 = vpop.f32.mrb[0].mxu0
          %6056 = vmatprep.mubr.bf16.mxu0 %v5161
          %6057 = vmatmul.mubr.bf16.gmra.mrb[0].mxu0 %v5057
          %v6058 = vpop.f32.mrb[0].mxu0
          %v6059 = vadd.f32 %v5962, %v6058
          %v6060 = vpop.f32.mrb[0].mxu0
          %v6061 = vpop.f32.mrb[0].mxu0
          %v6062 = vadd.f32 %v5965, %v6061
          %v6063 = vpop.f32.mrb[0].mxu0
          %6064 = vdwg.mxu0
          %6065 = vmatprep.subr.bf16.mxu0 0
          %6066 = vmatpush1.bf16.msra.mxu0 %v5678
          %6067 = vmatprep.subr.bf16.mxu0 0
          %6068 = vmatpush1.bf16.msra.mxu0 %v5679
          %6069 = vmatprep.subr.bf16.mxu0 0
          %6070 = vmatpush1.bf16.msra.mxu0 %v5680
          %6071 = vmatprep.subr.bf16.mxu0 0
          %6072 = vmatpush1.bf16.msra.mxu0 %v5681
          %6073 = vmatprep.subr.bf16.mxu0 0
          %6074 = vmatpush1.bf16.msra.mxu0 %v5682
          %6075 = vmatprep.subr.bf16.mxu0 0
          %6076 = vmatpush1.bf16.msra.mxu0 %v5683
          %6077 = vmatprep.subr.bf16.mxu0 0
          %6078 = vmatpush1.bf16.msra.mxu0 %v5684
          %6079 = vmatprep.subr.bf16.mxu0 0
          %6080 = vmatpush1.bf16.msra.mxu0 %v5685
          %6081 = vmatprep.subr.bf16.mxu0 0
          %6082 = vmatpush1.bf16.msra.mxu0 %v5686
          %6083 = vmatprep.subr.bf16.mxu0 0
          %6084 = vmatpush1.bf16.msra.mxu0 %v5687
          %6085 = vmatprep.subr.bf16.mxu0 0
          %6086 = vmatpush1.bf16.msra.mxu0 %v5688
          %6087 = vmatprep.subr.bf16.mxu0 0
          %6088 = vmatpush1.bf16.msra.mxu0 %v5689
          %6089 = vmatprep.subr.bf16.mxu0 0
          %6090 = vmatpush1.bf16.msra.mxu0 %v5690
          %6091 = vmatprep.subr.bf16.mxu0 0
          %6092 = vmatpush1.bf16.msra.mxu0 %v5691
          %6093 = vmatprep.subr.bf16.mxu0 0
          %6094 = vmatpush1.bf16.msra.mxu0 %v5692
          %6095 = vmatprep.subr.bf16.mxu0 0
          %6096 = vmatpush1.bf16.msra.mxu0 %v5693
          %6097 = vmatprep.mubr.bf16.mxu0 %v5179
          %6098 = vmatmul.mubr.bf16.gmra.mrb[0].mxu0 %v5168
          %v6099 = vpop.f32.mrb[0].mxu0
          %v6100 = vadd.f32 %v6003, %v6099
          %v6101 = vpop.f32.mrb[0].mxu0
          %v6102 = vpop.f32.mrb[0].mxu0
          %v6103 = vadd.f32 %v6006, %v6102
          %v6104 = vpop.f32.mrb[0].mxu0
          %6105 = vmatprep.mubr.bf16.mxu0 %v5134
          %6106 = vmatmul.mubr.bf16.gmra.mrb[0].mxu0 %v5107
          %v6107 = vpop.f32.mrb[0].mxu0
          %v6108 = vadd.f32 %v6011, %v6107
          %v6109 = vpop.f32.mrb[0].mxu0
          %v6110 = vpop.f32.mrb[0].mxu0
          %v6111 = vadd.f32 %v6014, %v6110
          %v6112 = vpop.f32.mrb[0].mxu0
          %6113 = vmatprep.mubr.bf16.mxu0 %v5136
          %6114 = vmatmul.mubr.bf16.gmra.mrb[0].mxu0 %v5109
          %v6115 = vpop.f32.mrb[0].mxu0
          %v6116 = vadd.f32 %v6019, %v6115
          %v6117 = vpop.f32.mrb[0].mxu0
          %v6118 = vpop.f32.mrb[0].mxu0
          %v6119 = vadd.f32 %v6022, %v6118
          %v6120 = vpop.f32.mrb[0].mxu0
          %6121 = vmatprep.mubr.bf16.mxu0 %v5138
          %6122 = vmatmul.mubr.bf16.gmra.mrb[0].mxu0 %v5111
          %v6123 = vpop.f32.mrb[0].mxu0
          %v6124 = vadd.f32 %v6027, %v6123
          %v6125 = vpop.f32.mrb[0].mxu0
          %v6126 = vpop.f32.mrb[0].mxu0
          %v6127 = vadd.f32 %v6030, %v6126
          %v6128 = vpop.f32.mrb[0].mxu0
          %6129 = vmatprep.mubr.bf16.mxu0 %v5140
          %6130 = vmatmul.mubr.bf16.gmra.mrb[0].mxu0 %v5113
          %v6131 = vpop.f32.mrb[0].mxu0
          %v6132 = vadd.f32 %v6035, %v6131
          %v6133 = vpop.f32.mrb[0].mxu0
          %v6134 = vpop.f32.mrb[0].mxu0
          %v6135 = vadd.f32 %v6038, %v6134
          %v6136 = vpop.f32.mrb[0].mxu0
          %6137 = vmatprep.mubr.bf16.mxu0 %v5142
          %6138 = vmatmul.mubr.bf16.gmra.mrb[0].mxu0 %v5115
          %v6139 = vpop.f32.mrb[0].mxu0
          %v6140 = vadd.f32 %v6043, %v6139
          %v6141 = vpop.f32.mrb[0].mxu0
          %v6142 = vpop.f32.mrb[0].mxu0
          %v6143 = vadd.f32 %v6046, %v6142
          %v6144 = vpop.f32.mrb[0].mxu0
          %6145 = vmatprep.mubr.bf16.mxu0 %v5181
          %6146 = vmatmul.mubr.bf16.gmra.mrb[0].mxu0 %v5170
          %v6147 = vpop.f32.mrb[0].mxu0
          %v6148 = vadd.f32 %v6051, %v6147
          %v6149 = vpop.f32.mrb[0].mxu0
          %v6150 = vpop.f32.mrb[0].mxu0
          %v6151 = vadd.f32 %v6054, %v6150
          %v6152 = vpop.f32.mrb[0].mxu0
          %6153 = vmatprep.mubr.bf16.mxu0 %v5183
          %6154 = vmatmul.mubr.bf16.gmra.mrb[0].mxu0 %v5172
          %v6155 = vpop.f32.mrb[0].mxu0
          %v6156 = vadd.f32 %v6059, %v6155
          %v6157 = vpop.f32.mrb[0].mxu0
          %v6158 = vpop.f32.mrb[0].mxu0
          %v6159 = vadd.f32 %v6062, %v6158
          %v6160 = vpop.f32.mrb[0].mxu0
          %6161 = vdwg.mxu0
          %6162 = vmatprep.subr.bf16.mxu0 0
          %6163 = vmatpush1.bf16.msra.mxu0 %v5694
          %6164 = vmatprep.subr.bf16.mxu0 0
          %6165 = vmatpush1.bf16.msra.mxu0 %v5695
          %6166 = vmatprep.subr.bf16.mxu0 0
          %6167 = vmatpush1.bf16.msra.mxu0 %v5696
          %6168 = vmatprep.subr.bf16.mxu0 0
          %6169 = vmatpush1.bf16.msra.mxu0 %v5697
          %6170 = vmatprep.subr.bf16.mxu0 0
          %6171 = vmatpush1.bf16.msra.mxu0 %v5698
          %6172 = vmatprep.subr.bf16.mxu0 0
          %6173 = vmatpush1.bf16.msra.mxu0 %v5699
          %6174 = vmatprep.subr.bf16.mxu0 0
          %6175 = vmatpush1.bf16.msra.mxu0 %v5700
          %6176 = vmatprep.subr.bf16.mxu0 0
          %6177 = vmatpush1.bf16.msra.mxu0 %v5701
          %6178 = vmatprep.subr.bf16.mxu0 0
          %6179 = vmatpush1.bf16.msra.mxu0 0
          %6180 = vmatprep.subr.bf16.mxu0 0
          %6181 = vmatpush1.bf16.msra.mxu0 0
          %6182 = vmatprep.subr.bf16.mxu0 0
          %6183 = vmatpush1.bf16.msra.mxu0 0
          %6184 = vmatprep.subr.bf16.mxu0 0
          %6185 = vmatpush1.bf16.msra.mxu0 0
          %6186 = vmatprep.subr.bf16.mxu0 0
          %6187 = vmatpush1.bf16.msra.mxu0 0
          %6188 = vmatprep.subr.bf16.mxu0 0
          %6189 = vmatpush1.bf16.msra.mxu0 0
          %6190 = vmatprep.subr.bf16.mxu0 0
          %6191 = vmatpush1.bf16.msra.mxu0 0
          %6192 = vmatprep.subr.bf16.mxu0 0
          %6193 = vmatpush1.bf16.msra.mxu0 0
          %6194 = vmatprep.mubr.bf16.mxu0 0
          %6195 = vmatmul.mubr.bf16.gmra.mrb[0].mxu0 %v5045
          %v6196 = vpop.f32.mrb[0].mxu0
          %v6197 = vadd.f32 %v6100, %v6196
          %v6198 = vpop.f32.mrb[0].mxu0
          %v6199 = vpop.f32.mrb[0].mxu0
          %v6200 = vadd.f32 %v6103, %v6199
          %v6201 = vpop.f32.mrb[0].mxu0
          %6202 = vmatprep.mubr.bf16.mxu0 0
          %6203 = vmatmul.mubr.bf16.gmra.mrb[0].mxu0 %v5046
          %v6204 = vpop.f32.mrb[0].mxu0
          %v6205 = vadd.f32 %v6108, %v6204
          %v6206 = vpop.f32.mrb[0].mxu0
          %v6207 = vpop.f32.mrb[0].mxu0
          %v6208 = vadd.f32 %v6111, %v6207
          %v6209 = vpop.f32.mrb[0].mxu0
          %6210 = vmatprep.mubr.bf16.mxu0 0
          %6211 = vmatmul.mubr.bf16.gmra.mrb[0].mxu0 %v5047
          %v6212 = vpop.f32.mrb[0].mxu0
          %v6213 = vadd.f32 %v6116, %v6212
          %v6214 = vpop.f32.mrb[0].mxu0
          %v6215 = vpop.f32.mrb[0].mxu0
          %v6216 = vadd.f32 %v6119, %v6215
          %v6217 = vpop.f32.mrb[0].mxu0
          %6218 = vmatprep.mubr.bf16.mxu0 0
          %6219 = vmatmul.mubr.bf16.gmra.mrb[0].mxu0 %v5048
          %v6220 = vpop.f32.mrb[0].mxu0
          %v6221 = vadd.f32 %v6124, %v6220
          %v6222 = vpop.f32.mrb[0].mxu0
          %v6223 = vpop.f32.mrb[0].mxu0
          %v6224 = vadd.f32 %v6127, %v6223
          %v6225 = vpop.f32.mrb[0].mxu0
          %6226 = vmatprep.mubr.bf16.mxu0 0
          %6227 = vmatmul.mubr.bf16.gmra.mrb[0].mxu0 %v5049
          %v6228 = vpop.f32.mrb[0].mxu0
          %v6229 = vadd.f32 %v6132, %v6228
          %v6230 = vpop.f32.mrb[0].mxu0
          %v6231 = vpop.f32.mrb[0].mxu0
          %v6232 = vadd.f32 %v6135, %v6231
          %v6233 = vpop.f32.mrb[0].mxu0
          %6234 = vmatprep.mubr.bf16.mxu0 0
          %6235 = vmatmul.mubr.bf16.gmra.mrb[0].mxu0 %v5050
          %v6236 = vpop.f32.mrb[0].mxu0
          %v6237 = vadd.f32 %v6140, %v6236
          %v6238 = vpop.f32.mrb[0].mxu0
          %v6239 = vpop.f32.mrb[0].mxu0
          %v6240 = vadd.f32 %v6143, %v6239
          %v6241 = vpop.f32.mrb[0].mxu0
          %6242 = vmatprep.mubr.bf16.mxu0 0
          %6243 = vmatmul.mubr.bf16.gmra.mrb[0].mxu0 %v5057
          %v6244 = vpop.f32.mrb[0].mxu0
          %v6245 = vadd.f32 %v6148, %v6244
          %v6246 = vpop.f32.mrb[0].mxu0
          %v6247 = vpop.f32.mrb[0].mxu0
          %v6248 = vadd.f32 %v6151, %v6247
          %v6249 = vpop.f32.mrb[0].mxu0
          %6250 = vmatprep.mubr.bf16.mxu0 0
          %6251 = vmatmul.mubr.bf16.gmra.mrb[0].mxu0 %v5064
          %v6252 = vpop.f32.mrb[0].mxu0
          %v6253 = vadd.f32 %v6156, %v6252
          %v6254 = vpop.f32.mrb[0].mxu0
          %v6255 = vpop.f32.mrb[0].mxu0
          %v6256 = vadd.f32 %v6159, %v6255
          %v6257 = vpop.f32.mrb[0].mxu0
          %6258 = vdwg.mxu0
          %v6259 = vmul.f32 %v6197, 0.5
          %v6260 = vmul.f32 %v6200, 0.5
          %v6261 = vmul.f32 %v6205, 0.5
          %v6262 = vmul.f32 %v6208, 0.5
          %v6263 = vmul.f32 %v6213, 0.5
          %v6264 = vmul.f32 %v6216, 0.5
          %v6265 = vmul.f32 %v6221, 0.5
          %v6266 = vmul.f32 %v6224, 0.5
          %v6267 = vmul.f32 %v6229, 0.5
          %v6268 = vmul.f32 %v6232, 0.5
          %v6269 = vmul.f32 %v6237, 0.5
          %v6270 = vmul.f32 %v6240, 0.5
          %v6271 = vmul.f32 %v6245, 0.5
          %v6272 = vmul.f32 %v6248, 0.5
          %v6273 = vmul.f32 %v6253, 0.5
          %v6274 = vmul.f32 %v6256, 0.5
          %v6275 = vmul.f32 %v6197, 0.70710677
          %v6276 = vmul.f32 %v6200, 0.70710677
          %v6277 = vmul.f32 %v6205, 0.70710677
          %v6278 = vmul.f32 %v6208, 0.70710677
          %v6279 = vmul.f32 %v6213, 0.70710677
          %v6280 = vmul.f32 %v6216, 0.70710677
          %v6281 = vmul.f32 %v6221, 0.70710677
          %v6282 = vmul.f32 %v6224, 0.70710677
          %v6283 = vmul.f32 %v6229, 0.70710677
          %v6284 = vmul.f32 %v6232, 0.70710677
          %v6285 = vmul.f32 %v6237, 0.70710677
          %v6286 = vmul.f32 %v6240, 0.70710677
          %v6287 = vmul.f32 %v6245, 0.70710677
          %v6288 = vmul.f32 %v6248, 0.70710677
          %v6289 = vmul.f32 %v6253, 0.70710677
          %v6290 = vmul.f32 %v6256, 0.70710677
          %v6291 = verf.f32.pop %v6275
          %v6292 = verf.f32.pop %v6276
          %v6293 = verf.f32.pop %v6277
          %v6294 = verf.f32.pop %v6278
          %v6295 = verf.f32.pop %v6279
          %v6296 = verf.f32.pop %v6280
          %v6297 = verf.f32.pop %v6281
          %v6298 = verf.f32.pop %v6282
          %v6299 = verf.f32.pop %v6283
          %v6300 = verf.f32.pop %v6284
          %v6301 = verf.f32.pop %v6285
          %v6302 = verf.f32.pop %v6286
          %v6303 = verf.f32.pop %v6287
          %v6304 = verf.f32.pop %v6288
          %v6305 = verf.f32.pop %v6289
          %v6306 = verf.f32.pop %v6290
          %v6307 = vadd.f32 %v6291, 1.0
          %v6308 = vadd.f32 %v6292, 1.0
          %v6309 = vadd.f32 %v6293, 1.0
          %v6310 = vadd.f32 %v6294, 1.0
          %v6311 = vadd.f32 %v6295, 1.0
          %v6312 = vadd.f32 %v6296, 1.0
          %v6313 = vadd.f32 %v6297, 1.0
          %v6314 = vadd.f32 %v6298, 1.0
          %v6315 = vadd.f32 %v6299, 1.0
          %v6316 = vadd.f32 %v6300, 1.0
          %v6317 = vadd.f32 %v6301, 1.0
          %v6318 = vadd.f32 %v6302, 1.0
          %v6319 = vadd.f32 %v6303, 1.0
          %v6320 = vadd.f32 %v6304, 1.0
          %v6321 = vadd.f32 %v6305, 1.0
          %v6322 = vadd.f32 %v6306, 1.0
          %v6323 = vmul.f32 %v6259, %v6307
          %v6324 = vmul.f32 %v6260, %v6308
          %v6325 = vmul.f32 %v6261, %v6309
          %v6326 = vmul.f32 %v6262, %v6310
          %v6327 = vmul.f32 %v6263, %v6311
          %v6328 = vmul.f32 %v6264, %v6312
          %v6329 = vmul.f32 %v6265, %v6313
          %v6330 = vmul.f32 %v6266, %v6314
          %v6331 = vmul.f32 %v6267, %v6315
          %v6332 = vmul.f32 %v6268, %v6316
          %v6333 = vmul.f32 %v6269, %v6317
          %v6334 = vmul.f32 %v6270, %v6318
          %v6335 = vmul.f32 %v6271, %v6319
          %v6336 = vmul.f32 %v6272, %v6320
          %v6337 = vmul.f32 %v6273, %v6321
          %v6338 = vmul.f32 %v6274, %v6322
          %v6339 = vadd.f32 %v4754, %v6323
          %v6340 = vadd.f32 %v4755, %v6324
          %v6341 = vadd.f32 %v4756, %v6325
          %v6342 = vadd.f32 %v4757, %v6326
          %v6343 = vadd.f32 %v4758, %v6327
          %v6344 = vadd.f32 %v4759, %v6328
          %v6345 = vadd.f32 %v4760, %v6329
          %v6346 = vadd.f32 %v4761, %v6330
          %v6347 = vadd.f32 %v4762, %v6331
          %v6348 = vadd.f32 %v4763, %v6332
          %v6349 = vadd.f32 %v4764, %v6333
          %v6350 = vadd.f32 %v4765, %v6334
          %v6351 = vadd.f32 %v4766, %v6335
          %v6352 = vadd.f32 %v4767, %v6336
          %v6353 = vadd.f32 %v4768, %v6337
          %v6354 = vadd.f32 %v4769, %v6338
          %s6355 = sadd.s32 %s847, 3
          %6356 = vadd.xlane.f32.xlu0 %v6339
          %v6357 = vpop.xlane.xlu0 %6356
          %6358 = vadd.xlane.f32.xlu0 %v6340
          %v6359 = vpop.xlane.xlu0 %6358
          %6360 = vadd.xlane.f32.xlu0 %v6341
          %v6361 = vpop.xlane.xlu0 %6360
          %6362 = vadd.xlane.f32.xlu0 %v6342
          %v6363 = vpop.xlane.xlu0 %6362
          %6364 = vadd.xlane.f32.xlu0 %v6343
          %v6365 = vpop.xlane.xlu0 %6364
          %6366 = vadd.xlane.f32.xlu0 %v6344
          %v6367 = vpop.xlane.xlu0 %6366
          %6368 = vadd.xlane.f32.xlu0 %v6345
          %v6369 = vpop.xlane.xlu0 %6368
          %6370 = vadd.xlane.f32.xlu0 %v6346
          %v6371 = vpop.xlane.xlu0 %6370
          %6372 = vadd.xlane.f32.xlu0 %v6347
          %v6373 = vpop.xlane.xlu0 %6372
          %6374 = vadd.xlane.f32.xlu0 %v6348
          %v6375 = vpop.xlane.xlu0 %6374
          %6376 = vadd.xlane.f32.xlu0 %v6349
          %v6377 = vpop.xlane.xlu0 %6376
          %6378 = vadd.xlane.f32.xlu0 %v6350
          %v6379 = vpop.xlane.xlu0 %6378
          %6380 = vadd.xlane.f32.xlu0 %v6351
          %v6381 = vpop.xlane.xlu0 %6380
          %6382 = vadd.xlane.f32.xlu0 %v6352
          %v6383 = vpop.xlane.xlu0 %6382
          %6384 = vadd.xlane.f32.xlu0 %v6353
          %v6385 = vpop.xlane.xlu0 %6384
          %6386 = vadd.xlane.f32.xlu0 %v6354
          %v6387 = vpop.xlane.xlu0 %6386
          %v6388 = vmul.f32 %v6357, 0.0078125
          %v6389 = vmul.f32 %v6359, 0.0078125
          %v6390 = vmul.f32 %v6361, 0.0078125
          %v6391 = vmul.f32 %v6363, 0.0078125
          %v6392 = vmul.f32 %v6365, 0.0078125
          %v6393 = vmul.f32 %v6367, 0.0078125
          %v6394 = vmul.f32 %v6369, 0.0078125
          %v6395 = vmul.f32 %v6371, 0.0078125
          %v6396 = vmul.f32 %v6373, 0.0078125
          %v6397 = vmul.f32 %v6375, 0.0078125
          %v6398 = vmul.f32 %v6377, 0.0078125
          %v6399 = vmul.f32 %v6379, 0.0078125
          %v6400 = vmul.f32 %v6381, 0.0078125
          %v6401 = vmul.f32 %v6383, 0.0078125
          %v6402 = vmul.f32 %v6385, 0.0078125
          %v6403 = vmul.f32 %v6387, 0.0078125
          %v6404 = vmul.f32 %v6339, %v6339
          %v6405 = vmul.f32 %v6340, %v6340
          %v6406 = vmul.f32 %v6341, %v6341
          %v6407 = vmul.f32 %v6342, %v6342
          %v6408 = vmul.f32 %v6343, %v6343
          %v6409 = vmul.f32 %v6344, %v6344
          %v6410 = vmul.f32 %v6345, %v6345
          %v6411 = vmul.f32 %v6346, %v6346
          %v6412 = vmul.f32 %v6347, %v6347
          %v6413 = vmul.f32 %v6348, %v6348
          %v6414 = vmul.f32 %v6349, %v6349
          %v6415 = vmul.f32 %v6350, %v6350
          %v6416 = vmul.f32 %v6351, %v6351
          %v6417 = vmul.f32 %v6352, %v6352
          %v6418 = vmul.f32 %v6353, %v6353
          %v6419 = vmul.f32 %v6354, %v6354
          %6420 = vadd.xlane.f32.xlu0 %v6404
          %v6421 = vpop.xlane.xlu0 %6420
          %6422 = vadd.xlane.f32.xlu0 %v6405
          %v6423 = vpop.xlane.xlu0 %6422
          %6424 = vadd.xlane.f32.xlu0 %v6406
          %v6425 = vpop.xlane.xlu0 %6424
          %6426 = vadd.xlane.f32.xlu0 %v6407
          %v6427 = vpop.xlane.xlu0 %6426
          %6428 = vadd.xlane.f32.xlu0 %v6408
          %v6429 = vpop.xlane.xlu0 %6428
          %6430 = vadd.xlane.f32.xlu0 %v6409
          %v6431 = vpop.xlane.xlu0 %6430
          %6432 = vadd.xlane.f32.xlu0 %v6410
          %v6433 = vpop.xlane.xlu0 %6432
          %6434 = vadd.xlane.f32.xlu0 %v6411
          %v6435 = vpop.xlane.xlu0 %6434
          %6436 = vadd.xlane.f32.xlu0 %v6412
          %v6437 = vpop.xlane.xlu0 %6436
          %6438 = vadd.xlane.f32.xlu0 %v6413
          %v6439 = vpop.xlane.xlu0 %6438
          %6440 = vadd.xlane.f32.xlu0 %v6414
          %v6441 = vpop.xlane.xlu0 %6440
          %6442 = vadd.xlane.f32.xlu0 %v6415
          %v6443 = vpop.xlane.xlu0 %6442
          %6444 = vadd.xlane.f32.xlu0 %v6416
          %v6445 = vpop.xlane.xlu0 %6444
          %6446 = vadd.xlane.f32.xlu0 %v6417
          %v6447 = vpop.xlane.xlu0 %6446
          %6448 = vadd.xlane.f32.xlu0 %v6418
          %v6449 = vpop.xlane.xlu0 %6448
          %6450 = vadd.xlane.f32.xlu0 %v6419
          %v6451 = vpop.xlane.xlu0 %6450
          %v6452 = vmul.f32 %v6421, 0.0078125
          %v6453 = vmul.f32 %v6423, 0.0078125
          %v6454 = vmul.f32 %v6425, 0.0078125
          %v6455 = vmul.f32 %v6427, 0.0078125
          %v6456 = vmul.f32 %v6429, 0.0078125
          %v6457 = vmul.f32 %v6431, 0.0078125
          %v6458 = vmul.f32 %v6433, 0.0078125
          %v6459 = vmul.f32 %v6435, 0.0078125
          %v6460 = vmul.f32 %v6437, 0.0078125
          %v6461 = vmul.f32 %v6439, 0.0078125
          %v6462 = vmul.f32 %v6441, 0.0078125
          %v6463 = vmul.f32 %v6443, 0.0078125
          %v6464 = vmul.f32 %v6445, 0.0078125
          %v6465 = vmul.f32 %v6447, 0.0078125
          %v6466 = vmul.f32 %v6449, 0.0078125
          %v6467 = vmul.f32 %v6451, 0.0078125
          %v6468 = vmul.f32 %v6388, %v6388
          %v6469 = vmul.f32 %v6389, %v6389
          %v6470 = vmul.f32 %v6390, %v6390
          %v6471 = vmul.f32 %v6391, %v6391
          %v6472 = vmul.f32 %v6392, %v6392
          %v6473 = vmul.f32 %v6393, %v6393
          %v6474 = vmul.f32 %v6394, %v6394
          %v6475 = vmul.f32 %v6395, %v6395
          %v6476 = vmul.f32 %v6396, %v6396
          %v6477 = vmul.f32 %v6397, %v6397
          %v6478 = vmul.f32 %v6398, %v6398
          %v6479 = vmul.f32 %v6399, %v6399
          %v6480 = vmul.f32 %v6400, %v6400
          %v6481 = vmul.f32 %v6401, %v6401
          %v6482 = vmul.f32 %v6402, %v6402
          %v6483 = vmul.f32 %v6403, %v6403
          %v6484 = vsub.f32 %v6452, %v6468
          %v6485 = vsub.f32 %v6453, %v6469
          %v6486 = vsub.f32 %v6454, %v6470
          %v6487 = vsub.f32 %v6455, %v6471
          %v6488 = vsub.f32 %v6456, %v6472
          %v6489 = vsub.f32 %v6457, %v6473
          %v6490 = vsub.f32 %v6458, %v6474
          %v6491 = vsub.f32 %v6459, %v6475
          %v6492 = vsub.f32 %v6460, %v6476
          %v6493 = vsub.f32 %v6461, %v6477
          %v6494 = vsub.f32 %v6462, %v6478
          %v6495 = vsub.f32 %v6463, %v6479
          %v6496 = vsub.f32 %v6464, %v6480
          %v6497 = vsub.f32 %v6465, %v6481
          %v6498 = vsub.f32 %v6466, %v6482
          %v6499 = vsub.f32 %v6467, %v6483
          %v6500 = vsub.f32 %v6339, %v6388
          %v6501 = vsub.f32 %v6340, %v6389
          %v6502 = vsub.f32 %v6341, %v6390
          %v6503 = vsub.f32 %v6342, %v6391
          %v6504 = vsub.f32 %v6343, %v6392
          %v6505 = vsub.f32 %v6344, %v6393
          %v6506 = vsub.f32 %v6345, %v6394
          %v6507 = vsub.f32 %v6346, %v6395
          %v6508 = vsub.f32 %v6347, %v6396
          %v6509 = vsub.f32 %v6348, %v6397
          %v6510 = vsub.f32 %v6349, %v6398
          %v6511 = vsub.f32 %v6350, %v6399
          %v6512 = vsub.f32 %v6351, %v6400
          %v6513 = vsub.f32 %v6352, %v6401
          %v6514 = vsub.f32 %v6353, %v6402
          %v6515 = vsub.f32 %v6354, %v6403
          %v6516 = vadd.f32 %v6484, 1e-05
          %v6517 = vadd.f32 %v6485, 1e-05
          %v6518 = vadd.f32 %v6486, 1e-05
          %v6519 = vadd.f32 %v6487, 1e-05
          %v6520 = vadd.f32 %v6488, 1e-05
          %v6521 = vadd.f32 %v6489, 1e-05
          %v6522 = vadd.f32 %v6490, 1e-05
          %v6523 = vadd.f32 %v6491, 1e-05
          %v6524 = vadd.f32 %v6492, 1e-05
          %v6525 = vadd.f32 %v6493, 1e-05
          %v6526 = vadd.f32 %v6494, 1e-05
          %v6527 = vadd.f32 %v6495, 1e-05
          %v6528 = vadd.f32 %v6496, 1e-05
          %v6529 = vadd.f32 %v6497, 1e-05
          %v6530 = vadd.f32 %v6498, 1e-05
          %v6531 = vadd.f32 %v6499, 1e-05
          %v6532 = vrsqrt.pop %v6516
          %v6533 = vrsqrt.pop %v6517
          %v6534 = vrsqrt.pop %v6518
          %v6535 = vrsqrt.pop %v6519
          %v6536 = vrsqrt.pop %v6520
          %v6537 = vrsqrt.pop %v6521
          %v6538 = vrsqrt.pop %v6522
          %v6539 = vrsqrt.pop %v6523
          %v6540 = vrsqrt.pop %v6524
          %v6541 = vrsqrt.pop %v6525
          %v6542 = vrsqrt.pop %v6526
          %v6543 = vrsqrt.pop %v6527
          %v6544 = vrsqrt.pop %v6528
          %v6545 = vrsqrt.pop %v6529
          %v6546 = vrsqrt.pop %v6530
          %v6547 = vrsqrt.pop %v6531
          %v6548 = vmul.f32 %v6500, %v6532
          %v6549 = vmul.f32 %v6501, %v6533
          %v6550 = vmul.f32 %v6502, %v6534
          %v6551 = vmul.f32 %v6503, %v6535
          %v6552 = vmul.f32 %v6504, %v6536
          %v6553 = vmul.f32 %v6505, %v6537
          %v6554 = vmul.f32 %v6506, %v6538
          %v6555 = vmul.f32 %v6507, %v6539
          %v6556 = vmul.f32 %v6508, %v6540
          %v6557 = vmul.f32 %v6509, %v6541
          %v6558 = vmul.f32 %v6510, %v6542
          %v6559 = vmul.f32 %v6511, %v6543
          %v6560 = vmul.f32 %v6512, %v6544
          %v6561 = vmul.f32 %v6513, %v6545
          %v6562 = vmul.f32 %v6514, %v6546
          %v6563 = vmul.f32 %v6515, %v6547
          %s6564 = scalar_lea.vmem [#allocation9], %s6355
          %v6565 = vld [vmem:[%s6564] sm:$0x1]
          %v6567 = vlaneseq
          %v6568 = vshrl.u32 %v6567, 7
          %v6569 = vsub.s32 0, %v6568
          %v6570 = vrot.slane %v6565, %v6569
          %v6572 = vmul.f32 %v6548, %v6570
          %v6573 = vmul.f32 %v6549, %v6570
          %v6574 = vmul.f32 %v6550, %v6570
          %v6575 = vmul.f32 %v6551, %v6570
          %v6576 = vmul.f32 %v6552, %v6570
          %v6577 = vmul.f32 %v6553, %v6570
          %v6578 = vmul.f32 %v6554, %v6570
          %v6579 = vmul.f32 %v6555, %v6570
          %v6580 = vmul.f32 %v6556, %v6570
          %v6581 = vmul.f32 %v6557, %v6570
          %v6582 = vmul.f32 %v6558, %v6570
          %v6583 = vmul.f32 %v6559, %v6570
          %v6584 = vmul.f32 %v6560, %v6570
          %v6585 = vmul.f32 %v6561, %v6570
          %v6586 = vmul.f32 %v6562, %v6570
          %v6587 = vmul.f32 %v6563, %v6570
          %s6588 = scalar_lea.vmem [#allocation11], %s6355
          %v6589 = vld [vmem:[%s6588] sm:$0x1]
          %v6591 = vlaneseq
          %v6592 = vshrl.u32 %v6591, 7
          %v6593 = vsub.s32 0, %v6592
          %v6594 = vrot.slane %v6589, %v6593
          %v6596 = vadd.f32 %v6572, %v6594
          %v6597 = vadd.f32 %v6573, %v6594
          %v6598 = vadd.f32 %v6574, %v6594
          %v6599 = vadd.f32 %v6575, %v6594
          %v6600 = vadd.f32 %v6576, %v6594
          %v6601 = vadd.f32 %v6577, %v6594
          %v6602 = vadd.f32 %v6578, %v6594
          %v6603 = vadd.f32 %v6579, %v6594
          %v6604 = vadd.f32 %v6580, %v6594
          %v6605 = vadd.f32 %v6581, %v6594
          %v6606 = vadd.f32 %v6582, %v6594
          %v6607 = vadd.f32 %v6583, %v6594
          %v6608 = vadd.f32 %v6584, %v6594
          %v6609 = vadd.f32 %v6585, %v6594
          %v6610 = vadd.f32 %v6586, %v6594
          %v6611 = vadd.f32 %v6587, %v6594
          %v6612 = vpack.c.bf16 %v6597, %v6596
          %v6613 = vpack.c.bf16 %v6599, %v6598
          %v6614 = vpack.c.bf16 %v6601, %v6600
          %v6615 = vpack.c.bf16 %v6603, %v6602
          %v6616 = vpack.c.bf16 %v6605, %v6604
          %v6617 = vpack.c.bf16 %v6607, %v6606
          %v6618 = vpack.c.bf16 %v6609, %v6608
          %v6619 = vpack.c.bf16 %v6611, %v6610
          %6620 = vst [vmem:[#allocation2 + $0x80] sm:$0xff] %v6612
          %6621 = vst [vmem:[#allocation2 + $0x88] sm:$0xff] %v6613
          %6622 = vst [vmem:[#allocation2 + $0x90] sm:$0xff] %v6614
          %6623 = vst [vmem:[#allocation2 + $0x98] sm:$0xff] %v6615
          %6624 = vst [vmem:[#allocation2 + $0xa0] sm:$0xff] %v6616
          %6625 = vst [vmem:[#allocation2 + $0xa8] sm:$0xff] %v6617
          %6626 = vst [vmem:[#allocation2 + $0xb0] sm:$0xff] %v6618
          %6627 = vst [vmem:[#allocation2 + $0xb8] sm:$0xff] %v6619
          %v6628 = vld [vmem:[#allocation2 + $0x60] sm:$0xff]
          %v6629 = vld [vmem:[#allocation2 + $0x68] sm:$0xff]
          %v6630 = vld [vmem:[#allocation2 + $0x70] sm:$0xff]
          %v6631 = vld [vmem:[#allocation2 + $0x78] sm:$0xff]
          %v6632 = vld [vmem:[#allocation2 + $0x80] sm:$0xff]
          %v6633 = vld [vmem:[#allocation2 + $0x88] sm:$0xff]
          %v6634 = vld [vmem:[#allocation2 + $0x90] sm:$0xff]
          %v6635 = vld [vmem:[#allocation2 + $0x98] sm:$0xff]
          %v6636 = vld [vmem:[#allocation2 + $0xa0] sm:$0xff]
          %v6637 = vld [vmem:[#allocation2 + $0xa8] sm:$0xff]
          %v6638 = vld [vmem:[#allocation2 + $0xb0] sm:$0xff]
          %v6639 = vld [vmem:[#allocation2 + $0xb8] sm:$0xff]
          %v6640 = vld [vmem:[#allocation2 + $0xc0] sm:$0xff]
          %v6641 = vld [vmem:[#allocation2 + $0xc8] sm:$0xff]
          %v6642 = vld [vmem:[#allocation2 + $0xd0] sm:$0xff]
          %v6643 = vld [vmem:[#allocation2 + $0xd8] sm:$0xff]
          %s6644 = smul.u32 %s6355, 144
          %s6645 = smul.addr %s6644, 4
          %s6646 = scalar_lea.vmem [#allocation12], %s6645
          %v6647 = vld [vmem:[%s6646] sm:$0xf]
          %v6648 = vld [vmem:[%s6646 + $0x4] sm:$0xf]
          %v6649 = vld [vmem:[%s6646 + $0x8] sm:$0xf]
          %v6650 = vld [vmem:[%s6646 + $0xc] sm:$0xf]
          %v6651 = vld [vmem:[%s6646 + $0x10] sm:$0xf]
          %v6652 = vld [vmem:[%s6646 + $0x14] sm:$0xf]
          %v6653 = vld [vmem:[%s6646 + $0x18] sm:$0xf]
          %v6654 = vld [vmem:[%s6646 + $0x1c] sm:$0xf]
          %v6655 = vld [vmem:[%s6646 + $0x20] sm:$0xf]
          %v6656 = vld [vmem:[%s6646 + $0x24] sm:$0xf]
          %v6657 = vld [vmem:[%s6646 + $0x28] sm:$0xf]
          %v6658 = vld [vmem:[%s6646 + $0x2c] sm:$0xf]
          %v6659 = vld [vmem:[%s6646 + $0x30] sm:$0xf]
          %v6660 = vld [vmem:[%s6646 + $0x34] sm:$0xf]
          %v6661 = vld [vmem:[%s6646 + $0x38] sm:$0xf]
          %v6662 = vld [vmem:[%s6646 + $0x3c] sm:$0xf]
          %v6663 = vld [vmem:[%s6646 + $0x40] sm:$0xf]
          %v6664 = vld [vmem:[%s6646 + $0x44] sm:$0xf]
          %v6665 = vld [vmem:[%s6646 + $0x48] sm:$0xf]
          %v6666 = vld [vmem:[%s6646 + $0x4c] sm:$0xf]
          %v6667 = vld [vmem:[%s6646 + $0x50] sm:$0xf]
          %v6668 = vld [vmem:[%s6646 + $0x54] sm:$0xf]
          %v6669 = vld [vmem:[%s6646 + $0x58] sm:$0xf]
          %v6670 = vld [vmem:[%s6646 + $0x5c] sm:$0xf]
          %v6671 = vld [vmem:[%s6646 + $0x60] sm:$0xf]
          %v6672 = vld [vmem:[%s6646 + $0x64] sm:$0xf]
          %v6673 = vld [vmem:[%s6646 + $0x68] sm:$0xf]
          %v6674 = vld [vmem:[%s6646 + $0x6c] sm:$0xf]
          %v6675 = vld [vmem:[%s6646 + $0x70] sm:$0xf]
          %v6676 = vld [vmem:[%s6646 + $0x74] sm:$0xf]
          %v6677 = vld [vmem:[%s6646 + $0x78] sm:$0xf]
          %v6678 = vld [vmem:[%s6646 + $0x7c] sm:$0xf]
          %v6679 = vld [vmem:[%s6646 + $0x80] sm:$0xf]
          %v6680 = vld [vmem:[%s6646 + $0x84] sm:$0xf]
          %v6681 = vld [vmem:[%s6646 + $0x88] sm:$0xf]
          %v6682 = vld [vmem:[%s6646 + $0x8c] sm:$0xf]
          %v6683 = vld [vmem:[%s6646 + $0x90] sm:$0xf]
          %v6684 = vld [vmem:[%s6646 + $0x94] sm:$0xf]
          %v6685 = vld [vmem:[%s6646 + $0x98] sm:$0xf]
          %v6686 = vld [vmem:[%s6646 + $0x9c] sm:$0xf]
          %v6687 = vld [vmem:[%s6646 + $0xa0] sm:$0xf]
          %v6688 = vld [vmem:[%s6646 + $0xa4] sm:$0xf]
          %v6689 = vld [vmem:[%s6646 + $0xa8] sm:$0xf]
          %v6690 = vld [vmem:[%s6646 + $0xac] sm:$0xf]
          %v6691 = vld [vmem:[%s6646 + $0xb0] sm:$0xf]
          %v6692 = vld [vmem:[%s6646 + $0xb4] sm:$0xf]
          %v6693 = vld [vmem:[%s6646 + $0xb8] sm:$0xf]
          %v6694 = vld [vmem:[%s6646 + $0xbc] sm:$0xf]
          %v6695 = vld [vmem:[%s6646 + $0xc0] sm:$0xf]
          %v6696 = vld [vmem:[%s6646 + $0xc4] sm:$0xf]
          %v6697 = vld [vmem:[%s6646 + $0xc8] sm:$0xf]
          %v6698 = vld [vmem:[%s6646 + $0xcc] sm:$0xf]
          %v6699 = vld [vmem:[%s6646 + $0xd0] sm:$0xf]
          %v6700 = vld [vmem:[%s6646 + $0xd4] sm:$0xf]
          %v6701 = vld [vmem:[%s6646 + $0xd8] sm:$0xf]
          %v6702 = vld [vmem:[%s6646 + $0xdc] sm:$0xf]
          %v6703 = vld [vmem:[%s6646 + $0xe0] sm:$0xf]
          %v6704 = vld [vmem:[%s6646 + $0xe4] sm:$0xf]
          %v6705 = vld [vmem:[%s6646 + $0xe8] sm:$0xf]
          %v6706 = vld [vmem:[%s6646 + $0xec] sm:$0xf]
          %v6707 = vld [vmem:[%s6646 + $0xf0] sm:$0xf]
          %v6708 = vld [vmem:[%s6646 + $0xf4] sm:$0xf]
          %v6709 = vld [vmem:[%s6646 + $0xf8] sm:$0xf]
          %v6710 = vld [vmem:[%s6646 + $0xfc] sm:$0xf]
          %v6711 = vld [vmem:[%s6646 + $0x100] sm:$0xf]
          %v6712 = vld [vmem:[%s6646 + $0x104] sm:$0xf]
          %v6713 = vld [vmem:[%s6646 + $0x108] sm:$0xf]
          %v6714 = vld [vmem:[%s6646 + $0x10c] sm:$0xf]
          %v6715 = vld [vmem:[%s6646 + $0x110] sm:$0xf]
          %v6716 = vld [vmem:[%s6646 + $0x114] sm:$0xf]
          %v6717 = vld [vmem:[%s6646 + $0x118] sm:$0xf]
          %v6718 = vld [vmem:[%s6646 + $0x11c] sm:$0xf]
          %v6719 = vld [vmem:[%s6646 + $0x120] sm:$0xf]
          %v6720 = vld [vmem:[%s6646 + $0x124] sm:$0xf]
          %v6721 = vld [vmem:[%s6646 + $0x128] sm:$0xf]
          %v6722 = vld [vmem:[%s6646 + $0x12c] sm:$0xf]
          %v6723 = vld [vmem:[%s6646 + $0x130] sm:$0xf]
          %v6724 = vld [vmem:[%s6646 + $0x134] sm:$0xf]
          %v6725 = vld [vmem:[%s6646 + $0x138] sm:$0xf]
          %v6726 = vld [vmem:[%s6646 + $0x13c] sm:$0xf]
          %v6727 = vld [vmem:[%s6646 + $0x140] sm:$0xf]
          %v6728 = vld [vmem:[%s6646 + $0x144] sm:$0xf]
          %v6729 = vld [vmem:[%s6646 + $0x148] sm:$0xf]
          %v6730 = vld [vmem:[%s6646 + $0x14c] sm:$0xf]
          %v6731 = vld [vmem:[%s6646 + $0x150] sm:$0xf]
          %v6732 = vld [vmem:[%s6646 + $0x154] sm:$0xf]
          %v6733 = vld [vmem:[%s6646 + $0x158] sm:$0xf]
          %v6734 = vld [vmem:[%s6646 + $0x15c] sm:$0xf]
          %v6735 = vld [vmem:[%s6646 + $0x160] sm:$0xf]
          %v6736 = vld [vmem:[%s6646 + $0x164] sm:$0xf]
          %v6737 = vld [vmem:[%s6646 + $0x168] sm:$0xf]
          %v6738 = vld [vmem:[%s6646 + $0x16c] sm:$0xf]
          %v6739 = vld [vmem:[%s6646 + $0x170] sm:$0xf]
          %v6740 = vld [vmem:[%s6646 + $0x174] sm:$0xf]
          %v6741 = vld [vmem:[%s6646 + $0x178] sm:$0xf]
          %v6742 = vld [vmem:[%s6646 + $0x17c] sm:$0xf]
          %v6743 = vld [vmem:[%s6646 + $0x180] sm:$0xf]
          %v6744 = vld [vmem:[%s6646 + $0x184] sm:$0xf]
          %v6745 = vld [vmem:[%s6646 + $0x188] sm:$0xf]
          %v6746 = vld [vmem:[%s6646 + $0x18c] sm:$0xf]
          %v6747 = vld [vmem:[%s6646 + $0x190] sm:$0xf]
          %v6748 = vld [vmem:[%s6646 + $0x194] sm:$0xf]
          %v6749 = vld [vmem:[%s6646 + $0x198] sm:$0xf]
          %v6750 = vld [vmem:[%s6646 + $0x19c] sm:$0xf]
          %v6751 = vld [vmem:[%s6646 + $0x1a0] sm:$0xf]
          %v6752 = vld [vmem:[%s6646 + $0x1a4] sm:$0xf]
          %v6753 = vld [vmem:[%s6646 + $0x1a8] sm:$0xf]
          %v6754 = vld [vmem:[%s6646 + $0x1ac] sm:$0xf]
          %v6755 = vld [vmem:[%s6646 + $0x1b0] sm:$0xf]
          %v6756 = vld [vmem:[%s6646 + $0x1b4] sm:$0xf]
          %v6757 = vld [vmem:[%s6646 + $0x1b8] sm:$0xf]
          %v6758 = vld [vmem:[%s6646 + $0x1bc] sm:$0xf]
          %v6759 = vld [vmem:[%s6646 + $0x1c0] sm:$0xf]
          %v6760 = vld [vmem:[%s6646 + $0x1c4] sm:$0xf]
          %v6761 = vld [vmem:[%s6646 + $0x1c8] sm:$0xf]
          %v6762 = vld [vmem:[%s6646 + $0x1cc] sm:$0xf]
          %v6763 = vld [vmem:[%s6646 + $0x1d0] sm:$0xf]
          %v6764 = vld [vmem:[%s6646 + $0x1d4] sm:$0xf]
          %v6765 = vld [vmem:[%s6646 + $0x1d8] sm:$0xf]
          %v6766 = vld [vmem:[%s6646 + $0x1dc] sm:$0xf]
          %v6767 = vld [vmem:[%s6646 + $0x1e0] sm:$0xf]
          %v6768 = vld [vmem:[%s6646 + $0x1e4] sm:$0xf]
          %v6769 = vld [vmem:[%s6646 + $0x1e8] sm:$0xf]
          %v6770 = vld [vmem:[%s6646 + $0x1ec] sm:$0xf]
          %v6771 = vld [vmem:[%s6646 + $0x1f0] sm:$0xf]
          %v6772 = vld [vmem:[%s6646 + $0x1f4] sm:$0xf]
          %v6773 = vld [vmem:[%s6646 + $0x1f8] sm:$0xf]
          %v6774 = vld [vmem:[%s6646 + $0x1fc] sm:$0xf]
          %v6775 = vld [vmem:[%s6646 + $0x200] sm:$0xf]
          %v6776 = vld [vmem:[%s6646 + $0x204] sm:$0xf]
          %v6777 = vld [vmem:[%s6646 + $0x208] sm:$0xf]
          %v6778 = vld [vmem:[%s6646 + $0x20c] sm:$0xf]
          %v6779 = vld [vmem:[%s6646 + $0x210] sm:$0xf]
          %v6780 = vld [vmem:[%s6646 + $0x214] sm:$0xf]
          %v6781 = vld [vmem:[%s6646 + $0x218] sm:$0xf]
          %v6782 = vld [vmem:[%s6646 + $0x21c] sm:$0xf]
          %v6783 = vld [vmem:[%s6646 + $0x220] sm:$0xf]
          %v6784 = vld [vmem:[%s6646 + $0x224] sm:$0xf]
          %v6785 = vld [vmem:[%s6646 + $0x228] sm:$0xf]
          %v6786 = vld [vmem:[%s6646 + $0x22c] sm:$0xf]
          %v6787 = vld [vmem:[%s6646 + $0x230] sm:$0xf]
          %v6788 = vld [vmem:[%s6646 + $0x234] sm:$0xf]
          %v6789 = vld [vmem:[%s6646 + $0x238] sm:$0xf]
          %v6790 = vld [vmem:[%s6646 + $0x23c] sm:$0xf]
          %s6791 = scalar_lea.vmem [#allocation14], %s6355
          %v6792 = vld [vmem:[%s6791] sm:$0x1]
          %v6794 = vlaneseq
          %v6795 = vshrl.u32 %v6794, 7
          %v6796 = vsub.s32 0, %v6795
          %v6797 = vrot.slane %v6792, %v6796
          %v6943 = vunpack.c.l.b16 %v6647
          %v6944 = vunpack.c.l.b16 %v6648
          %v6945 = vunpack.c.l.b16 %v6649
          %v6946 = vunpack.c.l.b16 %v6650
          %v6947 = vunpack.c.l.b16 %v6651
          %v6948 = vunpack.c.l.b16 %v6652
          %v6949 = vunpack.c.l.b16 %v6653
          %v6950 = vunpack.c.l.b16 %v6654
          %v6951 = vunpack.c.l.b16 %v6655
          %v6952 = vunpack.c.l.b16 %v6656
          %v6953 = vunpack.c.l.b16 %v6657
          %v6954 = vunpack.c.l.b16 %v6658
          %v6955 = vunpack.c.l.b16 %v6659
          %v6956 = vunpack.c.l.b16 %v6660
          %v6957 = vunpack.c.l.b16 %v6661
          %v6958 = vunpack.c.l.b16 %v6662
          %v6959 = vunpack.c.l.b16 %v6663
          %v6960 = vunpack.c.l.b16 %v6664
          %v6961 = vunpack.c.l.b16 %v6665
          %v6962 = vunpack.c.l.b16 %v6666
          %v6963 = vunpack.c.l.b16 %v6667
          %v6964 = vunpack.c.l.b16 %v6668
          %v6965 = vunpack.c.l.b16 %v6669
          %v6966 = vunpack.c.l.b16 %v6670
          %v6967 = vunpack.c.l.b16 %v6671
          %v6968 = vunpack.c.l.b16 %v6672
          %v6969 = vunpack.c.l.b16 %v6673
          %v6970 = vunpack.c.l.b16 %v6674
          %v6971 = vunpack.c.l.b16 %v6675
          %v6972 = vunpack.c.l.b16 %v6676
          %v6973 = vunpack.c.l.b16 %v6677
          %v6974 = vunpack.c.l.b16 %v6678
          %v6975 = vunpack.c.l.b16 %v6679
          %v6976 = vunpack.c.l.b16 %v6680
          %v6977 = vunpack.c.l.b16 %v6681
          %v6978 = vunpack.c.l.b16 %v6682
          %v6979 = vunpack.c.l.b16 %v6683
          %v6980 = vunpack.c.l.b16 %v6684
          %v6981 = vunpack.c.l.b16 %v6685
          %v6982 = vunpack.c.l.b16 %v6686
          %v6983 = vunpack.c.l.b16 %v6687
          %v6984 = vunpack.c.l.b16 %v6688
          %v6985 = vunpack.c.l.b16 %v6689
          %v6986 = vunpack.c.l.b16 %v6690
          %v6987 = vunpack.c.l.b16 %v6691
          %v6988 = vunpack.c.l.b16 %v6692
          %v6989 = vunpack.c.l.b16 %v6693
          %v6990 = vunpack.c.l.b16 %v6694
          %v6991 = vunpack.c.l.b16 %v6695
          %v6992 = vunpack.c.l.b16 %v6696
          %v6993 = vunpack.c.l.b16 %v6697
          %v6994 = vunpack.c.l.b16 %v6698
          %v6995 = vunpack.c.l.b16 %v6699
          %v6996 = vunpack.c.l.b16 %v6700
          %v6997 = vunpack.c.l.b16 %v6701
          %v6998 = vunpack.c.l.b16 %v6702
          %v6999 = vunpack.c.l.b16 %v6703
          %v7000 = vunpack.c.l.b16 %v6704
          %v7001 = vunpack.c.l.b16 %v6705
          %v7002 = vunpack.c.l.b16 %v6706
          %v7003 = vunpack.c.l.b16 %v6707
          %v7004 = vunpack.c.l.b16 %v6708
          %v7005 = vunpack.c.l.b16 %v6709
          %v7006 = vunpack.c.l.b16 %v6710
          %v7007 = vunpack.c.l.b16 %v6711
          %v7008 = vunpack.c.l.b16 %v6712
          %v7009 = vunpack.c.l.b16 %v6713
          %v7010 = vunpack.c.l.b16 %v6714
          %v7011 = vunpack.c.l.b16 %v6715
          %v7012 = vunpack.c.l.b16 %v6716
          %v7013 = vunpack.c.l.b16 %v6717
          %v7014 = vunpack.c.l.b16 %v6718
          %v7015 = vunpack.c.l.b16 %v6719
          %v7016 = vunpack.c.l.b16 %v6720
          %v7017 = vunpack.c.l.b16 %v6721
          %v7018 = vunpack.c.l.b16 %v6722
          %v7019 = vunpack.c.l.b16 %v6723
          %v7020 = vunpack.c.l.b16 %v6724
          %v7021 = vunpack.c.l.b16 %v6725
          %v7022 = vunpack.c.l.b16 %v6726
          %v7023 = vunpack.c.l.b16 %v6727
          %v7024 = vunpack.c.l.b16 %v6728
          %v7025 = vunpack.c.l.b16 %v6729
          %v7026 = vunpack.c.l.b16 %v6730
          %v7027 = vunpack.c.l.b16 %v6731
          %v7028 = vunpack.c.l.b16 %v6732
          %v7029 = vunpack.c.l.b16 %v6733
          %v7030 = vunpack.c.l.b16 %v6734
          %v7031 = vunpack.c.l.b16 %v6735
          %v7032 = vunpack.c.l.b16 %v6736
          %v7033 = vunpack.c.l.b16 %v6737
          %v7034 = vunpack.c.l.b16 %v6738
          %v7035 = vunpack.c.l.b16 %v6739
          %v7036 = vunpack.c.l.b16 %v6740
          %v7037 = vunpack.c.l.b16 %v6741
          %v7038 = vunpack.c.l.b16 %v6742
          %v7039 = vunpack.c.l.b16 %v6743
          %v7040 = vunpack.c.l.b16 %v6744
          %v7041 = vunpack.c.l.b16 %v6745
          %v7042 = vunpack.c.l.b16 %v6746
          %v7043 = vunpack.c.l.b16 %v6747
          %v7044 = vunpack.c.l.b16 %v6748
          %v7045 = vunpack.c.l.b16 %v6749
          %v7046 = vunpack.c.l.b16 %v6750
          %v7047 = vunpack.c.l.b16 %v6751
          %v7048 = vunpack.c.l.b16 %v6752
          %v7049 = vunpack.c.l.b16 %v6753
          %v7050 = vunpack.c.l.b16 %v6754
          %v7051 = vunpack.c.l.b16 %v6755
          %v7052 = vunpack.c.l.b16 %v6756
          %v7053 = vunpack.c.l.b16 %v6757
          %v7054 = vunpack.c.l.b16 %v6758
          %v7055 = vunpack.c.l.b16 %v6759
          %v7056 = vunpack.c.l.b16 %v6760
          %v7057 = vunpack.c.l.b16 %v6761
          %v7058 = vunpack.c.l.b16 %v6762
          %v7059 = vunpack.c.l.b16 %v6763
          %v7060 = vunpack.c.l.b16 %v6764
          %v7061 = vunpack.c.l.b16 %v6765
          %v7062 = vunpack.c.l.b16 %v6766
          %v7063 = vunpack.c.l.b16 %v6767
          %v7064 = vunpack.c.l.b16 %v6768
          %v7065 = vunpack.c.l.b16 %v6769
          %v7066 = vunpack.c.l.b16 %v6770
          %v7067 = vunpack.c.l.b16 %v6771
          %v7068 = vunpack.c.l.b16 %v6772
          %v7069 = vunpack.c.l.b16 %v6773
          %v7070 = vunpack.c.l.b16 %v6774
          %v7071 = vunpack.c.l.b16 %v6775
          %v7072 = vunpack.c.l.b16 %v6776
          %v7073 = vunpack.c.l.b16 %v6777
          %v7074 = vunpack.c.l.b16 %v6778
          %v7075 = vunpack.c.l.b16 %v6779
          %v7076 = vunpack.c.l.b16 %v6780
          %v7077 = vunpack.c.l.b16 %v6781
          %v7078 = vunpack.c.l.b16 %v6782
          %v7079 = vunpack.c.l.b16 %v6783
          %v7080 = vunpack.c.l.b16 %v6784
          %v7081 = vunpack.c.l.b16 %v6785
          %v7082 = vunpack.c.l.b16 %v6786
          %v7083 = vunpack.c.l.b16 %v6787
          %v7084 = vunpack.c.l.b16 %v6788
          %v7085 = vunpack.c.l.b16 %v6789
          %v7086 = vunpack.c.l.b16 %v6790
          %v7087 = vpack.c.b16 %v6944, %v6943
          %v7088 = vpack.c.b16 %v6946, %v6945
          %v7089 = vpack.c.b16 %v6948, %v6947
          %v7090 = vpack.c.b16 %v6950, %v6949
          %v7091 = vpack.c.b16 %v6952, %v6951
          %v7092 = vpack.c.b16 %v6954, %v6953
          %v7093 = vpack.c.b16 %v6956, %v6955
          %v7094 = vpack.c.b16 %v6958, %v6957
          %v7095 = vpack.c.b16 %v6960, %v6959
          %v7096 = vpack.c.b16 %v6962, %v6961
          %v7097 = vpack.c.b16 %v6964, %v6963
          %v7098 = vpack.c.b16 %v6966, %v6965
          %v7099 = vpack.c.b16 %v6968, %v6967
          %v7100 = vpack.c.b16 %v6970, %v6969
          %v7101 = vpack.c.b16 %v6972, %v6971
          %v7102 = vpack.c.b16 %v6974, %v6973
          %v7103 = vpack.c.b16 %v6976, %v6975
          %v7104 = vpack.c.b16 %v6978, %v6977
          %v7105 = vpack.c.b16 %v6980, %v6979
          %v7106 = vpack.c.b16 %v6982, %v6981
          %v7107 = vpack.c.b16 %v6984, %v6983
          %v7108 = vpack.c.b16 %v6986, %v6985
          %v7109 = vpack.c.b16 %v6988, %v6987
          %v7110 = vpack.c.b16 %v6990, %v6989
          %v7111 = vpack.c.b16 %v6992, %v6991
          %v7112 = vpack.c.b16 %v6994, %v6993
          %v7113 = vpack.c.b16 %v6996, %v6995
          %v7114 = vpack.c.b16 %v6998, %v6997
          %v7115 = vpack.c.b16 %v7000, %v6999
          %v7116 = vpack.c.b16 %v7002, %v7001
          %v7117 = vpack.c.b16 %v7004, %v7003
          %v7118 = vpack.c.b16 %v7006, %v7005
          %v7119 = vpack.c.b16 %v7008, %v7007
          %v7120 = vpack.c.b16 %v7010, %v7009
          %v7121 = vpack.c.b16 %v7012, %v7011
          %v7122 = vpack.c.b16 %v7014, %v7013
          %v7123 = vpack.c.b16 %v7016, %v7015
          %v7124 = vpack.c.b16 %v7018, %v7017
          %v7125 = vpack.c.b16 %v7020, %v7019
          %v7126 = vpack.c.b16 %v7022, %v7021
          %v7127 = vpack.c.b16 %v7024, %v7023
          %v7128 = vpack.c.b16 %v7026, %v7025
          %v7129 = vpack.c.b16 %v7028, %v7027
          %v7130 = vpack.c.b16 %v7030, %v7029
          %v7131 = vpack.c.b16 %v7032, %v7031
          %v7132 = vpack.c.b16 %v7034, %v7033
          %v7133 = vpack.c.b16 %v7036, %v7035
          %v7134 = vpack.c.b16 %v7038, %v7037
          %v7135 = vpack.c.b16 %v7040, %v7039
          %v7136 = vpack.c.b16 %v7042, %v7041
          %v7137 = vpack.c.b16 %v7044, %v7043
          %v7138 = vpack.c.b16 %v7046, %v7045
          %v7139 = vpack.c.b16 %v7048, %v7047
          %v7140 = vpack.c.b16 %v7050, %v7049
          %v7141 = vpack.c.b16 %v7052, %v7051
          %v7142 = vpack.c.b16 %v7054, %v7053
          %v7143 = vpack.c.b16 %v7056, %v7055
          %v7144 = vpack.c.b16 %v7058, %v7057
          %v7145 = vpack.c.b16 %v7060, %v7059
          %v7146 = vpack.c.b16 %v7062, %v7061
          %v7147 = vpack.c.b16 %v7064, %v7063
          %v7148 = vpack.c.b16 %v7066, %v7065
          %v7149 = vpack.c.b16 %v7068, %v7067
          %v7150 = vpack.c.b16 %v7070, %v7069
          %v7151 = vpack.c.b16 %v7072, %v7071
          %v7152 = vpack.c.b16 %v7074, %v7073
          %v7153 = vpack.c.b16 %v7076, %v7075
          %v7154 = vpack.c.b16 %v7078, %v7077
          %v7155 = vpack.c.b16 %v7080, %v7079
          %v7156 = vpack.c.b16 %v7082, %v7081
          %v7157 = vpack.c.b16 %v7084, %v7083
          %v7158 = vpack.c.b16 %v7086, %v7085
          %7231 = vmatprep.subr.bf16.mxu0 0
          %7232 = vmatpush1.bf16.msra.mxu0 %v7087
          %7233 = vmatprep.subr.bf16.mxu0 0
          %7234 = vmatpush1.bf16.msra.mxu0 %v7088
          %7235 = vmatprep.subr.bf16.mxu0 0
          %7236 = vmatpush1.bf16.msra.mxu0 %v7089
          %7237 = vmatprep.subr.bf16.mxu0 0
          %7238 = vmatpush1.bf16.msra.mxu0 %v7090
          %7239 = vmatprep.subr.bf16.mxu0 0
          %7240 = vmatpush1.bf16.msra.mxu0 %v7091
          %7241 = vmatprep.subr.bf16.mxu0 0
          %7242 = vmatpush1.bf16.msra.mxu0 %v7092
          %7243 = vmatprep.subr.bf16.mxu0 0
          %7244 = vmatpush1.bf16.msra.mxu0 %v7093
          %7245 = vmatprep.subr.bf16.mxu0 0
          %7246 = vmatpush1.bf16.msra.mxu0 %v7094
          %7247 = vmatprep.subr.bf16.mxu0 0
          %7248 = vmatpush1.bf16.msra.mxu0 %v7095
          %7249 = vmatprep.subr.bf16.mxu0 0
          %7250 = vmatpush1.bf16.msra.mxu0 %v7096
          %7251 = vmatprep.subr.bf16.mxu0 0
          %7252 = vmatpush1.bf16.msra.mxu0 %v7097
          %7253 = vmatprep.subr.bf16.mxu0 0
          %7254 = vmatpush1.bf16.msra.mxu0 %v7098
          %7255 = vmatprep.subr.bf16.mxu0 0
          %7256 = vmatpush1.bf16.msra.mxu0 %v7099
          %7257 = vmatprep.subr.bf16.mxu0 0
          %7258 = vmatpush1.bf16.msra.mxu0 %v7100
          %7259 = vmatprep.subr.bf16.mxu0 0
          %7260 = vmatpush1.bf16.msra.mxu0 %v7101
          %7261 = vmatprep.subr.bf16.mxu0 0
          %7262 = vmatpush1.bf16.msra.mxu0 %v7102
          %7263 = vmatprep.mubr.bf16.mxu0 %v6629
          %7264 = vmatmul.mubr.bf16.gmra.mrb[0].mxu0 %v6628
          %v7265 = vpop.f32.mrb[0].mxu0
          %v7266 = vadd.f32 %v6797, %v7265
          %v7267 = vpop.f32.mrb[0].mxu0
          %v7268 = vpop.f32.mrb[0].mxu0
          %v7269 = vadd.f32 %v6797, %v7268
          %v7270 = vpop.f32.mrb[0].mxu0
          %7271 = vmatprep.mubr.bf16.mxu0 %v6630
          %7272 = vmatmul.mubr.bf16.gmra.mrb[0].mxu0 %v6629
          %v7273 = vpop.f32.mrb[0].mxu0
          %v7274 = vadd.f32 %v6797, %v7273
          %v7275 = vpop.f32.mrb[0].mxu0
          %v7276 = vpop.f32.mrb[0].mxu0
          %v7277 = vadd.f32 %v6797, %v7276
          %v7278 = vpop.f32.mrb[0].mxu0
          %7279 = vmatprep.mubr.bf16.mxu0 %v6631
          %7280 = vmatmul.mubr.bf16.gmra.mrb[0].mxu0 %v6630
          %v7281 = vpop.f32.mrb[0].mxu0
          %v7282 = vadd.f32 %v6797, %v7281
          %v7283 = vpop.f32.mrb[0].mxu0
          %v7284 = vpop.f32.mrb[0].mxu0
          %v7285 = vadd.f32 %v6797, %v7284
          %v7286 = vpop.f32.mrb[0].mxu0
          %7287 = vmatprep.mubr.bf16.mxu0 %v6632
          %7288 = vmatmul.mubr.bf16.gmra.mrb[0].mxu0 %v6631
          %v7289 = vpop.f32.mrb[0].mxu0
          %v7290 = vadd.f32 %v6797, %v7289
          %v7291 = vpop.f32.mrb[0].mxu0
          %v7292 = vpop.f32.mrb[0].mxu0
          %v7293 = vadd.f32 %v6797, %v7292
          %v7294 = vpop.f32.mrb[0].mxu0
          %7295 = vmatprep.mubr.bf16.mxu0 %v6633
          %7296 = vmatmul.mubr.bf16.gmra.mrb[0].mxu0 %v6632
          %v7297 = vpop.f32.mrb[0].mxu0
          %v7298 = vadd.f32 %v6797, %v7297
          %v7299 = vpop.f32.mrb[0].mxu0
          %v7300 = vpop.f32.mrb[0].mxu0
          %v7301 = vadd.f32 %v6797, %v7300
          %v7302 = vpop.f32.mrb[0].mxu0
          %7303 = vmatprep.mubr.bf16.mxu0 %v6634
          %7304 = vmatmul.mubr.bf16.gmra.mrb[0].mxu0 %v6633
          %v7305 = vpop.f32.mrb[0].mxu0
          %v7306 = vadd.f32 %v6797, %v7305
          %v7307 = vpop.f32.mrb[0].mxu0
          %v7308 = vpop.f32.mrb[0].mxu0
          %v7309 = vadd.f32 %v6797, %v7308
          %v7310 = vpop.f32.mrb[0].mxu0
          %7311 = vmatprep.mubr.bf16.mxu0 %v6635
          %7312 = vmatmul.mubr.bf16.gmra.mrb[0].mxu0 %v6634
          %v7313 = vpop.f32.mrb[0].mxu0
          %v7314 = vadd.f32 %v6797, %v7313
          %v7315 = vpop.f32.mrb[0].mxu0
          %v7316 = vpop.f32.mrb[0].mxu0
          %v7317 = vadd.f32 %v6797, %v7316
          %v7318 = vpop.f32.mrb[0].mxu0
          %7319 = vmatprep.mubr.bf16.mxu0 %v6636
          %7320 = vmatmul.mubr.bf16.gmra.mrb[0].mxu0 %v6635
          %v7321 = vpop.f32.mrb[0].mxu0
          %v7322 = vadd.f32 %v6797, %v7321
          %v7323 = vpop.f32.mrb[0].mxu0
          %v7324 = vpop.f32.mrb[0].mxu0
          %v7325 = vadd.f32 %v6797, %v7324
          %v7326 = vpop.f32.mrb[0].mxu0
          %7327 = vdwg.mxu0
          %7328 = vmatprep.subr.bf16.mxu0 0
          %7329 = vmatpush1.bf16.msra.mxu0 %v7103
          %7330 = vmatprep.subr.bf16.mxu0 0
          %7331 = vmatpush1.bf16.msra.mxu0 %v7104
          %7332 = vmatprep.subr.bf16.mxu0 0
          %7333 = vmatpush1.bf16.msra.mxu0 %v7105
          %7334 = vmatprep.subr.bf16.mxu0 0
          %7335 = vmatpush1.bf16.msra.mxu0 %v7106
          %7336 = vmatprep.subr.bf16.mxu0 0
          %7337 = vmatpush1.bf16.msra.mxu0 %v7107
          %7338 = vmatprep.subr.bf16.mxu0 0
          %7339 = vmatpush1.bf16.msra.mxu0 %v7108
          %7340 = vmatprep.subr.bf16.mxu0 0
          %7341 = vmatpush1.bf16.msra.mxu0 %v7109
          %7342 = vmatprep.subr.bf16.mxu0 0
          %7343 = vmatpush1.bf16.msra.mxu0 %v7110
          %7344 = vmatprep.subr.bf16.mxu0 0
          %7345 = vmatpush1.bf16.msra.mxu0 %v7111
          %7346 = vmatprep.subr.bf16.mxu0 0
          %7347 = vmatpush1.bf16.msra.mxu0 %v7112
          %7348 = vmatprep.subr.bf16.mxu0 0
          %7349 = vmatpush1.bf16.msra.mxu0 %v7113
          %7350 = vmatprep.subr.bf16.mxu0 0
          %7351 = vmatpush1.bf16.msra.mxu0 %v7114
          %7352 = vmatprep.subr.bf16.mxu0 0
          %7353 = vmatpush1.bf16.msra.mxu0 %v7115
          %7354 = vmatprep.subr.bf16.mxu0 0
          %7355 = vmatpush1.bf16.msra.mxu0 %v7116
          %7356 = vmatprep.subr.bf16.mxu0 0
          %7357 = vmatpush1.bf16.msra.mxu0 %v7117
          %7358 = vmatprep.subr.bf16.mxu0 0
          %7359 = vmatpush1.bf16.msra.mxu0 %v7118
          %7360 = vmatprep.mubr.bf16.mxu0 %v6631
          %7361 = vmatmul.mubr.bf16.gmra.mrb[0].mxu0 %v6630
          %v7362 = vpop.f32.mrb[0].mxu0
          %v7363 = vadd.f32 %v7266, %v7362
          %v7364 = vpop.f32.mrb[0].mxu0
          %v7365 = vpop.f32.mrb[0].mxu0
          %v7366 = vadd.f32 %v7269, %v7365
          %v7367 = vpop.f32.mrb[0].mxu0
          %7368 = vmatprep.mubr.bf16.mxu0 %v6632
          %7369 = vmatmul.mubr.bf16.gmra.mrb[0].mxu0 %v6631
          %v7370 = vpop.f32.mrb[0].mxu0
          %v7371 = vadd.f32 %v7274, %v7370
          %v7372 = vpop.f32.mrb[0].mxu0
          %v7373 = vpop.f32.mrb[0].mxu0
          %v7374 = vadd.f32 %v7277, %v7373
          %v7375 = vpop.f32.mrb[0].mxu0
          %7376 = vmatprep.mubr.bf16.mxu0 %v6633
          %7377 = vmatmul.mubr.bf16.gmra.mrb[0].mxu0 %v6632
          %v7378 = vpop.f32.mrb[0].mxu0
          %v7379 = vadd.f32 %v7282, %v7378
          %v7380 = vpop.f32.mrb[0].mxu0
          %v7381 = vpop.f32.mrb[0].mxu0
          %v7382 = vadd.f32 %v7285, %v7381
          %v7383 = vpop.f32.mrb[0].mxu0
          %7384 = vmatprep.mubr.bf16.mxu0 %v6634
          %7385 = vmatmul.mubr.bf16.gmra.mrb[0].mxu0 %v6633
          %v7386 = vpop.f32.mrb[0].mxu0
          %v7387 = vadd.f32 %v7290, %v7386
          %v7388 = vpop.f32.mrb[0].mxu0
          %v7389 = vpop.f32.mrb[0].mxu0
          %v7390 = vadd.f32 %v7293, %v7389
          %v7391 = vpop.f32.mrb[0].mxu0
          %7392 = vmatprep.mubr.bf16.mxu0 %v6635
          %7393 = vmatmul.mubr.bf16.gmra.mrb[0].mxu0 %v6634
          %v7394 = vpop.f32.mrb[0].mxu0
          %v7395 = vadd.f32 %v7298, %v7394
          %v7396 = vpop.f32.mrb[0].mxu0
          %v7397 = vpop.f32.mrb[0].mxu0
          %v7398 = vadd.f32 %v7301, %v7397
          %v7399 = vpop.f32.mrb[0].mxu0
          %7400 = vmatprep.mubr.bf16.mxu0 %v6636
          %7401 = vmatmul.mubr.bf16.gmra.mrb[0].mxu0 %v6635
          %v7402 = vpop.f32.mrb[0].mxu0
          %v7403 = vadd.f32 %v7306, %v7402
          %v7404 = vpop.f32.mrb[0].mxu0
          %v7405 = vpop.f32.mrb[0].mxu0
          %v7406 = vadd.f32 %v7309, %v7405
          %v7407 = vpop.f32.mrb[0].mxu0
          %7408 = vmatprep.mubr.bf16.mxu0 %v6637
          %7409 = vmatmul.mubr.bf16.gmra.mrb[0].mxu0 %v6636
          %v7410 = vpop.f32.mrb[0].mxu0
          %v7411 = vadd.f32 %v7314, %v7410
          %v7412 = vpop.f32.mrb[0].mxu0
          %v7413 = vpop.f32.mrb[0].mxu0
          %v7414 = vadd.f32 %v7317, %v7413
          %v7415 = vpop.f32.mrb[0].mxu0
          %7416 = vmatprep.mubr.bf16.mxu0 %v6638
          %7417 = vmatmul.mubr.bf16.gmra.mrb[0].mxu0 %v6637
          %v7418 = vpop.f32.mrb[0].mxu0
          %v7419 = vadd.f32 %v7322, %v7418
          %v7420 = vpop.f32.mrb[0].mxu0
          %v7421 = vpop.f32.mrb[0].mxu0
          %v7422 = vadd.f32 %v7325, %v7421
          %v7423 = vpop.f32.mrb[0].mxu0
          %7424 = vdwg.mxu0
          %7425 = vmatprep.subr.bf16.mxu0 0
          %7426 = vmatpush1.bf16.msra.mxu0 %v7119
          %7427 = vmatprep.subr.bf16.mxu0 0
          %7428 = vmatpush1.bf16.msra.mxu0 %v7120
          %7429 = vmatprep.subr.bf16.mxu0 0
          %7430 = vmatpush1.bf16.msra.mxu0 %v7121
          %7431 = vmatprep.subr.bf16.mxu0 0
          %7432 = vmatpush1.bf16.msra.mxu0 %v7122
          %7433 = vmatprep.subr.bf16.mxu0 0
          %7434 = vmatpush1.bf16.msra.mxu0 %v7123
          %7435 = vmatprep.subr.bf16.mxu0 0
          %7436 = vmatpush1.bf16.msra.mxu0 %v7124
          %7437 = vmatprep.subr.bf16.mxu0 0
          %7438 = vmatpush1.bf16.msra.mxu0 %v7125
          %7439 = vmatprep.subr.bf16.mxu0 0
          %7440 = vmatpush1.bf16.msra.mxu0 %v7126
          %7441 = vmatprep.subr.bf16.mxu0 0
          %7442 = vmatpush1.bf16.msra.mxu0 %v7127
          %7443 = vmatprep.subr.bf16.mxu0 0
          %7444 = vmatpush1.bf16.msra.mxu0 %v7128
          %7445 = vmatprep.subr.bf16.mxu0 0
          %7446 = vmatpush1.bf16.msra.mxu0 %v7129
          %7447 = vmatprep.subr.bf16.mxu0 0
          %7448 = vmatpush1.bf16.msra.mxu0 %v7130
          %7449 = vmatprep.subr.bf16.mxu0 0
          %7450 = vmatpush1.bf16.msra.mxu0 %v7131
          %7451 = vmatprep.subr.bf16.mxu0 0
          %7452 = vmatpush1.bf16.msra.mxu0 %v7132
          %7453 = vmatprep.subr.bf16.mxu0 0
          %7454 = vmatpush1.bf16.msra.mxu0 %v7133
          %7455 = vmatprep.subr.bf16.mxu0 0
          %7456 = vmatpush1.bf16.msra.mxu0 %v7134
          %7457 = vmatprep.mubr.bf16.mxu0 %v6633
          %7458 = vmatmul.mubr.bf16.gmra.mrb[0].mxu0 %v6632
          %v7459 = vpop.f32.mrb[0].mxu0
          %v7460 = vadd.f32 %v7363, %v7459
          %v7461 = vpop.f32.mrb[0].mxu0
          %v7462 = vpop.f32.mrb[0].mxu0
          %v7463 = vadd.f32 %v7366, %v7462
          %v7464 = vpop.f32.mrb[0].mxu0
          %7465 = vmatprep.mubr.bf16.mxu0 %v6634
          %7466 = vmatmul.mubr.bf16.gmra.mrb[0].mxu0 %v6633
          %v7467 = vpop.f32.mrb[0].mxu0
          %v7468 = vadd.f32 %v7371, %v7467
          %v7469 = vpop.f32.mrb[0].mxu0
          %v7470 = vpop.f32.mrb[0].mxu0
          %v7471 = vadd.f32 %v7374, %v7470
          %v7472 = vpop.f32.mrb[0].mxu0
          %7473 = vmatprep.mubr.bf16.mxu0 %v6635
          %7474 = vmatmul.mubr.bf16.gmra.mrb[0].mxu0 %v6634
          %v7475 = vpop.f32.mrb[0].mxu0
          %v7476 = vadd.f32 %v7379, %v7475
          %v7477 = vpop.f32.mrb[0].mxu0
          %v7478 = vpop.f32.mrb[0].mxu0
          %v7479 = vadd.f32 %v7382, %v7478
          %v7480 = vpop.f32.mrb[0].mxu0
          %7481 = vmatprep.mubr.bf16.mxu0 %v6636
          %7482 = vmatmul.mubr.bf16.gmra.mrb[0].mxu0 %v6635
          %v7483 = vpop.f32.mrb[0].mxu0
          %v7484 = vadd.f32 %v7387, %v7483
          %v7485 = vpop.f32.mrb[0].mxu0
          %v7486 = vpop.f32.mrb[0].mxu0
          %v7487 = vadd.f32 %v7390, %v7486
          %v7488 = vpop.f32.mrb[0].mxu0
          %7489 = vmatprep.mubr.bf16.mxu0 %v6637
          %7490 = vmatmul.mubr.bf16.gmra.mrb[0].mxu0 %v6636
          %v7491 = vpop.f32.mrb[0].mxu0
          %v7492 = vadd.f32 %v7395, %v7491
          %v7493 = vpop.f32.mrb[0].mxu0
          %v7494 = vpop.f32.mrb[0].mxu0
          %v7495 = vadd.f32 %v7398, %v7494
          %v7496 = vpop.f32.mrb[0].mxu0
          %7497 = vmatprep.mubr.bf16.mxu0 %v6638
          %7498 = vmatmul.mubr.bf16.gmra.mrb[0].mxu0 %v6637
          %v7499 = vpop.f32.mrb[0].mxu0
          %v7500 = vadd.f32 %v7403, %v7499
          %v7501 = vpop.f32.mrb[0].mxu0
          %v7502 = vpop.f32.mrb[0].mxu0
          %v7503 = vadd.f32 %v7406, %v7502
          %v7504 = vpop.f32.mrb[0].mxu0
          %7505 = vmatprep.mubr.bf16.mxu0 %v6639
          %7506 = vmatmul.mubr.bf16.gmra.mrb[0].mxu0 %v6638
          %v7507 = vpop.f32.mrb[0].mxu0
          %v7508 = vadd.f32 %v7411, %v7507
          %v7509 = vpop.f32.mrb[0].mxu0
          %v7510 = vpop.f32.mrb[0].mxu0
          %v7511 = vadd.f32 %v7414, %v7510
          %v7512 = vpop.f32.mrb[0].mxu0
          %7513 = vmatprep.mubr.bf16.mxu0 %v6640
          %7514 = vmatmul.mubr.bf16.gmra.mrb[0].mxu0 %v6639
          %v7515 = vpop.f32.mrb[0].mxu0
          %v7516 = vadd.f32 %v7419, %v7515
          %v7517 = vpop.f32.mrb[0].mxu0
          %v7518 = vpop.f32.mrb[0].mxu0
          %v7519 = vadd.f32 %v7422, %v7518
          %v7520 = vpop.f32.mrb[0].mxu0
          %7521 = vdwg.mxu0
          %7522 = vmatprep.subr.bf16.mxu0 0
          %7523 = vmatpush1.bf16.msra.mxu0 %v7135
          %7524 = vmatprep.subr.bf16.mxu0 0
          %7525 = vmatpush1.bf16.msra.mxu0 %v7136
          %7526 = vmatprep.subr.bf16.mxu0 0
          %7527 = vmatpush1.bf16.msra.mxu0 %v7137
          %7528 = vmatprep.subr.bf16.mxu0 0
          %7529 = vmatpush1.bf16.msra.mxu0 %v7138
          %7530 = vmatprep.subr.bf16.mxu0 0
          %7531 = vmatpush1.bf16.msra.mxu0 %v7139
          %7532 = vmatprep.subr.bf16.mxu0 0
          %7533 = vmatpush1.bf16.msra.mxu0 %v7140
          %7534 = vmatprep.subr.bf16.mxu0 0
          %7535 = vmatpush1.bf16.msra.mxu0 %v7141
          %7536 = vmatprep.subr.bf16.mxu0 0
          %7537 = vmatpush1.bf16.msra.mxu0 %v7142
          %7538 = vmatprep.subr.bf16.mxu0 0
          %7539 = vmatpush1.bf16.msra.mxu0 %v7143
          %7540 = vmatprep.subr.bf16.mxu0 0
          %7541 = vmatpush1.bf16.msra.mxu0 %v7144
          %7542 = vmatprep.subr.bf16.mxu0 0
          %7543 = vmatpush1.bf16.msra.mxu0 %v7145
          %7544 = vmatprep.subr.bf16.mxu0 0
          %7545 = vmatpush1.bf16.msra.mxu0 %v7146
          %7546 = vmatprep.subr.bf16.mxu0 0
          %7547 = vmatpush1.bf16.msra.mxu0 %v7147
          %7548 = vmatprep.subr.bf16.mxu0 0
          %7549 = vmatpush1.bf16.msra.mxu0 %v7148
          %7550 = vmatprep.subr.bf16.mxu0 0
          %7551 = vmatpush1.bf16.msra.mxu0 %v7149
          %7552 = vmatprep.subr.bf16.mxu0 0
          %7553 = vmatpush1.bf16.msra.mxu0 %v7150
          %7554 = vmatprep.mubr.bf16.mxu0 %v6635
          %7555 = vmatmul.mubr.bf16.gmra.mrb[0].mxu0 %v6634
          %v7556 = vpop.f32.mrb[0].mxu0
          %v7557 = vadd.f32 %v7460, %v7556
          %v7558 = vpop.f32.mrb[0].mxu0
          %v7559 = vpop.f32.mrb[0].mxu0
          %v7560 = vadd.f32 %v7463, %v7559
          %v7561 = vpop.f32.mrb[0].mxu0
          %7562 = vmatprep.mubr.bf16.mxu0 %v6636
          %7563 = vmatmul.mubr.bf16.gmra.mrb[0].mxu0 %v6635
          %v7564 = vpop.f32.mrb[0].mxu0
          %v7565 = vadd.f32 %v7468, %v7564
          %v7566 = vpop.f32.mrb[0].mxu0
          %v7567 = vpop.f32.mrb[0].mxu0
          %v7568 = vadd.f32 %v7471, %v7567
          %v7569 = vpop.f32.mrb[0].mxu0
          %7570 = vmatprep.mubr.bf16.mxu0 %v6637
          %7571 = vmatmul.mubr.bf16.gmra.mrb[0].mxu0 %v6636
          %v7572 = vpop.f32.mrb[0].mxu0
          %v7573 = vadd.f32 %v7476, %v7572
          %v7574 = vpop.f32.mrb[0].mxu0
          %v7575 = vpop.f32.mrb[0].mxu0
          %v7576 = vadd.f32 %v7479, %v7575
          %v7577 = vpop.f32.mrb[0].mxu0
          %7578 = vmatprep.mubr.bf16.mxu0 %v6638
          %7579 = vmatmul.mubr.bf16.gmra.mrb[0].mxu0 %v6637
          %v7580 = vpop.f32.mrb[0].mxu0
          %v7581 = vadd.f32 %v7484, %v7580
          %v7582 = vpop.f32.mrb[0].mxu0
          %v7583 = vpop.f32.mrb[0].mxu0
          %v7584 = vadd.f32 %v7487, %v7583
          %v7585 = vpop.f32.mrb[0].mxu0
          %7586 = vmatprep.mubr.bf16.mxu0 %v6639
          %7587 = vmatmul.mubr.bf16.gmra.mrb[0].mxu0 %v6638
          %v7588 = vpop.f32.mrb[0].mxu0
          %v7589 = vadd.f32 %v7492, %v7588
          %v7590 = vpop.f32.mrb[0].mxu0
          %v7591 = vpop.f32.mrb[0].mxu0
          %v7592 = vadd.f32 %v7495, %v7591
          %v7593 = vpop.f32.mrb[0].mxu0
          %7594 = vmatprep.mubr.bf16.mxu0 %v6640
          %7595 = vmatmul.mubr.bf16.gmra.mrb[0].mxu0 %v6639
          %v7596 = vpop.f32.mrb[0].mxu0
          %v7597 = vadd.f32 %v7500, %v7596
          %v7598 = vpop.f32.mrb[0].mxu0
          %v7599 = vpop.f32.mrb[0].mxu0
          %v7600 = vadd.f32 %v7503, %v7599
          %v7601 = vpop.f32.mrb[0].mxu0
          %7602 = vmatprep.mubr.bf16.mxu0 %v6641
          %7603 = vmatmul.mubr.bf16.gmra.mrb[0].mxu0 %v6640
          %v7604 = vpop.f32.mrb[0].mxu0
          %v7605 = vadd.f32 %v7508, %v7604
          %v7606 = vpop.f32.mrb[0].mxu0
          %v7607 = vpop.f32.mrb[0].mxu0
          %v7608 = vadd.f32 %v7511, %v7607
          %v7609 = vpop.f32.mrb[0].mxu0
          %7610 = vmatprep.mubr.bf16.mxu0 %v6642
          %7611 = vmatmul.mubr.bf16.gmra.mrb[0].mxu0 %v6641
          %v7612 = vpop.f32.mrb[0].mxu0
          %v7613 = vadd.f32 %v7516, %v7612
          %v7614 = vpop.f32.mrb[0].mxu0
          %v7615 = vpop.f32.mrb[0].mxu0
          %v7616 = vadd.f32 %v7519, %v7615
          %v7617 = vpop.f32.mrb[0].mxu0
          %7618 = vdwg.mxu0
          %7619 = vmatprep.subr.bf16.mxu0 0
          %7620 = vmatpush1.bf16.msra.mxu0 %v7151
          %7621 = vmatprep.subr.bf16.mxu0 0
          %7622 = vmatpush1.bf16.msra.mxu0 %v7152
          %7623 = vmatprep.subr.bf16.mxu0 0
          %7624 = vmatpush1.bf16.msra.mxu0 %v7153
          %7625 = vmatprep.subr.bf16.mxu0 0
          %7626 = vmatpush1.bf16.msra.mxu0 %v7154
          %7627 = vmatprep.subr.bf16.mxu0 0
          %7628 = vmatpush1.bf16.msra.mxu0 %v7155
          %7629 = vmatprep.subr.bf16.mxu0 0
          %7630 = vmatpush1.bf16.msra.mxu0 %v7156
          %7631 = vmatprep.subr.bf16.mxu0 0
          %7632 = vmatpush1.bf16.msra.mxu0 %v7157
          %7633 = vmatprep.subr.bf16.mxu0 0
          %7634 = vmatpush1.bf16.msra.mxu0 %v7158
          %7635 = vmatprep.subr.bf16.mxu0 0
          %7636 = vmatpush1.bf16.msra.mxu0 0
          %7637 = vmatprep.subr.bf16.mxu0 0
          %7638 = vmatpush1.bf16.msra.mxu0 0
          %7639 = vmatprep.subr.bf16.mxu0 0
          %7640 = vmatpush1.bf16.msra.mxu0 0
          %7641 = vmatprep.subr.bf16.mxu0 0
          %7642 = vmatpush1.bf16.msra.mxu0 0
          %7643 = vmatprep.subr.bf16.mxu0 0
          %7644 = vmatpush1.bf16.msra.mxu0 0
          %7645 = vmatprep.subr.bf16.mxu0 0
          %7646 = vmatpush1.bf16.msra.mxu0 0
          %7647 = vmatprep.subr.bf16.mxu0 0
          %7648 = vmatpush1.bf16.msra.mxu0 0
          %7649 = vmatprep.subr.bf16.mxu0 0
          %7650 = vmatpush1.bf16.msra.mxu0 0
          %7651 = vmatprep.mubr.bf16.mxu0 0
          %7652 = vmatmul.mubr.bf16.gmra.mrb[0].mxu0 %v6636
          %v7653 = vpop.f32.mrb[0].mxu0
          %v7654 = vadd.f32 %v7557, %v7653
          %v7655 = vpop.f32.mrb[0].mxu0
          %v7656 = vpop.f32.mrb[0].mxu0
          %v7657 = vadd.f32 %v7560, %v7656
          %v7658 = vpop.f32.mrb[0].mxu0
          %7659 = vmatprep.mubr.bf16.mxu0 0
          %7660 = vmatmul.mubr.bf16.gmra.mrb[0].mxu0 %v6637
          %v7661 = vpop.f32.mrb[0].mxu0
          %v7662 = vadd.f32 %v7565, %v7661
          %v7663 = vpop.f32.mrb[0].mxu0
          %v7664 = vpop.f32.mrb[0].mxu0
          %v7665 = vadd.f32 %v7568, %v7664
          %v7666 = vpop.f32.mrb[0].mxu0
          %7667 = vmatprep.mubr.bf16.mxu0 0
          %7668 = vmatmul.mubr.bf16.gmra.mrb[0].mxu0 %v6638
          %v7669 = vpop.f32.mrb[0].mxu0
          %v7670 = vadd.f32 %v7573, %v7669
          %v7671 = vpop.f32.mrb[0].mxu0
          %v7672 = vpop.f32.mrb[0].mxu0
          %v7673 = vadd.f32 %v7576, %v7672
          %v7674 = vpop.f32.mrb[0].mxu0
          %7675 = vmatprep.mubr.bf16.mxu0 0
          %7676 = vmatmul.mubr.bf16.gmra.mrb[0].mxu0 %v6639
          %v7677 = vpop.f32.mrb[0].mxu0
          %v7678 = vadd.f32 %v7581, %v7677
          %v7679 = vpop.f32.mrb[0].mxu0
          %v7680 = vpop.f32.mrb[0].mxu0
          %v7681 = vadd.f32 %v7584, %v7680
          %v7682 = vpop.f32.mrb[0].mxu0
          %7683 = vmatprep.mubr.bf16.mxu0 0
          %7684 = vmatmul.mubr.bf16.gmra.mrb[0].mxu0 %v6640
          %v7685 = vpop.f32.mrb[0].mxu0
          %v7686 = vadd.f32 %v7589, %v7685
          %v7687 = vpop.f32.mrb[0].mxu0
          %v7688 = vpop.f32.mrb[0].mxu0
          %v7689 = vadd.f32 %v7592, %v7688
          %v7690 = vpop.f32.mrb[0].mxu0
          %7691 = vmatprep.mubr.bf16.mxu0 0
          %7692 = vmatmul.mubr.bf16.gmra.mrb[0].mxu0 %v6641
          %v7693 = vpop.f32.mrb[0].mxu0
          %v7694 = vadd.f32 %v7597, %v7693
          %v7695 = vpop.f32.mrb[0].mxu0
          %v7696 = vpop.f32.mrb[0].mxu0
          %v7697 = vadd.f32 %v7600, %v7696
          %v7698 = vpop.f32.mrb[0].mxu0
          %7699 = vmatprep.mubr.bf16.mxu0 0
          %7700 = vmatmul.mubr.bf16.gmra.mrb[0].mxu0 %v6642
          %v7701 = vpop.f32.mrb[0].mxu0
          %v7702 = vadd.f32 %v7605, %v7701
          %v7703 = vpop.f32.mrb[0].mxu0
          %v7704 = vpop.f32.mrb[0].mxu0
          %v7705 = vadd.f32 %v7608, %v7704
          %v7706 = vpop.f32.mrb[0].mxu0
          %7707 = vmatprep.mubr.bf16.mxu0 0
          %7708 = vmatmul.mubr.bf16.gmra.mrb[0].mxu0 %v6643
          %v7709 = vpop.f32.mrb[0].mxu0
          %v7710 = vadd.f32 %v7613, %v7709
          %v7711 = vpop.f32.mrb[0].mxu0
          %v7712 = vpop.f32.mrb[0].mxu0
          %v7713 = vadd.f32 %v7616, %v7712
          %v7714 = vpop.f32.mrb[0].mxu0
          %7715 = vdwg.mxu0
          %v7716 = vmul.f32 %v7654, 0.5
          %v7717 = vmul.f32 %v7657, 0.5
          %v7718 = vmul.f32 %v7662, 0.5
          %v7719 = vmul.f32 %v7665, 0.5
          %v7720 = vmul.f32 %v7670, 0.5
          %v7721 = vmul.f32 %v7673, 0.5
          %v7722 = vmul.f32 %v7678, 0.5
          %v7723 = vmul.f32 %v7681, 0.5
          %v7724 = vmul.f32 %v7686, 0.5
          %v7725 = vmul.f32 %v7689, 0.5
          %v7726 = vmul.f32 %v7694, 0.5
          %v7727 = vmul.f32 %v7697, 0.5
          %v7728 = vmul.f32 %v7702, 0.5
          %v7729 = vmul.f32 %v7705, 0.5
          %v7730 = vmul.f32 %v7710, 0.5
          %v7731 = vmul.f32 %v7713, 0.5
          %v7732 = vmul.f32 %v7654, 0.70710677
          %v7733 = vmul.f32 %v7657, 0.70710677
          %v7734 = vmul.f32 %v7662, 0.70710677
          %v7735 = vmul.f32 %v7665, 0.70710677
          %v7736 = vmul.f32 %v7670, 0.70710677
          %v7737 = vmul.f32 %v7673, 0.70710677
          %v7738 = vmul.f32 %v7678, 0.70710677
          %v7739 = vmul.f32 %v7681, 0.70710677
          %v7740 = vmul.f32 %v7686, 0.70710677
          %v7741 = vmul.f32 %v7689, 0.70710677
          %v7742 = vmul.f32 %v7694, 0.70710677
          %v7743 = vmul.f32 %v7697, 0.70710677
          %v7744 = vmul.f32 %v7702, 0.70710677
          %v7745 = vmul.f32 %v7705, 0.70710677
          %v7746 = vmul.f32 %v7710, 0.70710677
          %v7747 = vmul.f32 %v7713, 0.70710677
          %v7748 = verf.f32.pop %v7732
          %v7749 = verf.f32.pop %v7733
          %v7750 = verf.f32.pop %v7734
          %v7751 = verf.f32.pop %v7735
          %v7752 = verf.f32.pop %v7736
          %v7753 = verf.f32.pop %v7737
          %v7754 = verf.f32.pop %v7738
          %v7755 = verf.f32.pop %v7739
          %v7756 = verf.f32.pop %v7740
          %v7757 = verf.f32.pop %v7741
          %v7758 = verf.f32.pop %v7742
          %v7759 = verf.f32.pop %v7743
          %v7760 = verf.f32.pop %v7744
          %v7761 = verf.f32.pop %v7745
          %v7762 = verf.f32.pop %v7746
          %v7763 = verf.f32.pop %v7747
          %v7764 = vadd.f32 %v7748, 1.0
          %v7765 = vadd.f32 %v7749, 1.0
          %v7766 = vadd.f32 %v7750, 1.0
          %v7767 = vadd.f32 %v7751, 1.0
          %v7768 = vadd.f32 %v7752, 1.0
          %v7769 = vadd.f32 %v7753, 1.0
          %v7770 = vadd.f32 %v7754, 1.0
          %v7771 = vadd.f32 %v7755, 1.0
          %v7772 = vadd.f32 %v7756, 1.0
          %v7773 = vadd.f32 %v7757, 1.0
          %v7774 = vadd.f32 %v7758, 1.0
          %v7775 = vadd.f32 %v7759, 1.0
          %v7776 = vadd.f32 %v7760, 1.0
          %v7777 = vadd.f32 %v7761, 1.0
          %v7778 = vadd.f32 %v7762, 1.0
          %v7779 = vadd.f32 %v7763, 1.0
          %v7780 = vmul.f32 %v7716, %v7764
          %v7781 = vmul.f32 %v7717, %v7765
          %v7782 = vmul.f32 %v7718, %v7766
          %v7783 = vmul.f32 %v7719, %v7767
          %v7784 = vmul.f32 %v7720, %v7768
          %v7785 = vmul.f32 %v7721, %v7769
          %v7786 = vmul.f32 %v7722, %v7770
          %v7787 = vmul.f32 %v7723, %v7771
          %v7788 = vmul.f32 %v7724, %v7772
          %v7789 = vmul.f32 %v7725, %v7773
          %v7790 = vmul.f32 %v7726, %v7774
          %v7791 = vmul.f32 %v7727, %v7775
          %v7792 = vmul.f32 %v7728, %v7776
          %v7793 = vmul.f32 %v7729, %v7777
          %v7794 = vmul.f32 %v7730, %v7778
          %v7795 = vmul.f32 %v7731, %v7779
          %v7796 = vadd.f32 %v6339, %v7780
          %v7797 = vadd.f32 %v6340, %v7781
          %v7798 = vadd.f32 %v6341, %v7782
          %v7799 = vadd.f32 %v6342, %v7783
          %v7800 = vadd.f32 %v6343, %v7784
          %v7801 = vadd.f32 %v6344, %v7785
          %v7802 = vadd.f32 %v6345, %v7786
          %v7803 = vadd.f32 %v6346, %v7787
          %v7804 = vadd.f32 %v6347, %v7788
          %v7805 = vadd.f32 %v6348, %v7789
          %v7806 = vadd.f32 %v6349, %v7790
          %v7807 = vadd.f32 %v6350, %v7791
          %v7808 = vadd.f32 %v6351, %v7792
          %v7809 = vadd.f32 %v6352, %v7793
          %v7810 = vadd.f32 %v6353, %v7794
          %v7811 = vadd.f32 %v6354, %v7795
          %s7812 = sadd.s32 %s847, 4
          %7813 = vadd.xlane.f32.xlu0 %v7796
          %v7814 = vpop.xlane.xlu0 %7813
          %7815 = vadd.xlane.f32.xlu0 %v7797
          %v7816 = vpop.xlane.xlu0 %7815
          %7817 = vadd.xlane.f32.xlu0 %v7798
          %v7818 = vpop.xlane.xlu0 %7817
          %7819 = vadd.xlane.f32.xlu0 %v7799
          %v7820 = vpop.xlane.xlu0 %7819
          %7821 = vadd.xlane.f32.xlu0 %v7800
          %v7822 = vpop.xlane.xlu0 %7821
          %7823 = vadd.xlane.f32.xlu0 %v7801
          %v7824 = vpop.xlane.xlu0 %7823
          %7825 = vadd.xlane.f32.xlu0 %v7802
          %v7826 = vpop.xlane.xlu0 %7825
          %7827 = vadd.xlane.f32.xlu0 %v7803
          %v7828 = vpop.xlane.xlu0 %7827
          %7829 = vadd.xlane.f32.xlu0 %v7804
          %v7830 = vpop.xlane.xlu0 %7829
          %7831 = vadd.xlane.f32.xlu0 %v7805
          %v7832 = vpop.xlane.xlu0 %7831
          %7833 = vadd.xlane.f32.xlu0 %v7806
          %v7834 = vpop.xlane.xlu0 %7833
          %7835 = vadd.xlane.f32.xlu0 %v7807
          %v7836 = vpop.xlane.xlu0 %7835
          %7837 = vadd.xlane.f32.xlu0 %v7808
          %v7838 = vpop.xlane.xlu0 %7837
          %7839 = vadd.xlane.f32.xlu0 %v7809
          %v7840 = vpop.xlane.xlu0 %7839
          %7841 = vadd.xlane.f32.xlu0 %v7810
          %v7842 = vpop.xlane.xlu0 %7841
          %7843 = vadd.xlane.f32.xlu0 %v7811
          %v7844 = vpop.xlane.xlu0 %7843
          %v7845 = vmul.f32 %v7814, 0.0078125
          %v7846 = vmul.f32 %v7816, 0.0078125
          %v7847 = vmul.f32 %v7818, 0.0078125
          %v7848 = vmul.f32 %v7820, 0.0078125
          %v7849 = vmul.f32 %v7822, 0.0078125
          %v7850 = vmul.f32 %v7824, 0.0078125
          %v7851 = vmul.f32 %v7826, 0.0078125
          %v7852 = vmul.f32 %v7828, 0.0078125
          %v7853 = vmul.f32 %v7830, 0.0078125
          %v7854 = vmul.f32 %v7832, 0.0078125
          %v7855 = vmul.f32 %v7834, 0.0078125
          %v7856 = vmul.f32 %v7836, 0.0078125
          %v7857 = vmul.f32 %v7838, 0.0078125
          %v7858 = vmul.f32 %v7840, 0.0078125
          %v7859 = vmul.f32 %v7842, 0.0078125
          %v7860 = vmul.f32 %v7844, 0.0078125
          %v7861 = vmul.f32 %v7796, %v7796
          %v7862 = vmul.f32 %v7797, %v7797
          %v7863 = vmul.f32 %v7798, %v7798
          %v7864 = vmul.f32 %v7799, %v7799
          %v7865 = vmul.f32 %v7800, %v7800
          %v7866 = vmul.f32 %v7801, %v7801
          %v7867 = vmul.f32 %v7802, %v7802
          %v7868 = vmul.f32 %v7803, %v7803
          %v7869 = vmul.f32 %v7804, %v7804
          %v7870 = vmul.f32 %v7805, %v7805
          %v7871 = vmul.f32 %v7806, %v7806
          %v7872 = vmul.f32 %v7807, %v7807
          %v7873 = vmul.f32 %v7808, %v7808
          %v7874 = vmul.f32 %v7809, %v7809
          %v7875 = vmul.f32 %v7810, %v7810
          %v7876 = vmul.f32 %v7811, %v7811
          %7877 = vadd.xlane.f32.xlu0 %v7861
          %v7878 = vpop.xlane.xlu0 %7877
          %7879 = vadd.xlane.f32.xlu0 %v7862
          %v7880 = vpop.xlane.xlu0 %7879
          %7881 = vadd.xlane.f32.xlu0 %v7863
          %v7882 = vpop.xlane.xlu0 %7881
          %7883 = vadd.xlane.f32.xlu0 %v7864
          %v7884 = vpop.xlane.xlu0 %7883
          %7885 = vadd.xlane.f32.xlu0 %v7865
          %v7886 = vpop.xlane.xlu0 %7885
          %7887 = vadd.xlane.f32.xlu0 %v7866
          %v7888 = vpop.xlane.xlu0 %7887
          %7889 = vadd.xlane.f32.xlu0 %v7867
          %v7890 = vpop.xlane.xlu0 %7889
          %7891 = vadd.xlane.f32.xlu0 %v7868
          %v7892 = vpop.xlane.xlu0 %7891
          %7893 = vadd.xlane.f32.xlu0 %v7869
          %v7894 = vpop.xlane.xlu0 %7893
          %7895 = vadd.xlane.f32.xlu0 %v7870
          %v7896 = vpop.xlane.xlu0 %7895
          %7897 = vadd.xlane.f32.xlu0 %v7871
          %v7898 = vpop.xlane.xlu0 %7897
          %7899 = vadd.xlane.f32.xlu0 %v7872
          %v7900 = vpop.xlane.xlu0 %7899
          %7901 = vadd.xlane.f32.xlu0 %v7873
          %v7902 = vpop.xlane.xlu0 %7901
          %7903 = vadd.xlane.f32.xlu0 %v7874
          %v7904 = vpop.xlane.xlu0 %7903
          %7905 = vadd.xlane.f32.xlu0 %v7875
          %v7906 = vpop.xlane.xlu0 %7905
          %7907 = vadd.xlane.f32.xlu0 %v7876
          %v7908 = vpop.xlane.xlu0 %7907
          %v7909 = vmul.f32 %v7878, 0.0078125
          %v7910 = vmul.f32 %v7880, 0.0078125
          %v7911 = vmul.f32 %v7882, 0.0078125
          %v7912 = vmul.f32 %v7884, 0.0078125
          %v7913 = vmul.f32 %v7886, 0.0078125
          %v7914 = vmul.f32 %v7888, 0.0078125
          %v7915 = vmul.f32 %v7890, 0.0078125
          %v7916 = vmul.f32 %v7892, 0.0078125
          %v7917 = vmul.f32 %v7894, 0.0078125
          %v7918 = vmul.f32 %v7896, 0.0078125
          %v7919 = vmul.f32 %v7898, 0.0078125
          %v7920 = vmul.f32 %v7900, 0.0078125
          %v7921 = vmul.f32 %v7902, 0.0078125
          %v7922 = vmul.f32 %v7904, 0.0078125
          %v7923 = vmul.f32 %v7906, 0.0078125
          %v7924 = vmul.f32 %v7908, 0.0078125
          %v7925 = vmul.f32 %v7845, %v7845
          %v7926 = vmul.f32 %v7846, %v7846
          %v7927 = vmul.f32 %v7847, %v7847
          %v7928 = vmul.f32 %v7848, %v7848
          %v7929 = vmul.f32 %v7849, %v7849
          %v7930 = vmul.f32 %v7850, %v7850
          %v7931 = vmul.f32 %v7851, %v7851
          %v7932 = vmul.f32 %v7852, %v7852
          %v7933 = vmul.f32 %v7853, %v7853
          %v7934 = vmul.f32 %v7854, %v7854
          %v7935 = vmul.f32 %v7855, %v7855
          %v7936 = vmul.f32 %v7856, %v7856
          %v7937 = vmul.f32 %v7857, %v7857
          %v7938 = vmul.f32 %v7858, %v7858
          %v7939 = vmul.f32 %v7859, %v7859
          %v7940 = vmul.f32 %v7860, %v7860
          %v7941 = vsub.f32 %v7909, %v7925
          %v7942 = vsub.f32 %v7910, %v7926
          %v7943 = vsub.f32 %v7911, %v7927
          %v7944 = vsub.f32 %v7912, %v7928
          %v7945 = vsub.f32 %v7913, %v7929
          %v7946 = vsub.f32 %v7914, %v7930
          %v7947 = vsub.f32 %v7915, %v7931
          %v7948 = vsub.f32 %v7916, %v7932
          %v7949 = vsub.f32 %v7917, %v7933
          %v7950 = vsub.f32 %v7918, %v7934
          %v7951 = vsub.f32 %v7919, %v7935
          %v7952 = vsub.f32 %v7920, %v7936
          %v7953 = vsub.f32 %v7921, %v7937
          %v7954 = vsub.f32 %v7922, %v7938
          %v7955 = vsub.f32 %v7923, %v7939
          %v7956 = vsub.f32 %v7924, %v7940
          %v7957 = vsub.f32 %v7796, %v7845
          %v7958 = vsub.f32 %v7797, %v7846
          %v7959 = vsub.f32 %v7798, %v7847
          %v7960 = vsub.f32 %v7799, %v7848
          %v7961 = vsub.f32 %v7800, %v7849
          %v7962 = vsub.f32 %v7801, %v7850
          %v7963 = vsub.f32 %v7802, %v7851
          %v7964 = vsub.f32 %v7803, %v7852
          %v7965 = vsub.f32 %v7804, %v7853
          %v7966 = vsub.f32 %v7805, %v7854
          %v7967 = vsub.f32 %v7806, %v7855
          %v7968 = vsub.f32 %v7807, %v7856
          %v7969 = vsub.f32 %v7808, %v7857
          %v7970 = vsub.f32 %v7809, %v7858
          %v7971 = vsub.f32 %v7810, %v7859
          %v7972 = vsub.f32 %v7811, %v7860
          %v7973 = vadd.f32 %v7941, 1e-05
          %v7974 = vadd.f32 %v7942, 1e-05
          %v7975 = vadd.f32 %v7943, 1e-05
          %v7976 = vadd.f32 %v7944, 1e-05
          %v7977 = vadd.f32 %v7945, 1e-05
          %v7978 = vadd.f32 %v7946, 1e-05
          %v7979 = vadd.f32 %v7947, 1e-05
          %v7980 = vadd.f32 %v7948, 1e-05
          %v7981 = vadd.f32 %v7949, 1e-05
          %v7982 = vadd.f32 %v7950, 1e-05
          %v7983 = vadd.f32 %v7951, 1e-05
          %v7984 = vadd.f32 %v7952, 1e-05
          %v7985 = vadd.f32 %v7953, 1e-05
          %v7986 = vadd.f32 %v7954, 1e-05
          %v7987 = vadd.f32 %v7955, 1e-05
          %v7988 = vadd.f32 %v7956, 1e-05
          %v7989 = vrsqrt.pop %v7973
          %v7990 = vrsqrt.pop %v7974
          %v7991 = vrsqrt.pop %v7975
          %v7992 = vrsqrt.pop %v7976
          %v7993 = vrsqrt.pop %v7977
          %v7994 = vrsqrt.pop %v7978
          %v7995 = vrsqrt.pop %v7979
          %v7996 = vrsqrt.pop %v7980
          %v7997 = vrsqrt.pop %v7981
          %v7998 = vrsqrt.pop %v7982
          %v7999 = vrsqrt.pop %v7983
          %v8000 = vrsqrt.pop %v7984
          %v8001 = vrsqrt.pop %v7985
          %v8002 = vrsqrt.pop %v7986
          %v8003 = vrsqrt.pop %v7987
          %v8004 = vrsqrt.pop %v7988
          %v8005 = vmul.f32 %v7957, %v7989
          %v8006 = vmul.f32 %v7958, %v7990
          %v8007 = vmul.f32 %v7959, %v7991
          %v8008 = vmul.f32 %v7960, %v7992
          %v8009 = vmul.f32 %v7961, %v7993
          %v8010 = vmul.f32 %v7962, %v7994
          %v8011 = vmul.f32 %v7963, %v7995
          %v8012 = vmul.f32 %v7964, %v7996
          %v8013 = vmul.f32 %v7965, %v7997
          %v8014 = vmul.f32 %v7966, %v7998
          %v8015 = vmul.f32 %v7967, %v7999
          %v8016 = vmul.f32 %v7968, %v8000
          %v8017 = vmul.f32 %v7969, %v8001
          %v8018 = vmul.f32 %v7970, %v8002
          %v8019 = vmul.f32 %v7971, %v8003
          %v8020 = vmul.f32 %v7972, %v8004
          %s8021 = scalar_lea.vmem [#allocation9], %s7812
          %v8022 = vld [vmem:[%s8021] sm:$0x1]
          %v8024 = vlaneseq
          %v8025 = vshrl.u32 %v8024, 7
          %v8026 = vsub.s32 0, %v8025
          %v8027 = vrot.slane %v8022, %v8026
          %v8029 = vmul.f32 %v8005, %v8027
          %v8030 = vmul.f32 %v8006, %v8027
          %v8031 = vmul.f32 %v8007, %v8027
          %v8032 = vmul.f32 %v8008, %v8027
          %v8033 = vmul.f32 %v8009, %v8027
          %v8034 = vmul.f32 %v8010, %v8027
          %v8035 = vmul.f32 %v8011, %v8027
          %v8036 = vmul.f32 %v8012, %v8027
          %v8037 = vmul.f32 %v8013, %v8027
          %v8038 = vmul.f32 %v8014, %v8027
          %v8039 = vmul.f32 %v8015, %v8027
          %v8040 = vmul.f32 %v8016, %v8027
          %v8041 = vmul.f32 %v8017, %v8027
          %v8042 = vmul.f32 %v8018, %v8027
          %v8043 = vmul.f32 %v8019, %v8027
          %v8044 = vmul.f32 %v8020, %v8027
          %s8045 = scalar_lea.vmem [#allocation11], %s7812
          %v8046 = vld [vmem:[%s8045] sm:$0x1]
          %v8048 = vlaneseq
          %v8049 = vshrl.u32 %v8048, 7
          %v8050 = vsub.s32 0, %v8049
          %v8051 = vrot.slane %v8046, %v8050
          %v8053 = vadd.f32 %v8029, %v8051
          %v8054 = vadd.f32 %v8030, %v8051
          %v8055 = vadd.f32 %v8031, %v8051
          %v8056 = vadd.f32 %v8032, %v8051
          %v8057 = vadd.f32 %v8033, %v8051
          %v8058 = vadd.f32 %v8034, %v8051
          %v8059 = vadd.f32 %v8035, %v8051
          %v8060 = vadd.f32 %v8036, %v8051
          %v8061 = vadd.f32 %v8037, %v8051
          %v8062 = vadd.f32 %v8038, %v8051
          %v8063 = vadd.f32 %v8039, %v8051
          %v8064 = vadd.f32 %v8040, %v8051
          %v8065 = vadd.f32 %v8041, %v8051
          %v8066 = vadd.f32 %v8042, %v8051
          %v8067 = vadd.f32 %v8043, %v8051
          %v8068 = vadd.f32 %v8044, %v8051
          %v8069 = vpack.c.bf16 %v8054, %v8053
          %v8070 = vpack.c.bf16 %v8056, %v8055
          %v8071 = vpack.c.bf16 %v8058, %v8057
          %v8072 = vpack.c.bf16 %v8060, %v8059
          %v8073 = vpack.c.bf16 %v8062, %v8061
          %v8074 = vpack.c.bf16 %v8064, %v8063
          %v8075 = vpack.c.bf16 %v8066, %v8065
          %v8076 = vpack.c.bf16 %v8068, %v8067
          %8077 = vst [vmem:[#allocation2 + $0x80] sm:$0xff] %v8069
          %8078 = vst [vmem:[#allocation2 + $0x88] sm:$0xff] %v8070
          %8079 = vst [vmem:[#allocation2 + $0x90] sm:$0xff] %v8071
          %8080 = vst [vmem:[#allocation2 + $0x98] sm:$0xff] %v8072
          %8081 = vst [vmem:[#allocation2 + $0xa0] sm:$0xff] %v8073
          %8082 = vst [vmem:[#allocation2 + $0xa8] sm:$0xff] %v8074
          %8083 = vst [vmem:[#allocation2 + $0xb0] sm:$0xff] %v8075
          %8084 = vst [vmem:[#allocation2 + $0xb8] sm:$0xff] %v8076
          %v8085 = vld [vmem:[#allocation2] sm:$0xff]
          %v8086 = vld [vmem:[#allocation2 + $0x8] sm:$0xff]
          %v8087 = vld [vmem:[#allocation2 + $0x10] sm:$0xff]
          %v8088 = vld [vmem:[#allocation2 + $0x18] sm:$0xff]
          %v8089 = vld [vmem:[#allocation2 + $0x20] sm:$0xff]
          %v8090 = vld [vmem:[#allocation2 + $0x28] sm:$0xff]
          %v8091 = vld [vmem:[#allocation2 + $0x30] sm:$0xff]
          %v8092 = vld [vmem:[#allocation2 + $0x38] sm:$0xff]
          %v8093 = vld [vmem:[#allocation2 + $0x40] sm:$0xff]
          %v8094 = vld [vmem:[#allocation2 + $0x48] sm:$0xff]
          %v8095 = vld [vmem:[#allocation2 + $0x50] sm:$0xff]
          %v8096 = vld [vmem:[#allocation2 + $0x58] sm:$0xff]
          %v8097 = vld [vmem:[#allocation2 + $0x60] sm:$0xff]
          %v8098 = vld [vmem:[#allocation2 + $0x68] sm:$0xff]
          %v8099 = vld [vmem:[#allocation2 + $0x70] sm:$0xff]
          %v8100 = vld [vmem:[#allocation2 + $0x78] sm:$0xff]
          %v8101 = vld [vmem:[#allocation2 + $0x80] sm:$0xff]
          %v8102 = vld [vmem:[#allocation2 + $0x88] sm:$0xff]
          %v8103 = vld [vmem:[#allocation2 + $0x90] sm:$0xff]
          %v8104 = vld [vmem:[#allocation2 + $0x98] sm:$0xff]
          %v8105 = vld [vmem:[#allocation2 + $0xa0] sm:$0xff]
          %v8106 = vld [vmem:[#allocation2 + $0xa8] sm:$0xff]
          %v8107 = vld [vmem:[#allocation2 + $0xb0] sm:$0xff]
          %v8108 = vld [vmem:[#allocation2 + $0xb8] sm:$0xff]
          %v8109 = vld [vmem:[#allocation2 + $0xc0] sm:$0xff]
          %v8110 = vld [vmem:[#allocation2 + $0xc8] sm:$0xff]
          %v8111 = vld [vmem:[#allocation2 + $0xd0] sm:$0xff]
          %v8112 = vld [vmem:[#allocation2 + $0xd8] sm:$0xff]
          %v8113 = vld [vmem:[#allocation2 + $0xe0] sm:$0xff]
          %v8114 = vld [vmem:[#allocation2 + $0xe8] sm:$0xff]
          %v8115 = vld [vmem:[#allocation2 + $0xf0] sm:$0xff]
          %v8116 = vld [vmem:[#allocation2 + $0xf8] sm:$0xff]
          %v8117 = vld [vmem:[#allocation2 + $0x100] sm:$0xff]
          %v8118 = vld [vmem:[#allocation2 + $0x108] sm:$0xff]
          %v8119 = vld [vmem:[#allocation2 + $0x110] sm:$0xff]
          %v8120 = vld [vmem:[#allocation2 + $0x118] sm:$0xff]
          %v8121 = vld [vmem:[#allocation2 + $0x100] sm:$0xff]
          %v8122 = vld [vmem:[#allocation2 + $0x108] sm:$0xff]
          %v8123 = vld [vmem:[#allocation2 + $0x110] sm:$0xff]
          %v8124 = vld [vmem:[#allocation2 + $0x118] sm:$0xff]
          %v8125 = vld [vmem:[#allocation2 + $0x120] sm:$0xff]
          %v8126 = vld [vmem:[#allocation2 + $0x128] sm:$0xff]
          %v8127 = vld [vmem:[#allocation2 + $0x130] sm:$0xff]
          %v8128 = vld [vmem:[#allocation2 + $0x138] sm:$0xff]
          %s8129 = smul.u32 %s7812, 144
          %s8130 = smul.addr %s8129, 4
          %s8131 = scalar_lea.vmem [#allocation12], %s8130
          %v8132 = vld [vmem:[%s8131] sm:$0xf]
          %v8133 = vld [vmem:[%s8131 + $0x4] sm:$0xf]
          %v8134 = vld [vmem:[%s8131 + $0x8] sm:$0xf]
          %v8135 = vld [vmem:[%s8131 + $0xc] sm:$0xf]
          %v8136 = vld [vmem:[%s8131 + $0x10] sm:$0xf]
          %v8137 = vld [vmem:[%s8131 + $0x14] sm:$0xf]
          %v8138 = vld [vmem:[%s8131 + $0x18] sm:$0xf]
          %v8139 = vld [vmem:[%s8131 + $0x1c] sm:$0xf]
          %v8140 = vld [vmem:[%s8131 + $0x20] sm:$0xf]
          %v8141 = vld [vmem:[%s8131 + $0x24] sm:$0xf]
          %v8142 = vld [vmem:[%s8131 + $0x28] sm:$0xf]
          %v8143 = vld [vmem:[%s8131 + $0x2c] sm:$0xf]
          %v8144 = vld [vmem:[%s8131 + $0x30] sm:$0xf]
          %v8145 = vld [vmem:[%s8131 + $0x34] sm:$0xf]
          %v8146 = vld [vmem:[%s8131 + $0x38] sm:$0xf]
          %v8147 = vld [vmem:[%s8131 + $0x3c] sm:$0xf]
          %v8148 = vld [vmem:[%s8131 + $0x40] sm:$0xf]
          %v8149 = vld [vmem:[%s8131 + $0x44] sm:$0xf]
          %v8150 = vld [vmem:[%s8131 + $0x48] sm:$0xf]
          %v8151 = vld [vmem:[%s8131 + $0x4c] sm:$0xf]
          %v8152 = vld [vmem:[%s8131 + $0x50] sm:$0xf]
          %v8153 = vld [vmem:[%s8131 + $0x54] sm:$0xf]
          %v8154 = vld [vmem:[%s8131 + $0x58] sm:$0xf]
          %v8155 = vld [vmem:[%s8131 + $0x5c] sm:$0xf]
          %v8156 = vld [vmem:[%s8131 + $0x60] sm:$0xf]
          %v8157 = vld [vmem:[%s8131 + $0x64] sm:$0xf]
          %v8158 = vld [vmem:[%s8131 + $0x68] sm:$0xf]
          %v8159 = vld [vmem:[%s8131 + $0x6c] sm:$0xf]
          %v8160 = vld [vmem:[%s8131 + $0x70] sm:$0xf]
          %v8161 = vld [vmem:[%s8131 + $0x74] sm:$0xf]
          %v8162 = vld [vmem:[%s8131 + $0x78] sm:$0xf]
          %v8163 = vld [vmem:[%s8131 + $0x7c] sm:$0xf]
          %v8164 = vld [vmem:[%s8131 + $0x80] sm:$0xf]
          %v8165 = vld [vmem:[%s8131 + $0x84] sm:$0xf]
          %v8166 = vld [vmem:[%s8131 + $0x88] sm:$0xf]
          %v8167 = vld [vmem:[%s8131 + $0x8c] sm:$0xf]
          %v8168 = vld [vmem:[%s8131 + $0x90] sm:$0xf]
          %v8169 = vld [vmem:[%s8131 + $0x94] sm:$0xf]
          %v8170 = vld [vmem:[%s8131 + $0x98] sm:$0xf]
          %v8171 = vld [vmem:[%s8131 + $0x9c] sm:$0xf]
          %v8172 = vld [vmem:[%s8131 + $0xa0] sm:$0xf]
          %v8173 = vld [vmem:[%s8131 + $0xa4] sm:$0xf]
          %v8174 = vld [vmem:[%s8131 + $0xa8] sm:$0xf]
          %v8175 = vld [vmem:[%s8131 + $0xac] sm:$0xf]
          %v8176 = vld [vmem:[%s8131 + $0xb0] sm:$0xf]
          %v8177 = vld [vmem:[%s8131 + $0xb4] sm:$0xf]
          %v8178 = vld [vmem:[%s8131 + $0xb8] sm:$0xf]
          %v8179 = vld [vmem:[%s8131 + $0xbc] sm:$0xf]
          %v8180 = vld [vmem:[%s8131 + $0xc0] sm:$0xf]
          %v8181 = vld [vmem:[%s8131 + $0xc4] sm:$0xf]
          %v8182 = vld [vmem:[%s8131 + $0xc8] sm:$0xf]
          %v8183 = vld [vmem:[%s8131 + $0xcc] sm:$0xf]
          %v8184 = vld [vmem:[%s8131 + $0xd0] sm:$0xf]
          %v8185 = vld [vmem:[%s8131 + $0xd4] sm:$0xf]
          %v8186 = vld [vmem:[%s8131 + $0xd8] sm:$0xf]
          %v8187 = vld [vmem:[%s8131 + $0xdc] sm:$0xf]
          %v8188 = vld [vmem:[%s8131 + $0xe0] sm:$0xf]
          %v8189 = vld [vmem:[%s8131 + $0xe4] sm:$0xf]
          %v8190 = vld [vmem:[%s8131 + $0xe8] sm:$0xf]
          %v8191 = vld [vmem:[%s8131 + $0xec] sm:$0xf]
          %v8192 = vld [vmem:[%s8131 + $0xf0] sm:$0xf]
          %v8193 = vld [vmem:[%s8131 + $0xf4] sm:$0xf]
          %v8194 = vld [vmem:[%s8131 + $0xf8] sm:$0xf]
          %v8195 = vld [vmem:[%s8131 + $0xfc] sm:$0xf]
          %v8196 = vld [vmem:[%s8131 + $0x100] sm:$0xf]
          %v8197 = vld [vmem:[%s8131 + $0x104] sm:$0xf]
          %v8198 = vld [vmem:[%s8131 + $0x108] sm:$0xf]
          %v8199 = vld [vmem:[%s8131 + $0x10c] sm:$0xf]
          %v8200 = vld [vmem:[%s8131 + $0x110] sm:$0xf]
          %v8201 = vld [vmem:[%s8131 + $0x114] sm:$0xf]
          %v8202 = vld [vmem:[%s8131 + $0x118] sm:$0xf]
          %v8203 = vld [vmem:[%s8131 + $0x11c] sm:$0xf]
          %v8204 = vld [vmem:[%s8131 + $0x120] sm:$0xf]
          %v8205 = vld [vmem:[%s8131 + $0x124] sm:$0xf]
          %v8206 = vld [vmem:[%s8131 + $0x128] sm:$0xf]
          %v8207 = vld [vmem:[%s8131 + $0x12c] sm:$0xf]
          %v8208 = vld [vmem:[%s8131 + $0x130] sm:$0xf]
          %v8209 = vld [vmem:[%s8131 + $0x134] sm:$0xf]
          %v8210 = vld [vmem:[%s8131 + $0x138] sm:$0xf]
          %v8211 = vld [vmem:[%s8131 + $0x13c] sm:$0xf]
          %v8212 = vld [vmem:[%s8131 + $0x140] sm:$0xf]
          %v8213 = vld [vmem:[%s8131 + $0x144] sm:$0xf]
          %v8214 = vld [vmem:[%s8131 + $0x148] sm:$0xf]
          %v8215 = vld [vmem:[%s8131 + $0x14c] sm:$0xf]
          %v8216 = vld [vmem:[%s8131 + $0x150] sm:$0xf]
          %v8217 = vld [vmem:[%s8131 + $0x154] sm:$0xf]
          %v8218 = vld [vmem:[%s8131 + $0x158] sm:$0xf]
          %v8219 = vld [vmem:[%s8131 + $0x15c] sm:$0xf]
          %v8220 = vld [vmem:[%s8131 + $0x160] sm:$0xf]
          %v8221 = vld [vmem:[%s8131 + $0x164] sm:$0xf]
          %v8222 = vld [vmem:[%s8131 + $0x168] sm:$0xf]
          %v8223 = vld [vmem:[%s8131 + $0x16c] sm:$0xf]
          %v8224 = vld [vmem:[%s8131 + $0x170] sm:$0xf]
          %v8225 = vld [vmem:[%s8131 + $0x174] sm:$0xf]
          %v8226 = vld [vmem:[%s8131 + $0x178] sm:$0xf]
          %v8227 = vld [vmem:[%s8131 + $0x17c] sm:$0xf]
          %v8228 = vld [vmem:[%s8131 + $0x180] sm:$0xf]
          %v8229 = vld [vmem:[%s8131 + $0x184] sm:$0xf]
          %v8230 = vld [vmem:[%s8131 + $0x188] sm:$0xf]
          %v8231 = vld [vmem:[%s8131 + $0x18c] sm:$0xf]
          %v8232 = vld [vmem:[%s8131 + $0x190] sm:$0xf]
          %v8233 = vld [vmem:[%s8131 + $0x194] sm:$0xf]
          %v8234 = vld [vmem:[%s8131 + $0x198] sm:$0xf]
          %v8235 = vld [vmem:[%s8131 + $0x19c] sm:$0xf]
          %v8236 = vld [vmem:[%s8131 + $0x1a0] sm:$0xf]
          %v8237 = vld [vmem:[%s8131 + $0x1a4] sm:$0xf]
          %v8238 = vld [vmem:[%s8131 + $0x1a8] sm:$0xf]
          %v8239 = vld [vmem:[%s8131 + $0x1ac] sm:$0xf]
          %v8240 = vld [vmem:[%s8131 + $0x1b0] sm:$0xf]
          %v8241 = vld [vmem:[%s8131 + $0x1b4] sm:$0xf]
          %v8242 = vld [vmem:[%s8131 + $0x1b8] sm:$0xf]
          %v8243 = vld [vmem:[%s8131 + $0x1bc] sm:$0xf]
          %v8244 = vld [vmem:[%s8131 + $0x1c0] sm:$0xf]
          %v8245 = vld [vmem:[%s8131 + $0x1c4] sm:$0xf]
          %v8246 = vld [vmem:[%s8131 + $0x1c8] sm:$0xf]
          %v8247 = vld [vmem:[%s8131 + $0x1cc] sm:$0xf]
          %v8248 = vld [vmem:[%s8131 + $0x1d0] sm:$0xf]
          %v8249 = vld [vmem:[%s8131 + $0x1d4] sm:$0xf]
          %v8250 = vld [vmem:[%s8131 + $0x1d8] sm:$0xf]
          %v8251 = vld [vmem:[%s8131 + $0x1dc] sm:$0xf]
          %v8252 = vld [vmem:[%s8131 + $0x1e0] sm:$0xf]
          %v8253 = vld [vmem:[%s8131 + $0x1e4] sm:$0xf]
          %v8254 = vld [vmem:[%s8131 + $0x1e8] sm:$0xf]
          %v8255 = vld [vmem:[%s8131 + $0x1ec] sm:$0xf]
          %v8256 = vld [vmem:[%s8131 + $0x1f0] sm:$0xf]
          %v8257 = vld [vmem:[%s8131 + $0x1f4] sm:$0xf]
          %v8258 = vld [vmem:[%s8131 + $0x1f8] sm:$0xf]
          %v8259 = vld [vmem:[%s8131 + $0x1fc] sm:$0xf]
          %v8260 = vld [vmem:[%s8131 + $0x200] sm:$0xf]
          %v8261 = vld [vmem:[%s8131 + $0x204] sm:$0xf]
          %v8262 = vld [vmem:[%s8131 + $0x208] sm:$0xf]
          %v8263 = vld [vmem:[%s8131 + $0x20c] sm:$0xf]
          %v8264 = vld [vmem:[%s8131 + $0x210] sm:$0xf]
          %v8265 = vld [vmem:[%s8131 + $0x214] sm:$0xf]
          %v8266 = vld [vmem:[%s8131 + $0x218] sm:$0xf]
          %v8267 = vld [vmem:[%s8131 + $0x21c] sm:$0xf]
          %v8268 = vld [vmem:[%s8131 + $0x220] sm:$0xf]
          %v8269 = vld [vmem:[%s8131 + $0x224] sm:$0xf]
          %v8270 = vld [vmem:[%s8131 + $0x228] sm:$0xf]
          %v8271 = vld [vmem:[%s8131 + $0x22c] sm:$0xf]
          %v8272 = vld [vmem:[%s8131 + $0x230] sm:$0xf]
          %v8273 = vld [vmem:[%s8131 + $0x234] sm:$0xf]
          %v8274 = vld [vmem:[%s8131 + $0x238] sm:$0xf]
          %v8275 = vld [vmem:[%s8131 + $0x23c] sm:$0xf]
          %s8276 = scalar_lea.vmem [#allocation14], %s7812
          %v8277 = vld [vmem:[%s8276] sm:$0x1]
          %v8279 = vlaneseq
          %v8280 = vshrl.u32 %v8279, 7
          %v8281 = vsub.s32 0, %v8280
          %v8282 = vrot.slane %v8277, %v8281
          %v8428 = vunpack.c.l.b16 %v8132
          %v8429 = vunpack.c.l.b16 %v8133
          %v8430 = vunpack.c.l.b16 %v8134
          %v8431 = vunpack.c.l.b16 %v8135
          %v8432 = vunpack.c.l.b16 %v8136
          %v8433 = vunpack.c.l.b16 %v8137
          %v8434 = vunpack.c.l.b16 %v8138
          %v8435 = vunpack.c.l.b16 %v8139
          %v8436 = vunpack.c.l.b16 %v8140
          %v8437 = vunpack.c.l.b16 %v8141
          %v8438 = vunpack.c.l.b16 %v8142
          %v8439 = vunpack.c.l.b16 %v8143
          %v8440 = vunpack.c.l.b16 %v8144
          %v8441 = vunpack.c.l.b16 %v8145
          %v8442 = vunpack.c.l.b16 %v8146
          %v8443 = vunpack.c.l.b16 %v8147
          %v8444 = vunpack.c.l.b16 %v8148
          %v8445 = vunpack.c.l.b16 %v8149
          %v8446 = vunpack.c.l.b16 %v8150
          %v8447 = vunpack.c.l.b16 %v8151
          %v8448 = vunpack.c.l.b16 %v8152
          %v8449 = vunpack.c.l.b16 %v8153
          %v8450 = vunpack.c.l.b16 %v8154
          %v8451 = vunpack.c.l.b16 %v8155
          %v8452 = vunpack.c.l.b16 %v8156
          %v8453 = vunpack.c.l.b16 %v8157
          %v8454 = vunpack.c.l.b16 %v8158
          %v8455 = vunpack.c.l.b16 %v8159
          %v8456 = vunpack.c.l.b16 %v8160
          %v8457 = vunpack.c.l.b16 %v8161
          %v8458 = vunpack.c.l.b16 %v8162
          %v8459 = vunpack.c.l.b16 %v8163
          %v8460 = vunpack.c.l.b16 %v8164
          %v8461 = vunpack.c.l.b16 %v8165
          %v8462 = vunpack.c.l.b16 %v8166
          %v8463 = vunpack.c.l.b16 %v8167
          %v8464 = vunpack.c.l.b16 %v8168
          %v8465 = vunpack.c.l.b16 %v8169
          %v8466 = vunpack.c.l.b16 %v8170
          %v8467 = vunpack.c.l.b16 %v8171
          %v8468 = vunpack.c.l.b16 %v8172
          %v8469 = vunpack.c.l.b16 %v8173
          %v8470 = vunpack.c.l.b16 %v8174
          %v8471 = vunpack.c.l.b16 %v8175
          %v8472 = vunpack.c.l.b16 %v8176
          %v8473 = vunpack.c.l.b16 %v8177
          %v8474 = vunpack.c.l.b16 %v8178
          %v8475 = vunpack.c.l.b16 %v8179
          %v8476 = vunpack.c.l.b16 %v8180
          %v8477 = vunpack.c.l.b16 %v8181
          %v8478 = vunpack.c.l.b16 %v8182
          %v8479 = vunpack.c.l.b16 %v8183
          %v8480 = vunpack.c.l.b16 %v8184
          %v8481 = vunpack.c.l.b16 %v8185
          %v8482 = vunpack.c.l.b16 %v8186
          %v8483 = vunpack.c.l.b16 %v8187
          %v8484 = vunpack.c.l.b16 %v8188
          %v8485 = vunpack.c.l.b16 %v8189
          %v8486 = vunpack.c.l.b16 %v8190
          %v8487 = vunpack.c.l.b16 %v8191
          %v8488 = vunpack.c.l.b16 %v8192
          %v8489 = vunpack.c.l.b16 %v8193
          %v8490 = vunpack.c.l.b16 %v8194
          %v8491 = vunpack.c.l.b16 %v8195
          %v8492 = vunpack.c.l.b16 %v8196
          %v8493 = vunpack.c.l.b16 %v8197
          %v8494 = vunpack.c.l.b16 %v8198
          %v8495 = vunpack.c.l.b16 %v8199
          %v8496 = vunpack.c.l.b16 %v8200
          %v8497 = vunpack.c.l.b16 %v8201
          %v8498 = vunpack.c.l.b16 %v8202
          %v8499 = vunpack.c.l.b16 %v8203
          %v8500 = vunpack.c.l.b16 %v8204
          %v8501 = vunpack.c.l.b16 %v8205
          %v8502 = vunpack.c.l.b16 %v8206
          %v8503 = vunpack.c.l.b16 %v8207
          %v8504 = vunpack.c.l.b16 %v8208
          %v8505 = vunpack.c.l.b16 %v8209
          %v8506 = vunpack.c.l.b16 %v8210
          %v8507 = vunpack.c.l.b16 %v8211
          %v8508 = vunpack.c.l.b16 %v8212
          %v8509 = vunpack.c.l.b16 %v8213
          %v8510 = vunpack.c.l.b16 %v8214
          %v8511 = vunpack.c.l.b16 %v8215
          %v8512 = vunpack.c.l.b16 %v8216
          %v8513 = vunpack.c.l.b16 %v8217
          %v8514 = vunpack.c.l.b16 %v8218
          %v8515 = vunpack.c.l.b16 %v8219
          %v8516 = vunpack.c.l.b16 %v8220
          %v8517 = vunpack.c.l.b16 %v8221
          %v8518 = vunpack.c.l.b16 %v8222
          %v8519 = vunpack.c.l.b16 %v8223
          %v8520 = vunpack.c.l.b16 %v8224
          %v8521 = vunpack.c.l.b16 %v8225
          %v8522 = vunpack.c.l.b16 %v8226
          %v8523 = vunpack.c.l.b16 %v8227
          %v8524 = vunpack.c.l.b16 %v8228
          %v8525 = vunpack.c.l.b16 %v8229
          %v8526 = vunpack.c.l.b16 %v8230
          %v8527 = vunpack.c.l.b16 %v8231
          %v8528 = vunpack.c.l.b16 %v8232
          %v8529 = vunpack.c.l.b16 %v8233
          %v8530 = vunpack.c.l.b16 %v8234
          %v8531 = vunpack.c.l.b16 %v8235
          %v8532 = vunpack.c.l.b16 %v8236
          %v8533 = vunpack.c.l.b16 %v8237
          %v8534 = vunpack.c.l.b16 %v8238
          %v8535 = vunpack.c.l.b16 %v8239
          %v8536 = vunpack.c.l.b16 %v8240
          %v8537 = vunpack.c.l.b16 %v8241
          %v8538 = vunpack.c.l.b16 %v8242
          %v8539 = vunpack.c.l.b16 %v8243
          %v8540 = vunpack.c.l.b16 %v8244
          %v8541 = vunpack.c.l.b16 %v8245
          %v8542 = vunpack.c.l.b16 %v8246
          %v8543 = vunpack.c.l.b16 %v8247
          %v8544 = vunpack.c.l.b16 %v8248
          %v8545 = vunpack.c.l.b16 %v8249
          %v8546 = vunpack.c.l.b16 %v8250
          %v8547 = vunpack.c.l.b16 %v8251
          %v8548 = vunpack.c.l.b16 %v8252
          %v8549 = vunpack.c.l.b16 %v8253
          %v8550 = vunpack.c.l.b16 %v8254
          %v8551 = vunpack.c.l.b16 %v8255
          %v8552 = vunpack.c.l.b16 %v8256
          %v8553 = vunpack.c.l.b16 %v8257
          %v8554 = vunpack.c.l.b16 %v8258
          %v8555 = vunpack.c.l.b16 %v8259
          %v8556 = vunpack.c.l.b16 %v8260
          %v8557 = vunpack.c.l.b16 %v8261
          %v8558 = vunpack.c.l.b16 %v8262
          %v8559 = vunpack.c.l.b16 %v8263
          %v8560 = vunpack.c.l.b16 %v8264
          %v8561 = vunpack.c.l.b16 %v8265
          %v8562 = vunpack.c.l.b16 %v8266
          %v8563 = vunpack.c.l.b16 %v8267
          %v8564 = vunpack.c.l.b16 %v8268
          %v8565 = vunpack.c.l.b16 %v8269
          %v8566 = vunpack.c.l.b16 %v8270
          %v8567 = vunpack.c.l.b16 %v8271
          %v8568 = vunpack.c.l.b16 %v8272
          %v8569 = vunpack.c.l.b16 %v8273
          %v8570 = vunpack.c.l.b16 %v8274
          %v8571 = vunpack.c.l.b16 %v8275
          %v8572 = vpack.c.b16 %v8429, %v8428
          %v8573 = vpack.c.b16 %v8431, %v8430
          %v8574 = vpack.c.b16 %v8433, %v8432
          %v8575 = vpack.c.b16 %v8435, %v8434
          %v8576 = vpack.c.b16 %v8437, %v8436
          %v8577 = vpack.c.b16 %v8439, %v8438
          %v8578 = vpack.c.b16 %v8441, %v8440
          %v8579 = vpack.c.b16 %v8443, %v8442
          %v8580 = vpack.c.b16 %v8445, %v8444
          %v8581 = vpack.c.b16 %v8447, %v8446
          %v8582 = vpack.c.b16 %v8449, %v8448
          %v8583 = vpack.c.b16 %v8451, %v8450
          %v8584 = vpack.c.b16 %v8453, %v8452
          %v8585 = vpack.c.b16 %v8455, %v8454
          %v8586 = vpack.c.b16 %v8457, %v8456
          %v8587 = vpack.c.b16 %v8459, %v8458
          %v8588 = vpack.c.b16 %v8461, %v8460
          %v8589 = vpack.c.b16 %v8463, %v8462
          %v8590 = vpack.c.b16 %v8465, %v8464
          %v8591 = vpack.c.b16 %v8467, %v8466
          %v8592 = vpack.c.b16 %v8469, %v8468
          %v8593 = vpack.c.b16 %v8471, %v8470
          %v8594 = vpack.c.b16 %v8473, %v8472
          %v8595 = vpack.c.b16 %v8475, %v8474
          %v8596 = vpack.c.b16 %v8477, %v8476
          %v8597 = vpack.c.b16 %v8479, %v8478
          %v8598 = vpack.c.b16 %v8481, %v8480
          %v8599 = vpack.c.b16 %v8483, %v8482
          %v8600 = vpack.c.b16 %v8485, %v8484
          %v8601 = vpack.c.b16 %v8487, %v8486
          %v8602 = vpack.c.b16 %v8489, %v8488
          %v8603 = vpack.c.b16 %v8491, %v8490
          %v8604 = vpack.c.b16 %v8493, %v8492
          %v8605 = vpack.c.b16 %v8495, %v8494
          %v8606 = vpack.c.b16 %v8497, %v8496
          %v8607 = vpack.c.b16 %v8499, %v8498
          %v8608 = vpack.c.b16 %v8501, %v8500
          %v8609 = vpack.c.b16 %v8503, %v8502
          %v8610 = vpack.c.b16 %v8505, %v8504
          %v8611 = vpack.c.b16 %v8507, %v8506
          %v8612 = vpack.c.b16 %v8509, %v8508
          %v8613 = vpack.c.b16 %v8511, %v8510
          %v8614 = vpack.c.b16 %v8513, %v8512
          %v8615 = vpack.c.b16 %v8515, %v8514
          %v8616 = vpack.c.b16 %v8517, %v8516
          %v8617 = vpack.c.b16 %v8519, %v8518
          %v8618 = vpack.c.b16 %v8521, %v8520
          %v8619 = vpack.c.b16 %v8523, %v8522
          %v8620 = vpack.c.b16 %v8525, %v8524
          %v8621 = vpack.c.b16 %v8527, %v8526
          %v8622 = vpack.c.b16 %v8529, %v8528
          %v8623 = vpack.c.b16 %v8531, %v8530
          %v8624 = vpack.c.b16 %v8533, %v8532
          %v8625 = vpack.c.b16 %v8535, %v8534
          %v8626 = vpack.c.b16 %v8537, %v8536
          %v8627 = vpack.c.b16 %v8539, %v8538
          %v8628 = vpack.c.b16 %v8541, %v8540
          %v8629 = vpack.c.b16 %v8543, %v8542
          %v8630 = vpack.c.b16 %v8545, %v8544
          %v8631 = vpack.c.b16 %v8547, %v8546
          %v8632 = vpack.c.b16 %v8549, %v8548
          %v8633 = vpack.c.b16 %v8551, %v8550
          %v8634 = vpack.c.b16 %v8553, %v8552
          %v8635 = vpack.c.b16 %v8555, %v8554
          %v8636 = vpack.c.b16 %v8557, %v8556
          %v8637 = vpack.c.b16 %v8559, %v8558
          %v8638 = vpack.c.b16 %v8561, %v8560
          %v8639 = vpack.c.b16 %v8563, %v8562
          %v8640 = vpack.c.b16 %v8565, %v8564
          %v8641 = vpack.c.b16 %v8567, %v8566
          %v8642 = vpack.c.b16 %v8569, %v8568
          %v8643 = vpack.c.b16 %v8571, %v8570
          %8716 = vmatprep.subr.bf16.mxu0 0
          %8717 = vmatpush1.bf16.msra.mxu0 %v8572
          %8718 = vmatprep.subr.bf16.mxu0 0
          %8719 = vmatpush1.bf16.msra.mxu0 %v8573
          %8720 = vmatprep.subr.bf16.mxu0 0
          %8721 = vmatpush1.bf16.msra.mxu0 %v8574
          %8722 = vmatprep.subr.bf16.mxu0 0
          %8723 = vmatpush1.bf16.msra.mxu0 %v8575
          %8724 = vmatprep.subr.bf16.mxu0 0
          %8725 = vmatpush1.bf16.msra.mxu0 %v8576
          %8726 = vmatprep.subr.bf16.mxu0 0
          %8727 = vmatpush1.bf16.msra.mxu0 %v8577
          %8728 = vmatprep.subr.bf16.mxu0 0
          %8729 = vmatpush1.bf16.msra.mxu0 %v8578
          %8730 = vmatprep.subr.bf16.mxu0 0
          %8731 = vmatpush1.bf16.msra.mxu0 %v8579
          %8732 = vmatprep.subr.bf16.mxu0 0
          %8733 = vmatpush1.bf16.msra.mxu0 %v8580
          %8734 = vmatprep.subr.bf16.mxu0 0
          %8735 = vmatpush1.bf16.msra.mxu0 %v8581
          %8736 = vmatprep.subr.bf16.mxu0 0
          %8737 = vmatpush1.bf16.msra.mxu0 %v8582
          %8738 = vmatprep.subr.bf16.mxu0 0
          %8739 = vmatpush1.bf16.msra.mxu0 %v8583
          %8740 = vmatprep.subr.bf16.mxu0 0
          %8741 = vmatpush1.bf16.msra.mxu0 %v8584
          %8742 = vmatprep.subr.bf16.mxu0 0
          %8743 = vmatpush1.bf16.msra.mxu0 %v8585
          %8744 = vmatprep.subr.bf16.mxu0 0
          %8745 = vmatpush1.bf16.msra.mxu0 %v8586
          %8746 = vmatprep.subr.bf16.mxu0 0
          %8747 = vmatpush1.bf16.msra.mxu0 %v8587
          %8748 = vmatprep.mubr.bf16.mxu0 %v8089
          %8749 = vmatmul.mubr.bf16.gmra.mrb[0].mxu0 %v8085
          %v8750 = vpop.f32.mrb[0].mxu0
          %v8751 = vadd.f32 %v8282, %v8750
          %v8752 = vpop.f32.mrb[0].mxu0
          %v8753 = vpop.f32.mrb[0].mxu0
          %v8754 = vadd.f32 %v8282, %v8753
          %v8755 = vpop.f32.mrb[0].mxu0
          %8756 = vmatprep.mubr.bf16.mxu0 %v8090
          %8757 = vmatmul.mubr.bf16.gmra.mrb[0].mxu0 %v8086
          %v8758 = vpop.f32.mrb[0].mxu0
          %v8759 = vadd.f32 %v8282, %v8758
          %v8760 = vpop.f32.mrb[0].mxu0
          %v8761 = vpop.f32.mrb[0].mxu0
          %v8762 = vadd.f32 %v8282, %v8761
          %v8763 = vpop.f32.mrb[0].mxu0
          %8764 = vmatprep.mubr.bf16.mxu0 %v8091
          %8765 = vmatmul.mubr.bf16.gmra.mrb[0].mxu0 %v8087
          %v8766 = vpop.f32.mrb[0].mxu0
          %v8767 = vadd.f32 %v8282, %v8766
          %v8768 = vpop.f32.mrb[0].mxu0
          %v8769 = vpop.f32.mrb[0].mxu0
          %v8770 = vadd.f32 %v8282, %v8769
          %v8771 = vpop.f32.mrb[0].mxu0
          %8772 = vmatprep.mubr.bf16.mxu0 %v8092
          %8773 = vmatmul.mubr.bf16.gmra.mrb[0].mxu0 %v8088
          %v8774 = vpop.f32.mrb[0].mxu0
          %v8775 = vadd.f32 %v8282, %v8774
          %v8776 = vpop.f32.mrb[0].mxu0
          %v8777 = vpop.f32.mrb[0].mxu0
          %v8778 = vadd.f32 %v8282, %v8777
          %v8779 = vpop.f32.mrb[0].mxu0
          %8780 = vmatprep.mubr.bf16.mxu0 %v8093
          %8781 = vmatmul.mubr.bf16.gmra.mrb[0].mxu0 %v8089
          %v8782 = vpop.f32.mrb[0].mxu0
          %v8783 = vadd.f32 %v8282, %v8782
          %v8784 = vpop.f32.mrb[0].mxu0
          %v8785 = vpop.f32.mrb[0].mxu0
          %v8786 = vadd.f32 %v8282, %v8785
          %v8787 = vpop.f32.mrb[0].mxu0
          %8788 = vmatprep.mubr.bf16.mxu0 %v8094
          %8789 = vmatmul.mubr.bf16.gmra.mrb[0].mxu0 %v8090
          %v8790 = vpop.f32.mrb[0].mxu0
          %v8791 = vadd.f32 %v8282, %v8790
          %v8792 = vpop.f32.mrb[0].mxu0
          %v8793 = vpop.f32.mrb[0].mxu0
          %v8794 = vadd.f32 %v8282, %v8793
          %v8795 = vpop.f32.mrb[0].mxu0
          %8796 = vmatprep.mubr.bf16.mxu0 %v8095
          %8797 = vmatmul.mubr.bf16.gmra.mrb[0].mxu0 %v8091
          %v8798 = vpop.f32.mrb[0].mxu0
          %v8799 = vadd.f32 %v8282, %v8798
          %v8800 = vpop.f32.mrb[0].mxu0
          %v8801 = vpop.f32.mrb[0].mxu0
          %v8802 = vadd.f32 %v8282, %v8801
          %v8803 = vpop.f32.mrb[0].mxu0
          %8804 = vmatprep.mubr.bf16.mxu0 %v8096
          %8805 = vmatmul.mubr.bf16.gmra.mrb[0].mxu0 %v8092
          %v8806 = vpop.f32.mrb[0].mxu0
          %v8807 = vadd.f32 %v8282, %v8806
          %v8808 = vpop.f32.mrb[0].mxu0
          %v8809 = vpop.f32.mrb[0].mxu0
          %v8810 = vadd.f32 %v8282, %v8809
          %v8811 = vpop.f32.mrb[0].mxu0
          %8812 = vdwg.mxu0
          %8813 = vmatprep.subr.bf16.mxu0 0
          %8814 = vmatpush1.bf16.msra.mxu0 %v8588
          %8815 = vmatprep.subr.bf16.mxu0 0
          %8816 = vmatpush1.bf16.msra.mxu0 %v8589
          %8817 = vmatprep.subr.bf16.mxu0 0
          %8818 = vmatpush1.bf16.msra.mxu0 %v8590
          %8819 = vmatprep.subr.bf16.mxu0 0
          %8820 = vmatpush1.bf16.msra.mxu0 %v8591
          %8821 = vmatprep.subr.bf16.mxu0 0
          %8822 = vmatpush1.bf16.msra.mxu0 %v8592
          %8823 = vmatprep.subr.bf16.mxu0 0
          %8824 = vmatpush1.bf16.msra.mxu0 %v8593
          %8825 = vmatprep.subr.bf16.mxu0 0
          %8826 = vmatpush1.bf16.msra.mxu0 %v8594
          %8827 = vmatprep.subr.bf16.mxu0 0
          %8828 = vmatpush1.bf16.msra.mxu0 %v8595
          %8829 = vmatprep.subr.bf16.mxu0 0
          %8830 = vmatpush1.bf16.msra.mxu0 %v8596
          %8831 = vmatprep.subr.bf16.mxu0 0
          %8832 = vmatpush1.bf16.msra.mxu0 %v8597
          %8833 = vmatprep.subr.bf16.mxu0 0
          %8834 = vmatpush1.bf16.msra.mxu0 %v8598
          %8835 = vmatprep.subr.bf16.mxu0 0
          %8836 = vmatpush1.bf16.msra.mxu0 %v8599
          %8837 = vmatprep.subr.bf16.mxu0 0
          %8838 = vmatpush1.bf16.msra.mxu0 %v8600
          %8839 = vmatprep.subr.bf16.mxu0 0
          %8840 = vmatpush1.bf16.msra.mxu0 %v8601
          %8841 = vmatprep.subr.bf16.mxu0 0
          %8842 = vmatpush1.bf16.msra.mxu0 %v8602
          %8843 = vmatprep.subr.bf16.mxu0 0
          %8844 = vmatpush1.bf16.msra.mxu0 %v8603
          %8845 = vmatprep.mubr.bf16.mxu0 %v8097
          %8846 = vmatmul.mubr.bf16.gmra.mrb[0].mxu0 %v8093
          %v8847 = vpop.f32.mrb[0].mxu0
          %v8848 = vadd.f32 %v8751, %v8847
          %v8849 = vpop.f32.mrb[0].mxu0
          %v8850 = vpop.f32.mrb[0].mxu0
          %v8851 = vadd.f32 %v8754, %v8850
          %v8852 = vpop.f32.mrb[0].mxu0
          %8853 = vmatprep.mubr.bf16.mxu0 %v8098
          %8854 = vmatmul.mubr.bf16.gmra.mrb[0].mxu0 %v8094
          %v8855 = vpop.f32.mrb[0].mxu0
          %v8856 = vadd.f32 %v8759, %v8855
          %v8857 = vpop.f32.mrb[0].mxu0
          %v8858 = vpop.f32.mrb[0].mxu0
          %v8859 = vadd.f32 %v8762, %v8858
          %v8860 = vpop.f32.mrb[0].mxu0
          %8861 = vmatprep.mubr.bf16.mxu0 %v8099
          %8862 = vmatmul.mubr.bf16.gmra.mrb[0].mxu0 %v8095
          %v8863 = vpop.f32.mrb[0].mxu0
          %v8864 = vadd.f32 %v8767, %v8863
          %v8865 = vpop.f32.mrb[0].mxu0
          %v8866 = vpop.f32.mrb[0].mxu0
          %v8867 = vadd.f32 %v8770, %v8866
          %v8868 = vpop.f32.mrb[0].mxu0
          %8869 = vmatprep.mubr.bf16.mxu0 %v8100
          %8870 = vmatmul.mubr.bf16.gmra.mrb[0].mxu0 %v8096
          %v8871 = vpop.f32.mrb[0].mxu0
          %v8872 = vadd.f32 %v8775, %v8871
          %v8873 = vpop.f32.mrb[0].mxu0
          %v8874 = vpop.f32.mrb[0].mxu0
          %v8875 = vadd.f32 %v8778, %v8874
          %v8876 = vpop.f32.mrb[0].mxu0
          %8877 = vmatprep.mubr.bf16.mxu0 %v8101
          %8878 = vmatmul.mubr.bf16.gmra.mrb[0].mxu0 %v8097
          %v8879 = vpop.f32.mrb[0].mxu0
          %v8880 = vadd.f32 %v8783, %v8879
          %v8881 = vpop.f32.mrb[0].mxu0
          %v8882 = vpop.f32.mrb[0].mxu0
          %v8883 = vadd.f32 %v8786, %v8882
          %v8884 = vpop.f32.mrb[0].mxu0
          %8885 = vmatprep.mubr.bf16.mxu0 %v8102
          %8886 = vmatmul.mubr.bf16.gmra.mrb[0].mxu0 %v8098
          %v8887 = vpop.f32.mrb[0].mxu0
          %v8888 = vadd.f32 %v8791, %v8887
          %v8889 = vpop.f32.mrb[0].mxu0
          %v8890 = vpop.f32.mrb[0].mxu0
          %v8891 = vadd.f32 %v8794, %v8890
          %v8892 = vpop.f32.mrb[0].mxu0
          %8893 = vmatprep.mubr.bf16.mxu0 %v8103
          %8894 = vmatmul.mubr.bf16.gmra.mrb[0].mxu0 %v8099
          %v8895 = vpop.f32.mrb[0].mxu0
          %v8896 = vadd.f32 %v8799, %v8895
          %v8897 = vpop.f32.mrb[0].mxu0
          %v8898 = vpop.f32.mrb[0].mxu0
          %v8899 = vadd.f32 %v8802, %v8898
          %v8900 = vpop.f32.mrb[0].mxu0
          %8901 = vmatprep.mubr.bf16.mxu0 %v8104
          %8902 = vmatmul.mubr.bf16.gmra.mrb[0].mxu0 %v8100
          %v8903 = vpop.f32.mrb[0].mxu0
          %v8904 = vadd.f32 %v8807, %v8903
          %v8905 = vpop.f32.mrb[0].mxu0
          %v8906 = vpop.f32.mrb[0].mxu0
          %v8907 = vadd.f32 %v8810, %v8906
          %v8908 = vpop.f32.mrb[0].mxu0
          %8909 = vdwg.mxu0
          %8910 = vmatprep.subr.bf16.mxu0 0
          %8911 = vmatpush1.bf16.msra.mxu0 %v8604
          %8912 = vmatprep.subr.bf16.mxu0 0
          %8913 = vmatpush1.bf16.msra.mxu0 %v8605
          %8914 = vmatprep.subr.bf16.mxu0 0
          %8915 = vmatpush1.bf16.msra.mxu0 %v8606
          %8916 = vmatprep.subr.bf16.mxu0 0
          %8917 = vmatpush1.bf16.msra.mxu0 %v8607
          %8918 = vmatprep.subr.bf16.mxu0 0
          %8919 = vmatpush1.bf16.msra.mxu0 %v8608
          %8920 = vmatprep.subr.bf16.mxu0 0
          %8921 = vmatpush1.bf16.msra.mxu0 %v8609
          %8922 = vmatprep.subr.bf16.mxu0 0
          %8923 = vmatpush1.bf16.msra.mxu0 %v8610
          %8924 = vmatprep.subr.bf16.mxu0 0
          %8925 = vmatpush1.bf16.msra.mxu0 %v8611
          %8926 = vmatprep.subr.bf16.mxu0 0
          %8927 = vmatpush1.bf16.msra.mxu0 %v8612
          %8928 = vmatprep.subr.bf16.mxu0 0
          %8929 = vmatpush1.bf16.msra.mxu0 %v8613
          %8930 = vmatprep.subr.bf16.mxu0 0
          %8931 = vmatpush1.bf16.msra.mxu0 %v8614
          %8932 = vmatprep.subr.bf16.mxu0 0
          %8933 = vmatpush1.bf16.msra.mxu0 %v8615
          %8934 = vmatprep.subr.bf16.mxu0 0
          %8935 = vmatpush1.bf16.msra.mxu0 %v8616
          %8936 = vmatprep.subr.bf16.mxu0 0
          %8937 = vmatpush1.bf16.msra.mxu0 %v8617
          %8938 = vmatprep.subr.bf16.mxu0 0
          %8939 = vmatpush1.bf16.msra.mxu0 %v8618
          %8940 = vmatprep.subr.bf16.mxu0 0
          %8941 = vmatpush1.bf16.msra.mxu0 %v8619
          %8942 = vmatprep.mubr.bf16.mxu0 %v8105
          %8943 = vmatmul.mubr.bf16.gmra.mrb[0].mxu0 %v8101
          %v8944 = vpop.f32.mrb[0].mxu0
          %v8945 = vadd.f32 %v8848, %v8944
          %v8946 = vpop.f32.mrb[0].mxu0
          %v8947 = vpop.f32.mrb[0].mxu0
          %v8948 = vadd.f32 %v8851, %v8947
          %v8949 = vpop.f32.mrb[0].mxu0
          %8950 = vmatprep.mubr.bf16.mxu0 %v8106
          %8951 = vmatmul.mubr.bf16.gmra.mrb[0].mxu0 %v8102
          %v8952 = vpop.f32.mrb[0].mxu0
          %v8953 = vadd.f32 %v8856, %v8952
          %v8954 = vpop.f32.mrb[0].mxu0
          %v8955 = vpop.f32.mrb[0].mxu0
          %v8956 = vadd.f32 %v8859, %v8955
          %v8957 = vpop.f32.mrb[0].mxu0
          %8958 = vmatprep.mubr.bf16.mxu0 %v8107
          %8959 = vmatmul.mubr.bf16.gmra.mrb[0].mxu0 %v8103
          %v8960 = vpop.f32.mrb[0].mxu0
          %v8961 = vadd.f32 %v8864, %v8960
          %v8962 = vpop.f32.mrb[0].mxu0
          %v8963 = vpop.f32.mrb[0].mxu0
          %v8964 = vadd.f32 %v8867, %v8963
          %v8965 = vpop.f32.mrb[0].mxu0
          %8966 = vmatprep.mubr.bf16.mxu0 %v8108
          %8967 = vmatmul.mubr.bf16.gmra.mrb[0].mxu0 %v8104
          %v8968 = vpop.f32.mrb[0].mxu0
          %v8969 = vadd.f32 %v8872, %v8968
          %v8970 = vpop.f32.mrb[0].mxu0
          %v8971 = vpop.f32.mrb[0].mxu0
          %v8972 = vadd.f32 %v8875, %v8971
          %v8973 = vpop.f32.mrb[0].mxu0
          %8974 = vmatprep.mubr.bf16.mxu0 %v8109
          %8975 = vmatmul.mubr.bf16.gmra.mrb[0].mxu0 %v8105
          %v8976 = vpop.f32.mrb[0].mxu0
          %v8977 = vadd.f32 %v8880, %v8976
          %v8978 = vpop.f32.mrb[0].mxu0
          %v8979 = vpop.f32.mrb[0].mxu0
          %v8980 = vadd.f32 %v8883, %v8979
          %v8981 = vpop.f32.mrb[0].mxu0
          %8982 = vmatprep.mubr.bf16.mxu0 %v8110
          %8983 = vmatmul.mubr.bf16.gmra.mrb[0].mxu0 %v8106
          %v8984 = vpop.f32.mrb[0].mxu0
          %v8985 = vadd.f32 %v8888, %v8984
          %v8986 = vpop.f32.mrb[0].mxu0
          %v8987 = vpop.f32.mrb[0].mxu0
          %v8988 = vadd.f32 %v8891, %v8987
          %v8989 = vpop.f32.mrb[0].mxu0
          %8990 = vmatprep.mubr.bf16.mxu0 %v8111
          %8991 = vmatmul.mubr.bf16.gmra.mrb[0].mxu0 %v8107
          %v8992 = vpop.f32.mrb[0].mxu0
          %v8993 = vadd.f32 %v8896, %v8992
          %v8994 = vpop.f32.mrb[0].mxu0
          %v8995 = vpop.f32.mrb[0].mxu0
          %v8996 = vadd.f32 %v8899, %v8995
          %v8997 = vpop.f32.mrb[0].mxu0
          %8998 = vmatprep.mubr.bf16.mxu0 %v8112
          %8999 = vmatmul.mubr.bf16.gmra.mrb[0].mxu0 %v8108
          %v9000 = vpop.f32.mrb[0].mxu0
          %v9001 = vadd.f32 %v8904, %v9000
          %v9002 = vpop.f32.mrb[0].mxu0
          %v9003 = vpop.f32.mrb[0].mxu0
          %v9004 = vadd.f32 %v8907, %v9003
          %v9005 = vpop.f32.mrb[0].mxu0
          %9006 = vdwg.mxu0
          %9007 = vmatprep.subr.bf16.mxu0 0
          %9008 = vmatpush1.bf16.msra.mxu0 %v8620
          %9009 = vmatprep.subr.bf16.mxu0 0
          %9010 = vmatpush1.bf16.msra.mxu0 %v8621
          %9011 = vmatprep.subr.bf16.mxu0 0
          %9012 = vmatpush1.bf16.msra.mxu0 %v8622
          %9013 = vmatprep.subr.bf16.mxu0 0
          %9014 = vmatpush1.bf16.msra.mxu0 %v8623
          %9015 = vmatprep.subr.bf16.mxu0 0
          %9016 = vmatpush1.bf16.msra.mxu0 %v8624
          %9017 = vmatprep.subr.bf16.mxu0 0
          %9018 = vmatpush1.bf16.msra.mxu0 %v8625
          %9019 = vmatprep.subr.bf16.mxu0 0
          %9020 = vmatpush1.bf16.msra.mxu0 %v8626
          %9021 = vmatprep.subr.bf16.mxu0 0
          %9022 = vmatpush1.bf16.msra.mxu0 %v8627
          %9023 = vmatprep.subr.bf16.mxu0 0
          %9024 = vmatpush1.bf16.msra.mxu0 %v8628
          %9025 = vmatprep.subr.bf16.mxu0 0
          %9026 = vmatpush1.bf16.msra.mxu0 %v8629
          %9027 = vmatprep.subr.bf16.mxu0 0
          %9028 = vmatpush1.bf16.msra.mxu0 %v8630
          %9029 = vmatprep.subr.bf16.mxu0 0
          %9030 = vmatpush1.bf16.msra.mxu0 %v8631
          %9031 = vmatprep.subr.bf16.mxu0 0
          %9032 = vmatpush1.bf16.msra.mxu0 %v8632
          %9033 = vmatprep.subr.bf16.mxu0 0
          %9034 = vmatpush1.bf16.msra.mxu0 %v8633
          %9035 = vmatprep.subr.bf16.mxu0 0
          %9036 = vmatpush1.bf16.msra.mxu0 %v8634
          %9037 = vmatprep.subr.bf16.mxu0 0
          %9038 = vmatpush1.bf16.msra.mxu0 %v8635
          %9039 = vmatprep.mubr.bf16.mxu0 %v8113
          %9040 = vmatmul.mubr.bf16.gmra.mrb[0].mxu0 %v8109
          %v9041 = vpop.f32.mrb[0].mxu0
          %v9042 = vadd.f32 %v8945, %v9041
          %v9043 = vpop.f32.mrb[0].mxu0
          %v9044 = vpop.f32.mrb[0].mxu0
          %v9045 = vadd.f32 %v8948, %v9044
          %v9046 = vpop.f32.mrb[0].mxu0
          %9047 = vmatprep.mubr.bf16.mxu0 %v8114
          %9048 = vmatmul.mubr.bf16.gmra.mrb[0].mxu0 %v8110
          %v9049 = vpop.f32.mrb[0].mxu0
          %v9050 = vadd.f32 %v8953, %v9049
          %v9051 = vpop.f32.mrb[0].mxu0
          %v9052 = vpop.f32.mrb[0].mxu0
          %v9053 = vadd.f32 %v8956, %v9052
          %v9054 = vpop.f32.mrb[0].mxu0
          %9055 = vmatprep.mubr.bf16.mxu0 %v8115
          %9056 = vmatmul.mubr.bf16.gmra.mrb[0].mxu0 %v8111
          %v9057 = vpop.f32.mrb[0].mxu0
          %v9058 = vadd.f32 %v8961, %v9057
          %v9059 = vpop.f32.mrb[0].mxu0
          %v9060 = vpop.f32.mrb[0].mxu0
          %v9061 = vadd.f32 %v8964, %v9060
          %v9062 = vpop.f32.mrb[0].mxu0
          %9063 = vmatprep.mubr.bf16.mxu0 %v8116
          %9064 = vmatmul.mubr.bf16.gmra.mrb[0].mxu0 %v8112
          %v9065 = vpop.f32.mrb[0].mxu0
          %v9066 = vadd.f32 %v8969, %v9065
          %v9067 = vpop.f32.mrb[0].mxu0
          %v9068 = vpop.f32.mrb[0].mxu0
          %v9069 = vadd.f32 %v8972, %v9068
          %v9070 = vpop.f32.mrb[0].mxu0
          %9071 = vmatprep.mubr.bf16.mxu0 %v8117
          %9072 = vmatmul.mubr.bf16.gmra.mrb[0].mxu0 %v8113
          %v9073 = vpop.f32.mrb[0].mxu0
          %v9074 = vadd.f32 %v8977, %v9073
          %v9075 = vpop.f32.mrb[0].mxu0
          %v9076 = vpop.f32.mrb[0].mxu0
          %v9077 = vadd.f32 %v8980, %v9076
          %v9078 = vpop.f32.mrb[0].mxu0
          %9079 = vmatprep.mubr.bf16.mxu0 %v8118
          %9080 = vmatmul.mubr.bf16.gmra.mrb[0].mxu0 %v8114
          %v9081 = vpop.f32.mrb[0].mxu0
          %v9082 = vadd.f32 %v8985, %v9081
          %v9083 = vpop.f32.mrb[0].mxu0
          %v9084 = vpop.f32.mrb[0].mxu0
          %v9085 = vadd.f32 %v8988, %v9084
          %v9086 = vpop.f32.mrb[0].mxu0
          %9087 = vmatprep.mubr.bf16.mxu0 %v8119
          %9088 = vmatmul.mubr.bf16.gmra.mrb[0].mxu0 %v8115
          %v9089 = vpop.f32.mrb[0].mxu0
          %v9090 = vadd.f32 %v8993, %v9089
          %v9091 = vpop.f32.mrb[0].mxu0
          %v9092 = vpop.f32.mrb[0].mxu0
          %v9093 = vadd.f32 %v8996, %v9092
          %v9094 = vpop.f32.mrb[0].mxu0
          %9095 = vmatprep.mubr.bf16.mxu0 %v8120
          %9096 = vmatmul.mubr.bf16.gmra.mrb[0].mxu0 %v8116
          %v9097 = vpop.f32.mrb[0].mxu0
          %v9098 = vadd.f32 %v9001, %v9097
          %v9099 = vpop.f32.mrb[0].mxu0
          %v9100 = vpop.f32.mrb[0].mxu0
          %v9101 = vadd.f32 %v9004, %v9100
          %v9102 = vpop.f32.mrb[0].mxu0
          %9103 = vdwg.mxu0
          %9104 = vmatprep.subr.bf16.mxu0 0
          %9105 = vmatpush1.bf16.msra.mxu0 %v8636
          %9106 = vmatprep.subr.bf16.mxu0 0
          %9107 = vmatpush1.bf16.msra.mxu0 %v8637
          %9108 = vmatprep.subr.bf16.mxu0 0
          %9109 = vmatpush1.bf16.msra.mxu0 %v8638
          %9110 = vmatprep.subr.bf16.mxu0 0
          %9111 = vmatpush1.bf16.msra.mxu0 %v8639
          %9112 = vmatprep.subr.bf16.mxu0 0
          %9113 = vmatpush1.bf16.msra.mxu0 %v8640
          %9114 = vmatprep.subr.bf16.mxu0 0
          %9115 = vmatpush1.bf16.msra.mxu0 %v8641
          %9116 = vmatprep.subr.bf16.mxu0 0
          %9117 = vmatpush1.bf16.msra.mxu0 %v8642
          %9118 = vmatprep.subr.bf16.mxu0 0
          %9119 = vmatpush1.bf16.msra.mxu0 %v8643
          %9120 = vmatprep.subr.bf16.mxu0 0
          %9121 = vmatpush1.bf16.msra.mxu0 0
          %9122 = vmatprep.subr.bf16.mxu0 0
          %9123 = vmatpush1.bf16.msra.mxu0 0
          %9124 = vmatprep.subr.bf16.mxu0 0
          %9125 = vmatpush1.bf16.msra.mxu0 0
          %9126 = vmatprep.subr.bf16.mxu0 0
          %9127 = vmatpush1.bf16.msra.mxu0 0
          %9128 = vmatprep.subr.bf16.mxu0 0
          %9129 = vmatpush1.bf16.msra.mxu0 0
          %9130 = vmatprep.subr.bf16.mxu0 0
          %9131 = vmatpush1.bf16.msra.mxu0 0
          %9132 = vmatprep.subr.bf16.mxu0 0
          %9133 = vmatpush1.bf16.msra.mxu0 0
          %9134 = vmatprep.subr.bf16.mxu0 0
          %9135 = vmatpush1.bf16.msra.mxu0 0
          %9136 = vmatprep.mubr.bf16.mxu0 0
          %9137 = vmatmul.mubr.bf16.gmra.mrb[0].mxu0 %v8121
          %v9138 = vpop.f32.mrb[0].mxu0
          %v9139 = vadd.f32 %v9042, %v9138
          %v9140 = vpop.f32.mrb[0].mxu0
          %v9141 = vpop.f32.mrb[0].mxu0
          %v9142 = vadd.f32 %v9045, %v9141
          %v9143 = vpop.f32.mrb[0].mxu0
          %9144 = vmatprep.mubr.bf16.mxu0 0
          %9145 = vmatmul.mubr.bf16.gmra.mrb[0].mxu0 %v8122
          %v9146 = vpop.f32.mrb[0].mxu0
          %v9147 = vadd.f32 %v9050, %v9146
          %v9148 = vpop.f32.mrb[0].mxu0
          %v9149 = vpop.f32.mrb[0].mxu0
          %v9150 = vadd.f32 %v9053, %v9149
          %v9151 = vpop.f32.mrb[0].mxu0
          %9152 = vmatprep.mubr.bf16.mxu0 0
          %9153 = vmatmul.mubr.bf16.gmra.mrb[0].mxu0 %v8123
          %v9154 = vpop.f32.mrb[0].mxu0
          %v9155 = vadd.f32 %v9058, %v9154
          %v9156 = vpop.f32.mrb[0].mxu0
          %v9157 = vpop.f32.mrb[0].mxu0
          %v9158 = vadd.f32 %v9061, %v9157
          %v9159 = vpop.f32.mrb[0].mxu0
          %9160 = vmatprep.mubr.bf16.mxu0 0
          %9161 = vmatmul.mubr.bf16.gmra.mrb[0].mxu0 %v8124
          %v9162 = vpop.f32.mrb[0].mxu0
          %v9163 = vadd.f32 %v9066, %v9162
          %v9164 = vpop.f32.mrb[0].mxu0
          %v9165 = vpop.f32.mrb[0].mxu0
          %v9166 = vadd.f32 %v9069, %v9165
          %v9167 = vpop.f32.mrb[0].mxu0
          %9168 = vmatprep.mubr.bf16.mxu0 0
          %9169 = vmatmul.mubr.bf16.gmra.mrb[0].mxu0 %v8125
          %v9170 = vpop.f32.mrb[0].mxu0
          %v9171 = vadd.f32 %v9074, %v9170
          %v9172 = vpop.f32.mrb[0].mxu0
          %v9173 = vpop.f32.mrb[0].mxu0
          %v9174 = vadd.f32 %v9077, %v9173
          %v9175 = vpop.f32.mrb[0].mxu0
          %9176 = vmatprep.mubr.bf16.mxu0 0
          %9177 = vmatmul.mubr.bf16.gmra.mrb[0].mxu0 %v8126
          %v9178 = vpop.f32.mrb[0].mxu0
          %v9179 = vadd.f32 %v9082, %v9178
          %v9180 = vpop.f32.mrb[0].mxu0
          %v9181 = vpop.f32.mrb[0].mxu0
          %v9182 = vadd.f32 %v9085, %v9181
          %v9183 = vpop.f32.mrb[0].mxu0
          %9184 = vmatprep.mubr.bf16.mxu0 0
          %9185 = vmatmul.mubr.bf16.gmra.mrb[0].mxu0 %v8127
          %v9186 = vpop.f32.mrb[0].mxu0
          %v9187 = vadd.f32 %v9090, %v9186
          %v9188 = vpop.f32.mrb[0].mxu0
          %v9189 = vpop.f32.mrb[0].mxu0
          %v9190 = vadd.f32 %v9093, %v9189
          %v9191 = vpop.f32.mrb[0].mxu0
          %9192 = vmatprep.mubr.bf16.mxu0 0
          %9193 = vmatmul.mubr.bf16.gmra.mrb[0].mxu0 %v8128
          %v9194 = vpop.f32.mrb[0].mxu0
          %v9195 = vadd.f32 %v9098, %v9194
          %v9196 = vpop.f32.mrb[0].mxu0
          %v9197 = vpop.f32.mrb[0].mxu0
          %v9198 = vadd.f32 %v9101, %v9197
          %v9199 = vpop.f32.mrb[0].mxu0
          %9200 = vdwg.mxu0
          %v9201 = vmul.f32 %v9139, 0.5
          %v9202 = vmul.f32 %v9142, 0.5
          %v9203 = vmul.f32 %v9147, 0.5
          %v9204 = vmul.f32 %v9150, 0.5
          %v9205 = vmul.f32 %v9155, 0.5
          %v9206 = vmul.f32 %v9158, 0.5
          %v9207 = vmul.f32 %v9163, 0.5
          %v9208 = vmul.f32 %v9166, 0.5
          %v9209 = vmul.f32 %v9171, 0.5
          %v9210 = vmul.f32 %v9174, 0.5
          %v9211 = vmul.f32 %v9179, 0.5
          %v9212 = vmul.f32 %v9182, 0.5
          %v9213 = vmul.f32 %v9187, 0.5
          %v9214 = vmul.f32 %v9190, 0.5
          %v9215 = vmul.f32 %v9195, 0.5
          %v9216 = vmul.f32 %v9198, 0.5
          %v9217 = vmul.f32 %v9139, 0.70710677
          %v9218 = vmul.f32 %v9142, 0.70710677
          %v9219 = vmul.f32 %v9147, 0.70710677
          %v9220 = vmul.f32 %v9150, 0.70710677
          %v9221 = vmul.f32 %v9155, 0.70710677
          %v9222 = vmul.f32 %v9158, 0.70710677
          %v9223 = vmul.f32 %v9163, 0.70710677
          %v9224 = vmul.f32 %v9166, 0.70710677
          %v9225 = vmul.f32 %v9171, 0.70710677
          %v9226 = vmul.f32 %v9174, 0.70710677
          %v9227 = vmul.f32 %v9179, 0.70710677
          %v9228 = vmul.f32 %v9182, 0.70710677
          %v9229 = vmul.f32 %v9187, 0.70710677
          %v9230 = vmul.f32 %v9190, 0.70710677
          %v9231 = vmul.f32 %v9195, 0.70710677
          %v9232 = vmul.f32 %v9198, 0.70710677
          %v9233 = verf.f32.pop %v9217
          %v9234 = verf.f32.pop %v9218
          %v9235 = verf.f32.pop %v9219
          %v9236 = verf.f32.pop %v9220
          %v9237 = verf.f32.pop %v9221
          %v9238 = verf.f32.pop %v9222
          %v9239 = verf.f32.pop %v9223
          %v9240 = verf.f32.pop %v9224
          %v9241 = verf.f32.pop %v9225
          %v9242 = verf.f32.pop %v9226
          %v9243 = verf.f32.pop %v9227
          %v9244 = verf.f32.pop %v9228
          %v9245 = verf.f32.pop %v9229
          %v9246 = verf.f32.pop %v9230
          %v9247 = verf.f32.pop %v9231
          %v9248 = verf.f32.pop %v9232
          %v9249 = vadd.f32 %v9233, 1.0
          %v9250 = vadd.f32 %v9234, 1.0
          %v9251 = vadd.f32 %v9235, 1.0
          %v9252 = vadd.f32 %v9236, 1.0
          %v9253 = vadd.f32 %v9237, 1.0
          %v9254 = vadd.f32 %v9238, 1.0
          %v9255 = vadd.f32 %v9239, 1.0
          %v9256 = vadd.f32 %v9240, 1.0
          %v9257 = vadd.f32 %v9241, 1.0
          %v9258 = vadd.f32 %v9242, 1.0
          %v9259 = vadd.f32 %v9243, 1.0
          %v9260 = vadd.f32 %v9244, 1.0
          %v9261 = vadd.f32 %v9245, 1.0
          %v9262 = vadd.f32 %v9246, 1.0
          %v9263 = vadd.f32 %v9247, 1.0
          %v9264 = vadd.f32 %v9248, 1.0
          %v9265 = vmul.f32 %v9201, %v9249
          %v9266 = vmul.f32 %v9202, %v9250
          %v9267 = vmul.f32 %v9203, %v9251
          %v9268 = vmul.f32 %v9204, %v9252
          %v9269 = vmul.f32 %v9205, %v9253
          %v9270 = vmul.f32 %v9206, %v9254
          %v9271 = vmul.f32 %v9207, %v9255
          %v9272 = vmul.f32 %v9208, %v9256
          %v9273 = vmul.f32 %v9209, %v9257
          %v9274 = vmul.f32 %v9210, %v9258
          %v9275 = vmul.f32 %v9211, %v9259
          %v9276 = vmul.f32 %v9212, %v9260
          %v9277 = vmul.f32 %v9213, %v9261
          %v9278 = vmul.f32 %v9214, %v9262
          %v9279 = vmul.f32 %v9215, %v9263
          %v9280 = vmul.f32 %v9216, %v9264
          %v9281 = vadd.f32 %v7796, %v9265
          %v9282 = vadd.f32 %v7797, %v9266
          %v9283 = vadd.f32 %v7798, %v9267
          %v9284 = vadd.f32 %v7799, %v9268
          %v9285 = vadd.f32 %v7800, %v9269
          %v9286 = vadd.f32 %v7801, %v9270
          %v9287 = vadd.f32 %v7802, %v9271
          %v9288 = vadd.f32 %v7803, %v9272
          %v9289 = vadd.f32 %v7804, %v9273
          %v9290 = vadd.f32 %v7805, %v9274
          %v9291 = vadd.f32 %v7806, %v9275
          %v9292 = vadd.f32 %v7807, %v9276
          %v9293 = vadd.f32 %v7808, %v9277
          %v9294 = vadd.f32 %v7809, %v9278
          %v9295 = vadd.f32 %v7810, %v9279
          %v9296 = vadd.f32 %v7811, %v9280
        $region113: #{tpu_custom_call.1} parent=63 // loop_footer
          %s830 = sadd.s32 1, %s826
        $region114: #{tpu_custom_call.1} parent=63 // loop_footer_branch
          %825 = sbr.rel target = $region110
        $region115: #{tpu_custom_call.1} parent=63 // loop_exit
          _
        %v9297 = vpack.c.bf16 %v832, %v831
        %v9298 = vpack.c.bf16 %v834, %v833
        %v9299 = vpack.c.bf16 %v836, %v835
        %v9300 = vpack.c.bf16 %v838, %v837
        %v9301 = vpack.c.bf16 %v840, %v839
        %v9302 = vpack.c.bf16 %v842, %v841
        %v9303 = vpack.c.bf16 %v844, %v843
        %v9304 = vpack.c.bf16 %v846, %v845
        %v9305 = vld [vmem:[#allocation15] sm:$0xf]
        %v9306 = vld [vmem:[#allocation15 + $0x4] sm:$0xf]
        %v9307 = vld [vmem:[#allocation15 + $0x8] sm:$0xf]
        %v9308 = vld [vmem:[#allocation15 + $0xc] sm:$0xf]
        %v9309 = vld [vmem:[#allocation15 + $0x10] sm:$0xf]
        %v9310 = vld [vmem:[#allocation15 + $0x14] sm:$0xf]
        %v9311 = vld [vmem:[#allocation15 + $0x18] sm:$0xf]
        %v9312 = vld [vmem:[#allocation15 + $0x1c] sm:$0xf]
        %v9313 = vld [vmem:[#allocation15 + $0x20] sm:$0xf]
        %v9314 = vld [vmem:[#allocation15 + $0x24] sm:$0xf]
        %v9315 = vld [vmem:[#allocation15 + $0x28] sm:$0xf]
        %v9316 = vld [vmem:[#allocation15 + $0x2c] sm:$0xf]
        %v9317 = vld [vmem:[#allocation15 + $0x30] sm:$0xf]
        %v9318 = vld [vmem:[#allocation15 + $0x34] sm:$0xf]
        %v9319 = vld [vmem:[#allocation15 + $0x38] sm:$0xf]
        %v9320 = vld [vmem:[#allocation15 + $0x3c] sm:$0xf]
        %v9321 = vld [vmem:[#allocation17] sm:$0x1]
        %v9323 = vlaneseq
        %v9324 = vshrl.u32 %v9323, 7
        %v9325 = vsub.s32 0, %v9324
        %v9326 = vrot.slane %v9321, %v9325
        %v9344 = vunpack.c.l.b16 %v9305
        %v9345 = vunpack.c.l.b16 %v9306
        %v9346 = vunpack.c.l.b16 %v9307
        %v9347 = vunpack.c.l.b16 %v9308
        %v9348 = vunpack.c.l.b16 %v9309
        %v9349 = vunpack.c.l.b16 %v9310
        %v9350 = vunpack.c.l.b16 %v9311
        %v9351 = vunpack.c.l.b16 %v9312
        %v9352 = vunpack.c.l.b16 %v9313
        %v9353 = vunpack.c.l.b16 %v9314
        %v9354 = vunpack.c.l.b16 %v9315
        %v9355 = vunpack.c.l.b16 %v9316
        %v9356 = vunpack.c.l.b16 %v9317
        %v9357 = vunpack.c.l.b16 %v9318
        %v9358 = vunpack.c.l.b16 %v9319
        %v9359 = vunpack.c.l.b16 %v9320
        %v9360 = vpack.c.b16 %v9345, %v9344
        %v9361 = vpack.c.b16 %v9347, %v9346
        %v9362 = vpack.c.b16 %v9349, %v9348
        %v9363 = vpack.c.b16 %v9351, %v9350
        %v9364 = vpack.c.b16 %v9353, %v9352
        %v9365 = vpack.c.b16 %v9355, %v9354
        %v9366 = vpack.c.b16 %v9357, %v9356
        %v9367 = vpack.c.b16 %v9359, %v9358
        %9376 = vmatprep.subr.bf16.mxu0 0
        %9377 = vmatpush1.bf16.msra.mxu0 %v9360
        %9378 = vmatprep.subr.bf16.mxu0 0
        %9379 = vmatpush1.bf16.msra.mxu0 %v9361
        %9380 = vmatprep.subr.bf16.mxu0 0
        %9381 = vmatpush1.bf16.msra.mxu0 %v9362
        %9382 = vmatprep.subr.bf16.mxu0 0
        %9383 = vmatpush1.bf16.msra.mxu0 %v9363
        %9384 = vmatprep.subr.bf16.mxu0 0
        %9385 = vmatpush1.bf16.msra.mxu0 %v9364
        %9386 = vmatprep.subr.bf16.mxu0 0
        %9387 = vmatpush1.bf16.msra.mxu0 %v9365
        %9388 = vmatprep.subr.bf16.mxu0 0
        %9389 = vmatpush1.bf16.msra.mxu0 %v9366
        %9390 = vmatprep.subr.bf16.mxu0 0
        %9391 = vmatpush1.bf16.msra.mxu0 %v9367
        %9392 = vmatprep.subr.bf16.mxu0 0
        %9393 = vmatpush1.bf16.msra.mxu0 0
        %9394 = vmatprep.subr.bf16.mxu0 0
        %9395 = vmatpush1.bf16.msra.mxu0 0
        %9396 = vmatprep.subr.bf16.mxu0 0
        %9397 = vmatpush1.bf16.msra.mxu0 0
        %9398 = vmatprep.subr.bf16.mxu0 0
        %9399 = vmatpush1.bf16.msra.mxu0 0
        %9400 = vmatprep.subr.bf16.mxu0 0
        %9401 = vmatpush1.bf16.msra.mxu0 0
        %9402 = vmatprep.subr.bf16.mxu0 0
        %9403 = vmatpush1.bf16.msra.mxu0 0
        %9404 = vmatprep.subr.bf16.mxu0 0
        %9405 = vmatpush1.bf16.msra.mxu0 0
        %9406 = vmatprep.subr.bf16.mxu0 0
        %9407 = vmatpush1.bf16.msra.mxu0 0
        %9408 = vmatprep.mubr.bf16.mxu0 0
        %9409 = vmatmul.mubr.bf16.gmra.mrb[0].mxu0 %v9297
        %v9410 = vpop.f32.mrb[0].mxu0
        %v9411 = vadd.f32 %v9326, %v9410
        %v9412 = vpop.f32.mrb[0].mxu0
        %v9413 = vpop.f32.mrb[0].mxu0
        %v9414 = vadd.f32 %v9326, %v9413
        %v9415 = vpop.f32.mrb[0].mxu0
        %9416 = vmatprep.mubr.bf16.mxu0 0
        %9417 = vmatmul.mubr.bf16.gmra.mrb[0].mxu0 %v9298
        %v9418 = vpop.f32.mrb[0].mxu0
        %v9419 = vadd.f32 %v9326, %v9418
        %v9420 = vpop.f32.mrb[0].mxu0
        %v9421 = vpop.f32.mrb[0].mxu0
        %v9422 = vadd.f32 %v9326, %v9421
        %v9423 = vpop.f32.mrb[0].mxu0
        %9424 = vmatprep.mubr.bf16.mxu0 0
        %9425 = vmatmul.mubr.bf16.gmra.mrb[0].mxu0 %v9299
        %v9426 = vpop.f32.mrb[0].mxu0
        %v9427 = vadd.f32 %v9326, %v9426
        %v9428 = vpop.f32.mrb[0].mxu0
        %v9429 = vpop.f32.mrb[0].mxu0
        %v9430 = vadd.f32 %v9326, %v9429
        %v9431 = vpop.f32.mrb[0].mxu0
        %9432 = vmatprep.mubr.bf16.mxu0 0
        %9433 = vmatmul.mubr.bf16.gmra.mrb[0].mxu0 %v9300
        %v9434 = vpop.f32.mrb[0].mxu0
        %v9435 = vadd.f32 %v9326, %v9434
        %v9436 = vpop.f32.mrb[0].mxu0
        %v9437 = vpop.f32.mrb[0].mxu0
        %v9438 = vadd.f32 %v9326, %v9437
        %v9439 = vpop.f32.mrb[0].mxu0
        %9440 = vmatprep.mubr.bf16.mxu0 0
        %9441 = vmatmul.mubr.bf16.gmra.mrb[0].mxu0 %v9301
        %v9442 = vpop.f32.mrb[0].mxu0
        %v9443 = vadd.f32 %v9326, %v9442
        %v9444 = vpop.f32.mrb[0].mxu0
        %v9445 = vpop.f32.mrb[0].mxu0
        %v9446 = vadd.f32 %v9326, %v9445
        %v9447 = vpop.f32.mrb[0].mxu0
        %9448 = vmatprep.mubr.bf16.mxu0 0
        %9449 = vmatmul.mubr.bf16.gmra.mrb[0].mxu0 %v9302
        %v9450 = vpop.f32.mrb[0].mxu0
        %v9451 = vadd.f32 %v9326, %v9450
        %v9452 = vpop.f32.mrb[0].mxu0
        %v9453 = vpop.f32.mrb[0].mxu0
        %v9454 = vadd.f32 %v9326, %v9453
        %v9455 = vpop.f32.mrb[0].mxu0
        %9456 = vmatprep.mubr.bf16.mxu0 0
        %9457 = vmatmul.mubr.bf16.gmra.mrb[0].mxu0 %v9303
        %v9458 = vpop.f32.mrb[0].mxu0
        %v9459 = vadd.f32 %v9326, %v9458
        %v9460 = vpop.f32.mrb[0].mxu0
        %v9461 = vpop.f32.mrb[0].mxu0
        %v9462 = vadd.f32 %v9326, %v9461
        %v9463 = vpop.f32.mrb[0].mxu0
        %9464 = vmatprep.mubr.bf16.mxu0 0
        %9465 = vmatmul.mubr.bf16.gmra.mrb[0].mxu0 %v9304
        %v9466 = vpop.f32.mrb[0].mxu0
        %v9467 = vadd.f32 %v9326, %v9466
        %v9468 = vpop.f32.mrb[0].mxu0
        %v9469 = vpop.f32.mrb[0].mxu0
        %v9470 = vadd.f32 %v9326, %v9469
        %v9471 = vpop.f32.mrb[0].mxu0
        %9472 = vdwg.mxu0
        %v9473 = vmax.f32 %v9411, 0.0
        %v9474 = vmax.f32 %v9414, 0.0
        %v9475 = vmax.f32 %v9419, 0.0
        %v9476 = vmax.f32 %v9422, 0.0
        %v9477 = vmax.f32 %v9427, 0.0
        %v9478 = vmax.f32 %v9430, 0.0
        %v9479 = vmax.f32 %v9435, 0.0
        %v9480 = vmax.f32 %v9438, 0.0
        %v9481 = vmax.f32 %v9443, 0.0
        %v9482 = vmax.f32 %v9446, 0.0
        %v9483 = vmax.f32 %v9451, 0.0
        %v9484 = vmax.f32 %v9454, 0.0
        %v9485 = vmax.f32 %v9459, 0.0
        %v9486 = vmax.f32 %v9462, 0.0
        %v9487 = vmax.f32 %v9467, 0.0
        %v9488 = vmax.f32 %v9470, 0.0
        %v9489 = vpack.c.bf16 %v9474, %v9473
        %v9490 = vpack.c.bf16 %v9476, %v9475
        %v9491 = vpack.c.bf16 %v9478, %v9477
        %v9492 = vpack.c.bf16 %v9480, %v9479
        %v9493 = vpack.c.bf16 %v9482, %v9481
        %v9494 = vpack.c.bf16 %v9484, %v9483
        %v9495 = vpack.c.bf16 %v9486, %v9485
        %v9496 = vpack.c.bf16 %v9488, %v9487
        %v9497 = vld [vmem:[#allocation18] sm:$0xf]
        %v9498 = vld [vmem:[#allocation18 + $0x4] sm:$0xf]
        %v9499 = vld [vmem:[#allocation18 + $0x8] sm:$0xf]
        %v9500 = vld [vmem:[#allocation18 + $0xc] sm:$0xf]
        %v9501 = vld [vmem:[#allocation18 + $0x10] sm:$0xf]
        %v9502 = vld [vmem:[#allocation18 + $0x14] sm:$0xf]
        %v9503 = vld [vmem:[#allocation18 + $0x18] sm:$0xf]
        %v9504 = vld [vmem:[#allocation18 + $0x1c] sm:$0xf]
        %v9505 = vld [vmem:[#allocation18 + $0x20] sm:$0xf]
        %v9506 = vld [vmem:[#allocation18 + $0x24] sm:$0xf]
        %v9507 = vld [vmem:[#allocation18 + $0x28] sm:$0xf]
        %v9508 = vld [vmem:[#allocation18 + $0x2c] sm:$0xf]
        %v9509 = vld [vmem:[#allocation18 + $0x30] sm:$0xf]
        %v9510 = vld [vmem:[#allocation18 + $0x34] sm:$0xf]
        %v9511 = vld [vmem:[#allocation18 + $0x38] sm:$0xf]
        %v9512 = vld [vmem:[#allocation18 + $0x3c] sm:$0xf]
        %v9513 = vld [vmem:[#allocation20] sm:$0x1]
        %v9515 = vlaneseq
        %v9516 = vshrl.u32 %v9515, 7
        %v9517 = vsub.s32 0, %v9516
        %v9518 = vrot.slane %v9513, %v9517
        %v9536 = vunpack.c.l.b16 %v9497
        %v9537 = vunpack.c.l.b16 %v9498
        %v9538 = vunpack.c.l.b16 %v9499
        %v9539 = vunpack.c.l.b16 %v9500
        %v9540 = vunpack.c.l.b16 %v9501
        %v9541 = vunpack.c.l.b16 %v9502
        %v9542 = vunpack.c.l.b16 %v9503
        %v9543 = vunpack.c.l.b16 %v9504
        %v9544 = vunpack.c.l.b16 %v9505
        %v9545 = vunpack.c.l.b16 %v9506
        %v9546 = vunpack.c.l.b16 %v9507
        %v9547 = vunpack.c.l.b16 %v9508
        %v9548 = vunpack.c.l.b16 %v9509
        %v9549 = vunpack.c.l.b16 %v9510
        %v9550 = vunpack.c.l.b16 %v9511
        %v9551 = vunpack.c.l.b16 %v9512
        %v9552 = vpack.c.b16 %v9537, %v9536
        %v9553 = vpack.c.b16 %v9539, %v9538
        %v9554 = vpack.c.b16 %v9541, %v9540
        %v9555 = vpack.c.b16 %v9543, %v9542
        %v9556 = vpack.c.b16 %v9545, %v9544
        %v9557 = vpack.c.b16 %v9547, %v9546
        %v9558 = vpack.c.b16 %v9549, %v9548
        %v9559 = vpack.c.b16 %v9551, %v9550
        %9568 = vmatprep.subr.bf16.mxu0 0
        %9569 = vmatpush1.bf16.msra.mxu0 %v9552
        %9570 = vmatprep.subr.bf16.mxu0 0
        %9571 = vmatpush1.bf16.msra.mxu0 %v9553
        %9572 = vmatprep.subr.bf16.mxu0 0
        %9573 = vmatpush1.bf16.msra.mxu0 %v9554
        %9574 = vmatprep.subr.bf16.mxu0 0
        %9575 = vmatpush1.bf16.msra.mxu0 %v9555
        %9576 = vmatprep.subr.bf16.mxu0 0
        %9577 = vmatpush1.bf16.msra.mxu0 %v9556
        %9578 = vmatprep.subr.bf16.mxu0 0
        %9579 = vmatpush1.bf16.msra.mxu0 %v9557
        %9580 = vmatprep.subr.bf16.mxu0 0
        %9581 = vmatpush1.bf16.msra.mxu0 %v9558
        %9582 = vmatprep.subr.bf16.mxu0 0
        %9583 = vmatpush1.bf16.msra.mxu0 %v9559
        %9584 = vmatprep.subr.bf16.mxu0 0
        %9585 = vmatpush1.bf16.msra.mxu0 0
        %9586 = vmatprep.subr.bf16.mxu0 0
        %9587 = vmatpush1.bf16.msra.mxu0 0
        %9588 = vmatprep.subr.bf16.mxu0 0
        %9589 = vmatpush1.bf16.msra.mxu0 0
        %9590 = vmatprep.subr.bf16.mxu0 0
        %9591 = vmatpush1.bf16.msra.mxu0 0
        %9592 = vmatprep.subr.bf16.mxu0 0
        %9593 = vmatpush1.bf16.msra.mxu0 0
        %9594 = vmatprep.subr.bf16.mxu0 0
        %9595 = vmatpush1.bf16.msra.mxu0 0
        %9596 = vmatprep.subr.bf16.mxu0 0
        %9597 = vmatpush1.bf16.msra.mxu0 0
        %9598 = vmatprep.subr.bf16.mxu0 0
        %9599 = vmatpush1.bf16.msra.mxu0 0
        %9600 = vmatprep.mubr.bf16.mxu0 0
        %9601 = vmatmul.mubr.bf16.gmra.mrb[0].mxu0 %v9489
        %v9602 = vpop.f32.mrb[0].mxu0
        %v9603 = vadd.f32 %v9518, %v9602
        %v9604 = vpop.f32.mrb[0].mxu0
        %v9605 = vpop.f32.mrb[0].mxu0
        %v9606 = vadd.f32 %v9518, %v9605
        %v9607 = vpop.f32.mrb[0].mxu0
        %9608 = vmatprep.mubr.bf16.mxu0 0
        %9609 = vmatmul.mubr.bf16.gmra.mrb[0].mxu0 %v9490
        %v9610 = vpop.f32.mrb[0].mxu0
        %v9611 = vadd.f32 %v9518, %v9610
        %v9612 = vpop.f32.mrb[0].mxu0
        %v9613 = vpop.f32.mrb[0].mxu0
        %v9614 = vadd.f32 %v9518, %v9613
        %v9615 = vpop.f32.mrb[0].mxu0
        %9616 = vmatprep.mubr.bf16.mxu0 0
        %9617 = vmatmul.mubr.bf16.gmra.mrb[0].mxu0 %v9491
        %v9618 = vpop.f32.mrb[0].mxu0
        %v9619 = vadd.f32 %v9518, %v9618
        %v9620 = vpop.f32.mrb[0].mxu0
        %v9621 = vpop.f32.mrb[0].mxu0
        %v9622 = vadd.f32 %v9518, %v9621
        %v9623 = vpop.f32.mrb[0].mxu0
        %9624 = vmatprep.mubr.bf16.mxu0 0
        %9625 = vmatmul.mubr.bf16.gmra.mrb[0].mxu0 %v9492
        %v9626 = vpop.f32.mrb[0].mxu0
        %v9627 = vadd.f32 %v9518, %v9626
        %v9628 = vpop.f32.mrb[0].mxu0
        %v9629 = vpop.f32.mrb[0].mxu0
        %v9630 = vadd.f32 %v9518, %v9629
        %v9631 = vpop.f32.mrb[0].mxu0
        %9632 = vmatprep.mubr.bf16.mxu0 0
        %9633 = vmatmul.mubr.bf16.gmra.mrb[0].mxu0 %v9493
        %v9634 = vpop.f32.mrb[0].mxu0
        %v9635 = vadd.f32 %v9518, %v9634
        %v9636 = vpop.f32.mrb[0].mxu0
        %v9637 = vpop.f32.mrb[0].mxu0
        %v9638 = vadd.f32 %v9518, %v9637
        %v9639 = vpop.f32.mrb[0].mxu0
        %9640 = vmatprep.mubr.bf16.mxu0 0
        %9641 = vmatmul.mubr.bf16.gmra.mrb[0].mxu0 %v9494
        %v9642 = vpop.f32.mrb[0].mxu0
        %v9643 = vadd.f32 %v9518, %v9642
        %v9644 = vpop.f32.mrb[0].mxu0
        %v9645 = vpop.f32.mrb[0].mxu0
        %v9646 = vadd.f32 %v9518, %v9645
        %v9647 = vpop.f32.mrb[0].mxu0
        %9648 = vmatprep.mubr.bf16.mxu0 0
        %9649 = vmatmul.mubr.bf16.gmra.mrb[0].mxu0 %v9495
        %v9650 = vpop.f32.mrb[0].mxu0
        %v9651 = vadd.f32 %v9518, %v9650
        %v9652 = vpop.f32.mrb[0].mxu0
        %v9653 = vpop.f32.mrb[0].mxu0
        %v9654 = vadd.f32 %v9518, %v9653
        %v9655 = vpop.f32.mrb[0].mxu0
        %9656 = vmatprep.mubr.bf16.mxu0 0
        %9657 = vmatmul.mubr.bf16.gmra.mrb[0].mxu0 %v9496
        %v9658 = vpop.f32.mrb[0].mxu0
        %v9659 = vadd.f32 %v9518, %v9658
        %v9660 = vpop.f32.mrb[0].mxu0
        %v9661 = vpop.f32.mrb[0].mxu0
        %v9662 = vadd.f32 %v9518, %v9661
        %v9663 = vpop.f32.mrb[0].mxu0
        %9664 = vdwg.mxu0
        %9665 = vst [vmem:[%s543] sm:$0xff] %v9603
        %9666 = vst [vmem:[%s543 + $0x8] sm:$0xff] %v9606
        %9667 = vst [vmem:[%s543 + $0x10] sm:$0xff] %v9611
        %9668 = vst [vmem:[%s543 + $0x18] sm:$0xff] %v9614
        %9669 = vst [vmem:[%s543 + $0x20] sm:$0xff] %v9619
        %9670 = vst [vmem:[%s543 + $0x28] sm:$0xff] %v9622
        %9671 = vst [vmem:[%s543 + $0x30] sm:$0xff] %v9627
        %9672 = vst [vmem:[%s543 + $0x38] sm:$0xff] %v9630
        %9673 = vst [vmem:[%s543 + $0x40] sm:$0xff] %v9635
        %9674 = vst [vmem:[%s543 + $0x48] sm:$0xff] %v9638
        %9675 = vst [vmem:[%s543 + $0x50] sm:$0xff] %v9643
        %9676 = vst [vmem:[%s543 + $0x58] sm:$0xff] %v9646
        %9677 = vst [vmem:[%s543 + $0x60] sm:$0xff] %v9651
        %9678 = vst [vmem:[%s543 + $0x68] sm:$0xff] %v9654
        %9679 = vst [vmem:[%s543 + $0x70] sm:$0xff] %v9659
        %9680 = vst [vmem:[%s543 + $0x78] sm:$0xff] %v9662
        %s9681 = sand.u32 %s277, 1
        %s9682 = scalar_lea.sflag [#allocation5], %s9681
        %s9683 = sand.u32 %s277, 1
        %s9684 = smul.addr %s9683, 128
        %s9685 = scalar_lea.vmem [#allocation21], %s9684
        // Predicated region
        $region116: #{tpu_custom_call.1} parent=63 // pred_check
          %p9686 = pneg %p287
        $region117: #{tpu_custom_call.1} parent=63 // pred_check_branch
          %9688 = sbr.rel (%p9686) target = $region119
        $region118: #{tpu_custom_call.1} parent=63 // pred_region
          %s9690 = ssub.s32 2048, 2048
          %9691 = vsyncadd %s9682, %s9690
          %s9692 = smul.addr %s33, 16
          %s9693 = smul.addr %s9692, 128
          %s9694 = scalar_lea.hbm %s11, %s9693
          %s9695 = sshll.u32 %s9685, 4
          %s9696 = int_to_ptr.vmem [resolvable:$true] %s9695
          %9701 = dma.vmem_to_hbm [thread:$0]  %s9696, 2048, %s9694, %s9682, 128, 128, 8
        $region119: #{tpu_custom_call.1} parent=63 // pred_fallthru
          _
      $region64: #{tpu_custom_call.1} parent=5 // pred_fallthru
        _
      %p9702 = scmp.le.s32.totalorder 2, %s28
      // Predicated region
      $region120: #{tpu_custom_call.1} parent=5 // pred_check
        %p9703 = pneg %p9702
      $region121: #{tpu_custom_call.1} parent=5 // pred_check_branch
        %9705 = sbr.rel (%p9703) target = $region123
      $region122: #{tpu_custom_call.1} parent=5 // pred_region
        %s9706 = ssub.s32 %s28, 2
        // Predicated region
        $region124: #{tpu_custom_call.1} parent=122 // pred_check
          %p9707 = pneg %p293
        $region125: #{tpu_custom_call.1} parent=122 // pred_check_branch
          %9709 = sbr.rel (%p9707) target = $region127
        $region126: #{tpu_custom_call.1} parent=122 // pred_region
          %s9710 = sand.u32 %s278, 1
          %s9711 = scalar_lea.sflag [#allocation5], %s9710
          %s9712 = sand.u32 %s278, 1
          %s9713 = smul.addr %s9712, 128
          %s9714 = scalar_lea.vmem [#allocation21], %s9713
          %9715 = dma.done %s9711, 2048
        $region127: #{tpu_custom_call.1} parent=122 // pred_fallthru
          _
      $region123: #{tpu_custom_call.1} parent=5 // pred_fallthru
        _
    $region6: #{tpu_custom_call.1} parent=1 // loop_footer
      %s32 = sadd.s32 1, %s28
    $region7: #{tpu_custom_call.1} parent=1 // loop_footer_branch
      %27 = sbr.rel target = $region3
    $region8: #{tpu_custom_call.1} parent=1 // loop_exit
      _
    %9716 = vsyncpa [#allocation4], 1
    %s9717 = scalar_lea.sflag [#allocation4], 1
    %9718 = vsyncpa %s9717, 1
    %9719 = vsyncpa [#allocation7], 1
    %9720 = vsyncpa [#allocation10], 1
    %9721 = vsyncpa [#allocation13], 1
    %9722 = vsyncpa [#allocation16], 1
    %9723 = vsyncpa [#allocation19], 1
    %9724 = vsyncpa [#allocation5], 1
    %s9725 = scalar_lea.sflag [#allocation5], 1
    %9726 = vsyncpa %s9725, 1

</llo_original>
